<compile_context>
chip_gen: v7x
topology: tpu7x:2x2x1
jax: 0.10.0
libtpu: 0.0.40
codegen_flags: <defaults>
</compile_context>

<pallas_src>
import jax
import jax.numpy as jnp
from jax import lax
from jax.experimental import pallas as pl
from jax.experimental.pallas import tpu as pltpu

LANE = 128


def _round_up(x, m):
    return (x + m - 1) // m * m


# ---------------------------------------------------------------------------
# Fused Pallas kernel (one grid step == one image)
# ---------------------------------------------------------------------------
def _make_fused_kernel(n_conv, tap_offsets, nc, woff):
    """(conv3x3 + ReLU) * n_conv  ->  1x1 conv head, activations resident in VMEM."""

    def kernel(*refs):
        x_ref, mask_ref = refs[0], refs[1]
        wb = refs[2:2 + 2 * n_conv]                       # (w_i, b_i) pairs
        wout_ref, bout_ref = refs[2 + 2 * n_conv:4 + 2 * n_conv]
        out_ref = refs[4 + 2 * n_conv]
        buf_ref = refs[5 + 2 * n_conv]                    # padded inter-layer act (VMEM)

        # The halo of the inter-layer buffer must read as zeros.
        buf_ref[...] = jnp.zeros_like(buf_ref)

        def conv_relu(load_tap, w_ref, b_ref):
            # sum_t  act[tap_t] @ W[t]  with f32 accumulation on the MXU.
            acc = jnp.zeros((nc, w_ref.shape[-1]), jnp.float32)
            for t, off in enumerate(tap_offsets):         # static offsets, unrolled
                acc = acc + jnp.dot(load_tap(off), w_ref[t],
                                    preferred_element_type=jnp.float32)
            return jnp.maximum(acc + b_ref[...], 0.0)

        def load_from_x(off):       # layer 0 reads the pipelined input block
            return x_ref[0, pl.ds(off, nc), :]

        def load_from_buf(off):     # deeper layers read the VMEM-resident activation
            return buf_ref[pl.ds(off, nc), :]

        load_tap = load_from_x
        for li in range(n_conv):
            w_ref, b_ref = wb[2 * li], wb[2 * li + 1]
            act = conv_relu(load_tap, w_ref, b_ref)
            if li + 1 < n_conv:
                # Zero the wrap-around columns so the next layer's halo stays zero,
                # then park the activation back into the padded VMEM buffer (bf16).
                buf_ref[pl.ds(woff, nc), :] = (act * mask_ref[...]).astype(buf_ref.dtype)
                load_tap = load_from_buf
            else:
                # Fused 1x1 conv head = channel matmul; lane-dense f32 store.
                h = act.astype(wout_ref.dtype)
                out_ref[0] = (jnp.dot(h, wout_ref[...],
                                      preferred_element_type=jnp.float32)
                              + bout_ref[...])

    return kernel


# ---------------------------------------------------------------------------
# Wrapper: input layout (tiny) + single fused pallas_call
# ---------------------------------------------------------------------------
def basic_network_forward(x_nchw, params):
    """BasicNetwork.forward: (conv -> ReLU)* -> 1x1 conv_out.  x: (B,C,H,W) f32."""
    layers = params["layers"]
    w_out_k, b_out_k = params["head_k"]
    n_out = params["n_out"]

    k = layers[0]["kernel_size"]
    for layer in layers:
        assert layer["kernel_size"] == k
        assert layer["stride"] == 1 and layer["padding"] == k // 2
        assert layer["out_channels"] <= LANE

    B, c_in, H, W = x_nchw.shape
    assert c_in <= LANE
    p = k // 2
    hp, wp = H + 2 * p, W + 2 * p
    np_full = hp * wp                                # rows of the padded activation
    nc = H * wp                                      # conv output rows per image
    np_alloc = _round_up(np_full + k - 1, 16)        # taps read up to k-1 rows past end
    woff = p * wp + p                                # flat index of real pixel (0,0)
    tap_offsets = [dh * wp + dw for dh in range(k) for dw in range(k)]
    n_taps = k * k

    # Input layout (tiny, pure data movement): NCHW -> NHWC bf16, spatial zero pad,
    # channel pad to 128 lanes, flatten spatial rows, pad rows to np_alloc.
    x = jnp.transpose(x_nchw, (0, 2, 3, 1)).astype(jnp.bfloat16)
    x = jnp.pad(x, ((0, 0), (p, p), (p, p), (0, LANE - c_in)))
    x = x.reshape(B, np_full, LANE)
    x = jnp.pad(x, ((0, 0), (0, np_alloc - np_full), (0, 0)))

    # Mask that zeroes the wrap-around columns of each flattened conv output row.
    cols = jnp.arange(nc, dtype=jnp.int32) % wp
    mask = jnp.broadcast_to((cols < W).astype(jnp.float32)[:, None], (nc, LANE))

    kernel = _make_fused_kernel(len(layers), tap_offsets, nc, woff)

    bcast2 = lambda b: (0, 0)
    bcast3 = lambda b: (0, 0, 0)
    in_specs = [pl.BlockSpec((1, np_alloc, LANE), lambda b: (b, 0, 0)),
                pl.BlockSpec((nc, LANE), bcast2)]
    args = [x, mask]
    flops = 0
    for layer in layers:
        in_specs += [pl.BlockSpec((n_taps, LANE, LANE), bcast3),
                     pl.BlockSpec((1, LANE), bcast2)]
        args += [layer["w_k"], layer["b_k"]]
        flops += 2 * nc * LANE * LANE * n_taps
    in_specs += [pl.BlockSpec((LANE, LANE), bcast2),
                 pl.BlockSpec((1, LANE), bcast2)]
    args += [w_out_k, b_out_k]
    flops = (flops + 2 * nc * LANE * LANE) * B
    bytes_accessed = sum(int(a.size) * a.dtype.itemsize for a in args) + B * nc * LANE * 4

    out = pl.pallas_call(
        kernel,
        out_shape=jax.ShapeDtypeStruct((B, nc, LANE), jnp.float32),
        grid=(B,),
        in_specs=in_specs,
        out_specs=pl.BlockSpec((1, nc, LANE), lambda b: (b, 0, 0)),
        scratch_shapes=[pltpu.VMEM((np_alloc, LANE), jnp.bfloat16)],
        compiler_params=pltpu.CompilerParams(
            dimension_semantics=("parallel",),
            vmem_limit_bytes=32 * 1024 * 1024),
        cost_estimate=pl.CostEstimate(flops=flops, transcendentals=0,
                                      bytes_accessed=bytes_accessed),
    )(*args)

    # Drop wrap-around columns and the lane padding of the head; back to NCHW.
    out = out.reshape(B, H, wp, LANE)[:, :, :W, :n_out]
    return jnp.transpose(out, (0, 3, 1, 2))


# ---------------------------------------------------------------------------
# Params + pure-JAX reference
# ---------------------------------------------------------------------------
def init_params(key, n_in_channels, n_out_channels, topology):
    """PyTorch-default Conv2d init.  Keeps f32 HWIO weights for the reference and
    lane-padded, tap-major bf16 copies for the fused kernel."""
    layers = []
    n_prev = n_in_channels
    keys = jax.random.split(key, 2 * len(topology) + 2)
    ki = 0
    for layer in topology:
        cout = layer.get("filters", layer.get("out_channels"))
        k = layer.get("kernel_size", 3)
        s = layer.get("stride", 1)
        p = layer.get("padding", 0)
        fan_in = n_prev * k * k
        bound = fan_in ** -0.5
        w = jax.random.uniform(keys[ki], (k, k, n_prev, cout), jnp.float32,
                               -bound, bound)                           # HWIO
        b = jax.random.uniform(keys[ki + 1], (cout,), jnp.float32, -bound, bound)
        # Kernel-side form: tap-major (k*k, 128, 128) with channels zero-padded to
        # 128 lanes so every activation load/store in the kernel is lane-dense.
        w_k = jnp.zeros((k * k, LANE, LANE), jnp.float32)
        w_k = w_k.at[:, :n_prev, :cout].set(w.reshape(k * k, n_prev, cout))
        b_k = jnp.zeros((1, LANE), jnp.float32).at[0, :cout].set(b)
        layers.append(dict(w=w, b=b, w_k=w_k.astype(jnp.bfloat16), b_k=b_k,
                           kernel_size=k, stride=s, padding=p, out_channels=cout))
        ki += 2
        n_prev = cout

    bound = n_prev ** -0.5
    w_out = jax.random.uniform(keys[ki], (n_prev, n_out_channels), jnp.float32,
                               -bound, bound)
    b_out = jax.random.uniform(keys[ki + 1], (n_out_channels,), jnp.float32,
                               -bound, bound)
    w_out_k = jnp.zeros((LANE, LANE), jnp.float32).at[:n_prev, :n_out_channels].set(w_out)
    b_out_k = jnp.zeros((1, LANE), jnp.float32).at[0, :n_out_channels].set(b_out)
    return dict(layers=layers,
                head=(w_out, b_out),
                head_k=(w_out_k.astype(jnp.bfloat16), b_out_k),
                n_out=n_out_channels)


def reference_forward(x_nchw, params):
    """Pure-JAX conv reference mirroring the kernel's bf16-operand numerics."""
    x = jnp.transpose(x_nchw, (0, 2, 3, 1))
    x = x.astype(jnp.bfloat16).astype(jnp.float32)        # kernel consumes bf16 input
    for layer in params["layers"]:
        w = layer["w"].astype(jnp.bfloat16).astype(jnp.float32)
        s, p = layer["stride"], layer["padding"]
        x = lax.conv_general_dilated(
            x, w, window_strides=(s, s), padding=[(p, p), (p, p)],
            dimension_numbers=("NHWC", "HWIO", "NHWC"),
            precision=lax.Precision.HIGHEST)
        x = jnp.maximum(x + layer["b"][None, None, None, :], 0.0)
        x = x.astype(jnp.bfloat16).astype(jnp.float32)    # bf16 inter-layer activations
    w_out, b_out = params["head"]
    w_out = w_out.astype(jnp.bfloat16).astype(jnp.float32)
    y = jnp.dot(x, w_out, precision=lax.Precision.HIGHEST) + b_out[None, None, None, :]
    return jnp.transpose(y, (0, 3, 1, 2))


if __name__ == "__main__":
    key = jax.random.PRNGKey(0)
    kx, kp = jax.random.split(key)

    # Small demo shapes consistent with the module: NCHW input, two 3x3 "same" convs,
    # final 1x1 conv head.
    B, n_in, H, W = 2, 4, 16, 16
    n_out = 8
    topology = [
        dict(filters=32, kernel_size=3, stride=1, padding=1),
        dict(filters=64, kernel_size=3, stride=1, padding=1),
    ]

    x = jax.random.normal(kx, (B, n_in, H, W), jnp.float32)
    params = init_params(kp, n_in, n_out, topology)

    fwd = jax.jit(lambda xx: basic_network_forward(xx, params))
    out = jax.block_until_ready(fwd(x))

    ref = reference_forward(x, params)
    assert out.shape == (B, n_out, H, W), out.shape
    max_err = float(jnp.max(jnp.abs(out - ref)))
    assert jnp.allclose(out, ref, atol=2e-2, rtol=2e-2), \
        f"mismatch vs reference (max abs err {max_err})"

    print("KERNEL_OK")
</pallas_src>

<mosaic_0001>
module attributes {stable_mosaic.version = 11 : i64} {
  func.func @kernel(%arg0: i32, %arg1: memref<1x336x128xbf16, #tpu.memory_space<vmem>>, %arg2: memref<288x128xf32, #tpu.memory_space<vmem>>, %arg3: memref<9x128x128xbf16, #tpu.memory_space<vmem>>, %arg4: memref<1x128xf32, #tpu.memory_space<vmem>>, %arg5: memref<9x128x128xbf16, #tpu.memory_space<vmem>>, %arg6: memref<1x128xf32, #tpu.memory_space<vmem>>, %arg7: memref<128x128xbf16, #tpu.memory_space<vmem>>, %arg8: memref<1x128xf32, #tpu.memory_space<vmem>>, %arg9: memref<1x288x128xf32, #tpu.memory_space<vmem>>, %arg10: memref<336x128xbf16, #tpu.memory_space<vmem>>) attributes {dimension_semantics = [#tpu.dimension_semantics<parallel>], iteration_bounds = array<i64: 2>, scalar_prefetch = 0 : i64, scratch_operands = 1 : i64, tpu.core_type = #tpu.core_type<tc>, window_params = [{transform_indices = @transform_0, window_bounds = array<i64: 1, 336, 128>}, {pipeline_mode = #tpu.pipeline_mode<synchronous>, transform_indices = @transform_1, window_bounds = array<i64: 288, 128>}, {pipeline_mode = #tpu.pipeline_mode<synchronous>, transform_indices = @transform_2, window_bounds = array<i64: 9, 128, 128>}, {pipeline_mode = #tpu.pipeline_mode<synchronous>, transform_indices = @transform_3, window_bounds = array<i64: 1, 128>}, {pipeline_mode = #tpu.pipeline_mode<synchronous>, transform_indices = @transform_4, window_bounds = array<i64: 9, 128, 128>}, {pipeline_mode = #tpu.pipeline_mode<synchronous>, transform_indices = @transform_5, window_bounds = array<i64: 1, 128>}, {pipeline_mode = #tpu.pipeline_mode<synchronous>, transform_indices = @transform_6, window_bounds = array<i64: 128, 128>}, {pipeline_mode = #tpu.pipeline_mode<synchronous>, transform_indices = @transform_7, window_bounds = array<i64: 1, 128>}, {transform_indices = @transform_8, window_bounds = array<i64: 1, 288, 128>}]} {
    %cst = arith.constant 0.000000e+00 : bf16
    %0 = vector.broadcast %cst : bf16 to vector<336x128xbf16>
    %c0 = arith.constant 0 : index
    %c0_0 = arith.constant 0 : index
    %1 = vector.load %arg10[%c0, %c0_0] : memref<336x128xbf16, #tpu.memory_space<vmem>>, vector<336x128xbf16>
    tpu.vector_store %arg10[%c0, %c0_0], %0 {strides = array<i32>} : memref<336x128xbf16, #tpu.memory_space<vmem>>, vector<336x128xbf16>,
    %cst_1 = arith.constant 0.000000e+00 : f32
    %2 = vector.broadcast %cst_1 : f32 to vector<288x128xf32>
    %c0_2 = arith.constant 0 : index
    %c0_3 = arith.constant 0 : index
    %c0_4 = arith.constant 0 : index
    %3 = vector.load %arg1[%c0_2, %c0_3, %c0_4] : memref<1x336x128xbf16, #tpu.memory_space<vmem>>, vector<1x288x128xbf16>
    %4 = vector.shape_cast %3 : vector<1x288x128xbf16> to vector<288x128xbf16>
    %c0_5 = arith.constant 0 : index
    %c0_6 = arith.constant 0 : index
    %c0_7 = arith.constant 0 : index
    %5 = vector.load %arg3[%c0_5, %c0_6, %c0_7] : memref<9x128x128xbf16, #tpu.memory_space<vmem>>, vector<1x128x128xbf16>
    %6 = vector.shape_cast %5 : vector<1x128x128xbf16> to vector<128x128xbf16>
    %cst_8 = arith.constant dense<0.000000e+00> : vector<288x128xf32>
    %7 = tpu.matmul %4, %6, %cst_8 {dimension_numbers = #tpu.dot_dimension_numbers<[1], [0], [0], [1], [0, 0, 1, 1], [], []>} : vector<288x128xbf16>, vector<128x128xbf16>, vector<288x128xf32> -> vector<288x128xf32>
    %8 = arith.addf %2, %7 : vector<288x128xf32>
    %c0_9 = arith.constant 0 : index
    %c1 = arith.constant 1 : index
    %c0_10 = arith.constant 0 : index
    %9 = vector.load %arg1[%c0_9, %c1, %c0_10] : memref<1x336x128xbf16, #tpu.memory_space<vmem>>, vector<1x288x128xbf16>
    %10 = vector.shape_cast %9 : vector<1x288x128xbf16> to vector<288x128xbf16>
    %c1_11 = arith.constant 1 : index
    %c0_12 = arith.constant 0 : index
    %c0_13 = arith.constant 0 : index
    %11 = vector.load %arg3[%c1_11, %c0_12, %c0_13] : memref<9x128x128xbf16, #tpu.memory_space<vmem>>, vector<1x128x128xbf16>
    %12 = vector.shape_cast %11 : vector<1x128x128xbf16> to vector<128x128xbf16>
    %cst_14 = arith.constant dense<0.000000e+00> : vector<288x128xf32>
    %13 = tpu.matmul %10, %12, %cst_14 {dimension_numbers = #tpu.dot_dimension_numbers<[1], [0], [0], [1], [0, 0, 1, 1], [], []>} : vector<288x128xbf16>, vector<128x128xbf16>, vector<288x128xf32> -> vector<288x128xf32>
    %14 = arith.addf %8, %13 : vector<288x128xf32>
    %c0_15 = arith.constant 0 : index
    %c2 = arith.constant 2 : index
    %c0_16 = arith.constant 0 : index
    %15 = vector.load %arg1[%c0_15, %c2, %c0_16] : memref<1x336x128xbf16, #tpu.memory_space<vmem>>, vector<1x288x128xbf16>
    %16 = vector.shape_cast %15 : vector<1x288x128xbf16> to vector<288x128xbf16>
    %c2_17 = arith.constant 2 : index
    %c0_18 = arith.constant 0 : index
    %c0_19 = arith.constant 0 : index
    %17 = vector.load %arg3[%c2_17, %c0_18, %c0_19] : memref<9x128x128xbf16, #tpu.memory_space<vmem>>, vector<1x128x128xbf16>
    %18 = vector.shape_cast %17 : vector<1x128x128xbf16> to vector<128x128xbf16>
    %cst_20 = arith.constant dense<0.000000e+00> : vector<288x128xf32>
    %19 = tpu.matmul %16, %18, %cst_20 {dimension_numbers = #tpu.dot_dimension_numbers<[1], [0], [0], [1], [0, 0, 1, 1], [], []>} : vector<288x128xbf16>, vector<128x128xbf16>, vector<288x128xf32> -> vector<288x128xf32>
    %20 = arith.addf %14, %19 : vector<288x128xf32>
    %c0_21 = arith.constant 0 : index
    %c18 = arith.constant 18 : index
    %c0_22 = arith.constant 0 : index
    %21 = vector.load %arg1[%c0_21, %c18, %c0_22] : memref<1x336x128xbf16, #tpu.memory_space<vmem>>, vector<1x288x128xbf16>
    %22 = vector.shape_cast %21 : vector<1x288x128xbf16> to vector<288x128xbf16>
    %c3 = arith.constant 3 : index
    %c0_23 = arith.constant 0 : index
    %c0_24 = arith.constant 0 : index
    %23 = vector.load %arg3[%c3, %c0_23, %c0_24] : memref<9x128x128xbf16, #tpu.memory_space<vmem>>, vector<1x128x128xbf16>
    %24 = vector.shape_cast %23 : vector<1x128x128xbf16> to vector<128x128xbf16>
    %cst_25 = arith.constant dense<0.000000e+00> : vector<288x128xf32>
    %25 = tpu.matmul %22, %24, %cst_25 {dimension_numbers = #tpu.dot_dimension_numbers<[1], [0], [0], [1], [0, 0, 1, 1], [], []>} : vector<288x128xbf16>, vector<128x128xbf16>, vector<288x128xf32> -> vector<288x128xf32>
    %26 = arith.addf %20, %25 : vector<288x128xf32>
    %c0_26 = arith.constant 0 : index
    %c19 = arith.constant 19 : index
    %c0_27 = arith.constant 0 : index
    %27 = vector.load %arg1[%c0_26, %c19, %c0_27] : memref<1x336x128xbf16, #tpu.memory_space<vmem>>, vector<1x288x128xbf16>
    %28 = vector.shape_cast %27 : vector<1x288x128xbf16> to vector<288x128xbf16>
    %c4 = arith.constant 4 : index
    %c0_28 = arith.constant 0 : index
    %c0_29 = arith.constant 0 : index
    %29 = vector.load %arg3[%c4, %c0_28, %c0_29] : memref<9x128x128xbf16, #tpu.memory_space<vmem>>, vector<1x128x128xbf16>
    %30 = vector.shape_cast %29 : vector<1x128x128xbf16> to vector<128x128xbf16>
    %cst_30 = arith.constant dense<0.000000e+00> : vector<288x128xf32>
    %31 = tpu.matmul %28, %30, %cst_30 {dimension_numbers = #tpu.dot_dimension_numbers<[1], [0], [0], [1], [0, 0, 1, 1], [], []>} : vector<288x128xbf16>, vector<128x128xbf16>, vector<288x128xf32> -> vector<288x128xf32>
    %32 = arith.addf %26, %31 : vector<288x128xf32>
    %c0_31 = arith.constant 0 : index
    %c20 = arith.constant 20 : index
    %c0_32 = arith.constant 0 : index
    %33 = vector.load %arg1[%c0_31, %c20, %c0_32] : memref<1x336x128xbf16, #tpu.memory_space<vmem>>, vector<1x288x128xbf16>
    %34 = vector.shape_cast %33 : vector<1x288x128xbf16> to vector<288x128xbf16>
    %c5 = arith.constant 5 : index
    %c0_33 = arith.constant 0 : index
    %c0_34 = arith.constant 0 : index
    %35 = vector.load %arg3[%c5, %c0_33, %c0_34] : memref<9x128x128xbf16, #tpu.memory_space<vmem>>, vector<1x128x128xbf16>
    %36 = vector.shape_cast %35 : vector<1x128x128xbf16> to vector<128x128xbf16>
    %cst_35 = arith.constant dense<0.000000e+00> : vector<288x128xf32>
    %37 = tpu.matmul %34, %36, %cst_35 {dimension_numbers = #tpu.dot_dimension_numbers<[1], [0], [0], [1], [0, 0, 1, 1], [], []>} : vector<288x128xbf16>, vector<128x128xbf16>, vector<288x128xf32> -> vector<288x128xf32>
    %38 = arith.addf %32, %37 : vector<288x128xf32>
    %c0_36 = arith.constant 0 : index
    %c36 = arith.constant 36 : index
    %c0_37 = arith.constant 0 : index
    %39 = vector.load %arg1[%c0_36, %c36, %c0_37] : memref<1x336x128xbf16, #tpu.memory_space<vmem>>, vector<1x288x128xbf16>
    %40 = vector.shape_cast %39 : vector<1x288x128xbf16> to vector<288x128xbf16>
    %c6 = arith.constant 6 : index
    %c0_38 = arith.constant 0 : index
    %c0_39 = arith.constant 0 : index
    %41 = vector.load %arg3[%c6, %c0_38, %c0_39] : memref<9x128x128xbf16, #tpu.memory_space<vmem>>, vector<1x128x128xbf16>
    %42 = vector.shape_cast %41 : vector<1x128x128xbf16> to vector<128x128xbf16>
    %cst_40 = arith.constant dense<0.000000e+00> : vector<288x128xf32>
    %43 = tpu.matmul %40, %42, %cst_40 {dimension_numbers = #tpu.dot_dimension_numbers<[1], [0], [0], [1], [0, 0, 1, 1], [], []>} : vector<288x128xbf16>, vector<128x128xbf16>, vector<288x128xf32> -> vector<288x128xf32>
    %44 = arith.addf %38, %43 : vector<288x128xf32>
    %c0_41 = arith.constant 0 : index
    %c37 = arith.constant 37 : index
    %c0_42 = arith.constant 0 : index
    %45 = vector.load %arg1[%c0_41, %c37, %c0_42] : memref<1x336x128xbf16, #tpu.memory_space<vmem>>, vector<1x288x128xbf16>
    %46 = vector.shape_cast %45 : vector<1x288x128xbf16> to vector<288x128xbf16>
    %c7 = arith.constant 7 : index
    %c0_43 = arith.constant 0 : index
    %c0_44 = arith.constant 0 : index
    %47 = vector.load %arg3[%c7, %c0_43, %c0_44] : memref<9x128x128xbf16, #tpu.memory_space<vmem>>, vector<1x128x128xbf16>
    %48 = vector.shape_cast %47 : vector<1x128x128xbf16> to vector<128x128xbf16>
    %cst_45 = arith.constant dense<0.000000e+00> : vector<288x128xf32>
    %49 = tpu.matmul %46, %48, %cst_45 {dimension_numbers = #tpu.dot_dimension_numbers<[1], [0], [0], [1], [0, 0, 1, 1], [], []>} : vector<288x128xbf16>, vector<128x128xbf16>, vector<288x128xf32> -> vector<288x128xf32>
    %50 = arith.addf %44, %49 : vector<288x128xf32>
    %c0_46 = arith.constant 0 : index
    %c38 = arith.constant 38 : index
    %c0_47 = arith.constant 0 : index
    %51 = vector.load %arg1[%c0_46, %c38, %c0_47] : memref<1x336x128xbf16, #tpu.memory_space<vmem>>, vector<1x288x128xbf16>
    %52 = vector.shape_cast %51 : vector<1x288x128xbf16> to vector<288x128xbf16>
    %c8 = arith.constant 8 : index
    %c0_48 = arith.constant 0 : index
    %c0_49 = arith.constant 0 : index
    %53 = vector.load %arg3[%c8, %c0_48, %c0_49] : memref<9x128x128xbf16, #tpu.memory_space<vmem>>, vector<1x128x128xbf16>
    %54 = vector.shape_cast %53 : vector<1x128x128xbf16> to vector<128x128xbf16>
    %cst_50 = arith.constant dense<0.000000e+00> : vector<288x128xf32>
    %55 = tpu.matmul %52, %54, %cst_50 {dimension_numbers = #tpu.dot_dimension_numbers<[1], [0], [0], [1], [0, 0, 1, 1], [], []>} : vector<288x128xbf16>, vector<128x128xbf16>, vector<288x128xf32> -> vector<288x128xf32>
    %56 = arith.addf %50, %55 : vector<288x128xf32>
    %c0_51 = arith.constant 0 : index
    %c0_52 = arith.constant 0 : index
    %57 = vector.load %arg4[%c0_51, %c0_52] : memref<1x128xf32, #tpu.memory_space<vmem>>, vector<1x128xf32>
    %58 = vector.broadcast %57 : vector<1x128xf32> to vector<288x128xf32>
    %59 = arith.addf %56, %58 : vector<288x128xf32>
    %cst_53 = arith.constant 0.000000e+00 : f32
    %60 = vector.broadcast %cst_53 : f32 to vector<288x128xf32>
    %61 = arith.maximumf %59, %60 : vector<288x128xf32>
    %c0_54 = arith.constant 0 : index
    %c0_55 = arith.constant 0 : index
    %62 = vector.load %arg2[%c0_54, %c0_55] : memref<288x128xf32, #tpu.memory_space<vmem>>, vector<288x128xf32>
    %63 = arith.mulf %61, %62 : vector<288x128xf32>
    %64 = arith.truncf %63 : vector<288x128xf32> to vector<288x128xbf16>
    %c19_56 = arith.constant 19 : index
    %c0_57 = arith.constant 0 : index
    %65 = vector.load %arg10[%c19_56, %c0_57] : memref<336x128xbf16, #tpu.memory_space<vmem>>, vector<288x128xbf16>
    tpu.vector_store %arg10[%c19_56, %c0_57], %64 {strides = array<i32>} : memref<336x128xbf16, #tpu.memory_space<vmem>>, vector<288x128xbf16>,
    %cst_58 = arith.constant 0.000000e+00 : f32
    %66 = vector.broadcast %cst_58 : f32 to vector<288x128xf32>
    %c0_59 = arith.constant 0 : index
    %c0_60 = arith.constant 0 : index
    %67 = vector.load %arg10[%c0_59, %c0_60] : memref<336x128xbf16, #tpu.memory_space<vmem>>, vector<288x128xbf16>
    %c0_61 = arith.constant 0 : index
    %c0_62 = arith.constant 0 : index
    %c0_63 = arith.constant 0 : index
    %68 = vector.load %arg5[%c0_61, %c0_62, %c0_63] : memref<9x128x128xbf16, #tpu.memory_space<vmem>>, vector<1x128x128xbf16>
    %69 = vector.shape_cast %68 : vector<1x128x128xbf16> to vector<128x128xbf16>
    %cst_64 = arith.constant dense<0.000000e+00> : vector<288x128xf32>
    %70 = tpu.matmul %67, %69, %cst_64 {dimension_numbers = #tpu.dot_dimension_numbers<[1], [0], [0], [1], [0, 0, 1, 1], [], []>} : vector<288x128xbf16>, vector<128x128xbf16>, vector<288x128xf32> -> vector<288x128xf32>
    %71 = arith.addf %66, %70 : vector<288x128xf32>
    %c1_65 = arith.constant 1 : index
    %c0_66 = arith.constant 0 : index
    %72 = vector.load %arg10[%c1_65, %c0_66] : memref<336x128xbf16, #tpu.memory_space<vmem>>, vector<288x128xbf16>
    %c1_67 = arith.constant 1 : index
    %c0_68 = arith.constant 0 : index
    %c0_69 = arith.constant 0 : index
    %73 = vector.load %arg5[%c1_67, %c0_68, %c0_69] : memref<9x128x128xbf16, #tpu.memory_space<vmem>>, vector<1x128x128xbf16>
    %74 = vector.shape_cast %73 : vector<1x128x128xbf16> to vector<128x128xbf16>
    %cst_70 = arith.constant dense<0.000000e+00> : vector<288x128xf32>
    %75 = tpu.matmul %72, %74, %cst_70 {dimension_numbers = #tpu.dot_dimension_numbers<[1], [0], [0], [1], [0, 0, 1, 1], [], []>} : vector<288x128xbf16>, vector<128x128xbf16>, vector<288x128xf32> -> vector<288x128xf32>
    %76 = arith.addf %71, %75 : vector<288x128xf32>
    %c2_71 = arith.constant 2 : index
    %c0_72 = arith.constant 0 : index
    %77 = vector.load %arg10[%c2_71, %c0_72] : memref<336x128xbf16, #tpu.memory_space<vmem>>, vector<288x128xbf16>
    %c2_73 = arith.constant 2 : index
    %c0_74 = arith.constant 0 : index
    %c0_75 = arith.constant 0 : index
    %78 = vector.load %arg5[%c2_73, %c0_74, %c0_75] : memref<9x128x128xbf16, #tpu.memory_space<vmem>>, vector<1x128x128xbf16>
    %79 = vector.shape_cast %78 : vector<1x128x128xbf16> to vector<128x128xbf16>
    %cst_76 = arith.constant dense<0.000000e+00> : vector<288x128xf32>
    %80 = tpu.matmul %77, %79, %cst_76 {dimension_numbers = #tpu.dot_dimension_numbers<[1], [0], [0], [1], [0, 0, 1, 1], [], []>} : vector<288x128xbf16>, vector<128x128xbf16>, vector<288x128xf32> -> vector<288x128xf32>
    %81 = arith.addf %76, %80 : vector<288x128xf32>
    %c18_77 = arith.constant 18 : index
    %c0_78 = arith.constant 0 : index
    %82 = vector.load %arg10[%c18_77, %c0_78] : memref<336x128xbf16, #tpu.memory_space<vmem>>, vector<288x128xbf16>
    %c3_79 = arith.constant 3 : index
    %c0_80 = arith.constant 0 : index
    %c0_81 = arith.constant 0 : index
    %83 = vector.load %arg5[%c3_79, %c0_80, %c0_81] : memref<9x128x128xbf16, #tpu.memory_space<vmem>>, vector<1x128x128xbf16>
    %84 = vector.shape_cast %83 : vector<1x128x128xbf16> to vector<128x128xbf16>
    %cst_82 = arith.constant dense<0.000000e+00> : vector<288x128xf32>
    %85 = tpu.matmul %82, %84, %cst_82 {dimension_numbers = #tpu.dot_dimension_numbers<[1], [0], [0], [1], [0, 0, 1, 1], [], []>} : vector<288x128xbf16>, vector<128x128xbf16>, vector<288x128xf32> -> vector<288x128xf32>
    %86 = arith.addf %81, %85 : vector<288x128xf32>
    %c19_83 = arith.constant 19 : index
    %c0_84 = arith.constant 0 : index
    %87 = vector.load %arg10[%c19_83, %c0_84] : memref<336x128xbf16, #tpu.memory_space<vmem>>, vector<288x128xbf16>
    %c4_85 = arith.constant 4 : index
    %c0_86 = arith.constant 0 : index
    %c0_87 = arith.constant 0 : index
    %88 = vector.load %arg5[%c4_85, %c0_86, %c0_87] : memref<9x128x128xbf16, #tpu.memory_space<vmem>>, vector<1x128x128xbf16>
    %89 = vector.shape_cast %88 : vector<1x128x128xbf16> to vector<128x128xbf16>
    %cst_88 = arith.constant dense<0.000000e+00> : vector<288x128xf32>
    %90 = tpu.matmul %87, %89, %cst_88 {dimension_numbers = #tpu.dot_dimension_numbers<[1], [0], [0], [1], [0, 0, 1, 1], [], []>} : vector<288x128xbf16>, vector<128x128xbf16>, vector<288x128xf32> -> vector<288x128xf32>
    %91 = arith.addf %86, %90 : vector<288x128xf32>
    %c20_89 = arith.constant 20 : index
    %c0_90 = arith.constant 0 : index
    %92 = vector.load %arg10[%c20_89, %c0_90] : memref<336x128xbf16, #tpu.memory_space<vmem>>, vector<288x128xbf16>
    %c5_91 = arith.constant 5 : index
    %c0_92 = arith.constant 0 : index
    %c0_93 = arith.constant 0 : index
    %93 = vector.load %arg5[%c5_91, %c0_92, %c0_93] : memref<9x128x128xbf16, #tpu.memory_space<vmem>>, vector<1x128x128xbf16>
    %94 = vector.shape_cast %93 : vector<1x128x128xbf16> to vector<128x128xbf16>
    %cst_94 = arith.constant dense<0.000000e+00> : vector<288x128xf32>
    %95 = tpu.matmul %92, %94, %cst_94 {dimension_numbers = #tpu.dot_dimension_numbers<[1], [0], [0], [1], [0, 0, 1, 1], [], []>} : vector<288x128xbf16>, vector<128x128xbf16>, vector<288x128xf32> -> vector<288x128xf32>
    %96 = arith.addf %91, %95 : vector<288x128xf32>
    %c36_95 = arith.constant 36 : index
    %c0_96 = arith.constant 0 : index
    %97 = vector.load %arg10[%c36_95, %c0_96] : memref<336x128xbf16, #tpu.memory_space<vmem>>, vector<288x128xbf16>
    %c6_97 = arith.constant 6 : index
    %c0_98 = arith.constant 0 : index
    %c0_99 = arith.constant 0 : index
    %98 = vector.load %arg5[%c6_97, %c0_98, %c0_99] : memref<9x128x128xbf16, #tpu.memory_space<vmem>>, vector<1x128x128xbf16>
    %99 = vector.shape_cast %98 : vector<1x128x128xbf16> to vector<128x128xbf16>
    %cst_100 = arith.constant dense<0.000000e+00> : vector<288x128xf32>
    %100 = tpu.matmul %97, %99, %cst_100 {dimension_numbers = #tpu.dot_dimension_numbers<[1], [0], [0], [1], [0, 0, 1, 1], [], []>} : vector<288x128xbf16>, vector<128x128xbf16>, vector<288x128xf32> -> vector<288x128xf32>
    %101 = arith.addf %96, %100 : vector<288x128xf32>
    %c37_101 = arith.constant 37 : index
    %c0_102 = arith.constant 0 : index
    %102 = vector.load %arg10[%c37_101, %c0_102] : memref<336x128xbf16, #tpu.memory_space<vmem>>, vector<288x128xbf16>
    %c7_103 = arith.constant 7 : index
    %c0_104 = arith.constant 0 : index
    %c0_105 = arith.constant 0 : index
    %103 = vector.load %arg5[%c7_103, %c0_104, %c0_105] : memref<9x128x128xbf16, #tpu.memory_space<vmem>>, vector<1x128x128xbf16>
    %104 = vector.shape_cast %103 : vector<1x128x128xbf16> to vector<128x128xbf16>
    %cst_106 = arith.constant dense<0.000000e+00> : vector<288x128xf32>
    %105 = tpu.matmul %102, %104, %cst_106 {dimension_numbers = #tpu.dot_dimension_numbers<[1], [0], [0], [1], [0, 0, 1, 1], [], []>} : vector<288x128xbf16>, vector<128x128xbf16>, vector<288x128xf32> -> vector<288x128xf32>
    %106 = arith.addf %101, %105 : vector<288x128xf32>
    %c38_107 = arith.constant 38 : index
    %c0_108 = arith.constant 0 : index
    %107 = vector.load %arg10[%c38_107, %c0_108] : memref<336x128xbf16, #tpu.memory_space<vmem>>, vector<288x128xbf16>
    %c8_109 = arith.constant 8 : index
    %c0_110 = arith.constant 0 : index
    %c0_111 = arith.constant 0 : index
    %108 = vector.load %arg5[%c8_109, %c0_110, %c0_111] : memref<9x128x128xbf16, #tpu.memory_space<vmem>>, vector<1x128x128xbf16>
    %109 = vector.shape_cast %108 : vector<1x128x128xbf16> to vector<128x128xbf16>
    %cst_112 = arith.constant dense<0.000000e+00> : vector<288x128xf32>
    %110 = tpu.matmul %107, %109, %cst_112 {dimension_numbers = #tpu.dot_dimension_numbers<[1], [0], [0], [1], [0, 0, 1, 1], [], []>} : vector<288x128xbf16>, vector<128x128xbf16>, vector<288x128xf32> -> vector<288x128xf32>
    %111 = arith.addf %106, %110 : vector<288x128xf32>
    %c0_113 = arith.constant 0 : index
    %c0_114 = arith.constant 0 : index
    %112 = vector.load %arg6[%c0_113, %c0_114] : memref<1x128xf32, #tpu.memory_space<vmem>>, vector<1x128xf32>
    %113 = vector.broadcast %112 : vector<1x128xf32> to vector<288x128xf32>
    %114 = arith.addf %111, %113 : vector<288x128xf32>
    %cst_115 = arith.constant 0.000000e+00 : f32
    %115 = vector.broadcast %cst_115 : f32 to vector<288x128xf32>
    %116 = arith.maximumf %114, %115 : vector<288x128xf32>
    %117 = arith.truncf %116 : vector<288x128xf32> to vector<288x128xbf16>
    %c0_116 = arith.constant 0 : index
    %c0_117 = arith.constant 0 : index
    %118 = vector.load %arg7[%c0_116, %c0_117] : memref<128x128xbf16, #tpu.memory_space<vmem>>, vector<128x128xbf16>
    %cst_118 = arith.constant dense<0.000000e+00> : vector<288x128xf32>
    %119 = tpu.matmul %117, %118, %cst_118 {dimension_numbers = #tpu.dot_dimension_numbers<[1], [0], [0], [1], [0, 0, 1, 1], [], []>} : vector<288x128xbf16>, vector<128x128xbf16>, vector<288x128xf32> -> vector<288x128xf32>
    %c0_119 = arith.constant 0 : index
    %c0_120 = arith.constant 0 : index
    %120 = vector.load %arg8[%c0_119, %c0_120] : memref<1x128xf32, #tpu.memory_space<vmem>>, vector<1x128xf32>
    %121 = vector.broadcast %120 : vector<1x128xf32> to vector<288x128xf32>
    %122 = arith.addf %119, %121 : vector<288x128xf32>
    %c0_121 = arith.constant 0 : index
    %c0_122 = arith.constant 0 : index
    %c0_123 = arith.constant 0 : index
    %123 = vector.load %arg9[%c0_121, %c0_122, %c0_123] : memref<1x288x128xf32, #tpu.memory_space<vmem>>, vector<1x288x128xf32>
    %124 = vector.shape_cast %123 : vector<1x288x128xf32> to vector<288x128xf32>
    %125 = vector.shape_cast %122 : vector<288x128xf32> to vector<1x288x128xf32>
    tpu.vector_store %arg9[%c0_121, %c0_122, %c0_123], %125 {strides = array<i32>} : memref<1x288x128xf32, #tpu.memory_space<vmem>>, vector<1x288x128xf32>,
    return
  }
  func.func @transform_0(%arg0: i32) -> (i32, i32, i32) {
    %c0_i32 = arith.constant 0 : i32
    %c0_i32_0 = arith.constant 0 : i32
    %c0_i32_1 = arith.constant 0 : i32
    return %arg0, %c0_i32, %c0_i32_0 : i32, i32, i32
  }
  func.func @transform_1(%arg0: i32) -> (i32, i32) {
    %c0_i32 = arith.constant 0 : i32
    %c0_i32_0 = arith.constant 0 : i32
    %c0_i32_1 = arith.constant 0 : i32
    return %c0_i32, %c0_i32_0 : i32, i32
  }
  func.func @transform_2(%arg0: i32) -> (i32, i32, i32) {
    %c0_i32 = arith.constant 0 : i32
    %c0_i32_0 = arith.constant 0 : i32
    %c0_i32_1 = arith.constant 0 : i32
    %c0_i32_2 = arith.constant 0 : i32
    return %c0_i32, %c0_i32_0, %c0_i32_1 : i32, i32, i32
  }
  func.func @transform_3(%arg0: i32) -> (i32, i32) {
    %c0_i32 = arith.constant 0 : i32
    %c0_i32_0 = arith.constant 0 : i32
    %c0_i32_1 = arith.constant 0 : i32
    return %c0_i32, %c0_i32_0 : i32, i32
  }
  func.func @transform_4(%arg0: i32) -> (i32, i32, i32) {
    %c0_i32 = arith.constant 0 : i32
    %c0_i32_0 = arith.constant 0 : i32
    %c0_i32_1 = arith.constant 0 : i32
    %c0_i32_2 = arith.constant 0 : i32
    return %c0_i32, %c0_i32_0, %c0_i32_1 : i32, i32, i32
  }
  func.func @transform_5(%arg0: i32) -> (i32, i32) {
    %c0_i32 = arith.constant 0 : i32
    %c0_i32_0 = arith.constant 0 : i32
    %c0_i32_1 = arith.constant 0 : i32
    return %c0_i32, %c0_i32_0 : i32, i32
  }
  func.func @transform_6(%arg0: i32) -> (i32, i32) {
    %c0_i32 = arith.constant 0 : i32
    %c0_i32_0 = arith.constant 0 : i32
    %c0_i32_1 = arith.constant 0 : i32
    return %c0_i32, %c0_i32_0 : i32, i32
  }
  func.func @transform_7(%arg0: i32) -> (i32, i32) {
    %c0_i32 = arith.constant 0 : i32
    %c0_i32_0 = arith.constant 0 : i32
    %c0_i32_1 = arith.constant 0 : i32
    return %c0_i32, %c0_i32_0 : i32, i32
  }
  func.func @transform_8(%arg0: i32) -> (i32, i32, i32) {
    %c0_i32 = arith.constant 0 : i32
    %c0_i32_0 = arith.constant 0 : i32
    %c0_i32_1 = arith.constant 0 : i32
    return %arg0, %c0_i32, %c0_i32_0 : i32, i32, i32
  }
}

</mosaic_0001>

<llo_original>
// kernel: _lambda_.1
$region0: #{_lambda_.1}
  #allocation0 [shape = 'u32[]', space=smem, size = 0x4, offset = 0x4, fixed_abs, tag = 'smem constant byte address 0x4 - core index']
  #allocation1 [shape = 'u32[144,128]{1,0:T(1,128)}', space=vmem, size = 0x12000, scoped, tag = 'internal scratch']
  #allocation2 [shape = 'bf16[336,128]{1,0:T(16,128)(2,1)}', space=vmem, size = 0x15000, scoped, tag = 'scratch operand']
  %s0 = inlined_call_operand.vmem [shape: bf16[2,336,128], index: 0, kind: input, shape index: {}]
  %s1 = inlined_call_operand.vmem [shape: f32[288,128], index: 1, kind: input, shape index: {}]
  %s2 = inlined_call_operand.vmem [shape: bf16[9,128,128], index: 2, kind: input, shape index: {}]
  %s3 = inlined_call_operand.vmem [shape: f32[1,128], index: 3, kind: input, shape index: {}]
  %s4 = inlined_call_operand.vmem [shape: bf16[9,128,128], index: 4, kind: input, shape index: {}]
  %s5 = inlined_call_operand.vmem [shape: f32[1,128], index: 5, kind: input, shape index: {}]
  %s6 = inlined_call_operand.vmem [shape: bf16[128,128], index: 6, kind: input, shape index: {}]
  %s7 = inlined_call_operand.vmem [shape: f32[1,128], index: 7, kind: input, shape index: {}]
  %s8 = inlined_call_operand.vmem [shape: f32[2,288,128], index: 8, kind: output, shape index: {}]
  %s9 = sld [smem:[#allocation0]]
  $region65: #{_lambda_.1} parent=0
    _
  %s11 = ssub.s32 1, %s9
  %s12 = scalar_select 0, %s11, %s9
  loop: start=0, step=1, limit=4
  $region2: #{_lambda_.1} parent=0 // loop_pre_header
    _
  $region3: #{_lambda_.1} parent=0 // loop_header
    %s14 = sphi 0, %s18
    %p15 = scmp.ge.s32.totalorder %s14, 4
    %s24 = sphi 0, %s26
    %s27 = sphi 0, %s24
    %s28 = sphi 0, %s27
    %s44 = sphi 0, %s28
    %s48 = sphi 0, %s48
    %s50 = sphi 0, %s48
    %s51 = sphi 0, %s50
    %s65 = sphi 0, %s51
    %s69 = sphi 0, %s69
    %s71 = sphi 0, %s69
    %s72 = sphi 0, %s71
    %s86 = sphi 0, %s72
    %s90 = sphi 0, %s90
    %s92 = sphi 0, %s90
    %s93 = sphi 0, %s92
    %s107 = sphi 0, %s93
    %s111 = sphi 0, %s111
    %s113 = sphi 0, %s111
    %s114 = sphi 0, %s113
    %s128 = sphi 0, %s114
    %s132 = sphi 0, %s132
    %s134 = sphi 0, %s132
    %s135 = sphi 0, %s134
    %s149 = sphi 0, %s135
    %s153 = sphi 0, %s153
    %s155 = sphi 0, %s153
    %s156 = sphi 0, %s155
    %s170 = sphi 0, %s156
    %s174 = sphi 0, %s174
    %s176 = sphi 0, %s174
    %s177 = sphi 0, %s176
    %s191 = sphi 0, %s177
    %s197 = sphi 0, %s199
    %s200 = sphi 0, %s197
    %s201 = sphi 0, %s200
    %s217 = sphi 0, %s201
  $region4: #{_lambda_.1} parent=0 // loop_header_branch
    %17 = sbr.rel (%p15) target = $region8
  $region5: #{_lambda_.1} parent=0 // loop_body
    %s19 = ssub.s32 %s14, 1
    %s20 = ssub.s32 %s14, 2
    %s21 = sadd.s32 %s14, 1
    %s22 = ssub.s32 %s14, %s21
    %p23 = scmp.eq.s32.totalorder %s22, 0
    %s25 = sadd.s32 %s24, 1
    %s26 = scalar_select %p23, %s24, %s25
    %p29 = pneg %p23
    %p30 = scmp.eq.s32.totalorder %s14, 1
    %p31 = por %p29, %p30
    %p32 = scmp.ne.s32.totalorder %s24, %s27
    %p33 = scmp.eq.s32.totalorder %s14, 0
    %p34 = por %p32, %p33
    %p35 = scmp.ne.s32.totalorder %s24, %s27
    %p36 = scmp.eq.s32.totalorder %s19, 1
    %p37 = por %p35, %p36
    %p38 = scmp.ne.s32.totalorder %s27, %s28
    %p39 = scmp.eq.s32.totalorder %s19, 0
    %p40 = por %p38, %p39
    %p41 = scmp.ne.s32.totalorder %s27, %s28
    %p42 = scmp.eq.s32.totalorder %s20, 1
    %p43 = por %p41, %p42
    %p45 = scmp.ne.s32.totalorder %s28, %s44
    %p46 = scmp.eq.s32.totalorder %s20, 0
    %p47 = por %p45, %p46
    %s49 = sadd.s32 %s48, 1
    %p52 = scmp.eq.s32.totalorder %s14, 1
    %p53 = scmp.ne.s32.totalorder %s48, %s50
    %p54 = scmp.eq.s32.totalorder %s14, 0
    %p55 = por %p53, %p54
    %p56 = scmp.ne.s32.totalorder %s48, %s50
    %p57 = scmp.eq.s32.totalorder %s19, 1
    %p58 = por %p56, %p57
    %p59 = scmp.ne.s32.totalorder %s50, %s51
    %p60 = scmp.eq.s32.totalorder %s19, 0
    %p61 = por %p59, %p60
    %p62 = scmp.ne.s32.totalorder %s50, %s51
    %p63 = scmp.eq.s32.totalorder %s20, 1
    %p64 = por %p62, %p63
    %p66 = scmp.ne.s32.totalorder %s51, %s65
    %p67 = scmp.eq.s32.totalorder %s20, 0
    %p68 = por %p66, %p67
    %s70 = sadd.s32 %s69, 1
    %p73 = scmp.eq.s32.totalorder %s14, 1
    %p74 = scmp.ne.s32.totalorder %s69, %s71
    %p75 = scmp.eq.s32.totalorder %s14, 0
    %p76 = por %p74, %p75
    %p77 = scmp.ne.s32.totalorder %s69, %s71
    %p78 = scmp.eq.s32.totalorder %s19, 1
    %p79 = por %p77, %p78
    %p80 = scmp.ne.s32.totalorder %s71, %s72
    %p81 = scmp.eq.s32.totalorder %s19, 0
    %p82 = por %p80, %p81
    %p83 = scmp.ne.s32.totalorder %s71, %s72
    %p84 = scmp.eq.s32.totalorder %s20, 1
    %p85 = por %p83, %p84
    %p87 = scmp.ne.s32.totalorder %s72, %s86
    %p88 = scmp.eq.s32.totalorder %s20, 0
    %p89 = por %p87, %p88
    %s91 = sadd.s32 %s90, 1
    %p94 = scmp.eq.s32.totalorder %s14, 1
    %p95 = scmp.ne.s32.totalorder %s90, %s92
    %p96 = scmp.eq.s32.totalorder %s14, 0
    %p97 = por %p95, %p96
    %p98 = scmp.ne.s32.totalorder %s90, %s92
    %p99 = scmp.eq.s32.totalorder %s19, 1
    %p100 = por %p98, %p99
    %p101 = scmp.ne.s32.totalorder %s92, %s93
    %p102 = scmp.eq.s32.totalorder %s19, 0
    %p103 = por %p101, %p102
    %p104 = scmp.ne.s32.totalorder %s92, %s93
    %p105 = scmp.eq.s32.totalorder %s20, 1
    %p106 = por %p104, %p105
    %p108 = scmp.ne.s32.totalorder %s93, %s107
    %p109 = scmp.eq.s32.totalorder %s20, 0
    %p110 = por %p108, %p109
    %s112 = sadd.s32 %s111, 1
    %p115 = scmp.eq.s32.totalorder %s14, 1
    %p116 = scmp.ne.s32.totalorder %s111, %s113
    %p117 = scmp.eq.s32.totalorder %s14, 0
    %p118 = por %p116, %p117
    %p119 = scmp.ne.s32.totalorder %s111, %s113
    %p120 = scmp.eq.s32.totalorder %s19, 1
    %p121 = por %p119, %p120
    %p122 = scmp.ne.s32.totalorder %s113, %s114
    %p123 = scmp.eq.s32.totalorder %s19, 0
    %p124 = por %p122, %p123
    %p125 = scmp.ne.s32.totalorder %s113, %s114
    %p126 = scmp.eq.s32.totalorder %s20, 1
    %p127 = por %p125, %p126
    %p129 = scmp.ne.s32.totalorder %s114, %s128
    %p130 = scmp.eq.s32.totalorder %s20, 0
    %p131 = por %p129, %p130
    %s133 = sadd.s32 %s132, 1
    %p136 = scmp.eq.s32.totalorder %s14, 1
    %p137 = scmp.ne.s32.totalorder %s132, %s134
    %p138 = scmp.eq.s32.totalorder %s14, 0
    %p139 = por %p137, %p138
    %p140 = scmp.ne.s32.totalorder %s132, %s134
    %p141 = scmp.eq.s32.totalorder %s19, 1
    %p142 = por %p140, %p141
    %p143 = scmp.ne.s32.totalorder %s134, %s135
    %p144 = scmp.eq.s32.totalorder %s19, 0
    %p145 = por %p143, %p144
    %p146 = scmp.ne.s32.totalorder %s134, %s135
    %p147 = scmp.eq.s32.totalorder %s20, 1
    %p148 = por %p146, %p147
    %p150 = scmp.ne.s32.totalorder %s135, %s149
    %p151 = scmp.eq.s32.totalorder %s20, 0
    %p152 = por %p150, %p151
    %s154 = sadd.s32 %s153, 1
    %p157 = scmp.eq.s32.totalorder %s14, 1
    %p158 = scmp.ne.s32.totalorder %s153, %s155
    %p159 = scmp.eq.s32.totalorder %s14, 0
    %p160 = por %p158, %p159
    %p161 = scmp.ne.s32.totalorder %s153, %s155
    %p162 = scmp.eq.s32.totalorder %s19, 1
    %p163 = por %p161, %p162
    %p164 = scmp.ne.s32.totalorder %s155, %s156
    %p165 = scmp.eq.s32.totalorder %s19, 0
    %p166 = por %p164, %p165
    %p167 = scmp.ne.s32.totalorder %s155, %s156
    %p168 = scmp.eq.s32.totalorder %s20, 1
    %p169 = por %p167, %p168
    %p171 = scmp.ne.s32.totalorder %s156, %s170
    %p172 = scmp.eq.s32.totalorder %s20, 0
    %p173 = por %p171, %p172
    %s175 = sadd.s32 %s174, 1
    %p178 = scmp.eq.s32.totalorder %s14, 1
    %p179 = scmp.ne.s32.totalorder %s174, %s176
    %p180 = scmp.eq.s32.totalorder %s14, 0
    %p181 = por %p179, %p180
    %p182 = scmp.ne.s32.totalorder %s174, %s176
    %p183 = scmp.eq.s32.totalorder %s19, 1
    %p184 = por %p182, %p183
    %p185 = scmp.ne.s32.totalorder %s176, %s177
    %p186 = scmp.eq.s32.totalorder %s19, 0
    %p187 = por %p185, %p186
    %p188 = scmp.ne.s32.totalorder %s176, %s177
    %p189 = scmp.eq.s32.totalorder %s20, 1
    %p190 = por %p188, %p189
    %p192 = scmp.ne.s32.totalorder %s177, %s191
    %p193 = scmp.eq.s32.totalorder %s20, 0
    %p194 = por %p192, %p193
    %s195 = ssub.s32 %s14, %s21
    %p196 = scmp.eq.s32.totalorder %s195, 0
    %s198 = sadd.s32 %s197, 1
    %s199 = scalar_select %p196, %s197, %s198
    %p202 = pneg %p196
    %p203 = scmp.eq.s32.totalorder %s14, 1
    %p204 = por %p202, %p203
    %p205 = scmp.ne.s32.totalorder %s197, %s200
    %p206 = scmp.eq.s32.totalorder %s14, 0
    %p207 = por %p205, %p206
    %p208 = scmp.ne.s32.totalorder %s197, %s200
    %p209 = scmp.eq.s32.totalorder %s19, 1
    %p210 = por %p208, %p209
    %p211 = scmp.ne.s32.totalorder %s200, %s201
    %p212 = scmp.eq.s32.totalorder %s19, 0
    %p213 = por %p211, %p212
    %p214 = scmp.ne.s32.totalorder %s200, %s201
    %p215 = scmp.eq.s32.totalorder %s20, 1
    %p216 = por %p214, %p215
    %p218 = scmp.ne.s32.totalorder %s201, %s217
    %p219 = scmp.eq.s32.totalorder %s20, 0
    %p220 = por %p218, %p219
    %p221 = scmp.le.s32.totalorder 1, %s14
    %p222 = scmp.lt.s32.totalorder %s14, 3
    %p223 = pnand %p221, %p222
    %p224 = pneg %p223
    // Predicated region
    $region9: #{_lambda_.1} parent=5 // pred_check
      _
    $region10: #{_lambda_.1} parent=5 // pred_check_branch
      %226 = sbr.rel (%p223) target = $region12
    $region11: #{_lambda_.1} parent=5 // pred_region
      %s227 = ssub.s32 %s14, 1
      // Predicated region
      $region13: #{_lambda_.1} parent=11 // pred_check
        %p228 = pneg %p61
      $region14: #{_lambda_.1} parent=11 // pred_check_branch
        %230 = sbr.rel (%p228) target = $region16
      $region15: #{_lambda_.1} parent=11 // pred_region
        _
      $region16: #{_lambda_.1} parent=11 // pred_fallthru
        _
      // Predicated region
      $region17: #{_lambda_.1} parent=11 // pred_check
        %p231 = pneg %p82
      $region18: #{_lambda_.1} parent=11 // pred_check_branch
        %233 = sbr.rel (%p231) target = $region20
      $region19: #{_lambda_.1} parent=11 // pred_region
        _
      $region20: #{_lambda_.1} parent=11 // pred_fallthru
        _
      // Predicated region
      $region21: #{_lambda_.1} parent=11 // pred_check
        %p234 = pneg %p103
      $region22: #{_lambda_.1} parent=11 // pred_check_branch
        %236 = sbr.rel (%p234) target = $region24
      $region23: #{_lambda_.1} parent=11 // pred_region
        _
      $region24: #{_lambda_.1} parent=11 // pred_fallthru
        _
      // Predicated region
      $region25: #{_lambda_.1} parent=11 // pred_check
        %p237 = pneg %p124
      $region26: #{_lambda_.1} parent=11 // pred_check_branch
        %239 = sbr.rel (%p237) target = $region28
      $region27: #{_lambda_.1} parent=11 // pred_region
        _
      $region28: #{_lambda_.1} parent=11 // pred_fallthru
        _
      // Predicated region
      $region29: #{_lambda_.1} parent=11 // pred_check
        %p240 = pneg %p145
      $region30: #{_lambda_.1} parent=11 // pred_check_branch
        %242 = sbr.rel (%p240) target = $region32
      $region31: #{_lambda_.1} parent=11 // pred_region
        _
      $region32: #{_lambda_.1} parent=11 // pred_fallthru
        _
      // Predicated region
      $region33: #{_lambda_.1} parent=11 // pred_check
        %p243 = pneg %p166
      $region34: #{_lambda_.1} parent=11 // pred_check_branch
        %245 = sbr.rel (%p243) target = $region36
      $region35: #{_lambda_.1} parent=11 // pred_region
        _
      $region36: #{_lambda_.1} parent=11 // pred_fallthru
        _
      // Predicated region
      $region37: #{_lambda_.1} parent=11 // pred_check
        %p246 = pneg %p187
      $region38: #{_lambda_.1} parent=11 // pred_check_branch
        %248 = sbr.rel (%p246) target = $region40
      $region39: #{_lambda_.1} parent=11 // pred_region
        _
      $region40: #{_lambda_.1} parent=11 // pred_fallthru
        _
    $region12: #{_lambda_.1} parent=5 // pred_fallthru
      _
    %p249 = scmp.lt.s32.totalorder %s14, 2
    // Predicated region
    $region41: #{_lambda_.1} parent=5 // pred_check
      %p250 = pneg %p249
    $region42: #{_lambda_.1} parent=5 // pred_check_branch
      %252 = sbr.rel (%p250) target = $region44
    $region43: #{_lambda_.1} parent=5 // pred_region
      // Predicated region
      $region45: #{_lambda_.1} parent=43 // pred_check
        %p253 = pneg %p34
      $region46: #{_lambda_.1} parent=43 // pred_check_branch
        %255 = sbr.rel (%p253) target = $region48
      $region47: #{_lambda_.1} parent=43 // pred_region
        %p256 = scmp.lt.s32.totalorder %s14, 1
        %s257 = scalar_select %p256, %s14, 1
        %s258 = smul.addr %s257, 42
        %s259 = smul.addr %s258, 4
        %s260 = scalar_lea.vmem %s0, %s259
      $region48: #{_lambda_.1} parent=43 // pred_fallthru
        _
    $region44: #{_lambda_.1} parent=5 // pred_fallthru
      _
    %p261 = scmp.le.s32.totalorder 1, %s14
    %p262 = scmp.lt.s32.totalorder %s14, 3
    %p263 = pnand %p261, %p262
    %p264 = pneg %p263
    // Predicated region
    $region49: #{_lambda_.1} parent=5 // pred_check
      _
    $region50: #{_lambda_.1} parent=5 // pred_check_branch
      %266 = sbr.rel (%p263) target = $region52
    $region51: #{_lambda_.1} parent=5 // pred_region
      %s267 = ssub.s32 %s14, 1
      %p268 = scmp.lt.s32.totalorder %s19, 1
      %s269 = scalar_select %p268, %s19, 1
      %s270 = smul.addr %s269, 42
      %s271 = smul.addr %s270, 4
      %s272 = scalar_lea.vmem %s0, %s271
      %p273 = pneg %p40
      %p274 = pneg %p37
      %p275 = pneg %p61
      %p276 = pneg %p58
      %p277 = pneg %p82
      %p278 = pneg %p79
      %p279 = pneg %p103
      %p280 = pneg %p100
      %p281 = pneg %p124
      %p282 = pneg %p121
      %p283 = pneg %p145
      %p284 = pneg %p142
      %p285 = pneg %p166
      %p286 = pneg %p163
      %p287 = pneg %p187
      %p288 = pneg %p184
      %p289 = pneg %p213
      %p290 = pneg %p210
      %p291 = scmp.lt.s32.totalorder %s19, 1
      %s292 = scalar_select %p291, %s19, 1
      %s293 = smul.addr %s292, 36
      %s294 = smul.addr %s293, 8
      %s295 = scalar_lea.vmem %s8, %s294
      %p296 = scmp.lt.s32.totalorder %s19, 1
      %s297 = scalar_select %p296, %s19, 1
      %s298 = smul.addr %s297, 42
      %s299 = smul.addr %s298, 4
      %s300 = scalar_lea.vmem %s0, %s299
      %p301 = scmp.lt.s32.totalorder %s19, 1
      %s302 = scalar_select %p301, %s19, 1
      %s303 = smul.addr %s302, 36
      %s304 = smul.addr %s303, 8
      %s305 = scalar_lea.vmem %s8, %s304
      %307 = vst [vmem:[#allocation2] sm:$0xff] 0
      %308 = vst [vmem:[#allocation2 + $0x8] sm:$0xff] 0
      %309 = vst [vmem:[#allocation2 + $0x10] sm:$0xff] 0
      %310 = vst [vmem:[#allocation2 + $0x18] sm:$0xff] 0
      %311 = vst [vmem:[#allocation2 + $0x20] sm:$0xff] 0
      %312 = vst [vmem:[#allocation2 + $0x28] sm:$0xff] 0
      %313 = vst [vmem:[#allocation2 + $0x30] sm:$0xff] 0
      %314 = vst [vmem:[#allocation2 + $0x38] sm:$0xff] 0
      %315 = vst [vmem:[#allocation2 + $0x40] sm:$0xff] 0
      %316 = vst [vmem:[#allocation2 + $0x48] sm:$0xff] 0
      %317 = vst [vmem:[#allocation2 + $0x50] sm:$0xff] 0
      %318 = vst [vmem:[#allocation2 + $0x58] sm:$0xff] 0
      %319 = vst [vmem:[#allocation2 + $0x60] sm:$0xff] 0
      %320 = vst [vmem:[#allocation2 + $0x68] sm:$0xff] 0
      %321 = vst [vmem:[#allocation2 + $0x70] sm:$0xff] 0
      %322 = vst [vmem:[#allocation2 + $0x78] sm:$0xff] 0
      %323 = vst [vmem:[#allocation2 + $0x80] sm:$0xff] 0
      %324 = vst [vmem:[#allocation2 + $0x88] sm:$0xff] 0
      %325 = vst [vmem:[#allocation2 + $0x90] sm:$0xff] 0
      %326 = vst [vmem:[#allocation2 + $0x98] sm:$0xff] 0
      %327 = vst [vmem:[#allocation2 + $0xa0] sm:$0xff] 0
      %v328 = vld [vmem:[%s300] sm:$0xf]
      %v329 = vld [vmem:[%s300 + $0x4] sm:$0xf]
      %v330 = vld [vmem:[%s300 + $0x8] sm:$0xf]
      %v331 = vld [vmem:[%s300 + $0xc] sm:$0xf]
      %v332 = vld [vmem:[%s300 + $0x10] sm:$0xf]
      %v333 = vld [vmem:[%s300 + $0x14] sm:$0xf]
      %v334 = vld [vmem:[%s300 + $0x18] sm:$0xf]
      %v335 = vld [vmem:[%s300 + $0x1c] sm:$0xf]
      %v336 = vld [vmem:[%s300 + $0x20] sm:$0xf]
      %v337 = vld [vmem:[%s300 + $0x24] sm:$0xf]
      %v338 = vld [vmem:[%s300 + $0x28] sm:$0xf]
      %v339 = vld [vmem:[%s300 + $0x2c] sm:$0xf]
      %v340 = vld [vmem:[%s300 + $0x30] sm:$0xf]
      %v341 = vld [vmem:[%s300 + $0x34] sm:$0xf]
      %v342 = vld [vmem:[%s300 + $0x38] sm:$0xf]
      %v343 = vld [vmem:[%s300 + $0x3c] sm:$0xf]
      %v344 = vld [vmem:[%s300 + $0x40] sm:$0xf]
      %v345 = vld [vmem:[%s300 + $0x44] sm:$0xf]
      %v346 = vld [vmem:[%s300 + $0x48] sm:$0xf]
      %v347 = vld [vmem:[%s300 + $0x4c] sm:$0xf]
      %v348 = vld [vmem:[%s300 + $0x50] sm:$0xf]
      %v349 = vld [vmem:[%s300 + $0x54] sm:$0xf]
      %v350 = vld [vmem:[%s300 + $0x58] sm:$0xf]
      %v351 = vld [vmem:[%s300 + $0x5c] sm:$0xf]
      %v352 = vld [vmem:[%s300 + $0x60] sm:$0xf]
      %v353 = vld [vmem:[%s300 + $0x64] sm:$0xf]
      %v354 = vld [vmem:[%s300 + $0x68] sm:$0xf]
      %v355 = vld [vmem:[%s300 + $0x6c] sm:$0xf]
      %v356 = vld [vmem:[%s300 + $0x70] sm:$0xf]
      %v357 = vld [vmem:[%s300 + $0x74] sm:$0xf]
      %v358 = vld [vmem:[%s300 + $0x78] sm:$0xf]
      %v359 = vld [vmem:[%s300 + $0x7c] sm:$0xf]
      %v360 = vld [vmem:[%s300 + $0x80] sm:$0xf]
      %v361 = vld [vmem:[%s300 + $0x84] sm:$0xf]
      %v362 = vld [vmem:[%s300 + $0x88] sm:$0xf]
      %v363 = vld [vmem:[%s300 + $0x8c] sm:$0xf]
      %v364 = vld [vmem:[%s2] sm:$0xf]
      %v365 = vld [vmem:[%s2 + $0x4] sm:$0xf]
      %v366 = vld [vmem:[%s2 + $0x8] sm:$0xf]
      %v367 = vld [vmem:[%s2 + $0xc] sm:$0xf]
      %v368 = vld [vmem:[%s2 + $0x10] sm:$0xf]
      %v369 = vld [vmem:[%s2 + $0x14] sm:$0xf]
      %v370 = vld [vmem:[%s2 + $0x18] sm:$0xf]
      %v371 = vld [vmem:[%s2 + $0x1c] sm:$0xf]
      %v372 = vld [vmem:[%s2 + $0x20] sm:$0xf]
      %v373 = vld [vmem:[%s2 + $0x24] sm:$0xf]
      %v374 = vld [vmem:[%s2 + $0x28] sm:$0xf]
      %v375 = vld [vmem:[%s2 + $0x2c] sm:$0xf]
      %v376 = vld [vmem:[%s2 + $0x30] sm:$0xf]
      %v377 = vld [vmem:[%s2 + $0x34] sm:$0xf]
      %v378 = vld [vmem:[%s2 + $0x38] sm:$0xf]
      %v379 = vld [vmem:[%s2 + $0x3c] sm:$0xf]
      %v380 = vld [vmem:[%s300 + $0x90] sm:$0x1]
      %s381 = scalar_lea.vmem %s2, 64
      %v382 = vld [vmem:[%s381] sm:$0xf]
      %v383 = vld [vmem:[%s381 + $0x4] sm:$0xf]
      %v384 = vld [vmem:[%s381 + $0x8] sm:$0xf]
      %v385 = vld [vmem:[%s381 + $0xc] sm:$0xf]
      %v386 = vld [vmem:[%s381 + $0x10] sm:$0xf]
      %v387 = vld [vmem:[%s381 + $0x14] sm:$0xf]
      %v388 = vld [vmem:[%s381 + $0x18] sm:$0xf]
      %v389 = vld [vmem:[%s381 + $0x1c] sm:$0xf]
      %v390 = vld [vmem:[%s381 + $0x20] sm:$0xf]
      %v391 = vld [vmem:[%s381 + $0x24] sm:$0xf]
      %v392 = vld [vmem:[%s381 + $0x28] sm:$0xf]
      %v393 = vld [vmem:[%s381 + $0x2c] sm:$0xf]
      %v394 = vld [vmem:[%s381 + $0x30] sm:$0xf]
      %v395 = vld [vmem:[%s381 + $0x34] sm:$0xf]
      %v396 = vld [vmem:[%s381 + $0x38] sm:$0xf]
      %v397 = vld [vmem:[%s381 + $0x3c] sm:$0xf]
      %v435 = vunpack.c.l.b16 %v328
      %v436 = vunpack.c.l.b16 %v329
      %v437 = vunpack.c.l.b16 %v330
      %v438 = vunpack.c.l.b16 %v331
      %v439 = vunpack.c.l.b16 %v332
      %v440 = vunpack.c.l.b16 %v333
      %v441 = vunpack.c.l.b16 %v334
      %v442 = vunpack.c.l.b16 %v335
      %v443 = vunpack.c.l.b16 %v336
      %v444 = vunpack.c.l.b16 %v337
      %v445 = vunpack.c.l.b16 %v338
      %v446 = vunpack.c.l.b16 %v339
      %v447 = vunpack.c.l.b16 %v340
      %v448 = vunpack.c.l.b16 %v341
      %v449 = vunpack.c.l.b16 %v342
      %v450 = vunpack.c.l.b16 %v343
      %v451 = vunpack.c.l.b16 %v344
      %v452 = vunpack.c.l.b16 %v345
      %v453 = vunpack.c.l.b16 %v346
      %v454 = vunpack.c.l.b16 %v347
      %v455 = vunpack.c.l.b16 %v348
      %v456 = vunpack.c.l.b16 %v349
      %v457 = vunpack.c.l.b16 %v350
      %v458 = vunpack.c.l.b16 %v351
      %v459 = vunpack.c.l.b16 %v352
      %v460 = vunpack.c.l.b16 %v353
      %v461 = vunpack.c.l.b16 %v354
      %v462 = vunpack.c.l.b16 %v355
      %v463 = vunpack.c.l.b16 %v356
      %v464 = vunpack.c.l.b16 %v357
      %v465 = vunpack.c.l.b16 %v358
      %v466 = vunpack.c.l.b16 %v359
      %v467 = vunpack.c.l.b16 %v360
      %v468 = vunpack.c.l.b16 %v361
      %v469 = vunpack.c.l.b16 %v362
      %v470 = vunpack.c.l.b16 %v363
      %v471 = vunpack.c.l.b16 %v380
      %v472 = vpack.c.b16 %v436, %v435
      %v473 = vpack.c.b16 %v438, %v437
      %v474 = vpack.c.b16 %v440, %v439
      %v475 = vpack.c.b16 %v442, %v441
      %v476 = vpack.c.b16 %v444, %v443
      %v477 = vpack.c.b16 %v446, %v445
      %v478 = vpack.c.b16 %v448, %v447
      %v479 = vpack.c.b16 %v450, %v449
      %v480 = vpack.c.b16 %v452, %v451
      %v481 = vpack.c.b16 %v454, %v453
      %v482 = vpack.c.b16 %v456, %v455
      %v483 = vpack.c.b16 %v458, %v457
      %v484 = vpack.c.b16 %v460, %v459
      %v485 = vpack.c.b16 %v462, %v461
      %v486 = vpack.c.b16 %v464, %v463
      %v487 = vpack.c.b16 %v466, %v465
      %v488 = vpack.c.b16 %v468, %v467
      %v489 = vpack.c.b16 %v470, %v469
      %v490 = vpack.c.b16 %v471, %v471
      %vm491 = vsmask.f32 7424
      %v493 = vshrl.u32 %v472, 16
      %v495 = vshll.u32 %v472, 16
      %v497 = vrot.slane %v495, 1
      %v498 = vor.u32 %v493, %v497
      %v500 = vshll.u32 %v473, 16
      %v502 = vrot.slane %v500, 1
      %v503 = vsel %vm491, %v498, %v502
      %v504 = vshrl.u32 %v473, 16
      %v506 = vor.u32 %v504, %v502
      %v508 = vshll.u32 %v474, 16
      %v510 = vrot.slane %v508, 1
      %v511 = vsel %vm491, %v506, %v510
      %v512 = vshrl.u32 %v474, 16
      %v514 = vor.u32 %v512, %v510
      %v516 = vshll.u32 %v475, 16
      %v518 = vrot.slane %v516, 1
      %v519 = vsel %vm491, %v514, %v518
      %v520 = vshrl.u32 %v475, 16
      %v522 = vor.u32 %v520, %v518
      %v524 = vshll.u32 %v476, 16
      %v526 = vrot.slane %v524, 1
      %v527 = vsel %vm491, %v522, %v526
      %v528 = vshrl.u32 %v476, 16
      %v530 = vor.u32 %v528, %v526
      %v532 = vshll.u32 %v477, 16
      %v534 = vrot.slane %v532, 1
      %v535 = vsel %vm491, %v530, %v534
      %v536 = vshrl.u32 %v477, 16
      %v538 = vor.u32 %v536, %v534
      %v540 = vshll.u32 %v478, 16
      %v542 = vrot.slane %v540, 1
      %v543 = vsel %vm491, %v538, %v542
      %v544 = vshrl.u32 %v478, 16
      %v546 = vor.u32 %v544, %v542
      %v548 = vshll.u32 %v479, 16
      %v550 = vrot.slane %v548, 1
      %v551 = vsel %vm491, %v546, %v550
      %v552 = vshrl.u32 %v479, 16
      %v554 = vor.u32 %v552, %v550
      %v556 = vshll.u32 %v480, 16
      %v558 = vrot.slane %v556, 1
      %v559 = vsel %vm491, %v554, %v558
      %v560 = vshrl.u32 %v480, 16
      %v562 = vor.u32 %v560, %v558
      %v564 = vshll.u32 %v481, 16
      %v566 = vrot.slane %v564, 1
      %v567 = vsel %vm491, %v562, %v566
      %v568 = vshrl.u32 %v481, 16
      %v570 = vor.u32 %v568, %v566
      %v572 = vshll.u32 %v482, 16
      %v574 = vrot.slane %v572, 1
      %v575 = vsel %vm491, %v570, %v574
      %v576 = vshrl.u32 %v482, 16
      %v578 = vor.u32 %v576, %v574
      %v580 = vshll.u32 %v483, 16
      %v582 = vrot.slane %v580, 1
      %v583 = vsel %vm491, %v578, %v582
      %v584 = vshrl.u32 %v483, 16
      %v586 = vor.u32 %v584, %v582
      %v588 = vshll.u32 %v484, 16
      %v590 = vrot.slane %v588, 1
      %v591 = vsel %vm491, %v586, %v590
      %v592 = vshrl.u32 %v484, 16
      %v594 = vor.u32 %v592, %v590
      %v596 = vshll.u32 %v485, 16
      %v598 = vrot.slane %v596, 1
      %v599 = vsel %vm491, %v594, %v598
      %v600 = vshrl.u32 %v485, 16
      %v602 = vor.u32 %v600, %v598
      %v604 = vshll.u32 %v486, 16
      %v606 = vrot.slane %v604, 1
      %v607 = vsel %vm491, %v602, %v606
      %v608 = vshrl.u32 %v486, 16
      %v610 = vor.u32 %v608, %v606
      %v612 = vshll.u32 %v487, 16
      %v614 = vrot.slane %v612, 1
      %v615 = vsel %vm491, %v610, %v614
      %v616 = vshrl.u32 %v487, 16
      %v618 = vor.u32 %v616, %v614
      %v620 = vshll.u32 %v488, 16
      %v622 = vrot.slane %v620, 1
      %v623 = vsel %vm491, %v618, %v622
      %v624 = vshrl.u32 %v488, 16
      %v626 = vor.u32 %v624, %v622
      %v628 = vshll.u32 %v489, 16
      %v630 = vrot.slane %v628, 1
      %v631 = vsel %vm491, %v626, %v630
      %v632 = vshrl.u32 %v489, 16
      %v634 = vor.u32 %v632, %v630
      %v636 = vshll.u32 %v490, 16
      %v638 = vrot.slane %v636, 1
      %v639 = vsel %vm491, %v634, %v638
      %v674 = vunpack.c.l.b16 %v382
      %v675 = vunpack.c.l.b16 %v383
      %v676 = vunpack.c.l.b16 %v384
      %v677 = vunpack.c.l.b16 %v385
      %v678 = vunpack.c.l.b16 %v386
      %v679 = vunpack.c.l.b16 %v387
      %v680 = vunpack.c.l.b16 %v388
      %v681 = vunpack.c.l.b16 %v389
      %v682 = vunpack.c.l.b16 %v390
      %v683 = vunpack.c.l.b16 %v391
      %v684 = vunpack.c.l.b16 %v392
      %v685 = vunpack.c.l.b16 %v393
      %v686 = vunpack.c.l.b16 %v394
      %v687 = vunpack.c.l.b16 %v395
      %v688 = vunpack.c.l.b16 %v396
      %v689 = vunpack.c.l.b16 %v397
      %v690 = vpack.c.b16 %v675, %v674
      %v691 = vpack.c.b16 %v677, %v676
      %v692 = vpack.c.b16 %v679, %v678
      %v693 = vpack.c.b16 %v681, %v680
      %v694 = vpack.c.b16 %v683, %v682
      %v695 = vpack.c.b16 %v685, %v684
      %v696 = vpack.c.b16 %v687, %v686
      %v697 = vpack.c.b16 %v689, %v688
      %706 = vmatprep.subr.bf16.mxu0 0
      %707 = vmatpush1.bf16.msra.mxu0 %v690
      %708 = vmatprep.subr.bf16.mxu0 0
      %709 = vmatpush1.bf16.msra.mxu0 %v691
      %710 = vmatprep.subr.bf16.mxu0 0
      %711 = vmatpush1.bf16.msra.mxu0 %v692
      %712 = vmatprep.subr.bf16.mxu0 0
      %713 = vmatpush1.bf16.msra.mxu0 %v693
      %714 = vmatprep.subr.bf16.mxu0 0
      %715 = vmatpush1.bf16.msra.mxu0 %v694
      %716 = vmatprep.subr.bf16.mxu0 0
      %717 = vmatpush1.bf16.msra.mxu0 %v695
      %718 = vmatprep.subr.bf16.mxu0 0
      %719 = vmatpush1.bf16.msra.mxu0 %v696
      %720 = vmatprep.subr.bf16.mxu0 0
      %721 = vmatpush1.bf16.msra.mxu0 %v697
      %722 = vmatprep.subr.bf16.mxu0 0
      %723 = vmatpush1.bf16.msra.mxu0 0
      %724 = vmatprep.subr.bf16.mxu0 0
      %725 = vmatpush1.bf16.msra.mxu0 0
      %726 = vmatprep.subr.bf16.mxu0 0
      %727 = vmatpush1.bf16.msra.mxu0 0
      %728 = vmatprep.subr.bf16.mxu0 0
      %729 = vmatpush1.bf16.msra.mxu0 0
      %730 = vmatprep.subr.bf16.mxu0 0
      %731 = vmatpush1.bf16.msra.mxu0 0
      %732 = vmatprep.subr.bf16.mxu0 0
      %733 = vmatpush1.bf16.msra.mxu0 0
      %734 = vmatprep.subr.bf16.mxu0 0
      %735 = vmatpush1.bf16.msra.mxu0 0
      %736 = vmatprep.subr.bf16.mxu0 0
      %737 = vmatpush1.bf16.msra.mxu0 0
      %738 = vmatprep.mubr.bf16.mxu0 0
      %739 = vmatmul.mubr.bf16.gmra.mrb[0].mxu0 %v503
      %v740 = vpop.f32.mrb[0].mxu0
      %v741 = vadd.f32 0.0, %v740
      %v742 = vpop.f32.mrb[0].mxu0
      %v743 = vpop.f32.mrb[0].mxu0
      %v744 = vadd.f32 0.0, %v743
      %v745 = vpop.f32.mrb[0].mxu0
      %746 = vmatprep.mubr.bf16.mxu0 0
      %747 = vmatmul.mubr.bf16.gmra.mrb[0].mxu0 %v511
      %v748 = vpop.f32.mrb[0].mxu0
      %v749 = vadd.f32 0.0, %v748
      %v750 = vpop.f32.mrb[0].mxu0
      %v751 = vpop.f32.mrb[0].mxu0
      %v752 = vadd.f32 0.0, %v751
      %v753 = vpop.f32.mrb[0].mxu0
      %754 = vmatprep.mubr.bf16.mxu0 0
      %755 = vmatmul.mubr.bf16.gmra.mrb[0].mxu0 %v519
      %v756 = vpop.f32.mrb[0].mxu0
      %v757 = vadd.f32 0.0, %v756
      %v758 = vpop.f32.mrb[0].mxu0
      %v759 = vpop.f32.mrb[0].mxu0
      %v760 = vadd.f32 0.0, %v759
      %v761 = vpop.f32.mrb[0].mxu0
      %762 = vmatprep.mubr.bf16.mxu0 0
      %763 = vmatmul.mubr.bf16.gmra.mrb[0].mxu0 %v527
      %v764 = vpop.f32.mrb[0].mxu0
      %v765 = vadd.f32 0.0, %v764
      %v766 = vpop.f32.mrb[0].mxu0
      %v767 = vpop.f32.mrb[0].mxu0
      %v768 = vadd.f32 0.0, %v767
      %v769 = vpop.f32.mrb[0].mxu0
      %770 = vmatprep.mubr.bf16.mxu0 0
      %771 = vmatmul.mubr.bf16.gmra.mrb[0].mxu0 %v535
      %v772 = vpop.f32.mrb[0].mxu0
      %v773 = vadd.f32 0.0, %v772
      %v774 = vpop.f32.mrb[0].mxu0
      %v775 = vpop.f32.mrb[0].mxu0
      %v776 = vadd.f32 0.0, %v775
      %v777 = vpop.f32.mrb[0].mxu0
      %778 = vmatprep.mubr.bf16.mxu0 0
      %779 = vmatmul.mubr.bf16.gmra.mrb[0].mxu0 %v543
      %v780 = vpop.f32.mrb[0].mxu0
      %v781 = vadd.f32 0.0, %v780
      %v782 = vpop.f32.mrb[0].mxu0
      %v783 = vpop.f32.mrb[0].mxu0
      %v784 = vadd.f32 0.0, %v783
      %v785 = vpop.f32.mrb[0].mxu0
      %786 = vmatprep.mubr.bf16.mxu0 0
      %787 = vmatmul.mubr.bf16.gmra.mrb[0].mxu0 %v551
      %v788 = vpop.f32.mrb[0].mxu0
      %v789 = vadd.f32 0.0, %v788
      %v790 = vpop.f32.mrb[0].mxu0
      %v791 = vpop.f32.mrb[0].mxu0
      %v792 = vadd.f32 0.0, %v791
      %v793 = vpop.f32.mrb[0].mxu0
      %794 = vmatprep.mubr.bf16.mxu0 0
      %795 = vmatmul.mubr.bf16.gmra.mrb[0].mxu0 %v559
      %v796 = vpop.f32.mrb[0].mxu0
      %v797 = vadd.f32 0.0, %v796
      %v798 = vpop.f32.mrb[0].mxu0
      %v799 = vpop.f32.mrb[0].mxu0
      %v800 = vadd.f32 0.0, %v799
      %v801 = vpop.f32.mrb[0].mxu0
      %802 = vmatprep.mubr.bf16.mxu0 0
      %803 = vmatmul.mubr.bf16.gmra.mrb[0].mxu0 %v567
      %v804 = vpop.f32.mrb[0].mxu0
      %v805 = vadd.f32 0.0, %v804
      %v806 = vpop.f32.mrb[0].mxu0
      %v807 = vpop.f32.mrb[0].mxu0
      %v808 = vadd.f32 0.0, %v807
      %v809 = vpop.f32.mrb[0].mxu0
      %810 = vmatprep.mubr.bf16.mxu0 0
      %811 = vmatmul.mubr.bf16.gmra.mrb[0].mxu0 %v575
      %v812 = vpop.f32.mrb[0].mxu0
      %v813 = vadd.f32 0.0, %v812
      %v814 = vpop.f32.mrb[0].mxu0
      %v815 = vpop.f32.mrb[0].mxu0
      %v816 = vadd.f32 0.0, %v815
      %v817 = vpop.f32.mrb[0].mxu0
      %818 = vmatprep.mubr.bf16.mxu0 0
      %819 = vmatmul.mubr.bf16.gmra.mrb[0].mxu0 %v583
      %v820 = vpop.f32.mrb[0].mxu0
      %v821 = vadd.f32 0.0, %v820
      %v822 = vpop.f32.mrb[0].mxu0
      %v823 = vpop.f32.mrb[0].mxu0
      %v824 = vadd.f32 0.0, %v823
      %v825 = vpop.f32.mrb[0].mxu0
      %826 = vmatprep.mubr.bf16.mxu0 0
      %827 = vmatmul.mubr.bf16.gmra.mrb[0].mxu0 %v591
      %v828 = vpop.f32.mrb[0].mxu0
      %v829 = vadd.f32 0.0, %v828
      %v830 = vpop.f32.mrb[0].mxu0
      %v831 = vpop.f32.mrb[0].mxu0
      %v832 = vadd.f32 0.0, %v831
      %v833 = vpop.f32.mrb[0].mxu0
      %834 = vmatprep.mubr.bf16.mxu0 0
      %835 = vmatmul.mubr.bf16.gmra.mrb[0].mxu0 %v599
      %v836 = vpop.f32.mrb[0].mxu0
      %v837 = vadd.f32 0.0, %v836
      %v838 = vpop.f32.mrb[0].mxu0
      %v839 = vpop.f32.mrb[0].mxu0
      %v840 = vadd.f32 0.0, %v839
      %v841 = vpop.f32.mrb[0].mxu0
      %842 = vmatprep.mubr.bf16.mxu0 0
      %843 = vmatmul.mubr.bf16.gmra.mrb[0].mxu0 %v607
      %v844 = vpop.f32.mrb[0].mxu0
      %v845 = vadd.f32 0.0, %v844
      %v846 = vpop.f32.mrb[0].mxu0
      %v847 = vpop.f32.mrb[0].mxu0
      %v848 = vadd.f32 0.0, %v847
      %v849 = vpop.f32.mrb[0].mxu0
      %850 = vmatprep.mubr.bf16.mxu0 0
      %851 = vmatmul.mubr.bf16.gmra.mrb[0].mxu0 %v615
      %v852 = vpop.f32.mrb[0].mxu0
      %v853 = vadd.f32 0.0, %v852
      %v854 = vpop.f32.mrb[0].mxu0
      %v855 = vpop.f32.mrb[0].mxu0
      %v856 = vadd.f32 0.0, %v855
      %v857 = vpop.f32.mrb[0].mxu0
      %858 = vmatprep.mubr.bf16.mxu0 0
      %859 = vmatmul.mubr.bf16.gmra.mrb[0].mxu0 %v623
      %v860 = vpop.f32.mrb[0].mxu0
      %v861 = vadd.f32 0.0, %v860
      %v862 = vpop.f32.mrb[0].mxu0
      %v863 = vpop.f32.mrb[0].mxu0
      %v864 = vadd.f32 0.0, %v863
      %v865 = vpop.f32.mrb[0].mxu0
      %866 = vmatprep.mubr.bf16.mxu0 0
      %867 = vmatmul.mubr.bf16.gmra.mrb[0].mxu0 %v631
      %v868 = vpop.f32.mrb[0].mxu0
      %v869 = vadd.f32 0.0, %v868
      %v870 = vpop.f32.mrb[0].mxu0
      %v871 = vpop.f32.mrb[0].mxu0
      %v872 = vadd.f32 0.0, %v871
      %v873 = vpop.f32.mrb[0].mxu0
      %874 = vmatprep.mubr.bf16.mxu0 0
      %875 = vmatmul.mubr.bf16.gmra.mrb[0].mxu0 %v639
      %v876 = vpop.f32.mrb[0].mxu0
      %v877 = vadd.f32 0.0, %v876
      %v878 = vpop.f32.mrb[0].mxu0
      %v879 = vpop.f32.mrb[0].mxu0
      %v880 = vadd.f32 0.0, %v879
      %v881 = vpop.f32.mrb[0].mxu0
      %882 = vdwg.mxu0
      %v917 = vunpack.c.l.b16 %v364
      %v918 = vunpack.c.l.b16 %v365
      %v919 = vunpack.c.l.b16 %v366
      %v920 = vunpack.c.l.b16 %v367
      %v921 = vunpack.c.l.b16 %v368
      %v922 = vunpack.c.l.b16 %v369
      %v923 = vunpack.c.l.b16 %v370
      %v924 = vunpack.c.l.b16 %v371
      %v925 = vunpack.c.l.b16 %v372
      %v926 = vunpack.c.l.b16 %v373
      %v927 = vunpack.c.l.b16 %v374
      %v928 = vunpack.c.l.b16 %v375
      %v929 = vunpack.c.l.b16 %v376
      %v930 = vunpack.c.l.b16 %v377
      %v931 = vunpack.c.l.b16 %v378
      %v932 = vunpack.c.l.b16 %v379
      %v933 = vpack.c.b16 %v918, %v917
      %v934 = vpack.c.b16 %v920, %v919
      %v935 = vpack.c.b16 %v922, %v921
      %v936 = vpack.c.b16 %v924, %v923
      %v937 = vpack.c.b16 %v926, %v925
      %v938 = vpack.c.b16 %v928, %v927
      %v939 = vpack.c.b16 %v930, %v929
      %v940 = vpack.c.b16 %v932, %v931
      %949 = vmatprep.subr.bf16.mxu0 0
      %950 = vmatpush1.bf16.msra.mxu0 %v933
      %951 = vmatprep.subr.bf16.mxu0 0
      %952 = vmatpush1.bf16.msra.mxu0 %v934
      %953 = vmatprep.subr.bf16.mxu0 0
      %954 = vmatpush1.bf16.msra.mxu0 %v935
      %955 = vmatprep.subr.bf16.mxu0 0
      %956 = vmatpush1.bf16.msra.mxu0 %v936
      %957 = vmatprep.subr.bf16.mxu0 0
      %958 = vmatpush1.bf16.msra.mxu0 %v937
      %959 = vmatprep.subr.bf16.mxu0 0
      %960 = vmatpush1.bf16.msra.mxu0 %v938
      %961 = vmatprep.subr.bf16.mxu0 0
      %962 = vmatpush1.bf16.msra.mxu0 %v939
      %963 = vmatprep.subr.bf16.mxu0 0
      %964 = vmatpush1.bf16.msra.mxu0 %v940
      %965 = vmatprep.subr.bf16.mxu0 0
      %966 = vmatpush1.bf16.msra.mxu0 0
      %967 = vmatprep.subr.bf16.mxu0 0
      %968 = vmatpush1.bf16.msra.mxu0 0
      %969 = vmatprep.subr.bf16.mxu0 0
      %970 = vmatpush1.bf16.msra.mxu0 0
      %971 = vmatprep.subr.bf16.mxu0 0
      %972 = vmatpush1.bf16.msra.mxu0 0
      %973 = vmatprep.subr.bf16.mxu0 0
      %974 = vmatpush1.bf16.msra.mxu0 0
      %975 = vmatprep.subr.bf16.mxu0 0
      %976 = vmatpush1.bf16.msra.mxu0 0
      %977 = vmatprep.subr.bf16.mxu0 0
      %978 = vmatpush1.bf16.msra.mxu0 0
      %979 = vmatprep.subr.bf16.mxu0 0
      %980 = vmatpush1.bf16.msra.mxu0 0
      %981 = vmatprep.mubr.bf16.mxu0 0
      %982 = vmatmul.mubr.bf16.gmra.mrb[0].mxu0 %v472
      %v983 = vpop.f32.mrb[0].mxu0
      %v984 = vadd.f32 %v741, %v983
      %v985 = vpop.f32.mrb[0].mxu0
      %v986 = vpop.f32.mrb[0].mxu0
      %v987 = vadd.f32 %v744, %v986
      %v988 = vpop.f32.mrb[0].mxu0
      %989 = vmatprep.mubr.bf16.mxu0 0
      %990 = vmatmul.mubr.bf16.gmra.mrb[0].mxu0 %v473
      %v991 = vpop.f32.mrb[0].mxu0
      %v992 = vadd.f32 %v749, %v991
      %v993 = vpop.f32.mrb[0].mxu0
      %v994 = vpop.f32.mrb[0].mxu0
      %v995 = vadd.f32 %v752, %v994
      %v996 = vpop.f32.mrb[0].mxu0
      %997 = vmatprep.mubr.bf16.mxu0 0
      %998 = vmatmul.mubr.bf16.gmra.mrb[0].mxu0 %v474
      %v999 = vpop.f32.mrb[0].mxu0
      %v1000 = vadd.f32 %v757, %v999
      %v1001 = vpop.f32.mrb[0].mxu0
      %v1002 = vpop.f32.mrb[0].mxu0
      %v1003 = vadd.f32 %v760, %v1002
      %v1004 = vpop.f32.mrb[0].mxu0
      %1005 = vmatprep.mubr.bf16.mxu0 0
      %1006 = vmatmul.mubr.bf16.gmra.mrb[0].mxu0 %v475
      %v1007 = vpop.f32.mrb[0].mxu0
      %v1008 = vadd.f32 %v765, %v1007
      %v1009 = vpop.f32.mrb[0].mxu0
      %v1010 = vpop.f32.mrb[0].mxu0
      %v1011 = vadd.f32 %v768, %v1010
      %v1012 = vpop.f32.mrb[0].mxu0
      %1013 = vmatprep.mubr.bf16.mxu0 0
      %1014 = vmatmul.mubr.bf16.gmra.mrb[0].mxu0 %v476
      %v1015 = vpop.f32.mrb[0].mxu0
      %v1016 = vadd.f32 %v773, %v1015
      %v1017 = vpop.f32.mrb[0].mxu0
      %v1018 = vpop.f32.mrb[0].mxu0
      %v1019 = vadd.f32 %v776, %v1018
      %v1020 = vpop.f32.mrb[0].mxu0
      %1021 = vmatprep.mubr.bf16.mxu0 0
      %1022 = vmatmul.mubr.bf16.gmra.mrb[0].mxu0 %v477
      %v1023 = vpop.f32.mrb[0].mxu0
      %v1024 = vadd.f32 %v781, %v1023
      %v1025 = vpop.f32.mrb[0].mxu0
      %v1026 = vpop.f32.mrb[0].mxu0
      %v1027 = vadd.f32 %v784, %v1026
      %v1028 = vpop.f32.mrb[0].mxu0
      %1029 = vmatprep.mubr.bf16.mxu0 0
      %1030 = vmatmul.mubr.bf16.gmra.mrb[0].mxu0 %v478
      %v1031 = vpop.f32.mrb[0].mxu0
      %v1032 = vadd.f32 %v789, %v1031
      %v1033 = vpop.f32.mrb[0].mxu0
      %v1034 = vpop.f32.mrb[0].mxu0
      %v1035 = vadd.f32 %v792, %v1034
      %v1036 = vpop.f32.mrb[0].mxu0
      %1037 = vmatprep.mubr.bf16.mxu0 0
      %1038 = vmatmul.mubr.bf16.gmra.mrb[0].mxu0 %v479
      %v1039 = vpop.f32.mrb[0].mxu0
      %v1040 = vadd.f32 %v797, %v1039
      %v1041 = vpop.f32.mrb[0].mxu0
      %v1042 = vpop.f32.mrb[0].mxu0
      %v1043 = vadd.f32 %v800, %v1042
      %v1044 = vpop.f32.mrb[0].mxu0
      %1045 = vmatprep.mubr.bf16.mxu0 0
      %1046 = vmatmul.mubr.bf16.gmra.mrb[0].mxu0 %v480
      %v1047 = vpop.f32.mrb[0].mxu0
      %v1048 = vadd.f32 %v805, %v1047
      %v1049 = vpop.f32.mrb[0].mxu0
      %v1050 = vpop.f32.mrb[0].mxu0
      %v1051 = vadd.f32 %v808, %v1050
      %v1052 = vpop.f32.mrb[0].mxu0
      %1053 = vmatprep.mubr.bf16.mxu0 0
      %1054 = vmatmul.mubr.bf16.gmra.mrb[0].mxu0 %v481
      %v1055 = vpop.f32.mrb[0].mxu0
      %v1056 = vadd.f32 %v813, %v1055
      %v1057 = vpop.f32.mrb[0].mxu0
      %v1058 = vpop.f32.mrb[0].mxu0
      %v1059 = vadd.f32 %v816, %v1058
      %v1060 = vpop.f32.mrb[0].mxu0
      %1061 = vmatprep.mubr.bf16.mxu0 0
      %1062 = vmatmul.mubr.bf16.gmra.mrb[0].mxu0 %v482
      %v1063 = vpop.f32.mrb[0].mxu0
      %v1064 = vadd.f32 %v821, %v1063
      %v1065 = vpop.f32.mrb[0].mxu0
      %v1066 = vpop.f32.mrb[0].mxu0
      %v1067 = vadd.f32 %v824, %v1066
      %v1068 = vpop.f32.mrb[0].mxu0
      %1069 = vmatprep.mubr.bf16.mxu0 0
      %1070 = vmatmul.mubr.bf16.gmra.mrb[0].mxu0 %v483
      %v1071 = vpop.f32.mrb[0].mxu0
      %v1072 = vadd.f32 %v829, %v1071
      %v1073 = vpop.f32.mrb[0].mxu0
      %v1074 = vpop.f32.mrb[0].mxu0
      %v1075 = vadd.f32 %v832, %v1074
      %v1076 = vpop.f32.mrb[0].mxu0
      %1077 = vmatprep.mubr.bf16.mxu0 0
      %1078 = vmatmul.mubr.bf16.gmra.mrb[0].mxu0 %v484
      %v1079 = vpop.f32.mrb[0].mxu0
      %v1080 = vadd.f32 %v837, %v1079
      %v1081 = vpop.f32.mrb[0].mxu0
      %v1082 = vpop.f32.mrb[0].mxu0
      %v1083 = vadd.f32 %v840, %v1082
      %v1084 = vpop.f32.mrb[0].mxu0
      %1085 = vmatprep.mubr.bf16.mxu0 0
      %1086 = vmatmul.mubr.bf16.gmra.mrb[0].mxu0 %v485
      %v1087 = vpop.f32.mrb[0].mxu0
      %v1088 = vadd.f32 %v845, %v1087
      %v1089 = vpop.f32.mrb[0].mxu0
      %v1090 = vpop.f32.mrb[0].mxu0
      %v1091 = vadd.f32 %v848, %v1090
      %v1092 = vpop.f32.mrb[0].mxu0
      %1093 = vmatprep.mubr.bf16.mxu0 0
      %1094 = vmatmul.mubr.bf16.gmra.mrb[0].mxu0 %v486
      %v1095 = vpop.f32.mrb[0].mxu0
      %v1096 = vadd.f32 %v853, %v1095
      %v1097 = vpop.f32.mrb[0].mxu0
      %v1098 = vpop.f32.mrb[0].mxu0
      %v1099 = vadd.f32 %v856, %v1098
      %v1100 = vpop.f32.mrb[0].mxu0
      %1101 = vmatprep.mubr.bf16.mxu0 0
      %1102 = vmatmul.mubr.bf16.gmra.mrb[0].mxu0 %v487
      %v1103 = vpop.f32.mrb[0].mxu0
      %v1104 = vadd.f32 %v861, %v1103
      %v1105 = vpop.f32.mrb[0].mxu0
      %v1106 = vpop.f32.mrb[0].mxu0
      %v1107 = vadd.f32 %v864, %v1106
      %v1108 = vpop.f32.mrb[0].mxu0
      %1109 = vmatprep.mubr.bf16.mxu0 0
      %1110 = vmatmul.mubr.bf16.gmra.mrb[0].mxu0 %v488
      %v1111 = vpop.f32.mrb[0].mxu0
      %v1112 = vadd.f32 %v869, %v1111
      %v1113 = vpop.f32.mrb[0].mxu0
      %v1114 = vpop.f32.mrb[0].mxu0
      %v1115 = vadd.f32 %v872, %v1114
      %v1116 = vpop.f32.mrb[0].mxu0
      %1117 = vmatprep.mubr.bf16.mxu0 0
      %1118 = vmatmul.mubr.bf16.gmra.mrb[0].mxu0 %v489
      %v1119 = vpop.f32.mrb[0].mxu0
      %v1120 = vadd.f32 %v877, %v1119
      %v1121 = vpop.f32.mrb[0].mxu0
      %v1122 = vpop.f32.mrb[0].mxu0
      %v1123 = vadd.f32 %v880, %v1122
      %v1124 = vpop.f32.mrb[0].mxu0
      %1125 = vdwg.mxu0
      %v1126 = vld [vmem:[%s300] sm:$0xe]
      %s1127 = scalar_lea.vmem %s2, 128
      %v1128 = vld [vmem:[%s1127] sm:$0xf]
      %v1129 = vld [vmem:[%s1127 + $0x4] sm:$0xf]
      %v1130 = vld [vmem:[%s1127 + $0x8] sm:$0xf]
      %v1131 = vld [vmem:[%s1127 + $0xc] sm:$0xf]
      %v1132 = vld [vmem:[%s1127 + $0x10] sm:$0xf]
      %v1133 = vld [vmem:[%s1127 + $0x14] sm:$0xf]
      %v1134 = vld [vmem:[%s1127 + $0x18] sm:$0xf]
      %v1135 = vld [vmem:[%s1127 + $0x1c] sm:$0xf]
      %v1136 = vld [vmem:[%s1127 + $0x20] sm:$0xf]
      %v1137 = vld [vmem:[%s1127 + $0x24] sm:$0xf]
      %v1138 = vld [vmem:[%s1127 + $0x28] sm:$0xf]
      %v1139 = vld [vmem:[%s1127 + $0x2c] sm:$0xf]
      %v1140 = vld [vmem:[%s1127 + $0x30] sm:$0xf]
      %v1141 = vld [vmem:[%s1127 + $0x34] sm:$0xf]
      %v1142 = vld [vmem:[%s1127 + $0x38] sm:$0xf]
      %v1143 = vld [vmem:[%s1127 + $0x3c] sm:$0xf]
      %v1145 = vunpack.c.l.b16 %v1126
      %v1146 = vpack.c.b16 %v436, %v1145
      %vm1147 = vcmask 1046528
      %v1148 = vrot.slane %v1146, 1
      %v1149 = vrot.slane %v473, 1
      %v1150 = vsel %vm1147, %v1148, %v1149
      %v1151 = vrot.slane %v474, 1
      %v1152 = vsel %vm1147, %v1149, %v1151
      %v1153 = vrot.slane %v475, 1
      %v1154 = vsel %vm1147, %v1151, %v1153
      %v1155 = vrot.slane %v476, 1
      %v1156 = vsel %vm1147, %v1153, %v1155
      %v1157 = vrot.slane %v477, 1
      %v1158 = vsel %vm1147, %v1155, %v1157
      %v1159 = vrot.slane %v478, 1
      %v1160 = vsel %vm1147, %v1157, %v1159
      %v1161 = vrot.slane %v479, 1
      %v1162 = vsel %vm1147, %v1159, %v1161
      %v1163 = vrot.slane %v480, 1
      %v1164 = vsel %vm1147, %v1161, %v1163
      %v1165 = vrot.slane %v481, 1
      %v1166 = vsel %vm1147, %v1163, %v1165
      %v1167 = vrot.slane %v482, 1
      %v1168 = vsel %vm1147, %v1165, %v1167
      %v1169 = vrot.slane %v483, 1
      %v1170 = vsel %vm1147, %v1167, %v1169
      %v1171 = vrot.slane %v484, 1
      %v1172 = vsel %vm1147, %v1169, %v1171
      %v1173 = vrot.slane %v485, 1
      %v1174 = vsel %vm1147, %v1171, %v1173
      %v1175 = vrot.slane %v486, 1
      %v1176 = vsel %vm1147, %v1173, %v1175
      %v1177 = vrot.slane %v487, 1
      %v1178 = vsel %vm1147, %v1175, %v1177
      %v1179 = vrot.slane %v488, 1
      %v1180 = vsel %vm1147, %v1177, %v1179
      %v1181 = vrot.slane %v489, 1
      %v1182 = vsel %vm1147, %v1179, %v1181
      %v1183 = vrot.slane %v490, 1
      %v1184 = vsel %vm1147, %v1181, %v1183
      %v1219 = vunpack.c.l.b16 %v1128
      %v1220 = vunpack.c.l.b16 %v1129
      %v1221 = vunpack.c.l.b16 %v1130
      %v1222 = vunpack.c.l.b16 %v1131
      %v1223 = vunpack.c.l.b16 %v1132
      %v1224 = vunpack.c.l.b16 %v1133
      %v1225 = vunpack.c.l.b16 %v1134
      %v1226 = vunpack.c.l.b16 %v1135
      %v1227 = vunpack.c.l.b16 %v1136
      %v1228 = vunpack.c.l.b16 %v1137
      %v1229 = vunpack.c.l.b16 %v1138
      %v1230 = vunpack.c.l.b16 %v1139
      %v1231 = vunpack.c.l.b16 %v1140
      %v1232 = vunpack.c.l.b16 %v1141
      %v1233 = vunpack.c.l.b16 %v1142
      %v1234 = vunpack.c.l.b16 %v1143
      %v1235 = vpack.c.b16 %v1220, %v1219
      %v1236 = vpack.c.b16 %v1222, %v1221
      %v1237 = vpack.c.b16 %v1224, %v1223
      %v1238 = vpack.c.b16 %v1226, %v1225
      %v1239 = vpack.c.b16 %v1228, %v1227
      %v1240 = vpack.c.b16 %v1230, %v1229
      %v1241 = vpack.c.b16 %v1232, %v1231
      %v1242 = vpack.c.b16 %v1234, %v1233
      %1251 = vmatprep.subr.bf16.mxu0 0
      %1252 = vmatpush1.bf16.msra.mxu0 %v1235
      %1253 = vmatprep.subr.bf16.mxu0 0
      %1254 = vmatpush1.bf16.msra.mxu0 %v1236
      %1255 = vmatprep.subr.bf16.mxu0 0
      %1256 = vmatpush1.bf16.msra.mxu0 %v1237
      %1257 = vmatprep.subr.bf16.mxu0 0
      %1258 = vmatpush1.bf16.msra.mxu0 %v1238
      %1259 = vmatprep.subr.bf16.mxu0 0
      %1260 = vmatpush1.bf16.msra.mxu0 %v1239
      %1261 = vmatprep.subr.bf16.mxu0 0
      %1262 = vmatpush1.bf16.msra.mxu0 %v1240
      %1263 = vmatprep.subr.bf16.mxu0 0
      %1264 = vmatpush1.bf16.msra.mxu0 %v1241
      %1265 = vmatprep.subr.bf16.mxu0 0
      %1266 = vmatpush1.bf16.msra.mxu0 %v1242
      %1267 = vmatprep.subr.bf16.mxu0 0
      %1268 = vmatpush1.bf16.msra.mxu0 0
      %1269 = vmatprep.subr.bf16.mxu0 0
      %1270 = vmatpush1.bf16.msra.mxu0 0
      %1271 = vmatprep.subr.bf16.mxu0 0
      %1272 = vmatpush1.bf16.msra.mxu0 0
      %1273 = vmatprep.subr.bf16.mxu0 0
      %1274 = vmatpush1.bf16.msra.mxu0 0
      %1275 = vmatprep.subr.bf16.mxu0 0
      %1276 = vmatpush1.bf16.msra.mxu0 0
      %1277 = vmatprep.subr.bf16.mxu0 0
      %1278 = vmatpush1.bf16.msra.mxu0 0
      %1279 = vmatprep.subr.bf16.mxu0 0
      %1280 = vmatpush1.bf16.msra.mxu0 0
      %1281 = vmatprep.subr.bf16.mxu0 0
      %1282 = vmatpush1.bf16.msra.mxu0 0
      %1283 = vmatprep.mubr.bf16.mxu0 0
      %1284 = vmatmul.mubr.bf16.gmra.mrb[0].mxu0 %v1150
      %v1285 = vpop.f32.mrb[0].mxu0
      %v1286 = vadd.f32 0.0, %v1285
      %v1287 = vpop.f32.mrb[0].mxu0
      %v1288 = vpop.f32.mrb[0].mxu0
      %v1289 = vadd.f32 0.0, %v1288
      %v1290 = vpop.f32.mrb[0].mxu0
      %1291 = vmatprep.mubr.bf16.mxu0 0
      %1292 = vmatmul.mubr.bf16.gmra.mrb[0].mxu0 %v1152
      %v1293 = vpop.f32.mrb[0].mxu0
      %v1294 = vadd.f32 0.0, %v1293
      %v1295 = vpop.f32.mrb[0].mxu0
      %v1296 = vpop.f32.mrb[0].mxu0
      %v1297 = vadd.f32 0.0, %v1296
      %v1298 = vpop.f32.mrb[0].mxu0
      %1299 = vmatprep.mubr.bf16.mxu0 0
      %1300 = vmatmul.mubr.bf16.gmra.mrb[0].mxu0 %v1154
      %v1301 = vpop.f32.mrb[0].mxu0
      %v1302 = vadd.f32 0.0, %v1301
      %v1303 = vpop.f32.mrb[0].mxu0
      %v1304 = vpop.f32.mrb[0].mxu0
      %v1305 = vadd.f32 0.0, %v1304
      %v1306 = vpop.f32.mrb[0].mxu0
      %1307 = vmatprep.mubr.bf16.mxu0 0
      %1308 = vmatmul.mubr.bf16.gmra.mrb[0].mxu0 %v1156
      %v1309 = vpop.f32.mrb[0].mxu0
      %v1310 = vadd.f32 0.0, %v1309
      %v1311 = vpop.f32.mrb[0].mxu0
      %v1312 = vpop.f32.mrb[0].mxu0
      %v1313 = vadd.f32 0.0, %v1312
      %v1314 = vpop.f32.mrb[0].mxu0
      %1315 = vmatprep.mubr.bf16.mxu0 0
      %1316 = vmatmul.mubr.bf16.gmra.mrb[0].mxu0 %v1158
      %v1317 = vpop.f32.mrb[0].mxu0
      %v1318 = vadd.f32 0.0, %v1317
      %v1319 = vpop.f32.mrb[0].mxu0
      %v1320 = vpop.f32.mrb[0].mxu0
      %v1321 = vadd.f32 0.0, %v1320
      %v1322 = vpop.f32.mrb[0].mxu0
      %1323 = vmatprep.mubr.bf16.mxu0 0
      %1324 = vmatmul.mubr.bf16.gmra.mrb[0].mxu0 %v1160
      %v1325 = vpop.f32.mrb[0].mxu0
      %v1326 = vadd.f32 0.0, %v1325
      %v1327 = vpop.f32.mrb[0].mxu0
      %v1328 = vpop.f32.mrb[0].mxu0
      %v1329 = vadd.f32 0.0, %v1328
      %v1330 = vpop.f32.mrb[0].mxu0
      %1331 = vmatprep.mubr.bf16.mxu0 0
      %1332 = vmatmul.mubr.bf16.gmra.mrb[0].mxu0 %v1162
      %v1333 = vpop.f32.mrb[0].mxu0
      %v1334 = vadd.f32 0.0, %v1333
      %v1335 = vpop.f32.mrb[0].mxu0
      %v1336 = vpop.f32.mrb[0].mxu0
      %v1337 = vadd.f32 0.0, %v1336
      %v1338 = vpop.f32.mrb[0].mxu0
      %1339 = vmatprep.mubr.bf16.mxu0 0
      %1340 = vmatmul.mubr.bf16.gmra.mrb[0].mxu0 %v1164
      %v1341 = vpop.f32.mrb[0].mxu0
      %v1342 = vadd.f32 0.0, %v1341
      %v1343 = vpop.f32.mrb[0].mxu0
      %v1344 = vpop.f32.mrb[0].mxu0
      %v1345 = vadd.f32 0.0, %v1344
      %v1346 = vpop.f32.mrb[0].mxu0
      %1347 = vmatprep.mubr.bf16.mxu0 0
      %1348 = vmatmul.mubr.bf16.gmra.mrb[0].mxu0 %v1166
      %v1349 = vpop.f32.mrb[0].mxu0
      %v1350 = vadd.f32 0.0, %v1349
      %v1351 = vpop.f32.mrb[0].mxu0
      %v1352 = vpop.f32.mrb[0].mxu0
      %v1353 = vadd.f32 0.0, %v1352
      %v1354 = vpop.f32.mrb[0].mxu0
      %1355 = vmatprep.mubr.bf16.mxu0 0
      %1356 = vmatmul.mubr.bf16.gmra.mrb[0].mxu0 %v1168
      %v1357 = vpop.f32.mrb[0].mxu0
      %v1358 = vadd.f32 0.0, %v1357
      %v1359 = vpop.f32.mrb[0].mxu0
      %v1360 = vpop.f32.mrb[0].mxu0
      %v1361 = vadd.f32 0.0, %v1360
      %v1362 = vpop.f32.mrb[0].mxu0
      %1363 = vmatprep.mubr.bf16.mxu0 0
      %1364 = vmatmul.mubr.bf16.gmra.mrb[0].mxu0 %v1170
      %v1365 = vpop.f32.mrb[0].mxu0
      %v1366 = vadd.f32 0.0, %v1365
      %v1367 = vpop.f32.mrb[0].mxu0
      %v1368 = vpop.f32.mrb[0].mxu0
      %v1369 = vadd.f32 0.0, %v1368
      %v1370 = vpop.f32.mrb[0].mxu0
      %1371 = vmatprep.mubr.bf16.mxu0 0
      %1372 = vmatmul.mubr.bf16.gmra.mrb[0].mxu0 %v1172
      %v1373 = vpop.f32.mrb[0].mxu0
      %v1374 = vadd.f32 0.0, %v1373
      %v1375 = vpop.f32.mrb[0].mxu0
      %v1376 = vpop.f32.mrb[0].mxu0
      %v1377 = vadd.f32 0.0, %v1376
      %v1378 = vpop.f32.mrb[0].mxu0
      %1379 = vmatprep.mubr.bf16.mxu0 0
      %1380 = vmatmul.mubr.bf16.gmra.mrb[0].mxu0 %v1174
      %v1381 = vpop.f32.mrb[0].mxu0
      %v1382 = vadd.f32 0.0, %v1381
      %v1383 = vpop.f32.mrb[0].mxu0
      %v1384 = vpop.f32.mrb[0].mxu0
      %v1385 = vadd.f32 0.0, %v1384
      %v1386 = vpop.f32.mrb[0].mxu0
      %1387 = vmatprep.mubr.bf16.mxu0 0
      %1388 = vmatmul.mubr.bf16.gmra.mrb[0].mxu0 %v1176
      %v1389 = vpop.f32.mrb[0].mxu0
      %v1390 = vadd.f32 0.0, %v1389
      %v1391 = vpop.f32.mrb[0].mxu0
      %v1392 = vpop.f32.mrb[0].mxu0
      %v1393 = vadd.f32 0.0, %v1392
      %v1394 = vpop.f32.mrb[0].mxu0
      %1395 = vmatprep.mubr.bf16.mxu0 0
      %1396 = vmatmul.mubr.bf16.gmra.mrb[0].mxu0 %v1178
      %v1397 = vpop.f32.mrb[0].mxu0
      %v1398 = vadd.f32 0.0, %v1397
      %v1399 = vpop.f32.mrb[0].mxu0
      %v1400 = vpop.f32.mrb[0].mxu0
      %v1401 = vadd.f32 0.0, %v1400
      %v1402 = vpop.f32.mrb[0].mxu0
      %1403 = vmatprep.mubr.bf16.mxu0 0
      %1404 = vmatmul.mubr.bf16.gmra.mrb[0].mxu0 %v1180
      %v1405 = vpop.f32.mrb[0].mxu0
      %v1406 = vadd.f32 0.0, %v1405
      %v1407 = vpop.f32.mrb[0].mxu0
      %v1408 = vpop.f32.mrb[0].mxu0
      %v1409 = vadd.f32 0.0, %v1408
      %v1410 = vpop.f32.mrb[0].mxu0
      %1411 = vmatprep.mubr.bf16.mxu0 0
      %1412 = vmatmul.mubr.bf16.gmra.mrb[0].mxu0 %v1182
      %v1413 = vpop.f32.mrb[0].mxu0
      %v1414 = vadd.f32 0.0, %v1413
      %v1415 = vpop.f32.mrb[0].mxu0
      %v1416 = vpop.f32.mrb[0].mxu0
      %v1417 = vadd.f32 0.0, %v1416
      %v1418 = vpop.f32.mrb[0].mxu0
      %1419 = vmatprep.mubr.bf16.mxu0 0
      %1420 = vmatmul.mubr.bf16.gmra.mrb[0].mxu0 %v1184
      %v1421 = vpop.f32.mrb[0].mxu0
      %v1422 = vadd.f32 0.0, %v1421
      %v1423 = vpop.f32.mrb[0].mxu0
      %v1424 = vpop.f32.mrb[0].mxu0
      %v1425 = vadd.f32 0.0, %v1424
      %v1426 = vpop.f32.mrb[0].mxu0
      %1427 = vdwg.mxu0
      %v1428 = vadd.f32 %v984, %v1286
      %v1429 = vadd.f32 %v987, %v1289
      %v1430 = vadd.f32 %v992, %v1294
      %v1431 = vadd.f32 %v995, %v1297
      %v1432 = vadd.f32 %v1000, %v1302
      %v1433 = vadd.f32 %v1003, %v1305
      %v1434 = vadd.f32 %v1008, %v1310
      %v1435 = vadd.f32 %v1011, %v1313
      %v1436 = vadd.f32 %v1016, %v1318
      %v1437 = vadd.f32 %v1019, %v1321
      %v1438 = vadd.f32 %v1024, %v1326
      %v1439 = vadd.f32 %v1027, %v1329
      %v1440 = vadd.f32 %v1032, %v1334
      %v1441 = vadd.f32 %v1035, %v1337
      %v1442 = vadd.f32 %v1040, %v1342
      %v1443 = vadd.f32 %v1043, %v1345
      %v1444 = vadd.f32 %v1048, %v1350
      %v1445 = vadd.f32 %v1051, %v1353
      %v1446 = vadd.f32 %v1056, %v1358
      %v1447 = vadd.f32 %v1059, %v1361
      %v1448 = vadd.f32 %v1064, %v1366
      %v1449 = vadd.f32 %v1067, %v1369
      %v1450 = vadd.f32 %v1072, %v1374
      %v1451 = vadd.f32 %v1075, %v1377
      %v1452 = vadd.f32 %v1080, %v1382
      %v1453 = vadd.f32 %v1083, %v1385
      %v1454 = vadd.f32 %v1088, %v1390
      %v1455 = vadd.f32 %v1091, %v1393
      %v1456 = vadd.f32 %v1096, %v1398
      %v1457 = vadd.f32 %v1099, %v1401
      %v1458 = vadd.f32 %v1104, %v1406
      %v1459 = vadd.f32 %v1107, %v1409
      %v1460 = vadd.f32 %v1112, %v1414
      %v1461 = vadd.f32 %v1115, %v1417
      %v1462 = vadd.f32 %v1120, %v1422
      %v1463 = vadd.f32 %v1123, %v1425
      %v1464 = vld [vmem:[%s300 + $0x8] sm:$0xe]
      %v1465 = vld [vmem:[%s300 + $0xc] sm:$0xf]
      %v1466 = vld [vmem:[%s300 + $0x10] sm:$0xf]
      %v1467 = vld [vmem:[%s300 + $0x14] sm:$0xf]
      %v1468 = vld [vmem:[%s300 + $0x18] sm:$0xf]
      %v1469 = vld [vmem:[%s300 + $0x1c] sm:$0xf]
      %v1470 = vld [vmem:[%s300 + $0x20] sm:$0xf]
      %v1471 = vld [vmem:[%s300 + $0x24] sm:$0xf]
      %v1472 = vld [vmem:[%s300 + $0x28] sm:$0xf]
      %v1473 = vld [vmem:[%s300 + $0x2c] sm:$0xf]
      %v1474 = vld [vmem:[%s300 + $0x30] sm:$0xf]
      %v1475 = vld [vmem:[%s300 + $0x34] sm:$0xf]
      %v1476 = vld [vmem:[%s300 + $0x38] sm:$0xf]
      %v1477 = vld [vmem:[%s300 + $0x3c] sm:$0xf]
      %v1478 = vld [vmem:[%s300 + $0x40] sm:$0xf]
      %v1479 = vld [vmem:[%s300 + $0x44] sm:$0xf]
      %v1480 = vld [vmem:[%s300 + $0x48] sm:$0xf]
      %v1481 = vld [vmem:[%s300 + $0x4c] sm:$0xf]
      %v1482 = vld [vmem:[%s300 + $0x50] sm:$0xf]
      %v1483 = vld [vmem:[%s300 + $0x54] sm:$0xf]
      %v1484 = vld [vmem:[%s300 + $0x58] sm:$0xf]
      %v1485 = vld [vmem:[%s300 + $0x5c] sm:$0xf]
      %v1486 = vld [vmem:[%s300 + $0x60] sm:$0xf]
      %v1487 = vld [vmem:[%s300 + $0x64] sm:$0xf]
      %v1488 = vld [vmem:[%s300 + $0x68] sm:$0xf]
      %v1489 = vld [vmem:[%s300 + $0x6c] sm:$0xf]
      %v1490 = vld [vmem:[%s300 + $0x70] sm:$0xf]
      %v1491 = vld [vmem:[%s300 + $0x74] sm:$0xf]
      %v1492 = vld [vmem:[%s300 + $0x78] sm:$0xf]
      %v1493 = vld [vmem:[%s300 + $0x7c] sm:$0xf]
      %v1494 = vld [vmem:[%s300 + $0x80] sm:$0xf]
      %v1495 = vld [vmem:[%s300 + $0x84] sm:$0xf]
      %v1496 = vld [vmem:[%s300 + $0x88] sm:$0xf]
      %v1497 = vld [vmem:[%s300 + $0x8c] sm:$0xf]
      %v1498 = vld [vmem:[%s300 + $0x90] sm:$0xf]
      %v1499 = vld [vmem:[%s300 + $0x94] sm:$0xf]
      %v1500 = vld [vmem:[%s300 + $0x98] sm:$0x1]
      %s1501 = scalar_lea.vmem %s2, 192
      %v1502 = vld [vmem:[%s1501] sm:$0xf]
      %v1503 = vld [vmem:[%s1501 + $0x4] sm:$0xf]
      %v1504 = vld [vmem:[%s1501 + $0x8] sm:$0xf]
      %v1505 = vld [vmem:[%s1501 + $0xc] sm:$0xf]
      %v1506 = vld [vmem:[%s1501 + $0x10] sm:$0xf]
      %v1507 = vld [vmem:[%s1501 + $0x14] sm:$0xf]
      %v1508 = vld [vmem:[%s1501 + $0x18] sm:$0xf]
      %v1509 = vld [vmem:[%s1501 + $0x1c] sm:$0xf]
      %v1510 = vld [vmem:[%s1501 + $0x20] sm:$0xf]
      %v1511 = vld [vmem:[%s1501 + $0x24] sm:$0xf]
      %v1512 = vld [vmem:[%s1501 + $0x28] sm:$0xf]
      %v1513 = vld [vmem:[%s1501 + $0x2c] sm:$0xf]
      %v1514 = vld [vmem:[%s1501 + $0x30] sm:$0xf]
      %v1515 = vld [vmem:[%s1501 + $0x34] sm:$0xf]
      %v1516 = vld [vmem:[%s1501 + $0x38] sm:$0xf]
      %v1517 = vld [vmem:[%s1501 + $0x3c] sm:$0xf]
      %v1555 = vunpack.c.l.b16 %v1464
      %v1556 = vunpack.c.l.b16 %v1465
      %v1557 = vunpack.c.l.b16 %v1466
      %v1558 = vunpack.c.l.b16 %v1467
      %v1559 = vunpack.c.l.b16 %v1468
      %v1560 = vunpack.c.l.b16 %v1469
      %v1561 = vunpack.c.l.b16 %v1470
      %v1562 = vunpack.c.l.b16 %v1471
      %v1563 = vunpack.c.l.b16 %v1472
      %v1564 = vunpack.c.l.b16 %v1473
      %v1565 = vunpack.c.l.b16 %v1474
      %v1566 = vunpack.c.l.b16 %v1475
      %v1567 = vunpack.c.l.b16 %v1476
      %v1568 = vunpack.c.l.b16 %v1477
      %v1569 = vunpack.c.l.b16 %v1478
      %v1570 = vunpack.c.l.b16 %v1479
      %v1571 = vunpack.c.l.b16 %v1480
      %v1572 = vunpack.c.l.b16 %v1481
      %v1573 = vunpack.c.l.b16 %v1482
      %v1574 = vunpack.c.l.b16 %v1483
      %v1575 = vunpack.c.l.b16 %v1484
      %v1576 = vunpack.c.l.b16 %v1485
      %v1577 = vunpack.c.l.b16 %v1486
      %v1578 = vunpack.c.l.b16 %v1487
      %v1579 = vunpack.c.l.b16 %v1488
      %v1580 = vunpack.c.l.b16 %v1489
      %v1581 = vunpack.c.l.b16 %v1490
      %v1582 = vunpack.c.l.b16 %v1491
      %v1583 = vunpack.c.l.b16 %v1492
      %v1584 = vunpack.c.l.b16 %v1493
      %v1585 = vunpack.c.l.b16 %v1494
      %v1586 = vunpack.c.l.b16 %v1495
      %v1587 = vunpack.c.l.b16 %v1496
      %v1588 = vunpack.c.l.b16 %v1497
      %v1589 = vunpack.c.l.b16 %v1498
      %v1590 = vunpack.c.l.b16 %v1499
      %v1591 = vunpack.c.l.b16 %v1500
      %v1592 = vpack.c.b16 %v1556, %v1555
      %v1593 = vpack.c.b16 %v1558, %v1557
      %v1594 = vpack.c.b16 %v1560, %v1559
      %v1595 = vpack.c.b16 %v1562, %v1561
      %v1596 = vpack.c.b16 %v1564, %v1563
      %v1597 = vpack.c.b16 %v1566, %v1565
      %v1598 = vpack.c.b16 %v1568, %v1567
      %v1599 = vpack.c.b16 %v1570, %v1569
      %v1600 = vpack.c.b16 %v1572, %v1571
      %v1601 = vpack.c.b16 %v1574, %v1573
      %v1602 = vpack.c.b16 %v1576, %v1575
      %v1603 = vpack.c.b16 %v1578, %v1577
      %v1604 = vpack.c.b16 %v1580, %v1579
      %v1605 = vpack.c.b16 %v1582, %v1581
      %v1606 = vpack.c.b16 %v1584, %v1583
      %v1607 = vpack.c.b16 %v1586, %v1585
      %v1608 = vpack.c.b16 %v1588, %v1587
      %v1609 = vpack.c.b16 %v1590, %v1589
      %v1610 = vpack.c.b16 %v1591, %v1591
      %v1611 = vrot.slane %v1592, 1
      %v1612 = vrot.slane %v1593, 1
      %v1613 = vsel %vm1147, %v1611, %v1612
      %v1614 = vrot.slane %v1594, 1
      %v1615 = vsel %vm1147, %v1612, %v1614
      %v1616 = vrot.slane %v1595, 1
      %v1617 = vsel %vm1147, %v1614, %v1616
      %v1618 = vrot.slane %v1596, 1
      %v1619 = vsel %vm1147, %v1616, %v1618
      %v1620 = vrot.slane %v1597, 1
      %v1621 = vsel %vm1147, %v1618, %v1620
      %v1622 = vrot.slane %v1598, 1
      %v1623 = vsel %vm1147, %v1620, %v1622
      %v1624 = vrot.slane %v1599, 1
      %v1625 = vsel %vm1147, %v1622, %v1624
      %v1626 = vrot.slane %v1600, 1
      %v1627 = vsel %vm1147, %v1624, %v1626
      %v1628 = vrot.slane %v1601, 1
      %v1629 = vsel %vm1147, %v1626, %v1628
      %v1630 = vrot.slane %v1602, 1
      %v1631 = vsel %vm1147, %v1628, %v1630
      %v1632 = vrot.slane %v1603, 1
      %v1633 = vsel %vm1147, %v1630, %v1632
      %v1634 = vrot.slane %v1604, 1
      %v1635 = vsel %vm1147, %v1632, %v1634
      %v1636 = vrot.slane %v1605, 1
      %v1637 = vsel %vm1147, %v1634, %v1636
      %v1638 = vrot.slane %v1606, 1
      %v1639 = vsel %vm1147, %v1636, %v1638
      %v1640 = vrot.slane %v1607, 1
      %v1641 = vsel %vm1147, %v1638, %v1640
      %v1642 = vrot.slane %v1608, 1
      %v1643 = vsel %vm1147, %v1640, %v1642
      %v1644 = vrot.slane %v1609, 1
      %v1645 = vsel %vm1147, %v1642, %v1644
      %v1646 = vrot.slane %v1610, 1
      %v1647 = vsel %vm1147, %v1644, %v1646
      %v1682 = vunpack.c.l.b16 %v1502
      %v1683 = vunpack.c.l.b16 %v1503
      %v1684 = vunpack.c.l.b16 %v1504
      %v1685 = vunpack.c.l.b16 %v1505
      %v1686 = vunpack.c.l.b16 %v1506
      %v1687 = vunpack.c.l.b16 %v1507
      %v1688 = vunpack.c.l.b16 %v1508
      %v1689 = vunpack.c.l.b16 %v1509
      %v1690 = vunpack.c.l.b16 %v1510
      %v1691 = vunpack.c.l.b16 %v1511
      %v1692 = vunpack.c.l.b16 %v1512
      %v1693 = vunpack.c.l.b16 %v1513
      %v1694 = vunpack.c.l.b16 %v1514
      %v1695 = vunpack.c.l.b16 %v1515
      %v1696 = vunpack.c.l.b16 %v1516
      %v1697 = vunpack.c.l.b16 %v1517
      %v1698 = vpack.c.b16 %v1683, %v1682
      %v1699 = vpack.c.b16 %v1685, %v1684
      %v1700 = vpack.c.b16 %v1687, %v1686
      %v1701 = vpack.c.b16 %v1689, %v1688
      %v1702 = vpack.c.b16 %v1691, %v1690
      %v1703 = vpack.c.b16 %v1693, %v1692
      %v1704 = vpack.c.b16 %v1695, %v1694
      %v1705 = vpack.c.b16 %v1697, %v1696
      %1714 = vmatprep.subr.bf16.mxu0 0
      %1715 = vmatpush1.bf16.msra.mxu0 %v1698
      %1716 = vmatprep.subr.bf16.mxu0 0
      %1717 = vmatpush1.bf16.msra.mxu0 %v1699
      %1718 = vmatprep.subr.bf16.mxu0 0
      %1719 = vmatpush1.bf16.msra.mxu0 %v1700
      %1720 = vmatprep.subr.bf16.mxu0 0
      %1721 = vmatpush1.bf16.msra.mxu0 %v1701
      %1722 = vmatprep.subr.bf16.mxu0 0
      %1723 = vmatpush1.bf16.msra.mxu0 %v1702
      %1724 = vmatprep.subr.bf16.mxu0 0
      %1725 = vmatpush1.bf16.msra.mxu0 %v1703
      %1726 = vmatprep.subr.bf16.mxu0 0
      %1727 = vmatpush1.bf16.msra.mxu0 %v1704
      %1728 = vmatprep.subr.bf16.mxu0 0
      %1729 = vmatpush1.bf16.msra.mxu0 %v1705
      %1730 = vmatprep.subr.bf16.mxu0 0
      %1731 = vmatpush1.bf16.msra.mxu0 0
      %1732 = vmatprep.subr.bf16.mxu0 0
      %1733 = vmatpush1.bf16.msra.mxu0 0
      %1734 = vmatprep.subr.bf16.mxu0 0
      %1735 = vmatpush1.bf16.msra.mxu0 0
      %1736 = vmatprep.subr.bf16.mxu0 0
      %1737 = vmatpush1.bf16.msra.mxu0 0
      %1738 = vmatprep.subr.bf16.mxu0 0
      %1739 = vmatpush1.bf16.msra.mxu0 0
      %1740 = vmatprep.subr.bf16.mxu0 0
      %1741 = vmatpush1.bf16.msra.mxu0 0
      %1742 = vmatprep.subr.bf16.mxu0 0
      %1743 = vmatpush1.bf16.msra.mxu0 0
      %1744 = vmatprep.subr.bf16.mxu0 0
      %1745 = vmatpush1.bf16.msra.mxu0 0
      %1746 = vmatprep.mubr.bf16.mxu0 0
      %1747 = vmatmul.mubr.bf16.gmra.mrb[0].mxu0 %v1613
      %v1748 = vpop.f32.mrb[0].mxu0
      %v1749 = vadd.f32 0.0, %v1748
      %v1750 = vpop.f32.mrb[0].mxu0
      %v1751 = vpop.f32.mrb[0].mxu0
      %v1752 = vadd.f32 0.0, %v1751
      %v1753 = vpop.f32.mrb[0].mxu0
      %1754 = vmatprep.mubr.bf16.mxu0 0
      %1755 = vmatmul.mubr.bf16.gmra.mrb[0].mxu0 %v1615
      %v1756 = vpop.f32.mrb[0].mxu0
      %v1757 = vadd.f32 0.0, %v1756
      %v1758 = vpop.f32.mrb[0].mxu0
      %v1759 = vpop.f32.mrb[0].mxu0
      %v1760 = vadd.f32 0.0, %v1759
      %v1761 = vpop.f32.mrb[0].mxu0
      %1762 = vmatprep.mubr.bf16.mxu0 0
      %1763 = vmatmul.mubr.bf16.gmra.mrb[0].mxu0 %v1617
      %v1764 = vpop.f32.mrb[0].mxu0
      %v1765 = vadd.f32 0.0, %v1764
      %v1766 = vpop.f32.mrb[0].mxu0
      %v1767 = vpop.f32.mrb[0].mxu0
      %v1768 = vadd.f32 0.0, %v1767
      %v1769 = vpop.f32.mrb[0].mxu0
      %1770 = vmatprep.mubr.bf16.mxu0 0
      %1771 = vmatmul.mubr.bf16.gmra.mrb[0].mxu0 %v1619
      %v1772 = vpop.f32.mrb[0].mxu0
      %v1773 = vadd.f32 0.0, %v1772
      %v1774 = vpop.f32.mrb[0].mxu0
      %v1775 = vpop.f32.mrb[0].mxu0
      %v1776 = vadd.f32 0.0, %v1775
      %v1777 = vpop.f32.mrb[0].mxu0
      %1778 = vmatprep.mubr.bf16.mxu0 0
      %1779 = vmatmul.mubr.bf16.gmra.mrb[0].mxu0 %v1621
      %v1780 = vpop.f32.mrb[0].mxu0
      %v1781 = vadd.f32 0.0, %v1780
      %v1782 = vpop.f32.mrb[0].mxu0
      %v1783 = vpop.f32.mrb[0].mxu0
      %v1784 = vadd.f32 0.0, %v1783
      %v1785 = vpop.f32.mrb[0].mxu0
      %1786 = vmatprep.mubr.bf16.mxu0 0
      %1787 = vmatmul.mubr.bf16.gmra.mrb[0].mxu0 %v1623
      %v1788 = vpop.f32.mrb[0].mxu0
      %v1789 = vadd.f32 0.0, %v1788
      %v1790 = vpop.f32.mrb[0].mxu0
      %v1791 = vpop.f32.mrb[0].mxu0
      %v1792 = vadd.f32 0.0, %v1791
      %v1793 = vpop.f32.mrb[0].mxu0
      %1794 = vmatprep.mubr.bf16.mxu0 0
      %1795 = vmatmul.mubr.bf16.gmra.mrb[0].mxu0 %v1625
      %v1796 = vpop.f32.mrb[0].mxu0
      %v1797 = vadd.f32 0.0, %v1796
      %v1798 = vpop.f32.mrb[0].mxu0
      %v1799 = vpop.f32.mrb[0].mxu0
      %v1800 = vadd.f32 0.0, %v1799
      %v1801 = vpop.f32.mrb[0].mxu0
      %1802 = vmatprep.mubr.bf16.mxu0 0
      %1803 = vmatmul.mubr.bf16.gmra.mrb[0].mxu0 %v1627
      %v1804 = vpop.f32.mrb[0].mxu0
      %v1805 = vadd.f32 0.0, %v1804
      %v1806 = vpop.f32.mrb[0].mxu0
      %v1807 = vpop.f32.mrb[0].mxu0
      %v1808 = vadd.f32 0.0, %v1807
      %v1809 = vpop.f32.mrb[0].mxu0
      %1810 = vmatprep.mubr.bf16.mxu0 0
      %1811 = vmatmul.mubr.bf16.gmra.mrb[0].mxu0 %v1629
      %v1812 = vpop.f32.mrb[0].mxu0
      %v1813 = vadd.f32 0.0, %v1812
      %v1814 = vpop.f32.mrb[0].mxu0
      %v1815 = vpop.f32.mrb[0].mxu0
      %v1816 = vadd.f32 0.0, %v1815
      %v1817 = vpop.f32.mrb[0].mxu0
      %1818 = vmatprep.mubr.bf16.mxu0 0
      %1819 = vmatmul.mubr.bf16.gmra.mrb[0].mxu0 %v1631
      %v1820 = vpop.f32.mrb[0].mxu0
      %v1821 = vadd.f32 0.0, %v1820
      %v1822 = vpop.f32.mrb[0].mxu0
      %v1823 = vpop.f32.mrb[0].mxu0
      %v1824 = vadd.f32 0.0, %v1823
      %v1825 = vpop.f32.mrb[0].mxu0
      %1826 = vmatprep.mubr.bf16.mxu0 0
      %1827 = vmatmul.mubr.bf16.gmra.mrb[0].mxu0 %v1633
      %v1828 = vpop.f32.mrb[0].mxu0
      %v1829 = vadd.f32 0.0, %v1828
      %v1830 = vpop.f32.mrb[0].mxu0
      %v1831 = vpop.f32.mrb[0].mxu0
      %v1832 = vadd.f32 0.0, %v1831
      %v1833 = vpop.f32.mrb[0].mxu0
      %1834 = vmatprep.mubr.bf16.mxu0 0
      %1835 = vmatmul.mubr.bf16.gmra.mrb[0].mxu0 %v1635
      %v1836 = vpop.f32.mrb[0].mxu0
      %v1837 = vadd.f32 0.0, %v1836
      %v1838 = vpop.f32.mrb[0].mxu0
      %v1839 = vpop.f32.mrb[0].mxu0
      %v1840 = vadd.f32 0.0, %v1839
      %v1841 = vpop.f32.mrb[0].mxu0
      %1842 = vmatprep.mubr.bf16.mxu0 0
      %1843 = vmatmul.mubr.bf16.gmra.mrb[0].mxu0 %v1637
      %v1844 = vpop.f32.mrb[0].mxu0
      %v1845 = vadd.f32 0.0, %v1844
      %v1846 = vpop.f32.mrb[0].mxu0
      %v1847 = vpop.f32.mrb[0].mxu0
      %v1848 = vadd.f32 0.0, %v1847
      %v1849 = vpop.f32.mrb[0].mxu0
      %1850 = vmatprep.mubr.bf16.mxu0 0
      %1851 = vmatmul.mubr.bf16.gmra.mrb[0].mxu0 %v1639
      %v1852 = vpop.f32.mrb[0].mxu0
      %v1853 = vadd.f32 0.0, %v1852
      %v1854 = vpop.f32.mrb[0].mxu0
      %v1855 = vpop.f32.mrb[0].mxu0
      %v1856 = vadd.f32 0.0, %v1855
      %v1857 = vpop.f32.mrb[0].mxu0
      %1858 = vmatprep.mubr.bf16.mxu0 0
      %1859 = vmatmul.mubr.bf16.gmra.mrb[0].mxu0 %v1641
      %v1860 = vpop.f32.mrb[0].mxu0
      %v1861 = vadd.f32 0.0, %v1860
      %v1862 = vpop.f32.mrb[0].mxu0
      %v1863 = vpop.f32.mrb[0].mxu0
      %v1864 = vadd.f32 0.0, %v1863
      %v1865 = vpop.f32.mrb[0].mxu0
      %1866 = vmatprep.mubr.bf16.mxu0 0
      %1867 = vmatmul.mubr.bf16.gmra.mrb[0].mxu0 %v1643
      %v1868 = vpop.f32.mrb[0].mxu0
      %v1869 = vadd.f32 0.0, %v1868
      %v1870 = vpop.f32.mrb[0].mxu0
      %v1871 = vpop.f32.mrb[0].mxu0
      %v1872 = vadd.f32 0.0, %v1871
      %v1873 = vpop.f32.mrb[0].mxu0
      %1874 = vmatprep.mubr.bf16.mxu0 0
      %1875 = vmatmul.mubr.bf16.gmra.mrb[0].mxu0 %v1645
      %v1876 = vpop.f32.mrb[0].mxu0
      %v1877 = vadd.f32 0.0, %v1876
      %v1878 = vpop.f32.mrb[0].mxu0
      %v1879 = vpop.f32.mrb[0].mxu0
      %v1880 = vadd.f32 0.0, %v1879
      %v1881 = vpop.f32.mrb[0].mxu0
      %1882 = vmatprep.mubr.bf16.mxu0 0
      %1883 = vmatmul.mubr.bf16.gmra.mrb[0].mxu0 %v1647
      %v1884 = vpop.f32.mrb[0].mxu0
      %v1885 = vadd.f32 0.0, %v1884
      %v1886 = vpop.f32.mrb[0].mxu0
      %v1887 = vpop.f32.mrb[0].mxu0
      %v1888 = vadd.f32 0.0, %v1887
      %v1889 = vpop.f32.mrb[0].mxu0
      %1890 = vdwg.mxu0
      %v1891 = vadd.f32 %v1428, %v1749
      %v1892 = vadd.f32 %v1429, %v1752
      %v1893 = vadd.f32 %v1430, %v1757
      %v1894 = vadd.f32 %v1431, %v1760
      %v1895 = vadd.f32 %v1432, %v1765
      %v1896 = vadd.f32 %v1433, %v1768
      %v1897 = vadd.f32 %v1434, %v1773
      %v1898 = vadd.f32 %v1435, %v1776
      %v1899 = vadd.f32 %v1436, %v1781
      %v1900 = vadd.f32 %v1437, %v1784
      %v1901 = vadd.f32 %v1438, %v1789
      %v1902 = vadd.f32 %v1439, %v1792
      %v1903 = vadd.f32 %v1440, %v1797
      %v1904 = vadd.f32 %v1441, %v1800
      %v1905 = vadd.f32 %v1442, %v1805
      %v1906 = vadd.f32 %v1443, %v1808
      %v1907 = vadd.f32 %v1444, %v1813
      %v1908 = vadd.f32 %v1445, %v1816
      %v1909 = vadd.f32 %v1446, %v1821
      %v1910 = vadd.f32 %v1447, %v1824
      %v1911 = vadd.f32 %v1448, %v1829
      %v1912 = vadd.f32 %v1449, %v1832
      %v1913 = vadd.f32 %v1450, %v1837
      %v1914 = vadd.f32 %v1451, %v1840
      %v1915 = vadd.f32 %v1452, %v1845
      %v1916 = vadd.f32 %v1453, %v1848
      %v1917 = vadd.f32 %v1454, %v1853
      %v1918 = vadd.f32 %v1455, %v1856
      %v1919 = vadd.f32 %v1456, %v1861
      %v1920 = vadd.f32 %v1457, %v1864
      %v1921 = vadd.f32 %v1458, %v1869
      %v1922 = vadd.f32 %v1459, %v1872
      %v1923 = vadd.f32 %v1460, %v1877
      %v1924 = vadd.f32 %v1461, %v1880
      %v1925 = vadd.f32 %v1462, %v1885
      %v1926 = vadd.f32 %v1463, %v1888
      %v1927 = vld [vmem:[%s300 + $0x98] sm:$0x3]
      %s1928 = scalar_lea.vmem %s2, 256
      %v1929 = vld [vmem:[%s1928] sm:$0xf]
      %v1930 = vld [vmem:[%s1928 + $0x4] sm:$0xf]
      %v1931 = vld [vmem:[%s1928 + $0x8] sm:$0xf]
      %v1932 = vld [vmem:[%s1928 + $0xc] sm:$0xf]
      %v1933 = vld [vmem:[%s1928 + $0x10] sm:$0xf]
      %v1934 = vld [vmem:[%s1928 + $0x14] sm:$0xf]
      %v1935 = vld [vmem:[%s1928 + $0x18] sm:$0xf]
      %v1936 = vld [vmem:[%s1928 + $0x1c] sm:$0xf]
      %v1937 = vld [vmem:[%s1928 + $0x20] sm:$0xf]
      %v1938 = vld [vmem:[%s1928 + $0x24] sm:$0xf]
      %v1939 = vld [vmem:[%s1928 + $0x28] sm:$0xf]
      %v1940 = vld [vmem:[%s1928 + $0x2c] sm:$0xf]
      %v1941 = vld [vmem:[%s1928 + $0x30] sm:$0xf]
      %v1942 = vld [vmem:[%s1928 + $0x34] sm:$0xf]
      %v1943 = vld [vmem:[%s1928 + $0x38] sm:$0xf]
      %v1944 = vld [vmem:[%s1928 + $0x3c] sm:$0xf]
      %v1946 = vunpack.c.l.b16 %v1927
      %v1947 = vpack.c.b16 %v1946, %v1946
      %vm1948 = vsmask.f32 6400
      %v1950 = vshrl.u32 %v1592, 16
      %v1952 = vrot.slane %v1950, 1
      %v1953 = vshll.u32 %v1592, 16
      %v1955 = vrot.slane %v1953, 2
      %v1956 = vor.u32 %v1952, %v1955
      %v1958 = vshrl.u32 %v1593, 16
      %v1960 = vrot.slane %v1958, 1
      %v1961 = vshll.u32 %v1593, 16
      %v1963 = vrot.slane %v1961, 2
      %v1964 = vor.u32 %v1960, %v1963
      %v1965 = vsel %vm1948, %v1956, %v1964
      %v1967 = vshrl.u32 %v1594, 16
      %v1969 = vrot.slane %v1967, 1
      %v1970 = vshll.u32 %v1594, 16
      %v1972 = vrot.slane %v1970, 2
      %v1973 = vor.u32 %v1969, %v1972
      %v1974 = vsel %vm1948, %v1964, %v1973
      %v1976 = vshrl.u32 %v1595, 16
      %v1978 = vrot.slane %v1976, 1
      %v1979 = vshll.u32 %v1595, 16
      %v1981 = vrot.slane %v1979, 2
      %v1982 = vor.u32 %v1978, %v1981
      %v1983 = vsel %vm1948, %v1973, %v1982
      %v1985 = vshrl.u32 %v1596, 16
      %v1987 = vrot.slane %v1985, 1
      %v1988 = vshll.u32 %v1596, 16
      %v1990 = vrot.slane %v1988, 2
      %v1991 = vor.u32 %v1987, %v1990
      %v1992 = vsel %vm1948, %v1982, %v1991
      %v1994 = vshrl.u32 %v1597, 16
      %v1996 = vrot.slane %v1994, 1
      %v1997 = vshll.u32 %v1597, 16
      %v1999 = vrot.slane %v1997, 2
      %v2000 = vor.u32 %v1996, %v1999
      %v2001 = vsel %vm1948, %v1991, %v2000
      %v2003 = vshrl.u32 %v1598, 16
      %v2005 = vrot.slane %v2003, 1
      %v2006 = vshll.u32 %v1598, 16
      %v2008 = vrot.slane %v2006, 2
      %v2009 = vor.u32 %v2005, %v2008
      %v2010 = vsel %vm1948, %v2000, %v2009
      %v2012 = vshrl.u32 %v1599, 16
      %v2014 = vrot.slane %v2012, 1
      %v2015 = vshll.u32 %v1599, 16
      %v2017 = vrot.slane %v2015, 2
      %v2018 = vor.u32 %v2014, %v2017
      %v2019 = vsel %vm1948, %v2009, %v2018
      %v2021 = vshrl.u32 %v1600, 16
      %v2023 = vrot.slane %v2021, 1
      %v2024 = vshll.u32 %v1600, 16
      %v2026 = vrot.slane %v2024, 2
      %v2027 = vor.u32 %v2023, %v2026
      %v2028 = vsel %vm1948, %v2018, %v2027
      %v2030 = vshrl.u32 %v1601, 16
      %v2032 = vrot.slane %v2030, 1
      %v2033 = vshll.u32 %v1601, 16
      %v2035 = vrot.slane %v2033, 2
      %v2036 = vor.u32 %v2032, %v2035
      %v2037 = vsel %vm1948, %v2027, %v2036
      %v2039 = vshrl.u32 %v1602, 16
      %v2041 = vrot.slane %v2039, 1
      %v2042 = vshll.u32 %v1602, 16
      %v2044 = vrot.slane %v2042, 2
      %v2045 = vor.u32 %v2041, %v2044
      %v2046 = vsel %vm1948, %v2036, %v2045
      %v2048 = vshrl.u32 %v1603, 16
      %v2050 = vrot.slane %v2048, 1
      %v2051 = vshll.u32 %v1603, 16
      %v2053 = vrot.slane %v2051, 2
      %v2054 = vor.u32 %v2050, %v2053
      %v2055 = vsel %vm1948, %v2045, %v2054
      %v2057 = vshrl.u32 %v1604, 16
      %v2059 = vrot.slane %v2057, 1
      %v2060 = vshll.u32 %v1604, 16
      %v2062 = vrot.slane %v2060, 2
      %v2063 = vor.u32 %v2059, %v2062
      %v2064 = vsel %vm1948, %v2054, %v2063
      %v2066 = vshrl.u32 %v1605, 16
      %v2068 = vrot.slane %v2066, 1
      %v2069 = vshll.u32 %v1605, 16
      %v2071 = vrot.slane %v2069, 2
      %v2072 = vor.u32 %v2068, %v2071
      %v2073 = vsel %vm1948, %v2063, %v2072
      %v2075 = vshrl.u32 %v1606, 16
      %v2077 = vrot.slane %v2075, 1
      %v2078 = vshll.u32 %v1606, 16
      %v2080 = vrot.slane %v2078, 2
      %v2081 = vor.u32 %v2077, %v2080
      %v2082 = vsel %vm1948, %v2072, %v2081
      %v2084 = vshrl.u32 %v1607, 16
      %v2086 = vrot.slane %v2084, 1
      %v2087 = vshll.u32 %v1607, 16
      %v2089 = vrot.slane %v2087, 2
      %v2090 = vor.u32 %v2086, %v2089
      %v2091 = vsel %vm1948, %v2081, %v2090
      %v2093 = vshrl.u32 %v1608, 16
      %v2095 = vrot.slane %v2093, 1
      %v2096 = vshll.u32 %v1608, 16
      %v2098 = vrot.slane %v2096, 2
      %v2099 = vor.u32 %v2095, %v2098
      %v2100 = vsel %vm1948, %v2090, %v2099
      %v2102 = vshrl.u32 %v1609, 16
      %v2104 = vrot.slane %v2102, 1
      %v2105 = vshll.u32 %v1609, 16
      %v2107 = vrot.slane %v2105, 2
      %v2108 = vor.u32 %v2104, %v2107
      %v2109 = vsel %vm1948, %v2099, %v2108
      %v2111 = vshrl.u32 %v1947, 16
      %v2113 = vrot.slane %v2111, 1
      %v2114 = vshll.u32 %v1947, 16
      %v2116 = vrot.slane %v2114, 2
      %v2117 = vor.u32 %v2113, %v2116
      %v2118 = vsel %vm1948, %v2108, %v2117
      %v2153 = vunpack.c.l.b16 %v1929
      %v2154 = vunpack.c.l.b16 %v1930
      %v2155 = vunpack.c.l.b16 %v1931
      %v2156 = vunpack.c.l.b16 %v1932
      %v2157 = vunpack.c.l.b16 %v1933
      %v2158 = vunpack.c.l.b16 %v1934
      %v2159 = vunpack.c.l.b16 %v1935
      %v2160 = vunpack.c.l.b16 %v1936
      %v2161 = vunpack.c.l.b16 %v1937
      %v2162 = vunpack.c.l.b16 %v1938
      %v2163 = vunpack.c.l.b16 %v1939
      %v2164 = vunpack.c.l.b16 %v1940
      %v2165 = vunpack.c.l.b16 %v1941
      %v2166 = vunpack.c.l.b16 %v1942
      %v2167 = vunpack.c.l.b16 %v1943
      %v2168 = vunpack.c.l.b16 %v1944
      %v2169 = vpack.c.b16 %v2154, %v2153
      %v2170 = vpack.c.b16 %v2156, %v2155
      %v2171 = vpack.c.b16 %v2158, %v2157
      %v2172 = vpack.c.b16 %v2160, %v2159
      %v2173 = vpack.c.b16 %v2162, %v2161
      %v2174 = vpack.c.b16 %v2164, %v2163
      %v2175 = vpack.c.b16 %v2166, %v2165
      %v2176 = vpack.c.b16 %v2168, %v2167
      %2185 = vmatprep.subr.bf16.mxu0 0
      %2186 = vmatpush1.bf16.msra.mxu0 %v2169
      %2187 = vmatprep.subr.bf16.mxu0 0
      %2188 = vmatpush1.bf16.msra.mxu0 %v2170
      %2189 = vmatprep.subr.bf16.mxu0 0
      %2190 = vmatpush1.bf16.msra.mxu0 %v2171
      %2191 = vmatprep.subr.bf16.mxu0 0
      %2192 = vmatpush1.bf16.msra.mxu0 %v2172
      %2193 = vmatprep.subr.bf16.mxu0 0
      %2194 = vmatpush1.bf16.msra.mxu0 %v2173
      %2195 = vmatprep.subr.bf16.mxu0 0
      %2196 = vmatpush1.bf16.msra.mxu0 %v2174
      %2197 = vmatprep.subr.bf16.mxu0 0
      %2198 = vmatpush1.bf16.msra.mxu0 %v2175
      %2199 = vmatprep.subr.bf16.mxu0 0
      %2200 = vmatpush1.bf16.msra.mxu0 %v2176
      %2201 = vmatprep.subr.bf16.mxu0 0
      %2202 = vmatpush1.bf16.msra.mxu0 0
      %2203 = vmatprep.subr.bf16.mxu0 0
      %2204 = vmatpush1.bf16.msra.mxu0 0
      %2205 = vmatprep.subr.bf16.mxu0 0
      %2206 = vmatpush1.bf16.msra.mxu0 0
      %2207 = vmatprep.subr.bf16.mxu0 0
      %2208 = vmatpush1.bf16.msra.mxu0 0
      %2209 = vmatprep.subr.bf16.mxu0 0
      %2210 = vmatpush1.bf16.msra.mxu0 0
      %2211 = vmatprep.subr.bf16.mxu0 0
      %2212 = vmatpush1.bf16.msra.mxu0 0
      %2213 = vmatprep.subr.bf16.mxu0 0
      %2214 = vmatpush1.bf16.msra.mxu0 0
      %2215 = vmatprep.subr.bf16.mxu0 0
      %2216 = vmatpush1.bf16.msra.mxu0 0
      %2217 = vmatprep.mubr.bf16.mxu0 0
      %2218 = vmatmul.mubr.bf16.gmra.mrb[0].mxu0 %v1965
      %v2219 = vpop.f32.mrb[0].mxu0
      %v2220 = vadd.f32 0.0, %v2219
      %v2221 = vpop.f32.mrb[0].mxu0
      %v2222 = vpop.f32.mrb[0].mxu0
      %v2223 = vadd.f32 0.0, %v2222
      %v2224 = vpop.f32.mrb[0].mxu0
      %2225 = vmatprep.mubr.bf16.mxu0 0
      %2226 = vmatmul.mubr.bf16.gmra.mrb[0].mxu0 %v1974
      %v2227 = vpop.f32.mrb[0].mxu0
      %v2228 = vadd.f32 0.0, %v2227
      %v2229 = vpop.f32.mrb[0].mxu0
      %v2230 = vpop.f32.mrb[0].mxu0
      %v2231 = vadd.f32 0.0, %v2230
      %v2232 = vpop.f32.mrb[0].mxu0
      %2233 = vmatprep.mubr.bf16.mxu0 0
      %2234 = vmatmul.mubr.bf16.gmra.mrb[0].mxu0 %v1983
      %v2235 = vpop.f32.mrb[0].mxu0
      %v2236 = vadd.f32 0.0, %v2235
      %v2237 = vpop.f32.mrb[0].mxu0
      %v2238 = vpop.f32.mrb[0].mxu0
      %v2239 = vadd.f32 0.0, %v2238
      %v2240 = vpop.f32.mrb[0].mxu0
      %2241 = vmatprep.mubr.bf16.mxu0 0
      %2242 = vmatmul.mubr.bf16.gmra.mrb[0].mxu0 %v1992
      %v2243 = vpop.f32.mrb[0].mxu0
      %v2244 = vadd.f32 0.0, %v2243
      %v2245 = vpop.f32.mrb[0].mxu0
      %v2246 = vpop.f32.mrb[0].mxu0
      %v2247 = vadd.f32 0.0, %v2246
      %v2248 = vpop.f32.mrb[0].mxu0
      %2249 = vmatprep.mubr.bf16.mxu0 0
      %2250 = vmatmul.mubr.bf16.gmra.mrb[0].mxu0 %v2001
      %v2251 = vpop.f32.mrb[0].mxu0
      %v2252 = vadd.f32 0.0, %v2251
      %v2253 = vpop.f32.mrb[0].mxu0
      %v2254 = vpop.f32.mrb[0].mxu0
      %v2255 = vadd.f32 0.0, %v2254
      %v2256 = vpop.f32.mrb[0].mxu0
      %2257 = vmatprep.mubr.bf16.mxu0 0
      %2258 = vmatmul.mubr.bf16.gmra.mrb[0].mxu0 %v2010
      %v2259 = vpop.f32.mrb[0].mxu0
      %v2260 = vadd.f32 0.0, %v2259
      %v2261 = vpop.f32.mrb[0].mxu0
      %v2262 = vpop.f32.mrb[0].mxu0
      %v2263 = vadd.f32 0.0, %v2262
      %v2264 = vpop.f32.mrb[0].mxu0
      %2265 = vmatprep.mubr.bf16.mxu0 0
      %2266 = vmatmul.mubr.bf16.gmra.mrb[0].mxu0 %v2019
      %v2267 = vpop.f32.mrb[0].mxu0
      %v2268 = vadd.f32 0.0, %v2267
      %v2269 = vpop.f32.mrb[0].mxu0
      %v2270 = vpop.f32.mrb[0].mxu0
      %v2271 = vadd.f32 0.0, %v2270
      %v2272 = vpop.f32.mrb[0].mxu0
      %2273 = vmatprep.mubr.bf16.mxu0 0
      %2274 = vmatmul.mubr.bf16.gmra.mrb[0].mxu0 %v2028
      %v2275 = vpop.f32.mrb[0].mxu0
      %v2276 = vadd.f32 0.0, %v2275
      %v2277 = vpop.f32.mrb[0].mxu0
      %v2278 = vpop.f32.mrb[0].mxu0
      %v2279 = vadd.f32 0.0, %v2278
      %v2280 = vpop.f32.mrb[0].mxu0
      %2281 = vmatprep.mubr.bf16.mxu0 0
      %2282 = vmatmul.mubr.bf16.gmra.mrb[0].mxu0 %v2037
      %v2283 = vpop.f32.mrb[0].mxu0
      %v2284 = vadd.f32 0.0, %v2283
      %v2285 = vpop.f32.mrb[0].mxu0
      %v2286 = vpop.f32.mrb[0].mxu0
      %v2287 = vadd.f32 0.0, %v2286
      %v2288 = vpop.f32.mrb[0].mxu0
      %2289 = vmatprep.mubr.bf16.mxu0 0
      %2290 = vmatmul.mubr.bf16.gmra.mrb[0].mxu0 %v2046
      %v2291 = vpop.f32.mrb[0].mxu0
      %v2292 = vadd.f32 0.0, %v2291
      %v2293 = vpop.f32.mrb[0].mxu0
      %v2294 = vpop.f32.mrb[0].mxu0
      %v2295 = vadd.f32 0.0, %v2294
      %v2296 = vpop.f32.mrb[0].mxu0
      %2297 = vmatprep.mubr.bf16.mxu0 0
      %2298 = vmatmul.mubr.bf16.gmra.mrb[0].mxu0 %v2055
      %v2299 = vpop.f32.mrb[0].mxu0
      %v2300 = vadd.f32 0.0, %v2299
      %v2301 = vpop.f32.mrb[0].mxu0
      %v2302 = vpop.f32.mrb[0].mxu0
      %v2303 = vadd.f32 0.0, %v2302
      %v2304 = vpop.f32.mrb[0].mxu0
      %2305 = vmatprep.mubr.bf16.mxu0 0
      %2306 = vmatmul.mubr.bf16.gmra.mrb[0].mxu0 %v2064
      %v2307 = vpop.f32.mrb[0].mxu0
      %v2308 = vadd.f32 0.0, %v2307
      %v2309 = vpop.f32.mrb[0].mxu0
      %v2310 = vpop.f32.mrb[0].mxu0
      %v2311 = vadd.f32 0.0, %v2310
      %v2312 = vpop.f32.mrb[0].mxu0
      %2313 = vmatprep.mubr.bf16.mxu0 0
      %2314 = vmatmul.mubr.bf16.gmra.mrb[0].mxu0 %v2073
      %v2315 = vpop.f32.mrb[0].mxu0
      %v2316 = vadd.f32 0.0, %v2315
      %v2317 = vpop.f32.mrb[0].mxu0
      %v2318 = vpop.f32.mrb[0].mxu0
      %v2319 = vadd.f32 0.0, %v2318
      %v2320 = vpop.f32.mrb[0].mxu0
      %2321 = vmatprep.mubr.bf16.mxu0 0
      %2322 = vmatmul.mubr.bf16.gmra.mrb[0].mxu0 %v2082
      %v2323 = vpop.f32.mrb[0].mxu0
      %v2324 = vadd.f32 0.0, %v2323
      %v2325 = vpop.f32.mrb[0].mxu0
      %v2326 = vpop.f32.mrb[0].mxu0
      %v2327 = vadd.f32 0.0, %v2326
      %v2328 = vpop.f32.mrb[0].mxu0
      %2329 = vmatprep.mubr.bf16.mxu0 0
      %2330 = vmatmul.mubr.bf16.gmra.mrb[0].mxu0 %v2091
      %v2331 = vpop.f32.mrb[0].mxu0
      %v2332 = vadd.f32 0.0, %v2331
      %v2333 = vpop.f32.mrb[0].mxu0
      %v2334 = vpop.f32.mrb[0].mxu0
      %v2335 = vadd.f32 0.0, %v2334
      %v2336 = vpop.f32.mrb[0].mxu0
      %2337 = vmatprep.mubr.bf16.mxu0 0
      %2338 = vmatmul.mubr.bf16.gmra.mrb[0].mxu0 %v2100
      %v2339 = vpop.f32.mrb[0].mxu0
      %v2340 = vadd.f32 0.0, %v2339
      %v2341 = vpop.f32.mrb[0].mxu0
      %v2342 = vpop.f32.mrb[0].mxu0
      %v2343 = vadd.f32 0.0, %v2342
      %v2344 = vpop.f32.mrb[0].mxu0
      %2345 = vmatprep.mubr.bf16.mxu0 0
      %2346 = vmatmul.mubr.bf16.gmra.mrb[0].mxu0 %v2109
      %v2347 = vpop.f32.mrb[0].mxu0
      %v2348 = vadd.f32 0.0, %v2347
      %v2349 = vpop.f32.mrb[0].mxu0
      %v2350 = vpop.f32.mrb[0].mxu0
      %v2351 = vadd.f32 0.0, %v2350
      %v2352 = vpop.f32.mrb[0].mxu0
      %2353 = vmatprep.mubr.bf16.mxu0 0
      %2354 = vmatmul.mubr.bf16.gmra.mrb[0].mxu0 %v2118
      %v2355 = vpop.f32.mrb[0].mxu0
      %v2356 = vadd.f32 0.0, %v2355
      %v2357 = vpop.f32.mrb[0].mxu0
      %v2358 = vpop.f32.mrb[0].mxu0
      %v2359 = vadd.f32 0.0, %v2358
      %v2360 = vpop.f32.mrb[0].mxu0
      %2361 = vdwg.mxu0
      %v2362 = vadd.f32 %v1891, %v2220
      %v2363 = vadd.f32 %v1892, %v2223
      %v2364 = vadd.f32 %v1893, %v2228
      %v2365 = vadd.f32 %v1894, %v2231
      %v2366 = vadd.f32 %v1895, %v2236
      %v2367 = vadd.f32 %v1896, %v2239
      %v2368 = vadd.f32 %v1897, %v2244
      %v2369 = vadd.f32 %v1898, %v2247
      %v2370 = vadd.f32 %v1899, %v2252
      %v2371 = vadd.f32 %v1900, %v2255
      %v2372 = vadd.f32 %v1901, %v2260
      %v2373 = vadd.f32 %v1902, %v2263
      %v2374 = vadd.f32 %v1903, %v2268
      %v2375 = vadd.f32 %v1904, %v2271
      %v2376 = vadd.f32 %v1905, %v2276
      %v2377 = vadd.f32 %v1906, %v2279
      %v2378 = vadd.f32 %v1907, %v2284
      %v2379 = vadd.f32 %v1908, %v2287
      %v2380 = vadd.f32 %v1909, %v2292
      %v2381 = vadd.f32 %v1910, %v2295
      %v2382 = vadd.f32 %v1911, %v2300
      %v2383 = vadd.f32 %v1912, %v2303
      %v2384 = vadd.f32 %v1913, %v2308
      %v2385 = vadd.f32 %v1914, %v2311
      %v2386 = vadd.f32 %v1915, %v2316
      %v2387 = vadd.f32 %v1916, %v2319
      %v2388 = vadd.f32 %v1917, %v2324
      %v2389 = vadd.f32 %v1918, %v2327
      %v2390 = vadd.f32 %v1919, %v2332
      %v2391 = vadd.f32 %v1920, %v2335
      %v2392 = vadd.f32 %v1921, %v2340
      %v2393 = vadd.f32 %v1922, %v2343
      %v2394 = vadd.f32 %v1923, %v2348
      %v2395 = vadd.f32 %v1924, %v2351
      %v2396 = vadd.f32 %v1925, %v2356
      %v2397 = vadd.f32 %v1926, %v2359
      %v2398 = vld [vmem:[%s300 + $0x8] sm:$0xc]
      %s2399 = scalar_lea.vmem %s2, 320
      %v2400 = vld [vmem:[%s2399] sm:$0xf]
      %v2401 = vld [vmem:[%s2399 + $0x4] sm:$0xf]
      %v2402 = vld [vmem:[%s2399 + $0x8] sm:$0xf]
      %v2403 = vld [vmem:[%s2399 + $0xc] sm:$0xf]
      %v2404 = vld [vmem:[%s2399 + $0x10] sm:$0xf]
      %v2405 = vld [vmem:[%s2399 + $0x14] sm:$0xf]
      %v2406 = vld [vmem:[%s2399 + $0x18] sm:$0xf]
      %v2407 = vld [vmem:[%s2399 + $0x1c] sm:$0xf]
      %v2408 = vld [vmem:[%s2399 + $0x20] sm:$0xf]
      %v2409 = vld [vmem:[%s2399 + $0x24] sm:$0xf]
      %v2410 = vld [vmem:[%s2399 + $0x28] sm:$0xf]
      %v2411 = vld [vmem:[%s2399 + $0x2c] sm:$0xf]
      %v2412 = vld [vmem:[%s2399 + $0x30] sm:$0xf]
      %v2413 = vld [vmem:[%s2399 + $0x34] sm:$0xf]
      %v2414 = vld [vmem:[%s2399 + $0x38] sm:$0xf]
      %v2415 = vld [vmem:[%s2399 + $0x3c] sm:$0xf]
      %v2417 = vunpack.c.l.b16 %v2398
      %v2418 = vpack.c.b16 %v1556, %v2417
      %vm2419 = vcmask 1045504
      %v2420 = vrot.slane %v2418, 2
      %v2421 = vrot.slane %v1593, 2
      %v2422 = vsel %vm2419, %v2420, %v2421
      %v2423 = vrot.slane %v1594, 2
      %v2424 = vsel %vm2419, %v2421, %v2423
      %v2425 = vrot.slane %v1595, 2
      %v2426 = vsel %vm2419, %v2423, %v2425
      %v2427 = vrot.slane %v1596, 2
      %v2428 = vsel %vm2419, %v2425, %v2427
      %v2429 = vrot.slane %v1597, 2
      %v2430 = vsel %vm2419, %v2427, %v2429
      %v2431 = vrot.slane %v1598, 2
      %v2432 = vsel %vm2419, %v2429, %v2431
      %v2433 = vrot.slane %v1599, 2
      %v2434 = vsel %vm2419, %v2431, %v2433
      %v2435 = vrot.slane %v1600, 2
      %v2436 = vsel %vm2419, %v2433, %v2435
      %v2437 = vrot.slane %v1601, 2
      %v2438 = vsel %vm2419, %v2435, %v2437
      %v2439 = vrot.slane %v1602, 2
      %v2440 = vsel %vm2419, %v2437, %v2439
      %v2441 = vrot.slane %v1603, 2
      %v2442 = vsel %vm2419, %v2439, %v2441
      %v2443 = vrot.slane %v1604, 2
      %v2444 = vsel %vm2419, %v2441, %v2443
      %v2445 = vrot.slane %v1605, 2
      %v2446 = vsel %vm2419, %v2443, %v2445
      %v2447 = vrot.slane %v1606, 2
      %v2448 = vsel %vm2419, %v2445, %v2447
      %v2449 = vrot.slane %v1607, 2
      %v2450 = vsel %vm2419, %v2447, %v2449
      %v2451 = vrot.slane %v1608, 2
      %v2452 = vsel %vm2419, %v2449, %v2451
      %v2453 = vrot.slane %v1609, 2
      %v2454 = vsel %vm2419, %v2451, %v2453
      %v2455 = vrot.slane %v1947, 2
      %v2456 = vsel %vm2419, %v2453, %v2455
      %v2491 = vunpack.c.l.b16 %v2400
      %v2492 = vunpack.c.l.b16 %v2401
      %v2493 = vunpack.c.l.b16 %v2402
      %v2494 = vunpack.c.l.b16 %v2403
      %v2495 = vunpack.c.l.b16 %v2404
      %v2496 = vunpack.c.l.b16 %v2405
      %v2497 = vunpack.c.l.b16 %v2406
      %v2498 = vunpack.c.l.b16 %v2407
      %v2499 = vunpack.c.l.b16 %v2408
      %v2500 = vunpack.c.l.b16 %v2409
      %v2501 = vunpack.c.l.b16 %v2410
      %v2502 = vunpack.c.l.b16 %v2411
      %v2503 = vunpack.c.l.b16 %v2412
      %v2504 = vunpack.c.l.b16 %v2413
      %v2505 = vunpack.c.l.b16 %v2414
      %v2506 = vunpack.c.l.b16 %v2415
      %v2507 = vpack.c.b16 %v2492, %v2491
      %v2508 = vpack.c.b16 %v2494, %v2493
      %v2509 = vpack.c.b16 %v2496, %v2495
      %v2510 = vpack.c.b16 %v2498, %v2497
      %v2511 = vpack.c.b16 %v2500, %v2499
      %v2512 = vpack.c.b16 %v2502, %v2501
      %v2513 = vpack.c.b16 %v2504, %v2503
      %v2514 = vpack.c.b16 %v2506, %v2505
      %2523 = vmatprep.subr.bf16.mxu0 0
      %2524 = vmatpush1.bf16.msra.mxu0 %v2507
      %2525 = vmatprep.subr.bf16.mxu0 0
      %2526 = vmatpush1.bf16.msra.mxu0 %v2508
      %2527 = vmatprep.subr.bf16.mxu0 0
      %2528 = vmatpush1.bf16.msra.mxu0 %v2509
      %2529 = vmatprep.subr.bf16.mxu0 0
      %2530 = vmatpush1.bf16.msra.mxu0 %v2510
      %2531 = vmatprep.subr.bf16.mxu0 0
      %2532 = vmatpush1.bf16.msra.mxu0 %v2511
      %2533 = vmatprep.subr.bf16.mxu0 0
      %2534 = vmatpush1.bf16.msra.mxu0 %v2512
      %2535 = vmatprep.subr.bf16.mxu0 0
      %2536 = vmatpush1.bf16.msra.mxu0 %v2513
      %2537 = vmatprep.subr.bf16.mxu0 0
      %2538 = vmatpush1.bf16.msra.mxu0 %v2514
      %2539 = vmatprep.subr.bf16.mxu0 0
      %2540 = vmatpush1.bf16.msra.mxu0 0
      %2541 = vmatprep.subr.bf16.mxu0 0
      %2542 = vmatpush1.bf16.msra.mxu0 0
      %2543 = vmatprep.subr.bf16.mxu0 0
      %2544 = vmatpush1.bf16.msra.mxu0 0
      %2545 = vmatprep.subr.bf16.mxu0 0
      %2546 = vmatpush1.bf16.msra.mxu0 0
      %2547 = vmatprep.subr.bf16.mxu0 0
      %2548 = vmatpush1.bf16.msra.mxu0 0
      %2549 = vmatprep.subr.bf16.mxu0 0
      %2550 = vmatpush1.bf16.msra.mxu0 0
      %2551 = vmatprep.subr.bf16.mxu0 0
      %2552 = vmatpush1.bf16.msra.mxu0 0
      %2553 = vmatprep.subr.bf16.mxu0 0
      %2554 = vmatpush1.bf16.msra.mxu0 0
      %2555 = vmatprep.mubr.bf16.mxu0 0
      %2556 = vmatmul.mubr.bf16.gmra.mrb[0].mxu0 %v2422
      %v2557 = vpop.f32.mrb[0].mxu0
      %v2558 = vadd.f32 0.0, %v2557
      %v2559 = vpop.f32.mrb[0].mxu0
      %v2560 = vpop.f32.mrb[0].mxu0
      %v2561 = vadd.f32 0.0, %v2560
      %v2562 = vpop.f32.mrb[0].mxu0
      %2563 = vmatprep.mubr.bf16.mxu0 0
      %2564 = vmatmul.mubr.bf16.gmra.mrb[0].mxu0 %v2424
      %v2565 = vpop.f32.mrb[0].mxu0
      %v2566 = vadd.f32 0.0, %v2565
      %v2567 = vpop.f32.mrb[0].mxu0
      %v2568 = vpop.f32.mrb[0].mxu0
      %v2569 = vadd.f32 0.0, %v2568
      %v2570 = vpop.f32.mrb[0].mxu0
      %2571 = vmatprep.mubr.bf16.mxu0 0
      %2572 = vmatmul.mubr.bf16.gmra.mrb[0].mxu0 %v2426
      %v2573 = vpop.f32.mrb[0].mxu0
      %v2574 = vadd.f32 0.0, %v2573
      %v2575 = vpop.f32.mrb[0].mxu0
      %v2576 = vpop.f32.mrb[0].mxu0
      %v2577 = vadd.f32 0.0, %v2576
      %v2578 = vpop.f32.mrb[0].mxu0
      %2579 = vmatprep.mubr.bf16.mxu0 0
      %2580 = vmatmul.mubr.bf16.gmra.mrb[0].mxu0 %v2428
      %v2581 = vpop.f32.mrb[0].mxu0
      %v2582 = vadd.f32 0.0, %v2581
      %v2583 = vpop.f32.mrb[0].mxu0
      %v2584 = vpop.f32.mrb[0].mxu0
      %v2585 = vadd.f32 0.0, %v2584
      %v2586 = vpop.f32.mrb[0].mxu0
      %2587 = vmatprep.mubr.bf16.mxu0 0
      %2588 = vmatmul.mubr.bf16.gmra.mrb[0].mxu0 %v2430
      %v2589 = vpop.f32.mrb[0].mxu0
      %v2590 = vadd.f32 0.0, %v2589
      %v2591 = vpop.f32.mrb[0].mxu0
      %v2592 = vpop.f32.mrb[0].mxu0
      %v2593 = vadd.f32 0.0, %v2592
      %v2594 = vpop.f32.mrb[0].mxu0
      %2595 = vmatprep.mubr.bf16.mxu0 0
      %2596 = vmatmul.mubr.bf16.gmra.mrb[0].mxu0 %v2432
      %v2597 = vpop.f32.mrb[0].mxu0
      %v2598 = vadd.f32 0.0, %v2597
      %v2599 = vpop.f32.mrb[0].mxu0
      %v2600 = vpop.f32.mrb[0].mxu0
      %v2601 = vadd.f32 0.0, %v2600
      %v2602 = vpop.f32.mrb[0].mxu0
      %2603 = vmatprep.mubr.bf16.mxu0 0
      %2604 = vmatmul.mubr.bf16.gmra.mrb[0].mxu0 %v2434
      %v2605 = vpop.f32.mrb[0].mxu0
      %v2606 = vadd.f32 0.0, %v2605
      %v2607 = vpop.f32.mrb[0].mxu0
      %v2608 = vpop.f32.mrb[0].mxu0
      %v2609 = vadd.f32 0.0, %v2608
      %v2610 = vpop.f32.mrb[0].mxu0
      %2611 = vmatprep.mubr.bf16.mxu0 0
      %2612 = vmatmul.mubr.bf16.gmra.mrb[0].mxu0 %v2436
      %v2613 = vpop.f32.mrb[0].mxu0
      %v2614 = vadd.f32 0.0, %v2613
      %v2615 = vpop.f32.mrb[0].mxu0
      %v2616 = vpop.f32.mrb[0].mxu0
      %v2617 = vadd.f32 0.0, %v2616
      %v2618 = vpop.f32.mrb[0].mxu0
      %2619 = vmatprep.mubr.bf16.mxu0 0
      %2620 = vmatmul.mubr.bf16.gmra.mrb[0].mxu0 %v2438
      %v2621 = vpop.f32.mrb[0].mxu0
      %v2622 = vadd.f32 0.0, %v2621
      %v2623 = vpop.f32.mrb[0].mxu0
      %v2624 = vpop.f32.mrb[0].mxu0
      %v2625 = vadd.f32 0.0, %v2624
      %v2626 = vpop.f32.mrb[0].mxu0
      %2627 = vmatprep.mubr.bf16.mxu0 0
      %2628 = vmatmul.mubr.bf16.gmra.mrb[0].mxu0 %v2440
      %v2629 = vpop.f32.mrb[0].mxu0
      %v2630 = vadd.f32 0.0, %v2629
      %v2631 = vpop.f32.mrb[0].mxu0
      %v2632 = vpop.f32.mrb[0].mxu0
      %v2633 = vadd.f32 0.0, %v2632
      %v2634 = vpop.f32.mrb[0].mxu0
      %2635 = vmatprep.mubr.bf16.mxu0 0
      %2636 = vmatmul.mubr.bf16.gmra.mrb[0].mxu0 %v2442
      %v2637 = vpop.f32.mrb[0].mxu0
      %v2638 = vadd.f32 0.0, %v2637
      %v2639 = vpop.f32.mrb[0].mxu0
      %v2640 = vpop.f32.mrb[0].mxu0
      %v2641 = vadd.f32 0.0, %v2640
      %v2642 = vpop.f32.mrb[0].mxu0
      %2643 = vmatprep.mubr.bf16.mxu0 0
      %2644 = vmatmul.mubr.bf16.gmra.mrb[0].mxu0 %v2444
      %v2645 = vpop.f32.mrb[0].mxu0
      %v2646 = vadd.f32 0.0, %v2645
      %v2647 = vpop.f32.mrb[0].mxu0
      %v2648 = vpop.f32.mrb[0].mxu0
      %v2649 = vadd.f32 0.0, %v2648
      %v2650 = vpop.f32.mrb[0].mxu0
      %2651 = vmatprep.mubr.bf16.mxu0 0
      %2652 = vmatmul.mubr.bf16.gmra.mrb[0].mxu0 %v2446
      %v2653 = vpop.f32.mrb[0].mxu0
      %v2654 = vadd.f32 0.0, %v2653
      %v2655 = vpop.f32.mrb[0].mxu0
      %v2656 = vpop.f32.mrb[0].mxu0
      %v2657 = vadd.f32 0.0, %v2656
      %v2658 = vpop.f32.mrb[0].mxu0
      %2659 = vmatprep.mubr.bf16.mxu0 0
      %2660 = vmatmul.mubr.bf16.gmra.mrb[0].mxu0 %v2448
      %v2661 = vpop.f32.mrb[0].mxu0
      %v2662 = vadd.f32 0.0, %v2661
      %v2663 = vpop.f32.mrb[0].mxu0
      %v2664 = vpop.f32.mrb[0].mxu0
      %v2665 = vadd.f32 0.0, %v2664
      %v2666 = vpop.f32.mrb[0].mxu0
      %2667 = vmatprep.mubr.bf16.mxu0 0
      %2668 = vmatmul.mubr.bf16.gmra.mrb[0].mxu0 %v2450
      %v2669 = vpop.f32.mrb[0].mxu0
      %v2670 = vadd.f32 0.0, %v2669
      %v2671 = vpop.f32.mrb[0].mxu0
      %v2672 = vpop.f32.mrb[0].mxu0
      %v2673 = vadd.f32 0.0, %v2672
      %v2674 = vpop.f32.mrb[0].mxu0
      %2675 = vmatprep.mubr.bf16.mxu0 0
      %2676 = vmatmul.mubr.bf16.gmra.mrb[0].mxu0 %v2452
      %v2677 = vpop.f32.mrb[0].mxu0
      %v2678 = vadd.f32 0.0, %v2677
      %v2679 = vpop.f32.mrb[0].mxu0
      %v2680 = vpop.f32.mrb[0].mxu0
      %v2681 = vadd.f32 0.0, %v2680
      %v2682 = vpop.f32.mrb[0].mxu0
      %2683 = vmatprep.mubr.bf16.mxu0 0
      %2684 = vmatmul.mubr.bf16.gmra.mrb[0].mxu0 %v2454
      %v2685 = vpop.f32.mrb[0].mxu0
      %v2686 = vadd.f32 0.0, %v2685
      %v2687 = vpop.f32.mrb[0].mxu0
      %v2688 = vpop.f32.mrb[0].mxu0
      %v2689 = vadd.f32 0.0, %v2688
      %v2690 = vpop.f32.mrb[0].mxu0
      %2691 = vmatprep.mubr.bf16.mxu0 0
      %2692 = vmatmul.mubr.bf16.gmra.mrb[0].mxu0 %v2456
      %v2693 = vpop.f32.mrb[0].mxu0
      %v2694 = vadd.f32 0.0, %v2693
      %v2695 = vpop.f32.mrb[0].mxu0
      %v2696 = vpop.f32.mrb[0].mxu0
      %v2697 = vadd.f32 0.0, %v2696
      %v2698 = vpop.f32.mrb[0].mxu0
      %2699 = vdwg.mxu0
      %v2700 = vadd.f32 %v2362, %v2558
      %v2701 = vadd.f32 %v2363, %v2561
      %v2702 = vadd.f32 %v2364, %v2566
      %v2703 = vadd.f32 %v2365, %v2569
      %v2704 = vadd.f32 %v2366, %v2574
      %v2705 = vadd.f32 %v2367, %v2577
      %v2706 = vadd.f32 %v2368, %v2582
      %v2707 = vadd.f32 %v2369, %v2585
      %v2708 = vadd.f32 %v2370, %v2590
      %v2709 = vadd.f32 %v2371, %v2593
      %v2710 = vadd.f32 %v2372, %v2598
      %v2711 = vadd.f32 %v2373, %v2601
      %v2712 = vadd.f32 %v2374, %v2606
      %v2713 = vadd.f32 %v2375, %v2609
      %v2714 = vadd.f32 %v2376, %v2614
      %v2715 = vadd.f32 %v2377, %v2617
      %v2716 = vadd.f32 %v2378, %v2622
      %v2717 = vadd.f32 %v2379, %v2625
      %v2718 = vadd.f32 %v2380, %v2630
      %v2719 = vadd.f32 %v2381, %v2633
      %v2720 = vadd.f32 %v2382, %v2638
      %v2721 = vadd.f32 %v2383, %v2641
      %v2722 = vadd.f32 %v2384, %v2646
      %v2723 = vadd.f32 %v2385, %v2649
      %v2724 = vadd.f32 %v2386, %v2654
      %v2725 = vadd.f32 %v2387, %v2657
      %v2726 = vadd.f32 %v2388, %v2662
      %v2727 = vadd.f32 %v2389, %v2665
      %v2728 = vadd.f32 %v2390, %v2670
      %v2729 = vadd.f32 %v2391, %v2673
      %v2730 = vadd.f32 %v2392, %v2678
      %v2731 = vadd.f32 %v2393, %v2681
      %v2732 = vadd.f32 %v2394, %v2686
      %v2733 = vadd.f32 %v2395, %v2689
      %v2734 = vadd.f32 %v2396, %v2694
      %v2735 = vadd.f32 %v2397, %v2697
      %v2736 = vld [vmem:[%s300 + $0x10] sm:$0xc]
      %v2737 = vld [vmem:[%s300 + $0x14] sm:$0xf]
      %v2738 = vld [vmem:[%s300 + $0x18] sm:$0xf]
      %v2739 = vld [vmem:[%s300 + $0x1c] sm:$0xf]
      %v2740 = vld [vmem:[%s300 + $0x20] sm:$0xf]
      %v2741 = vld [vmem:[%s300 + $0x24] sm:$0xf]
      %v2742 = vld [vmem:[%s300 + $0x28] sm:$0xf]
      %v2743 = vld [vmem:[%s300 + $0x2c] sm:$0xf]
      %v2744 = vld [vmem:[%s300 + $0x30] sm:$0xf]
      %v2745 = vld [vmem:[%s300 + $0x34] sm:$0xf]
      %v2746 = vld [vmem:[%s300 + $0x38] sm:$0xf]
      %v2747 = vld [vmem:[%s300 + $0x3c] sm:$0xf]
      %v2748 = vld [vmem:[%s300 + $0x40] sm:$0xf]
      %v2749 = vld [vmem:[%s300 + $0x44] sm:$0xf]
      %v2750 = vld [vmem:[%s300 + $0x48] sm:$0xf]
      %v2751 = vld [vmem:[%s300 + $0x4c] sm:$0xf]
      %v2752 = vld [vmem:[%s300 + $0x50] sm:$0xf]
      %v2753 = vld [vmem:[%s300 + $0x54] sm:$0xf]
      %v2754 = vld [vmem:[%s300 + $0x58] sm:$0xf]
      %v2755 = vld [vmem:[%s300 + $0x5c] sm:$0xf]
      %v2756 = vld [vmem:[%s300 + $0x60] sm:$0xf]
      %v2757 = vld [vmem:[%s300 + $0x64] sm:$0xf]
      %v2758 = vld [vmem:[%s300 + $0x68] sm:$0xf]
      %v2759 = vld [vmem:[%s300 + $0x6c] sm:$0xf]
      %v2760 = vld [vmem:[%s300 + $0x70] sm:$0xf]
      %v2761 = vld [vmem:[%s300 + $0x74] sm:$0xf]
      %v2762 = vld [vmem:[%s300 + $0x78] sm:$0xf]
      %v2763 = vld [vmem:[%s300 + $0x7c] sm:$0xf]
      %v2764 = vld [vmem:[%s300 + $0x80] sm:$0xf]
      %v2765 = vld [vmem:[%s300 + $0x84] sm:$0xf]
      %v2766 = vld [vmem:[%s300 + $0x88] sm:$0xf]
      %v2767 = vld [vmem:[%s300 + $0x8c] sm:$0xf]
      %v2768 = vld [vmem:[%s300 + $0x90] sm:$0xf]
      %v2769 = vld [vmem:[%s300 + $0x94] sm:$0xf]
      %v2770 = vld [vmem:[%s300 + $0x98] sm:$0xf]
      %v2771 = vld [vmem:[%s300 + $0x9c] sm:$0xf]
      %v2772 = vld [vmem:[%s300 + $0xa0] sm:$0x3]
      %s2773 = scalar_lea.vmem %s2, 384
      %v2774 = vld [vmem:[%s2773] sm:$0xf]
      %v2775 = vld [vmem:[%s2773 + $0x4] sm:$0xf]
      %v2776 = vld [vmem:[%s2773 + $0x8] sm:$0xf]
      %v2777 = vld [vmem:[%s2773 + $0xc] sm:$0xf]
      %v2778 = vld [vmem:[%s2773 + $0x10] sm:$0xf]
      %v2779 = vld [vmem:[%s2773 + $0x14] sm:$0xf]
      %v2780 = vld [vmem:[%s2773 + $0x18] sm:$0xf]
      %v2781 = vld [vmem:[%s2773 + $0x1c] sm:$0xf]
      %v2782 = vld [vmem:[%s2773 + $0x20] sm:$0xf]
      %v2783 = vld [vmem:[%s2773 + $0x24] sm:$0xf]
      %v2784 = vld [vmem:[%s2773 + $0x28] sm:$0xf]
      %v2785 = vld [vmem:[%s2773 + $0x2c] sm:$0xf]
      %v2786 = vld [vmem:[%s2773 + $0x30] sm:$0xf]
      %v2787 = vld [vmem:[%s2773 + $0x34] sm:$0xf]
      %v2788 = vld [vmem:[%s2773 + $0x38] sm:$0xf]
      %v2789 = vld [vmem:[%s2773 + $0x3c] sm:$0xf]
      %v2827 = vunpack.c.l.b16 %v2736
      %v2828 = vunpack.c.l.b16 %v2737
      %v2829 = vunpack.c.l.b16 %v2738
      %v2830 = vunpack.c.l.b16 %v2739
      %v2831 = vunpack.c.l.b16 %v2740
      %v2832 = vunpack.c.l.b16 %v2741
      %v2833 = vunpack.c.l.b16 %v2742
      %v2834 = vunpack.c.l.b16 %v2743
      %v2835 = vunpack.c.l.b16 %v2744
      %v2836 = vunpack.c.l.b16 %v2745
      %v2837 = vunpack.c.l.b16 %v2746
      %v2838 = vunpack.c.l.b16 %v2747
      %v2839 = vunpack.c.l.b16 %v2748
      %v2840 = vunpack.c.l.b16 %v2749
      %v2841 = vunpack.c.l.b16 %v2750
      %v2842 = vunpack.c.l.b16 %v2751
      %v2843 = vunpack.c.l.b16 %v2752
      %v2844 = vunpack.c.l.b16 %v2753
      %v2845 = vunpack.c.l.b16 %v2754
      %v2846 = vunpack.c.l.b16 %v2755
      %v2847 = vunpack.c.l.b16 %v2756
      %v2848 = vunpack.c.l.b16 %v2757
      %v2849 = vunpack.c.l.b16 %v2758
      %v2850 = vunpack.c.l.b16 %v2759
      %v2851 = vunpack.c.l.b16 %v2760
      %v2852 = vunpack.c.l.b16 %v2761
      %v2853 = vunpack.c.l.b16 %v2762
      %v2854 = vunpack.c.l.b16 %v2763
      %v2855 = vunpack.c.l.b16 %v2764
      %v2856 = vunpack.c.l.b16 %v2765
      %v2857 = vunpack.c.l.b16 %v2766
      %v2858 = vunpack.c.l.b16 %v2767
      %v2859 = vunpack.c.l.b16 %v2768
      %v2860 = vunpack.c.l.b16 %v2769
      %v2861 = vunpack.c.l.b16 %v2770
      %v2862 = vunpack.c.l.b16 %v2771
      %v2863 = vunpack.c.l.b16 %v2772
      %v2864 = vpack.c.b16 %v2828, %v2827
      %v2865 = vpack.c.b16 %v2830, %v2829
      %v2866 = vpack.c.b16 %v2832, %v2831
      %v2867 = vpack.c.b16 %v2834, %v2833
      %v2868 = vpack.c.b16 %v2836, %v2835
      %v2869 = vpack.c.b16 %v2838, %v2837
      %v2870 = vpack.c.b16 %v2840, %v2839
      %v2871 = vpack.c.b16 %v2842, %v2841
      %v2872 = vpack.c.b16 %v2844, %v2843
      %v2873 = vpack.c.b16 %v2846, %v2845
      %v2874 = vpack.c.b16 %v2848, %v2847
      %v2875 = vpack.c.b16 %v2850, %v2849
      %v2876 = vpack.c.b16 %v2852, %v2851
      %v2877 = vpack.c.b16 %v2854, %v2853
      %v2878 = vpack.c.b16 %v2856, %v2855
      %v2879 = vpack.c.b16 %v2858, %v2857
      %v2880 = vpack.c.b16 %v2860, %v2859
      %v2881 = vpack.c.b16 %v2862, %v2861
      %v2882 = vpack.c.b16 %v2863, %v2863
      %v2883 = vrot.slane %v2864, 2
      %v2884 = vrot.slane %v2865, 2
      %v2885 = vsel %vm2419, %v2883, %v2884
      %v2886 = vrot.slane %v2866, 2
      %v2887 = vsel %vm2419, %v2884, %v2886
      %v2888 = vrot.slane %v2867, 2
      %v2889 = vsel %vm2419, %v2886, %v2888
      %v2890 = vrot.slane %v2868, 2
      %v2891 = vsel %vm2419, %v2888, %v2890
      %v2892 = vrot.slane %v2869, 2
      %v2893 = vsel %vm2419, %v2890, %v2892
      %v2894 = vrot.slane %v2870, 2
      %v2895 = vsel %vm2419, %v2892, %v2894
      %v2896 = vrot.slane %v2871, 2
      %v2897 = vsel %vm2419, %v2894, %v2896
      %v2898 = vrot.slane %v2872, 2
      %v2899 = vsel %vm2419, %v2896, %v2898
      %v2900 = vrot.slane %v2873, 2
      %v2901 = vsel %vm2419, %v2898, %v2900
      %v2902 = vrot.slane %v2874, 2
      %v2903 = vsel %vm2419, %v2900, %v2902
      %v2904 = vrot.slane %v2875, 2
      %v2905 = vsel %vm2419, %v2902, %v2904
      %v2906 = vrot.slane %v2876, 2
      %v2907 = vsel %vm2419, %v2904, %v2906
      %v2908 = vrot.slane %v2877, 2
      %v2909 = vsel %vm2419, %v2906, %v2908
      %v2910 = vrot.slane %v2878, 2
      %v2911 = vsel %vm2419, %v2908, %v2910
      %v2912 = vrot.slane %v2879, 2
      %v2913 = vsel %vm2419, %v2910, %v2912
      %v2914 = vrot.slane %v2880, 2
      %v2915 = vsel %vm2419, %v2912, %v2914
      %v2916 = vrot.slane %v2881, 2
      %v2917 = vsel %vm2419, %v2914, %v2916
      %v2918 = vrot.slane %v2882, 2
      %v2919 = vsel %vm2419, %v2916, %v2918
      %v2954 = vunpack.c.l.b16 %v2774
      %v2955 = vunpack.c.l.b16 %v2775
      %v2956 = vunpack.c.l.b16 %v2776
      %v2957 = vunpack.c.l.b16 %v2777
      %v2958 = vunpack.c.l.b16 %v2778
      %v2959 = vunpack.c.l.b16 %v2779
      %v2960 = vunpack.c.l.b16 %v2780
      %v2961 = vunpack.c.l.b16 %v2781
      %v2962 = vunpack.c.l.b16 %v2782
      %v2963 = vunpack.c.l.b16 %v2783
      %v2964 = vunpack.c.l.b16 %v2784
      %v2965 = vunpack.c.l.b16 %v2785
      %v2966 = vunpack.c.l.b16 %v2786
      %v2967 = vunpack.c.l.b16 %v2787
      %v2968 = vunpack.c.l.b16 %v2788
      %v2969 = vunpack.c.l.b16 %v2789
      %v2970 = vpack.c.b16 %v2955, %v2954
      %v2971 = vpack.c.b16 %v2957, %v2956
      %v2972 = vpack.c.b16 %v2959, %v2958
      %v2973 = vpack.c.b16 %v2961, %v2960
      %v2974 = vpack.c.b16 %v2963, %v2962
      %v2975 = vpack.c.b16 %v2965, %v2964
      %v2976 = vpack.c.b16 %v2967, %v2966
      %v2977 = vpack.c.b16 %v2969, %v2968
      %2986 = vmatprep.subr.bf16.mxu0 0
      %2987 = vmatpush1.bf16.msra.mxu0 %v2970
      %2988 = vmatprep.subr.bf16.mxu0 0
      %2989 = vmatpush1.bf16.msra.mxu0 %v2971
      %2990 = vmatprep.subr.bf16.mxu0 0
      %2991 = vmatpush1.bf16.msra.mxu0 %v2972
      %2992 = vmatprep.subr.bf16.mxu0 0
      %2993 = vmatpush1.bf16.msra.mxu0 %v2973
      %2994 = vmatprep.subr.bf16.mxu0 0
      %2995 = vmatpush1.bf16.msra.mxu0 %v2974
      %2996 = vmatprep.subr.bf16.mxu0 0
      %2997 = vmatpush1.bf16.msra.mxu0 %v2975
      %2998 = vmatprep.subr.bf16.mxu0 0
      %2999 = vmatpush1.bf16.msra.mxu0 %v2976
      %3000 = vmatprep.subr.bf16.mxu0 0
      %3001 = vmatpush1.bf16.msra.mxu0 %v2977
      %3002 = vmatprep.subr.bf16.mxu0 0
      %3003 = vmatpush1.bf16.msra.mxu0 0
      %3004 = vmatprep.subr.bf16.mxu0 0
      %3005 = vmatpush1.bf16.msra.mxu0 0
      %3006 = vmatprep.subr.bf16.mxu0 0
      %3007 = vmatpush1.bf16.msra.mxu0 0
      %3008 = vmatprep.subr.bf16.mxu0 0
      %3009 = vmatpush1.bf16.msra.mxu0 0
      %3010 = vmatprep.subr.bf16.mxu0 0
      %3011 = vmatpush1.bf16.msra.mxu0 0
      %3012 = vmatprep.subr.bf16.mxu0 0
      %3013 = vmatpush1.bf16.msra.mxu0 0
      %3014 = vmatprep.subr.bf16.mxu0 0
      %3015 = vmatpush1.bf16.msra.mxu0 0
      %3016 = vmatprep.subr.bf16.mxu0 0
      %3017 = vmatpush1.bf16.msra.mxu0 0
      %3018 = vmatprep.mubr.bf16.mxu0 0
      %3019 = vmatmul.mubr.bf16.gmra.mrb[0].mxu0 %v2885
      %v3020 = vpop.f32.mrb[0].mxu0
      %v3021 = vadd.f32 0.0, %v3020
      %v3022 = vpop.f32.mrb[0].mxu0
      %v3023 = vpop.f32.mrb[0].mxu0
      %v3024 = vadd.f32 0.0, %v3023
      %v3025 = vpop.f32.mrb[0].mxu0
      %3026 = vmatprep.mubr.bf16.mxu0 0
      %3027 = vmatmul.mubr.bf16.gmra.mrb[0].mxu0 %v2887
      %v3028 = vpop.f32.mrb[0].mxu0
      %v3029 = vadd.f32 0.0, %v3028
      %v3030 = vpop.f32.mrb[0].mxu0
      %v3031 = vpop.f32.mrb[0].mxu0
      %v3032 = vadd.f32 0.0, %v3031
      %v3033 = vpop.f32.mrb[0].mxu0
      %3034 = vmatprep.mubr.bf16.mxu0 0
      %3035 = vmatmul.mubr.bf16.gmra.mrb[0].mxu0 %v2889
      %v3036 = vpop.f32.mrb[0].mxu0
      %v3037 = vadd.f32 0.0, %v3036
      %v3038 = vpop.f32.mrb[0].mxu0
      %v3039 = vpop.f32.mrb[0].mxu0
      %v3040 = vadd.f32 0.0, %v3039
      %v3041 = vpop.f32.mrb[0].mxu0
      %3042 = vmatprep.mubr.bf16.mxu0 0
      %3043 = vmatmul.mubr.bf16.gmra.mrb[0].mxu0 %v2891
      %v3044 = vpop.f32.mrb[0].mxu0
      %v3045 = vadd.f32 0.0, %v3044
      %v3046 = vpop.f32.mrb[0].mxu0
      %v3047 = vpop.f32.mrb[0].mxu0
      %v3048 = vadd.f32 0.0, %v3047
      %v3049 = vpop.f32.mrb[0].mxu0
      %3050 = vmatprep.mubr.bf16.mxu0 0
      %3051 = vmatmul.mubr.bf16.gmra.mrb[0].mxu0 %v2893
      %v3052 = vpop.f32.mrb[0].mxu0
      %v3053 = vadd.f32 0.0, %v3052
      %v3054 = vpop.f32.mrb[0].mxu0
      %v3055 = vpop.f32.mrb[0].mxu0
      %v3056 = vadd.f32 0.0, %v3055
      %v3057 = vpop.f32.mrb[0].mxu0
      %3058 = vmatprep.mubr.bf16.mxu0 0
      %3059 = vmatmul.mubr.bf16.gmra.mrb[0].mxu0 %v2895
      %v3060 = vpop.f32.mrb[0].mxu0
      %v3061 = vadd.f32 0.0, %v3060
      %v3062 = vpop.f32.mrb[0].mxu0
      %v3063 = vpop.f32.mrb[0].mxu0
      %v3064 = vadd.f32 0.0, %v3063
      %v3065 = vpop.f32.mrb[0].mxu0
      %3066 = vmatprep.mubr.bf16.mxu0 0
      %3067 = vmatmul.mubr.bf16.gmra.mrb[0].mxu0 %v2897
      %v3068 = vpop.f32.mrb[0].mxu0
      %v3069 = vadd.f32 0.0, %v3068
      %v3070 = vpop.f32.mrb[0].mxu0
      %v3071 = vpop.f32.mrb[0].mxu0
      %v3072 = vadd.f32 0.0, %v3071
      %v3073 = vpop.f32.mrb[0].mxu0
      %3074 = vmatprep.mubr.bf16.mxu0 0
      %3075 = vmatmul.mubr.bf16.gmra.mrb[0].mxu0 %v2899
      %v3076 = vpop.f32.mrb[0].mxu0
      %v3077 = vadd.f32 0.0, %v3076
      %v3078 = vpop.f32.mrb[0].mxu0
      %v3079 = vpop.f32.mrb[0].mxu0
      %v3080 = vadd.f32 0.0, %v3079
      %v3081 = vpop.f32.mrb[0].mxu0
      %3082 = vmatprep.mubr.bf16.mxu0 0
      %3083 = vmatmul.mubr.bf16.gmra.mrb[0].mxu0 %v2901
      %v3084 = vpop.f32.mrb[0].mxu0
      %v3085 = vadd.f32 0.0, %v3084
      %v3086 = vpop.f32.mrb[0].mxu0
      %v3087 = vpop.f32.mrb[0].mxu0
      %v3088 = vadd.f32 0.0, %v3087
      %v3089 = vpop.f32.mrb[0].mxu0
      %3090 = vmatprep.mubr.bf16.mxu0 0
      %3091 = vmatmul.mubr.bf16.gmra.mrb[0].mxu0 %v2903
      %v3092 = vpop.f32.mrb[0].mxu0
      %v3093 = vadd.f32 0.0, %v3092
      %v3094 = vpop.f32.mrb[0].mxu0
      %v3095 = vpop.f32.mrb[0].mxu0
      %v3096 = vadd.f32 0.0, %v3095
      %v3097 = vpop.f32.mrb[0].mxu0
      %3098 = vmatprep.mubr.bf16.mxu0 0
      %3099 = vmatmul.mubr.bf16.gmra.mrb[0].mxu0 %v2905
      %v3100 = vpop.f32.mrb[0].mxu0
      %v3101 = vadd.f32 0.0, %v3100
      %v3102 = vpop.f32.mrb[0].mxu0
      %v3103 = vpop.f32.mrb[0].mxu0
      %v3104 = vadd.f32 0.0, %v3103
      %v3105 = vpop.f32.mrb[0].mxu0
      %3106 = vmatprep.mubr.bf16.mxu0 0
      %3107 = vmatmul.mubr.bf16.gmra.mrb[0].mxu0 %v2907
      %v3108 = vpop.f32.mrb[0].mxu0
      %v3109 = vadd.f32 0.0, %v3108
      %v3110 = vpop.f32.mrb[0].mxu0
      %v3111 = vpop.f32.mrb[0].mxu0
      %v3112 = vadd.f32 0.0, %v3111
      %v3113 = vpop.f32.mrb[0].mxu0
      %3114 = vmatprep.mubr.bf16.mxu0 0
      %3115 = vmatmul.mubr.bf16.gmra.mrb[0].mxu0 %v2909
      %v3116 = vpop.f32.mrb[0].mxu0
      %v3117 = vadd.f32 0.0, %v3116
      %v3118 = vpop.f32.mrb[0].mxu0
      %v3119 = vpop.f32.mrb[0].mxu0
      %v3120 = vadd.f32 0.0, %v3119
      %v3121 = vpop.f32.mrb[0].mxu0
      %3122 = vmatprep.mubr.bf16.mxu0 0
      %3123 = vmatmul.mubr.bf16.gmra.mrb[0].mxu0 %v2911
      %v3124 = vpop.f32.mrb[0].mxu0
      %v3125 = vadd.f32 0.0, %v3124
      %v3126 = vpop.f32.mrb[0].mxu0
      %v3127 = vpop.f32.mrb[0].mxu0
      %v3128 = vadd.f32 0.0, %v3127
      %v3129 = vpop.f32.mrb[0].mxu0
      %3130 = vmatprep.mubr.bf16.mxu0 0
      %3131 = vmatmul.mubr.bf16.gmra.mrb[0].mxu0 %v2913
      %v3132 = vpop.f32.mrb[0].mxu0
      %v3133 = vadd.f32 0.0, %v3132
      %v3134 = vpop.f32.mrb[0].mxu0
      %v3135 = vpop.f32.mrb[0].mxu0
      %v3136 = vadd.f32 0.0, %v3135
      %v3137 = vpop.f32.mrb[0].mxu0
      %3138 = vmatprep.mubr.bf16.mxu0 0
      %3139 = vmatmul.mubr.bf16.gmra.mrb[0].mxu0 %v2915
      %v3140 = vpop.f32.mrb[0].mxu0
      %v3141 = vadd.f32 0.0, %v3140
      %v3142 = vpop.f32.mrb[0].mxu0
      %v3143 = vpop.f32.mrb[0].mxu0
      %v3144 = vadd.f32 0.0, %v3143
      %v3145 = vpop.f32.mrb[0].mxu0
      %3146 = vmatprep.mubr.bf16.mxu0 0
      %3147 = vmatmul.mubr.bf16.gmra.mrb[0].mxu0 %v2917
      %v3148 = vpop.f32.mrb[0].mxu0
      %v3149 = vadd.f32 0.0, %v3148
      %v3150 = vpop.f32.mrb[0].mxu0
      %v3151 = vpop.f32.mrb[0].mxu0
      %v3152 = vadd.f32 0.0, %v3151
      %v3153 = vpop.f32.mrb[0].mxu0
      %3154 = vmatprep.mubr.bf16.mxu0 0
      %3155 = vmatmul.mubr.bf16.gmra.mrb[0].mxu0 %v2919
      %v3156 = vpop.f32.mrb[0].mxu0
      %v3157 = vadd.f32 0.0, %v3156
      %v3158 = vpop.f32.mrb[0].mxu0
      %v3159 = vpop.f32.mrb[0].mxu0
      %v3160 = vadd.f32 0.0, %v3159
      %v3161 = vpop.f32.mrb[0].mxu0
      %3162 = vdwg.mxu0
      %v3163 = vadd.f32 %v2700, %v3021
      %v3164 = vadd.f32 %v2701, %v3024
      %v3165 = vadd.f32 %v2702, %v3029
      %v3166 = vadd.f32 %v2703, %v3032
      %v3167 = vadd.f32 %v2704, %v3037
      %v3168 = vadd.f32 %v2705, %v3040
      %v3169 = vadd.f32 %v2706, %v3045
      %v3170 = vadd.f32 %v2707, %v3048
      %v3171 = vadd.f32 %v2708, %v3053
      %v3172 = vadd.f32 %v2709, %v3056
      %v3173 = vadd.f32 %v2710, %v3061
      %v3174 = vadd.f32 %v2711, %v3064
      %v3175 = vadd.f32 %v2712, %v3069
      %v3176 = vadd.f32 %v2713, %v3072
      %v3177 = vadd.f32 %v2714, %v3077
      %v3178 = vadd.f32 %v2715, %v3080
      %v3179 = vadd.f32 %v2716, %v3085
      %v3180 = vadd.f32 %v2717, %v3088
      %v3181 = vadd.f32 %v2718, %v3093
      %v3182 = vadd.f32 %v2719, %v3096
      %v3183 = vadd.f32 %v2720, %v3101
      %v3184 = vadd.f32 %v2721, %v3104
      %v3185 = vadd.f32 %v2722, %v3109
      %v3186 = vadd.f32 %v2723, %v3112
      %v3187 = vadd.f32 %v2724, %v3117
      %v3188 = vadd.f32 %v2725, %v3120
      %v3189 = vadd.f32 %v2726, %v3125
      %v3190 = vadd.f32 %v2727, %v3128
      %v3191 = vadd.f32 %v2728, %v3133
      %v3192 = vadd.f32 %v2729, %v3136
      %v3193 = vadd.f32 %v2730, %v3141
      %v3194 = vadd.f32 %v2731, %v3144
      %v3195 = vadd.f32 %v2732, %v3149
      %v3196 = vadd.f32 %v2733, %v3152
      %v3197 = vadd.f32 %v2734, %v3157
      %v3198 = vadd.f32 %v2735, %v3160
      %v3199 = vld [vmem:[%s300 + $0xa0] sm:$0x7]
      %s3200 = scalar_lea.vmem %s2, 448
      %v3201 = vld [vmem:[%s3200] sm:$0xf]
      %v3202 = vld [vmem:[%s3200 + $0x4] sm:$0xf]
      %v3203 = vld [vmem:[%s3200 + $0x8] sm:$0xf]
      %v3204 = vld [vmem:[%s3200 + $0xc] sm:$0xf]
      %v3205 = vld [vmem:[%s3200 + $0x10] sm:$0xf]
      %v3206 = vld [vmem:[%s3200 + $0x14] sm:$0xf]
      %v3207 = vld [vmem:[%s3200 + $0x18] sm:$0xf]
      %v3208 = vld [vmem:[%s3200 + $0x1c] sm:$0xf]
      %v3209 = vld [vmem:[%s3200 + $0x20] sm:$0xf]
      %v3210 = vld [vmem:[%s3200 + $0x24] sm:$0xf]
      %v3211 = vld [vmem:[%s3200 + $0x28] sm:$0xf]
      %v3212 = vld [vmem:[%s3200 + $0x2c] sm:$0xf]
      %v3213 = vld [vmem:[%s3200 + $0x30] sm:$0xf]
      %v3214 = vld [vmem:[%s3200 + $0x34] sm:$0xf]
      %v3215 = vld [vmem:[%s3200 + $0x38] sm:$0xf]
      %v3216 = vld [vmem:[%s3200 + $0x3c] sm:$0xf]
      %v3218 = vunpack.c.l.b16 %v3199
      %v3219 = vpack.c.b16 %v3218, %v3218
      %vm3220 = vsmask.f32 5376
      %v3222 = vshrl.u32 %v2864, 16
      %v3224 = vrot.slane %v3222, 2
      %v3225 = vshll.u32 %v2864, 16
      %v3227 = vrot.slane %v3225, 3
      %v3228 = vor.u32 %v3224, %v3227
      %v3230 = vshrl.u32 %v2865, 16
      %v3232 = vrot.slane %v3230, 2
      %v3233 = vshll.u32 %v2865, 16
      %v3235 = vrot.slane %v3233, 3
      %v3236 = vor.u32 %v3232, %v3235
      %v3237 = vsel %vm3220, %v3228, %v3236
      %v3239 = vshrl.u32 %v2866, 16
      %v3241 = vrot.slane %v3239, 2
      %v3242 = vshll.u32 %v2866, 16
      %v3244 = vrot.slane %v3242, 3
      %v3245 = vor.u32 %v3241, %v3244
      %v3246 = vsel %vm3220, %v3236, %v3245
      %v3248 = vshrl.u32 %v2867, 16
      %v3250 = vrot.slane %v3248, 2
      %v3251 = vshll.u32 %v2867, 16
      %v3253 = vrot.slane %v3251, 3
      %v3254 = vor.u32 %v3250, %v3253
      %v3255 = vsel %vm3220, %v3245, %v3254
      %v3257 = vshrl.u32 %v2868, 16
      %v3259 = vrot.slane %v3257, 2
      %v3260 = vshll.u32 %v2868, 16
      %v3262 = vrot.slane %v3260, 3
      %v3263 = vor.u32 %v3259, %v3262
      %v3264 = vsel %vm3220, %v3254, %v3263
      %v3266 = vshrl.u32 %v2869, 16
      %v3268 = vrot.slane %v3266, 2
      %v3269 = vshll.u32 %v2869, 16
      %v3271 = vrot.slane %v3269, 3
      %v3272 = vor.u32 %v3268, %v3271
      %v3273 = vsel %vm3220, %v3263, %v3272
      %v3275 = vshrl.u32 %v2870, 16
      %v3277 = vrot.slane %v3275, 2
      %v3278 = vshll.u32 %v2870, 16
      %v3280 = vrot.slane %v3278, 3
      %v3281 = vor.u32 %v3277, %v3280
      %v3282 = vsel %vm3220, %v3272, %v3281
      %v3284 = vshrl.u32 %v2871, 16
      %v3286 = vrot.slane %v3284, 2
      %v3287 = vshll.u32 %v2871, 16
      %v3289 = vrot.slane %v3287, 3
      %v3290 = vor.u32 %v3286, %v3289
      %v3291 = vsel %vm3220, %v3281, %v3290
      %v3293 = vshrl.u32 %v2872, 16
      %v3295 = vrot.slane %v3293, 2
      %v3296 = vshll.u32 %v2872, 16
      %v3298 = vrot.slane %v3296, 3
      %v3299 = vor.u32 %v3295, %v3298
      %v3300 = vsel %vm3220, %v3290, %v3299
      %v3302 = vshrl.u32 %v2873, 16
      %v3304 = vrot.slane %v3302, 2
      %v3305 = vshll.u32 %v2873, 16
      %v3307 = vrot.slane %v3305, 3
      %v3308 = vor.u32 %v3304, %v3307
      %v3309 = vsel %vm3220, %v3299, %v3308
      %v3311 = vshrl.u32 %v2874, 16
      %v3313 = vrot.slane %v3311, 2
      %v3314 = vshll.u32 %v2874, 16
      %v3316 = vrot.slane %v3314, 3
      %v3317 = vor.u32 %v3313, %v3316
      %v3318 = vsel %vm3220, %v3308, %v3317
      %v3320 = vshrl.u32 %v2875, 16
      %v3322 = vrot.slane %v3320, 2
      %v3323 = vshll.u32 %v2875, 16
      %v3325 = vrot.slane %v3323, 3
      %v3326 = vor.u32 %v3322, %v3325
      %v3327 = vsel %vm3220, %v3317, %v3326
      %v3329 = vshrl.u32 %v2876, 16
      %v3331 = vrot.slane %v3329, 2
      %v3332 = vshll.u32 %v2876, 16
      %v3334 = vrot.slane %v3332, 3
      %v3335 = vor.u32 %v3331, %v3334
      %v3336 = vsel %vm3220, %v3326, %v3335
      %v3338 = vshrl.u32 %v2877, 16
      %v3340 = vrot.slane %v3338, 2
      %v3341 = vshll.u32 %v2877, 16
      %v3343 = vrot.slane %v3341, 3
      %v3344 = vor.u32 %v3340, %v3343
      %v3345 = vsel %vm3220, %v3335, %v3344
      %v3347 = vshrl.u32 %v2878, 16
      %v3349 = vrot.slane %v3347, 2
      %v3350 = vshll.u32 %v2878, 16
      %v3352 = vrot.slane %v3350, 3
      %v3353 = vor.u32 %v3349, %v3352
      %v3354 = vsel %vm3220, %v3344, %v3353
      %v3356 = vshrl.u32 %v2879, 16
      %v3358 = vrot.slane %v3356, 2
      %v3359 = vshll.u32 %v2879, 16
      %v3361 = vrot.slane %v3359, 3
      %v3362 = vor.u32 %v3358, %v3361
      %v3363 = vsel %vm3220, %v3353, %v3362
      %v3365 = vshrl.u32 %v2880, 16
      %v3367 = vrot.slane %v3365, 2
      %v3368 = vshll.u32 %v2880, 16
      %v3370 = vrot.slane %v3368, 3
      %v3371 = vor.u32 %v3367, %v3370
      %v3372 = vsel %vm3220, %v3362, %v3371
      %v3374 = vshrl.u32 %v2881, 16
      %v3376 = vrot.slane %v3374, 2
      %v3377 = vshll.u32 %v2881, 16
      %v3379 = vrot.slane %v3377, 3
      %v3380 = vor.u32 %v3376, %v3379
      %v3381 = vsel %vm3220, %v3371, %v3380
      %v3383 = vshrl.u32 %v3219, 16
      %v3385 = vrot.slane %v3383, 2
      %v3386 = vshll.u32 %v3219, 16
      %v3388 = vrot.slane %v3386, 3
      %v3389 = vor.u32 %v3385, %v3388
      %v3390 = vsel %vm3220, %v3380, %v3389
      %v3425 = vunpack.c.l.b16 %v3201
      %v3426 = vunpack.c.l.b16 %v3202
      %v3427 = vunpack.c.l.b16 %v3203
      %v3428 = vunpack.c.l.b16 %v3204
      %v3429 = vunpack.c.l.b16 %v3205
      %v3430 = vunpack.c.l.b16 %v3206
      %v3431 = vunpack.c.l.b16 %v3207
      %v3432 = vunpack.c.l.b16 %v3208
      %v3433 = vunpack.c.l.b16 %v3209
      %v3434 = vunpack.c.l.b16 %v3210
      %v3435 = vunpack.c.l.b16 %v3211
      %v3436 = vunpack.c.l.b16 %v3212
      %v3437 = vunpack.c.l.b16 %v3213
      %v3438 = vunpack.c.l.b16 %v3214
      %v3439 = vunpack.c.l.b16 %v3215
      %v3440 = vunpack.c.l.b16 %v3216
      %v3441 = vpack.c.b16 %v3426, %v3425
      %v3442 = vpack.c.b16 %v3428, %v3427
      %v3443 = vpack.c.b16 %v3430, %v3429
      %v3444 = vpack.c.b16 %v3432, %v3431
      %v3445 = vpack.c.b16 %v3434, %v3433
      %v3446 = vpack.c.b16 %v3436, %v3435
      %v3447 = vpack.c.b16 %v3438, %v3437
      %v3448 = vpack.c.b16 %v3440, %v3439
      %3457 = vmatprep.subr.bf16.mxu0 0
      %3458 = vmatpush1.bf16.msra.mxu0 %v3441
      %3459 = vmatprep.subr.bf16.mxu0 0
      %3460 = vmatpush1.bf16.msra.mxu0 %v3442
      %3461 = vmatprep.subr.bf16.mxu0 0
      %3462 = vmatpush1.bf16.msra.mxu0 %v3443
      %3463 = vmatprep.subr.bf16.mxu0 0
      %3464 = vmatpush1.bf16.msra.mxu0 %v3444
      %3465 = vmatprep.subr.bf16.mxu0 0
      %3466 = vmatpush1.bf16.msra.mxu0 %v3445
      %3467 = vmatprep.subr.bf16.mxu0 0
      %3468 = vmatpush1.bf16.msra.mxu0 %v3446
      %3469 = vmatprep.subr.bf16.mxu0 0
      %3470 = vmatpush1.bf16.msra.mxu0 %v3447
      %3471 = vmatprep.subr.bf16.mxu0 0
      %3472 = vmatpush1.bf16.msra.mxu0 %v3448
      %3473 = vmatprep.subr.bf16.mxu0 0
      %3474 = vmatpush1.bf16.msra.mxu0 0
      %3475 = vmatprep.subr.bf16.mxu0 0
      %3476 = vmatpush1.bf16.msra.mxu0 0
      %3477 = vmatprep.subr.bf16.mxu0 0
      %3478 = vmatpush1.bf16.msra.mxu0 0
      %3479 = vmatprep.subr.bf16.mxu0 0
      %3480 = vmatpush1.bf16.msra.mxu0 0
      %3481 = vmatprep.subr.bf16.mxu0 0
      %3482 = vmatpush1.bf16.msra.mxu0 0
      %3483 = vmatprep.subr.bf16.mxu0 0
      %3484 = vmatpush1.bf16.msra.mxu0 0
      %3485 = vmatprep.subr.bf16.mxu0 0
      %3486 = vmatpush1.bf16.msra.mxu0 0
      %3487 = vmatprep.subr.bf16.mxu0 0
      %3488 = vmatpush1.bf16.msra.mxu0 0
      %3489 = vmatprep.mubr.bf16.mxu0 0
      %3490 = vmatmul.mubr.bf16.gmra.mrb[0].mxu0 %v3237
      %v3491 = vpop.f32.mrb[0].mxu0
      %v3492 = vadd.f32 0.0, %v3491
      %v3493 = vpop.f32.mrb[0].mxu0
      %v3494 = vpop.f32.mrb[0].mxu0
      %v3495 = vadd.f32 0.0, %v3494
      %v3496 = vpop.f32.mrb[0].mxu0
      %3497 = vmatprep.mubr.bf16.mxu0 0
      %3498 = vmatmul.mubr.bf16.gmra.mrb[0].mxu0 %v3246
      %v3499 = vpop.f32.mrb[0].mxu0
      %v3500 = vadd.f32 0.0, %v3499
      %v3501 = vpop.f32.mrb[0].mxu0
      %v3502 = vpop.f32.mrb[0].mxu0
      %v3503 = vadd.f32 0.0, %v3502
      %v3504 = vpop.f32.mrb[0].mxu0
      %3505 = vmatprep.mubr.bf16.mxu0 0
      %3506 = vmatmul.mubr.bf16.gmra.mrb[0].mxu0 %v3255
      %v3507 = vpop.f32.mrb[0].mxu0
      %v3508 = vadd.f32 0.0, %v3507
      %v3509 = vpop.f32.mrb[0].mxu0
      %v3510 = vpop.f32.mrb[0].mxu0
      %v3511 = vadd.f32 0.0, %v3510
      %v3512 = vpop.f32.mrb[0].mxu0
      %3513 = vmatprep.mubr.bf16.mxu0 0
      %3514 = vmatmul.mubr.bf16.gmra.mrb[0].mxu0 %v3264
      %v3515 = vpop.f32.mrb[0].mxu0
      %v3516 = vadd.f32 0.0, %v3515
      %v3517 = vpop.f32.mrb[0].mxu0
      %v3518 = vpop.f32.mrb[0].mxu0
      %v3519 = vadd.f32 0.0, %v3518
      %v3520 = vpop.f32.mrb[0].mxu0
      %3521 = vmatprep.mubr.bf16.mxu0 0
      %3522 = vmatmul.mubr.bf16.gmra.mrb[0].mxu0 %v3273
      %v3523 = vpop.f32.mrb[0].mxu0
      %v3524 = vadd.f32 0.0, %v3523
      %v3525 = vpop.f32.mrb[0].mxu0
      %v3526 = vpop.f32.mrb[0].mxu0
      %v3527 = vadd.f32 0.0, %v3526
      %v3528 = vpop.f32.mrb[0].mxu0
      %3529 = vmatprep.mubr.bf16.mxu0 0
      %3530 = vmatmul.mubr.bf16.gmra.mrb[0].mxu0 %v3282
      %v3531 = vpop.f32.mrb[0].mxu0
      %v3532 = vadd.f32 0.0, %v3531
      %v3533 = vpop.f32.mrb[0].mxu0
      %v3534 = vpop.f32.mrb[0].mxu0
      %v3535 = vadd.f32 0.0, %v3534
      %v3536 = vpop.f32.mrb[0].mxu0
      %3537 = vmatprep.mubr.bf16.mxu0 0
      %3538 = vmatmul.mubr.bf16.gmra.mrb[0].mxu0 %v3291
      %v3539 = vpop.f32.mrb[0].mxu0
      %v3540 = vadd.f32 0.0, %v3539
      %v3541 = vpop.f32.mrb[0].mxu0
      %v3542 = vpop.f32.mrb[0].mxu0
      %v3543 = vadd.f32 0.0, %v3542
      %v3544 = vpop.f32.mrb[0].mxu0
      %3545 = vmatprep.mubr.bf16.mxu0 0
      %3546 = vmatmul.mubr.bf16.gmra.mrb[0].mxu0 %v3300
      %v3547 = vpop.f32.mrb[0].mxu0
      %v3548 = vadd.f32 0.0, %v3547
      %v3549 = vpop.f32.mrb[0].mxu0
      %v3550 = vpop.f32.mrb[0].mxu0
      %v3551 = vadd.f32 0.0, %v3550
      %v3552 = vpop.f32.mrb[0].mxu0
      %3553 = vmatprep.mubr.bf16.mxu0 0
      %3554 = vmatmul.mubr.bf16.gmra.mrb[0].mxu0 %v3309
      %v3555 = vpop.f32.mrb[0].mxu0
      %v3556 = vadd.f32 0.0, %v3555
      %v3557 = vpop.f32.mrb[0].mxu0
      %v3558 = vpop.f32.mrb[0].mxu0
      %v3559 = vadd.f32 0.0, %v3558
      %v3560 = vpop.f32.mrb[0].mxu0
      %3561 = vmatprep.mubr.bf16.mxu0 0
      %3562 = vmatmul.mubr.bf16.gmra.mrb[0].mxu0 %v3318
      %v3563 = vpop.f32.mrb[0].mxu0
      %v3564 = vadd.f32 0.0, %v3563
      %v3565 = vpop.f32.mrb[0].mxu0
      %v3566 = vpop.f32.mrb[0].mxu0
      %v3567 = vadd.f32 0.0, %v3566
      %v3568 = vpop.f32.mrb[0].mxu0
      %3569 = vmatprep.mubr.bf16.mxu0 0
      %3570 = vmatmul.mubr.bf16.gmra.mrb[0].mxu0 %v3327
      %v3571 = vpop.f32.mrb[0].mxu0
      %v3572 = vadd.f32 0.0, %v3571
      %v3573 = vpop.f32.mrb[0].mxu0
      %v3574 = vpop.f32.mrb[0].mxu0
      %v3575 = vadd.f32 0.0, %v3574
      %v3576 = vpop.f32.mrb[0].mxu0
      %3577 = vmatprep.mubr.bf16.mxu0 0
      %3578 = vmatmul.mubr.bf16.gmra.mrb[0].mxu0 %v3336
      %v3579 = vpop.f32.mrb[0].mxu0
      %v3580 = vadd.f32 0.0, %v3579
      %v3581 = vpop.f32.mrb[0].mxu0
      %v3582 = vpop.f32.mrb[0].mxu0
      %v3583 = vadd.f32 0.0, %v3582
      %v3584 = vpop.f32.mrb[0].mxu0
      %3585 = vmatprep.mubr.bf16.mxu0 0
      %3586 = vmatmul.mubr.bf16.gmra.mrb[0].mxu0 %v3345
      %v3587 = vpop.f32.mrb[0].mxu0
      %v3588 = vadd.f32 0.0, %v3587
      %v3589 = vpop.f32.mrb[0].mxu0
      %v3590 = vpop.f32.mrb[0].mxu0
      %v3591 = vadd.f32 0.0, %v3590
      %v3592 = vpop.f32.mrb[0].mxu0
      %3593 = vmatprep.mubr.bf16.mxu0 0
      %3594 = vmatmul.mubr.bf16.gmra.mrb[0].mxu0 %v3354
      %v3595 = vpop.f32.mrb[0].mxu0
      %v3596 = vadd.f32 0.0, %v3595
      %v3597 = vpop.f32.mrb[0].mxu0
      %v3598 = vpop.f32.mrb[0].mxu0
      %v3599 = vadd.f32 0.0, %v3598
      %v3600 = vpop.f32.mrb[0].mxu0
      %3601 = vmatprep.mubr.bf16.mxu0 0
      %3602 = vmatmul.mubr.bf16.gmra.mrb[0].mxu0 %v3363
      %v3603 = vpop.f32.mrb[0].mxu0
      %v3604 = vadd.f32 0.0, %v3603
      %v3605 = vpop.f32.mrb[0].mxu0
      %v3606 = vpop.f32.mrb[0].mxu0
      %v3607 = vadd.f32 0.0, %v3606
      %v3608 = vpop.f32.mrb[0].mxu0
      %3609 = vmatprep.mubr.bf16.mxu0 0
      %3610 = vmatmul.mubr.bf16.gmra.mrb[0].mxu0 %v3372
      %v3611 = vpop.f32.mrb[0].mxu0
      %v3612 = vadd.f32 0.0, %v3611
      %v3613 = vpop.f32.mrb[0].mxu0
      %v3614 = vpop.f32.mrb[0].mxu0
      %v3615 = vadd.f32 0.0, %v3614
      %v3616 = vpop.f32.mrb[0].mxu0
      %3617 = vmatprep.mubr.bf16.mxu0 0
      %3618 = vmatmul.mubr.bf16.gmra.mrb[0].mxu0 %v3381
      %v3619 = vpop.f32.mrb[0].mxu0
      %v3620 = vadd.f32 0.0, %v3619
      %v3621 = vpop.f32.mrb[0].mxu0
      %v3622 = vpop.f32.mrb[0].mxu0
      %v3623 = vadd.f32 0.0, %v3622
      %v3624 = vpop.f32.mrb[0].mxu0
      %3625 = vmatprep.mubr.bf16.mxu0 0
      %3626 = vmatmul.mubr.bf16.gmra.mrb[0].mxu0 %v3390
      %v3627 = vpop.f32.mrb[0].mxu0
      %v3628 = vadd.f32 0.0, %v3627
      %v3629 = vpop.f32.mrb[0].mxu0
      %v3630 = vpop.f32.mrb[0].mxu0
      %v3631 = vadd.f32 0.0, %v3630
      %v3632 = vpop.f32.mrb[0].mxu0
      %3633 = vdwg.mxu0
      %v3634 = vadd.f32 %v3163, %v3492
      %v3635 = vadd.f32 %v3164, %v3495
      %v3636 = vadd.f32 %v3165, %v3500
      %v3637 = vadd.f32 %v3166, %v3503
      %v3638 = vadd.f32 %v3167, %v3508
      %v3639 = vadd.f32 %v3168, %v3511
      %v3640 = vadd.f32 %v3169, %v3516
      %v3641 = vadd.f32 %v3170, %v3519
      %v3642 = vadd.f32 %v3171, %v3524
      %v3643 = vadd.f32 %v3172, %v3527
      %v3644 = vadd.f32 %v3173, %v3532
      %v3645 = vadd.f32 %v3174, %v3535
      %v3646 = vadd.f32 %v3175, %v3540
      %v3647 = vadd.f32 %v3176, %v3543
      %v3648 = vadd.f32 %v3177, %v3548
      %v3649 = vadd.f32 %v3178, %v3551
      %v3650 = vadd.f32 %v3179, %v3556
      %v3651 = vadd.f32 %v3180, %v3559
      %v3652 = vadd.f32 %v3181, %v3564
      %v3653 = vadd.f32 %v3182, %v3567
      %v3654 = vadd.f32 %v3183, %v3572
      %v3655 = vadd.f32 %v3184, %v3575
      %v3656 = vadd.f32 %v3185, %v3580
      %v3657 = vadd.f32 %v3186, %v3583
      %v3658 = vadd.f32 %v3187, %v3588
      %v3659 = vadd.f32 %v3188, %v3591
      %v3660 = vadd.f32 %v3189, %v3596
      %v3661 = vadd.f32 %v3190, %v3599
      %v3662 = vadd.f32 %v3191, %v3604
      %v3663 = vadd.f32 %v3192, %v3607
      %v3664 = vadd.f32 %v3193, %v3612
      %v3665 = vadd.f32 %v3194, %v3615
      %v3666 = vadd.f32 %v3195, %v3620
      %v3667 = vadd.f32 %v3196, %v3623
      %v3668 = vadd.f32 %v3197, %v3628
      %v3669 = vadd.f32 %v3198, %v3631
      %v3670 = vld [vmem:[%s300 + $0x10] sm:$0x8]
      %s3671 = scalar_lea.vmem %s2, 512
      %v3672 = vld [vmem:[%s3671] sm:$0xf]
      %v3673 = vld [vmem:[%s3671 + $0x4] sm:$0xf]
      %v3674 = vld [vmem:[%s3671 + $0x8] sm:$0xf]
      %v3675 = vld [vmem:[%s3671 + $0xc] sm:$0xf]
      %v3676 = vld [vmem:[%s3671 + $0x10] sm:$0xf]
      %v3677 = vld [vmem:[%s3671 + $0x14] sm:$0xf]
      %v3678 = vld [vmem:[%s3671 + $0x18] sm:$0xf]
      %v3679 = vld [vmem:[%s3671 + $0x1c] sm:$0xf]
      %v3680 = vld [vmem:[%s3671 + $0x20] sm:$0xf]
      %v3681 = vld [vmem:[%s3671 + $0x24] sm:$0xf]
      %v3682 = vld [vmem:[%s3671 + $0x28] sm:$0xf]
      %v3683 = vld [vmem:[%s3671 + $0x2c] sm:$0xf]
      %v3684 = vld [vmem:[%s3671 + $0x30] sm:$0xf]
      %v3685 = vld [vmem:[%s3671 + $0x34] sm:$0xf]
      %v3686 = vld [vmem:[%s3671 + $0x38] sm:$0xf]
      %v3687 = vld [vmem:[%s3671 + $0x3c] sm:$0xf]
      %v3689 = vunpack.c.l.b16 %v3670
      %v3690 = vpack.c.b16 %v2828, %v3689
      %vm3691 = vcmask 1044480
      %v3692 = vrot.slane %v3690, 3
      %v3693 = vrot.slane %v2865, 3
      %v3694 = vsel %vm3691, %v3692, %v3693
      %v3695 = vrot.slane %v2866, 3
      %v3696 = vsel %vm3691, %v3693, %v3695
      %v3697 = vrot.slane %v2867, 3
      %v3698 = vsel %vm3691, %v3695, %v3697
      %v3699 = vrot.slane %v2868, 3
      %v3700 = vsel %vm3691, %v3697, %v3699
      %v3701 = vrot.slane %v2869, 3
      %v3702 = vsel %vm3691, %v3699, %v3701
      %v3703 = vrot.slane %v2870, 3
      %v3704 = vsel %vm3691, %v3701, %v3703
      %v3705 = vrot.slane %v2871, 3
      %v3706 = vsel %vm3691, %v3703, %v3705
      %v3707 = vrot.slane %v2872, 3
      %v3708 = vsel %vm3691, %v3705, %v3707
      %v3709 = vrot.slane %v2873, 3
      %v3710 = vsel %vm3691, %v3707, %v3709
      %v3711 = vrot.slane %v2874, 3
      %v3712 = vsel %vm3691, %v3709, %v3711
      %v3713 = vrot.slane %v2875, 3
      %v3714 = vsel %vm3691, %v3711, %v3713
      %v3715 = vrot.slane %v2876, 3
      %v3716 = vsel %vm3691, %v3713, %v3715
      %v3717 = vrot.slane %v2877, 3
      %v3718 = vsel %vm3691, %v3715, %v3717
      %v3719 = vrot.slane %v2878, 3
      %v3720 = vsel %vm3691, %v3717, %v3719
      %v3721 = vrot.slane %v2879, 3
      %v3722 = vsel %vm3691, %v3719, %v3721
      %v3723 = vrot.slane %v2880, 3
      %v3724 = vsel %vm3691, %v3721, %v3723
      %v3725 = vrot.slane %v2881, 3
      %v3726 = vsel %vm3691, %v3723, %v3725
      %v3727 = vrot.slane %v3219, 3
      %v3728 = vsel %vm3691, %v3725, %v3727
      %v3763 = vunpack.c.l.b16 %v3672
      %v3764 = vunpack.c.l.b16 %v3673
      %v3765 = vunpack.c.l.b16 %v3674
      %v3766 = vunpack.c.l.b16 %v3675
      %v3767 = vunpack.c.l.b16 %v3676
      %v3768 = vunpack.c.l.b16 %v3677
      %v3769 = vunpack.c.l.b16 %v3678
      %v3770 = vunpack.c.l.b16 %v3679
      %v3771 = vunpack.c.l.b16 %v3680
      %v3772 = vunpack.c.l.b16 %v3681
      %v3773 = vunpack.c.l.b16 %v3682
      %v3774 = vunpack.c.l.b16 %v3683
      %v3775 = vunpack.c.l.b16 %v3684
      %v3776 = vunpack.c.l.b16 %v3685
      %v3777 = vunpack.c.l.b16 %v3686
      %v3778 = vunpack.c.l.b16 %v3687
      %v3779 = vpack.c.b16 %v3764, %v3763
      %v3780 = vpack.c.b16 %v3766, %v3765
      %v3781 = vpack.c.b16 %v3768, %v3767
      %v3782 = vpack.c.b16 %v3770, %v3769
      %v3783 = vpack.c.b16 %v3772, %v3771
      %v3784 = vpack.c.b16 %v3774, %v3773
      %v3785 = vpack.c.b16 %v3776, %v3775
      %v3786 = vpack.c.b16 %v3778, %v3777
      %3795 = vmatprep.subr.bf16.mxu0 0
      %3796 = vmatpush1.bf16.msra.mxu0 %v3779
      %3797 = vmatprep.subr.bf16.mxu0 0
      %3798 = vmatpush1.bf16.msra.mxu0 %v3780
      %3799 = vmatprep.subr.bf16.mxu0 0
      %3800 = vmatpush1.bf16.msra.mxu0 %v3781
      %3801 = vmatprep.subr.bf16.mxu0 0
      %3802 = vmatpush1.bf16.msra.mxu0 %v3782
      %3803 = vmatprep.subr.bf16.mxu0 0
      %3804 = vmatpush1.bf16.msra.mxu0 %v3783
      %3805 = vmatprep.subr.bf16.mxu0 0
      %3806 = vmatpush1.bf16.msra.mxu0 %v3784
      %3807 = vmatprep.subr.bf16.mxu0 0
      %3808 = vmatpush1.bf16.msra.mxu0 %v3785
      %3809 = vmatprep.subr.bf16.mxu0 0
      %3810 = vmatpush1.bf16.msra.mxu0 %v3786
      %3811 = vmatprep.subr.bf16.mxu0 0
      %3812 = vmatpush1.bf16.msra.mxu0 0
      %3813 = vmatprep.subr.bf16.mxu0 0
      %3814 = vmatpush1.bf16.msra.mxu0 0
      %3815 = vmatprep.subr.bf16.mxu0 0
      %3816 = vmatpush1.bf16.msra.mxu0 0
      %3817 = vmatprep.subr.bf16.mxu0 0
      %3818 = vmatpush1.bf16.msra.mxu0 0
      %3819 = vmatprep.subr.bf16.mxu0 0
      %3820 = vmatpush1.bf16.msra.mxu0 0
      %3821 = vmatprep.subr.bf16.mxu0 0
      %3822 = vmatpush1.bf16.msra.mxu0 0
      %3823 = vmatprep.subr.bf16.mxu0 0
      %3824 = vmatpush1.bf16.msra.mxu0 0
      %3825 = vmatprep.subr.bf16.mxu0 0
      %3826 = vmatpush1.bf16.msra.mxu0 0
      %3827 = vmatprep.mubr.bf16.mxu0 0
      %3828 = vmatmul.mubr.bf16.gmra.mrb[0].mxu0 %v3694
      %v3829 = vpop.f32.mrb[0].mxu0
      %v3830 = vadd.f32 0.0, %v3829
      %v3831 = vpop.f32.mrb[0].mxu0
      %v3832 = vpop.f32.mrb[0].mxu0
      %v3833 = vadd.f32 0.0, %v3832
      %v3834 = vpop.f32.mrb[0].mxu0
      %3835 = vmatprep.mubr.bf16.mxu0 0
      %3836 = vmatmul.mubr.bf16.gmra.mrb[0].mxu0 %v3696
      %v3837 = vpop.f32.mrb[0].mxu0
      %v3838 = vadd.f32 0.0, %v3837
      %v3839 = vpop.f32.mrb[0].mxu0
      %v3840 = vpop.f32.mrb[0].mxu0
      %v3841 = vadd.f32 0.0, %v3840
      %v3842 = vpop.f32.mrb[0].mxu0
      %3843 = vmatprep.mubr.bf16.mxu0 0
      %3844 = vmatmul.mubr.bf16.gmra.mrb[0].mxu0 %v3698
      %v3845 = vpop.f32.mrb[0].mxu0
      %v3846 = vadd.f32 0.0, %v3845
      %v3847 = vpop.f32.mrb[0].mxu0
      %v3848 = vpop.f32.mrb[0].mxu0
      %v3849 = vadd.f32 0.0, %v3848
      %v3850 = vpop.f32.mrb[0].mxu0
      %3851 = vmatprep.mubr.bf16.mxu0 0
      %3852 = vmatmul.mubr.bf16.gmra.mrb[0].mxu0 %v3700
      %v3853 = vpop.f32.mrb[0].mxu0
      %v3854 = vadd.f32 0.0, %v3853
      %v3855 = vpop.f32.mrb[0].mxu0
      %v3856 = vpop.f32.mrb[0].mxu0
      %v3857 = vadd.f32 0.0, %v3856
      %v3858 = vpop.f32.mrb[0].mxu0
      %3859 = vmatprep.mubr.bf16.mxu0 0
      %3860 = vmatmul.mubr.bf16.gmra.mrb[0].mxu0 %v3702
      %v3861 = vpop.f32.mrb[0].mxu0
      %v3862 = vadd.f32 0.0, %v3861
      %v3863 = vpop.f32.mrb[0].mxu0
      %v3864 = vpop.f32.mrb[0].mxu0
      %v3865 = vadd.f32 0.0, %v3864
      %v3866 = vpop.f32.mrb[0].mxu0
      %3867 = vmatprep.mubr.bf16.mxu0 0
      %3868 = vmatmul.mubr.bf16.gmra.mrb[0].mxu0 %v3704
      %v3869 = vpop.f32.mrb[0].mxu0
      %v3870 = vadd.f32 0.0, %v3869
      %v3871 = vpop.f32.mrb[0].mxu0
      %v3872 = vpop.f32.mrb[0].mxu0
      %v3873 = vadd.f32 0.0, %v3872
      %v3874 = vpop.f32.mrb[0].mxu0
      %3875 = vmatprep.mubr.bf16.mxu0 0
      %3876 = vmatmul.mubr.bf16.gmra.mrb[0].mxu0 %v3706
      %v3877 = vpop.f32.mrb[0].mxu0
      %v3878 = vadd.f32 0.0, %v3877
      %v3879 = vpop.f32.mrb[0].mxu0
      %v3880 = vpop.f32.mrb[0].mxu0
      %v3881 = vadd.f32 0.0, %v3880
      %v3882 = vpop.f32.mrb[0].mxu0
      %3883 = vmatprep.mubr.bf16.mxu0 0
      %3884 = vmatmul.mubr.bf16.gmra.mrb[0].mxu0 %v3708
      %v3885 = vpop.f32.mrb[0].mxu0
      %v3886 = vadd.f32 0.0, %v3885
      %v3887 = vpop.f32.mrb[0].mxu0
      %v3888 = vpop.f32.mrb[0].mxu0
      %v3889 = vadd.f32 0.0, %v3888
      %v3890 = vpop.f32.mrb[0].mxu0
      %3891 = vmatprep.mubr.bf16.mxu0 0
      %3892 = vmatmul.mubr.bf16.gmra.mrb[0].mxu0 %v3710
      %v3893 = vpop.f32.mrb[0].mxu0
      %v3894 = vadd.f32 0.0, %v3893
      %v3895 = vpop.f32.mrb[0].mxu0
      %v3896 = vpop.f32.mrb[0].mxu0
      %v3897 = vadd.f32 0.0, %v3896
      %v3898 = vpop.f32.mrb[0].mxu0
      %3899 = vmatprep.mubr.bf16.mxu0 0
      %3900 = vmatmul.mubr.bf16.gmra.mrb[0].mxu0 %v3712
      %v3901 = vpop.f32.mrb[0].mxu0
      %v3902 = vadd.f32 0.0, %v3901
      %v3903 = vpop.f32.mrb[0].mxu0
      %v3904 = vpop.f32.mrb[0].mxu0
      %v3905 = vadd.f32 0.0, %v3904
      %v3906 = vpop.f32.mrb[0].mxu0
      %3907 = vmatprep.mubr.bf16.mxu0 0
      %3908 = vmatmul.mubr.bf16.gmra.mrb[0].mxu0 %v3714
      %v3909 = vpop.f32.mrb[0].mxu0
      %v3910 = vadd.f32 0.0, %v3909
      %v3911 = vpop.f32.mrb[0].mxu0
      %v3912 = vpop.f32.mrb[0].mxu0
      %v3913 = vadd.f32 0.0, %v3912
      %v3914 = vpop.f32.mrb[0].mxu0
      %3915 = vmatprep.mubr.bf16.mxu0 0
      %3916 = vmatmul.mubr.bf16.gmra.mrb[0].mxu0 %v3716
      %v3917 = vpop.f32.mrb[0].mxu0
      %v3918 = vadd.f32 0.0, %v3917
      %v3919 = vpop.f32.mrb[0].mxu0
      %v3920 = vpop.f32.mrb[0].mxu0
      %v3921 = vadd.f32 0.0, %v3920
      %v3922 = vpop.f32.mrb[0].mxu0
      %3923 = vmatprep.mubr.bf16.mxu0 0
      %3924 = vmatmul.mubr.bf16.gmra.mrb[0].mxu0 %v3718
      %v3925 = vpop.f32.mrb[0].mxu0
      %v3926 = vadd.f32 0.0, %v3925
      %v3927 = vpop.f32.mrb[0].mxu0
      %v3928 = vpop.f32.mrb[0].mxu0
      %v3929 = vadd.f32 0.0, %v3928
      %v3930 = vpop.f32.mrb[0].mxu0
      %3931 = vmatprep.mubr.bf16.mxu0 0
      %3932 = vmatmul.mubr.bf16.gmra.mrb[0].mxu0 %v3720
      %v3933 = vpop.f32.mrb[0].mxu0
      %v3934 = vadd.f32 0.0, %v3933
      %v3935 = vpop.f32.mrb[0].mxu0
      %v3936 = vpop.f32.mrb[0].mxu0
      %v3937 = vadd.f32 0.0, %v3936
      %v3938 = vpop.f32.mrb[0].mxu0
      %3939 = vmatprep.mubr.bf16.mxu0 0
      %3940 = vmatmul.mubr.bf16.gmra.mrb[0].mxu0 %v3722
      %v3941 = vpop.f32.mrb[0].mxu0
      %v3942 = vadd.f32 0.0, %v3941
      %v3943 = vpop.f32.mrb[0].mxu0
      %v3944 = vpop.f32.mrb[0].mxu0
      %v3945 = vadd.f32 0.0, %v3944
      %v3946 = vpop.f32.mrb[0].mxu0
      %3947 = vmatprep.mubr.bf16.mxu0 0
      %3948 = vmatmul.mubr.bf16.gmra.mrb[0].mxu0 %v3724
      %v3949 = vpop.f32.mrb[0].mxu0
      %v3950 = vadd.f32 0.0, %v3949
      %v3951 = vpop.f32.mrb[0].mxu0
      %v3952 = vpop.f32.mrb[0].mxu0
      %v3953 = vadd.f32 0.0, %v3952
      %v3954 = vpop.f32.mrb[0].mxu0
      %3955 = vmatprep.mubr.bf16.mxu0 0
      %3956 = vmatmul.mubr.bf16.gmra.mrb[0].mxu0 %v3726
      %v3957 = vpop.f32.mrb[0].mxu0
      %v3958 = vadd.f32 0.0, %v3957
      %v3959 = vpop.f32.mrb[0].mxu0
      %v3960 = vpop.f32.mrb[0].mxu0
      %v3961 = vadd.f32 0.0, %v3960
      %v3962 = vpop.f32.mrb[0].mxu0
      %3963 = vmatprep.mubr.bf16.mxu0 0
      %3964 = vmatmul.mubr.bf16.gmra.mrb[0].mxu0 %v3728
      %v3965 = vpop.f32.mrb[0].mxu0
      %v3966 = vadd.f32 0.0, %v3965
      %v3967 = vpop.f32.mrb[0].mxu0
      %v3968 = vpop.f32.mrb[0].mxu0
      %v3969 = vadd.f32 0.0, %v3968
      %v3970 = vpop.f32.mrb[0].mxu0
      %3971 = vdwg.mxu0
      %v3972 = vadd.f32 %v3634, %v3830
      %v3973 = vadd.f32 %v3635, %v3833
      %v3974 = vadd.f32 %v3636, %v3838
      %v3975 = vadd.f32 %v3637, %v3841
      %v3976 = vadd.f32 %v3638, %v3846
      %v3977 = vadd.f32 %v3639, %v3849
      %v3978 = vadd.f32 %v3640, %v3854
      %v3979 = vadd.f32 %v3641, %v3857
      %v3980 = vadd.f32 %v3642, %v3862
      %v3981 = vadd.f32 %v3643, %v3865
      %v3982 = vadd.f32 %v3644, %v3870
      %v3983 = vadd.f32 %v3645, %v3873
      %v3984 = vadd.f32 %v3646, %v3878
      %v3985 = vadd.f32 %v3647, %v3881
      %v3986 = vadd.f32 %v3648, %v3886
      %v3987 = vadd.f32 %v3649, %v3889
      %v3988 = vadd.f32 %v3650, %v3894
      %v3989 = vadd.f32 %v3651, %v3897
      %v3990 = vadd.f32 %v3652, %v3902
      %v3991 = vadd.f32 %v3653, %v3905
      %v3992 = vadd.f32 %v3654, %v3910
      %v3993 = vadd.f32 %v3655, %v3913
      %v3994 = vadd.f32 %v3656, %v3918
      %v3995 = vadd.f32 %v3657, %v3921
      %v3996 = vadd.f32 %v3658, %v3926
      %v3997 = vadd.f32 %v3659, %v3929
      %v3998 = vadd.f32 %v3660, %v3934
      %v3999 = vadd.f32 %v3661, %v3937
      %v4000 = vadd.f32 %v3662, %v3942
      %v4001 = vadd.f32 %v3663, %v3945
      %v4002 = vadd.f32 %v3664, %v3950
      %v4003 = vadd.f32 %v3665, %v3953
      %v4004 = vadd.f32 %v3666, %v3958
      %v4005 = vadd.f32 %v3667, %v3961
      %v4006 = vadd.f32 %v3668, %v3966
      %v4007 = vadd.f32 %v3669, %v3969
      %v4008 = vld [vmem:[%s3] sm:$0x1]
      %v4010 = vlaneseq
      %v4011 = vshrl.u32 %v4010, 7
      %v4012 = vsub.s32 0, %v4011
      %v4013 = vrot.slane %v4008, %v4012
      %v4015 = vadd.f32 %v3972, %v4013
      %v4016 = vadd.f32 %v3973, %v4013
      %v4017 = vadd.f32 %v3974, %v4013
      %v4018 = vadd.f32 %v3975, %v4013
      %v4019 = vadd.f32 %v3976, %v4013
      %v4020 = vadd.f32 %v3977, %v4013
      %v4021 = vadd.f32 %v3978, %v4013
      %v4022 = vadd.f32 %v3979, %v4013
      %v4023 = vadd.f32 %v3980, %v4013
      %v4024 = vadd.f32 %v3981, %v4013
      %v4025 = vadd.f32 %v3982, %v4013
      %v4026 = vadd.f32 %v3983, %v4013
      %v4027 = vadd.f32 %v3984, %v4013
      %v4028 = vadd.f32 %v3985, %v4013
      %v4029 = vadd.f32 %v3986, %v4013
      %v4030 = vadd.f32 %v3987, %v4013
      %v4031 = vadd.f32 %v3988, %v4013
      %v4032 = vadd.f32 %v3989, %v4013
      %v4033 = vadd.f32 %v3990, %v4013
      %v4034 = vadd.f32 %v3991, %v4013
      %v4035 = vadd.f32 %v3992, %v4013
      %v4036 = vadd.f32 %v3993, %v4013
      %v4037 = vadd.f32 %v3994, %v4013
      %v4038 = vadd.f32 %v3995, %v4013
      %v4039 = vadd.f32 %v3996, %v4013
      %v4040 = vadd.f32 %v3997, %v4013
      %v4041 = vadd.f32 %v3998, %v4013
      %v4042 = vadd.f32 %v3999, %v4013
      %v4043 = vadd.f32 %v4000, %v4013
      %v4044 = vadd.f32 %v4001, %v4013
      %v4045 = vadd.f32 %v4002, %v4013
      %v4046 = vadd.f32 %v4003, %v4013
      %v4047 = vadd.f32 %v4004, %v4013
      %v4048 = vadd.f32 %v4005, %v4013
      %v4049 = vadd.f32 %v4006, %v4013
      %v4050 = vadd.f32 %v4007, %v4013
      %v4051 = vmax.f32 %v4015, 0.0
      %v4052 = vmax.f32 %v4016, 0.0
      %v4053 = vmax.f32 %v4017, 0.0
      %v4054 = vmax.f32 %v4018, 0.0
      %v4055 = vmax.f32 %v4019, 0.0
      %v4056 = vmax.f32 %v4020, 0.0
      %v4057 = vmax.f32 %v4021, 0.0
      %v4058 = vmax.f32 %v4022, 0.0
      %v4059 = vmax.f32 %v4023, 0.0
      %v4060 = vmax.f32 %v4024, 0.0
      %v4061 = vmax.f32 %v4025, 0.0
      %v4062 = vmax.f32 %v4026, 0.0
      %v4063 = vmax.f32 %v4027, 0.0
      %v4064 = vmax.f32 %v4028, 0.0
      %v4065 = vmax.f32 %v4029, 0.0
      %v4066 = vmax.f32 %v4030, 0.0
      %v4067 = vmax.f32 %v4031, 0.0
      %v4068 = vmax.f32 %v4032, 0.0
      %v4069 = vmax.f32 %v4033, 0.0
      %v4070 = vmax.f32 %v4034, 0.0
      %v4071 = vmax.f32 %v4035, 0.0
      %v4072 = vmax.f32 %v4036, 0.0
      %v4073 = vmax.f32 %v4037, 0.0
      %v4074 = vmax.f32 %v4038, 0.0
      %v4075 = vmax.f32 %v4039, 0.0
      %v4076 = vmax.f32 %v4040, 0.0
      %v4077 = vmax.f32 %v4041, 0.0
      %v4078 = vmax.f32 %v4042, 0.0
      %v4079 = vmax.f32 %v4043, 0.0
      %v4080 = vmax.f32 %v4044, 0.0
      %v4081 = vmax.f32 %v4045, 0.0
      %v4082 = vmax.f32 %v4046, 0.0
      %v4083 = vmax.f32 %v4047, 0.0
      %v4084 = vmax.f32 %v4048, 0.0
      %v4085 = vmax.f32 %v4049, 0.0
      %v4086 = vmax.f32 %v4050, 0.0
      %v4087 = vld [vmem:[%s1] sm:$0xff]
      %v4088 = vld [vmem:[%s1 + $0x8] sm:$0xff]
      %v4089 = vld [vmem:[%s1 + $0x10] sm:$0xff]
      %v4090 = vld [vmem:[%s1 + $0x18] sm:$0xff]
      %v4091 = vld [vmem:[%s1 + $0x20] sm:$0xff]
      %v4092 = vld [vmem:[%s1 + $0x28] sm:$0xff]
      %v4093 = vld [vmem:[%s1 + $0x30] sm:$0xff]
      %v4094 = vld [vmem:[%s1 + $0x38] sm:$0xff]
      %v4095 = vld [vmem:[%s1 + $0x40] sm:$0xff]
      %v4096 = vld [vmem:[%s1 + $0x48] sm:$0xff]
      %v4097 = vld [vmem:[%s1 + $0x50] sm:$0xff]
      %v4098 = vld [vmem:[%s1 + $0x58] sm:$0xff]
      %v4099 = vld [vmem:[%s1 + $0x60] sm:$0xff]
      %v4100 = vld [vmem:[%s1 + $0x68] sm:$0xff]
      %v4101 = vld [vmem:[%s1 + $0x70] sm:$0xff]
      %v4102 = vld [vmem:[%s1 + $0x78] sm:$0xff]
      %v4103 = vld [vmem:[%s1 + $0x80] sm:$0xff]
      %v4104 = vld [vmem:[%s1 + $0x88] sm:$0xff]
      %v4105 = vld [vmem:[%s1 + $0x90] sm:$0xff]
      %v4106 = vld [vmem:[%s1 + $0x98] sm:$0xff]
      %v4107 = vld [vmem:[%s1 + $0xa0] sm:$0xff]
      %v4108 = vld [vmem:[%s1 + $0xa8] sm:$0xff]
      %v4109 = vld [vmem:[%s1 + $0xb0] sm:$0xff]
      %v4110 = vld [vmem:[%s1 + $0xb8] sm:$0xff]
      %v4111 = vld [vmem:[%s1 + $0xc0] sm:$0xff]
      %v4112 = vld [vmem:[%s1 + $0xc8] sm:$0xff]
      %v4113 = vld [vmem:[%s1 + $0xd0] sm:$0xff]
      %v4114 = vld [vmem:[%s1 + $0xd8] sm:$0xff]
      %v4115 = vld [vmem:[%s1 + $0xe0] sm:$0xff]
      %v4116 = vld [vmem:[%s1 + $0xe8] sm:$0xff]
      %v4117 = vld [vmem:[%s1 + $0xf0] sm:$0xff]
      %v4118 = vld [vmem:[%s1 + $0xf8] sm:$0xff]
      %v4119 = vld [vmem:[%s1 + $0x100] sm:$0xff]
      %v4120 = vld [vmem:[%s1 + $0x108] sm:$0xff]
      %v4121 = vld [vmem:[%s1 + $0x110] sm:$0xff]
      %v4122 = vld [vmem:[%s1 + $0x118] sm:$0xff]
      %v4123 = vmul.f32 %v4051, %v4087
      %v4124 = vmul.f32 %v4052, %v4088
      %v4125 = vmul.f32 %v4053, %v4089
      %v4126 = vmul.f32 %v4054, %v4090
      %v4127 = vmul.f32 %v4055, %v4091
      %v4128 = vmul.f32 %v4056, %v4092
      %v4129 = vmul.f32 %v4057, %v4093
      %v4130 = vmul.f32 %v4058, %v4094
      %v4131 = vmul.f32 %v4059, %v4095
      %v4132 = vmul.f32 %v4060, %v4096
      %v4133 = vmul.f32 %v4061, %v4097
      %v4134 = vmul.f32 %v4062, %v4098
      %v4135 = vmul.f32 %v4063, %v4099
      %v4136 = vmul.f32 %v4064, %v4100
      %v4137 = vmul.f32 %v4065, %v4101
      %v4138 = vmul.f32 %v4066, %v4102
      %v4139 = vmul.f32 %v4067, %v4103
      %v4140 = vmul.f32 %v4068, %v4104
      %v4141 = vmul.f32 %v4069, %v4105
      %v4142 = vmul.f32 %v4070, %v4106
      %v4143 = vmul.f32 %v4071, %v4107
      %v4144 = vmul.f32 %v4072, %v4108
      %v4145 = vmul.f32 %v4073, %v4109
      %v4146 = vmul.f32 %v4074, %v4110
      %v4147 = vmul.f32 %v4075, %v4111
      %v4148 = vmul.f32 %v4076, %v4112
      %v4149 = vmul.f32 %v4077, %v4113
      %v4150 = vmul.f32 %v4078, %v4114
      %v4151 = vmul.f32 %v4079, %v4115
      %v4152 = vmul.f32 %v4080, %v4116
      %v4153 = vmul.f32 %v4081, %v4117
      %v4154 = vmul.f32 %v4082, %v4118
      %v4155 = vmul.f32 %v4083, %v4119
      %v4156 = vmul.f32 %v4084, %v4120
      %v4157 = vmul.f32 %v4085, %v4121
      %v4158 = vmul.f32 %v4086, %v4122
      %v4159 = vpack.c.bf16 %v4124, %v4123
      %v4160 = vpack.c.bf16 %v4126, %v4125
      %v4161 = vpack.c.bf16 %v4128, %v4127
      %v4162 = vpack.c.bf16 %v4130, %v4129
      %v4163 = vpack.c.bf16 %v4132, %v4131
      %v4164 = vpack.c.bf16 %v4134, %v4133
      %v4165 = vpack.c.bf16 %v4136, %v4135
      %v4166 = vpack.c.bf16 %v4138, %v4137
      %v4167 = vpack.c.bf16 %v4140, %v4139
      %v4168 = vpack.c.bf16 %v4142, %v4141
      %v4169 = vpack.c.bf16 %v4144, %v4143
      %v4170 = vpack.c.bf16 %v4146, %v4145
      %v4171 = vpack.c.bf16 %v4148, %v4147
      %v4172 = vpack.c.bf16 %v4150, %v4149
      %v4173 = vpack.c.bf16 %v4152, %v4151
      %v4174 = vpack.c.bf16 %v4154, %v4153
      %v4175 = vpack.c.bf16 %v4156, %v4155
      %v4176 = vpack.c.bf16 %v4158, %v4157
      %vm4177 = vsmask.f32 1280
      %v4179 = vshrl.u32 %v4159, 16
      %v4181 = vrot.slane %v4179, 6
      %v4182 = vshll.u32 %v4159, 16
      %v4184 = vrot.slane %v4182, 7
      %v4185 = vor.u32 %v4181, %v4184
      %v4187 = vshrl.u32 %v4160, 16
      %v4189 = vrot.slane %v4187, 6
      %v4190 = vshll.u32 %v4160, 16
      %v4192 = vrot.slane %v4190, 7
      %v4193 = vor.u32 %v4189, %v4192
      %v4194 = vsel %vm4177, %v4185, %v4193
      %v4196 = vshrl.u32 %v4161, 16
      %v4198 = vrot.slane %v4196, 6
      %v4199 = vshll.u32 %v4161, 16
      %v4201 = vrot.slane %v4199, 7
      %v4202 = vor.u32 %v4198, %v4201
      %v4203 = vsel %vm4177, %v4193, %v4202
      %v4205 = vshrl.u32 %v4162, 16
      %v4207 = vrot.slane %v4205, 6
      %v4208 = vshll.u32 %v4162, 16
      %v4210 = vrot.slane %v4208, 7
      %v4211 = vor.u32 %v4207, %v4210
      %v4212 = vsel %vm4177, %v4202, %v4211
      %v4214 = vshrl.u32 %v4163, 16
      %v4216 = vrot.slane %v4214, 6
      %v4217 = vshll.u32 %v4163, 16
      %v4219 = vrot.slane %v4217, 7
      %v4220 = vor.u32 %v4216, %v4219
      %v4221 = vsel %vm4177, %v4211, %v4220
      %v4223 = vshrl.u32 %v4164, 16
      %v4225 = vrot.slane %v4223, 6
      %v4226 = vshll.u32 %v4164, 16
      %v4228 = vrot.slane %v4226, 7
      %v4229 = vor.u32 %v4225, %v4228
      %v4230 = vsel %vm4177, %v4220, %v4229
      %v4232 = vshrl.u32 %v4165, 16
      %v4234 = vrot.slane %v4232, 6
      %v4235 = vshll.u32 %v4165, 16
      %v4237 = vrot.slane %v4235, 7
      %v4238 = vor.u32 %v4234, %v4237
      %v4239 = vsel %vm4177, %v4229, %v4238
      %v4241 = vshrl.u32 %v4166, 16
      %v4243 = vrot.slane %v4241, 6
      %v4244 = vshll.u32 %v4166, 16
      %v4246 = vrot.slane %v4244, 7
      %v4247 = vor.u32 %v4243, %v4246
      %v4248 = vsel %vm4177, %v4238, %v4247
      %v4250 = vshrl.u32 %v4167, 16
      %v4252 = vrot.slane %v4250, 6
      %v4253 = vshll.u32 %v4167, 16
      %v4255 = vrot.slane %v4253, 7
      %v4256 = vor.u32 %v4252, %v4255
      %v4257 = vsel %vm4177, %v4247, %v4256
      %v4259 = vshrl.u32 %v4168, 16
      %v4261 = vrot.slane %v4259, 6
      %v4262 = vshll.u32 %v4168, 16
      %v4264 = vrot.slane %v4262, 7
      %v4265 = vor.u32 %v4261, %v4264
      %v4266 = vsel %vm4177, %v4256, %v4265
      %v4268 = vshrl.u32 %v4169, 16
      %v4270 = vrot.slane %v4268, 6
      %v4271 = vshll.u32 %v4169, 16
      %v4273 = vrot.slane %v4271, 7
      %v4274 = vor.u32 %v4270, %v4273
      %v4275 = vsel %vm4177, %v4265, %v4274
      %v4277 = vshrl.u32 %v4170, 16
      %v4279 = vrot.slane %v4277, 6
      %v4280 = vshll.u32 %v4170, 16
      %v4282 = vrot.slane %v4280, 7
      %v4283 = vor.u32 %v4279, %v4282
      %v4284 = vsel %vm4177, %v4274, %v4283
      %v4286 = vshrl.u32 %v4171, 16
      %v4288 = vrot.slane %v4286, 6
      %v4289 = vshll.u32 %v4171, 16
      %v4291 = vrot.slane %v4289, 7
      %v4292 = vor.u32 %v4288, %v4291
      %v4293 = vsel %vm4177, %v4283, %v4292
      %v4295 = vshrl.u32 %v4172, 16
      %v4297 = vrot.slane %v4295, 6
      %v4298 = vshll.u32 %v4172, 16
      %v4300 = vrot.slane %v4298, 7
      %v4301 = vor.u32 %v4297, %v4300
      %v4302 = vsel %vm4177, %v4292, %v4301
      %v4304 = vshrl.u32 %v4173, 16
      %v4306 = vrot.slane %v4304, 6
      %v4307 = vshll.u32 %v4173, 16
      %v4309 = vrot.slane %v4307, 7
      %v4310 = vor.u32 %v4306, %v4309
      %v4311 = vsel %vm4177, %v4301, %v4310
      %v4313 = vshrl.u32 %v4174, 16
      %v4315 = vrot.slane %v4313, 6
      %v4316 = vshll.u32 %v4174, 16
      %v4318 = vrot.slane %v4316, 7
      %v4319 = vor.u32 %v4315, %v4318
      %v4320 = vsel %vm4177, %v4310, %v4319
      %v4322 = vshrl.u32 %v4175, 16
      %v4324 = vrot.slane %v4322, 6
      %v4325 = vshll.u32 %v4175, 16
      %v4327 = vrot.slane %v4325, 7
      %v4328 = vor.u32 %v4324, %v4327
      %v4329 = vsel %vm4177, %v4319, %v4328
      %v4331 = vshrl.u32 %v4176, 16
      %v4333 = vrot.slane %v4331, 6
      %v4334 = vshll.u32 %v4176, 16
      %v4336 = vrot.slane %v4334, 7
      %v4337 = vor.u32 %v4333, %v4336
      %v4338 = vsel %vm4177, %v4328, %v4337
      %vm4358 = vcmask 1047553
      %vm4359 = vsmask.f32 7942
      %vm4360 = vmand %vm4358, %vm4359
      %v4361 = vld [vmem:[#allocation2 + $0x8] sm:$0xfe]
      %v4362 = vsel %vm4360, %v4185, %v4361
      %4363 = vst [vmem:[#allocation2 + $0x8] sm:$0xfe] %v4362
      %4364 = vst [vmem:[#allocation2 + $0x10] sm:$0xff] %v4194
      %4365 = vst [vmem:[#allocation2 + $0x18] sm:$0xff] %v4203
      %4366 = vst [vmem:[#allocation2 + $0x20] sm:$0xff] %v4212
      %4367 = vst [vmem:[#allocation2 + $0x28] sm:$0xff] %v4221
      %4368 = vst [vmem:[#allocation2 + $0x30] sm:$0xff] %v4230
      %4369 = vst [vmem:[#allocation2 + $0x38] sm:$0xff] %v4239
      %4370 = vst [vmem:[#allocation2 + $0x40] sm:$0xff] %v4248
      %4371 = vst [vmem:[#allocation2 + $0x48] sm:$0xff] %v4257
      %4372 = vst [vmem:[#allocation2 + $0x50] sm:$0xff] %v4266
      %4373 = vst [vmem:[#allocation2 + $0x58] sm:$0xff] %v4275
      %4374 = vst [vmem:[#allocation2 + $0x60] sm:$0xff] %v4284
      %4375 = vst [vmem:[#allocation2 + $0x68] sm:$0xff] %v4293
      %4376 = vst [vmem:[#allocation2 + $0x70] sm:$0xff] %v4302
      %4377 = vst [vmem:[#allocation2 + $0x78] sm:$0xff] %v4311
      %4378 = vst [vmem:[#allocation2 + $0x80] sm:$0xff] %v4320
      %4379 = vst [vmem:[#allocation2 + $0x88] sm:$0xff] %v4329
      %4380 = vst [vmem:[#allocation2 + $0x90] sm:$0xff] %v4338
      %vm4381 = vcmask 1041408
      %vm4382 = vmand %vm4381, %vm4177
      %v4383 = vld [vmem:[#allocation2 + $0x98] sm:$0x3]
      %v4384 = vsel %vm4382, %v4337, %v4383
      %4385 = vst [vmem:[#allocation2 + $0x98] sm:$0x3] %v4384
      %v4386 = vld [vmem:[#allocation2] sm:$0xff]
      %v4387 = vld [vmem:[#allocation2 + $0x8] sm:$0xff]
      %v4388 = vld [vmem:[#allocation2 + $0x10] sm:$0xff]
      %v4389 = vld [vmem:[#allocation2 + $0x18] sm:$0xff]
      %v4390 = vld [vmem:[#allocation2 + $0x20] sm:$0xff]
      %v4391 = vld [vmem:[#allocation2 + $0x28] sm:$0xff]
      %v4392 = vld [vmem:[#allocation2 + $0x30] sm:$0xff]
      %v4393 = vld [vmem:[#allocation2 + $0x38] sm:$0xff]
      %v4394 = vld [vmem:[#allocation2 + $0x40] sm:$0xff]
      %v4395 = vld [vmem:[#allocation2 + $0x48] sm:$0xff]
      %v4396 = vld [vmem:[#allocation2 + $0x50] sm:$0xff]
      %v4397 = vld [vmem:[#allocation2 + $0x58] sm:$0xff]
      %v4398 = vld [vmem:[#allocation2 + $0x60] sm:$0xff]
      %v4399 = vld [vmem:[#allocation2 + $0x68] sm:$0xff]
      %v4400 = vld [vmem:[#allocation2 + $0x70] sm:$0xff]
      %v4401 = vld [vmem:[#allocation2 + $0x78] sm:$0xff]
      %v4402 = vld [vmem:[#allocation2 + $0x80] sm:$0xff]
      %v4403 = vld [vmem:[#allocation2 + $0x88] sm:$0xff]
      %v4404 = vld [vmem:[%s4] sm:$0xf]
      %v4405 = vld [vmem:[%s4 + $0x4] sm:$0xf]
      %v4406 = vld [vmem:[%s4 + $0x8] sm:$0xf]
      %v4407 = vld [vmem:[%s4 + $0xc] sm:$0xf]
      %v4408 = vld [vmem:[%s4 + $0x10] sm:$0xf]
      %v4409 = vld [vmem:[%s4 + $0x14] sm:$0xf]
      %v4410 = vld [vmem:[%s4 + $0x18] sm:$0xf]
      %v4411 = vld [vmem:[%s4 + $0x1c] sm:$0xf]
      %v4412 = vld [vmem:[%s4 + $0x20] sm:$0xf]
      %v4413 = vld [vmem:[%s4 + $0x24] sm:$0xf]
      %v4414 = vld [vmem:[%s4 + $0x28] sm:$0xf]
      %v4415 = vld [vmem:[%s4 + $0x2c] sm:$0xf]
      %v4416 = vld [vmem:[%s4 + $0x30] sm:$0xf]
      %v4417 = vld [vmem:[%s4 + $0x34] sm:$0xf]
      %v4418 = vld [vmem:[%s4 + $0x38] sm:$0xf]
      %v4419 = vld [vmem:[%s4 + $0x3c] sm:$0xf]
      %v4420 = vld [vmem:[#allocation2 + $0x90] sm:$0x1]
      %s4421 = scalar_lea.vmem %s4, 64
      %v4422 = vld [vmem:[%s4421] sm:$0xf]
      %v4423 = vld [vmem:[%s4421 + $0x4] sm:$0xf]
      %v4424 = vld [vmem:[%s4421 + $0x8] sm:$0xf]
      %v4425 = vld [vmem:[%s4421 + $0xc] sm:$0xf]
      %v4426 = vld [vmem:[%s4421 + $0x10] sm:$0xf]
      %v4427 = vld [vmem:[%s4421 + $0x14] sm:$0xf]
      %v4428 = vld [vmem:[%s4421 + $0x18] sm:$0xf]
      %v4429 = vld [vmem:[%s4421 + $0x1c] sm:$0xf]
      %v4430 = vld [vmem:[%s4421 + $0x20] sm:$0xf]
      %v4431 = vld [vmem:[%s4421 + $0x24] sm:$0xf]
      %v4432 = vld [vmem:[%s4421 + $0x28] sm:$0xf]
      %v4433 = vld [vmem:[%s4421 + $0x2c] sm:$0xf]
      %v4434 = vld [vmem:[%s4421 + $0x30] sm:$0xf]
      %v4435 = vld [vmem:[%s4421 + $0x34] sm:$0xf]
      %v4436 = vld [vmem:[%s4421 + $0x38] sm:$0xf]
      %v4437 = vld [vmem:[%s4421 + $0x3c] sm:$0xf]
      %v4439 = vshrl.u32 %v4386, 16
      %v4441 = vshll.u32 %v4386, 16
      %v4443 = vrot.slane %v4441, 1
      %v4444 = vor.u32 %v4439, %v4443
      %v4446 = vshll.u32 %v4387, 16
      %v4448 = vrot.slane %v4446, 1
      %v4449 = vsel %vm491, %v4444, %v4448
      %v4450 = vshrl.u32 %v4387, 16
      %v4452 = vor.u32 %v4450, %v4448
      %v4454 = vshll.u32 %v4388, 16
      %v4456 = vrot.slane %v4454, 1
      %v4457 = vsel %vm491, %v4452, %v4456
      %v4458 = vshrl.u32 %v4388, 16
      %v4460 = vor.u32 %v4458, %v4456
      %v4462 = vshll.u32 %v4389, 16
      %v4464 = vrot.slane %v4462, 1
      %v4465 = vsel %vm491, %v4460, %v4464
      %v4466 = vshrl.u32 %v4389, 16
      %v4468 = vor.u32 %v4466, %v4464
      %v4470 = vshll.u32 %v4390, 16
      %v4472 = vrot.slane %v4470, 1
      %v4473 = vsel %vm491, %v4468, %v4472
      %v4474 = vshrl.u32 %v4390, 16
      %v4476 = vor.u32 %v4474, %v4472
      %v4478 = vshll.u32 %v4391, 16
      %v4480 = vrot.slane %v4478, 1
      %v4481 = vsel %vm491, %v4476, %v4480
      %v4482 = vshrl.u32 %v4391, 16
      %v4484 = vor.u32 %v4482, %v4480
      %v4486 = vshll.u32 %v4392, 16
      %v4488 = vrot.slane %v4486, 1
      %v4489 = vsel %vm491, %v4484, %v4488
      %v4490 = vshrl.u32 %v4392, 16
      %v4492 = vor.u32 %v4490, %v4488
      %v4494 = vshll.u32 %v4393, 16
      %v4496 = vrot.slane %v4494, 1
      %v4497 = vsel %vm491, %v4492, %v4496
      %v4498 = vshrl.u32 %v4393, 16
      %v4500 = vor.u32 %v4498, %v4496
      %v4502 = vshll.u32 %v4394, 16
      %v4504 = vrot.slane %v4502, 1
      %v4505 = vsel %vm491, %v4500, %v4504
      %v4506 = vshrl.u32 %v4394, 16
      %v4508 = vor.u32 %v4506, %v4504
      %v4510 = vshll.u32 %v4395, 16
      %v4512 = vrot.slane %v4510, 1
      %v4513 = vsel %vm491, %v4508, %v4512
      %v4514 = vshrl.u32 %v4395, 16
      %v4516 = vor.u32 %v4514, %v4512
      %v4518 = vshll.u32 %v4396, 16
      %v4520 = vrot.slane %v4518, 1
      %v4521 = vsel %vm491, %v4516, %v4520
      %v4522 = vshrl.u32 %v4396, 16
      %v4524 = vor.u32 %v4522, %v4520
      %v4526 = vshll.u32 %v4397, 16
      %v4528 = vrot.slane %v4526, 1
      %v4529 = vsel %vm491, %v4524, %v4528
      %v4530 = vshrl.u32 %v4397, 16
      %v4532 = vor.u32 %v4530, %v4528
      %v4534 = vshll.u32 %v4398, 16
      %v4536 = vrot.slane %v4534, 1
      %v4537 = vsel %vm491, %v4532, %v4536
      %v4538 = vshrl.u32 %v4398, 16
      %v4540 = vor.u32 %v4538, %v4536
      %v4542 = vshll.u32 %v4399, 16
      %v4544 = vrot.slane %v4542, 1
      %v4545 = vsel %vm491, %v4540, %v4544
      %v4546 = vshrl.u32 %v4399, 16
      %v4548 = vor.u32 %v4546, %v4544
      %v4550 = vshll.u32 %v4400, 16
      %v4552 = vrot.slane %v4550, 1
      %v4553 = vsel %vm491, %v4548, %v4552
      %v4554 = vshrl.u32 %v4400, 16
      %v4556 = vor.u32 %v4554, %v4552
      %v4558 = vshll.u32 %v4401, 16
      %v4560 = vrot.slane %v4558, 1
      %v4561 = vsel %vm491, %v4556, %v4560
      %v4562 = vshrl.u32 %v4401, 16
      %v4564 = vor.u32 %v4562, %v4560
      %v4566 = vshll.u32 %v4402, 16
      %v4568 = vrot.slane %v4566, 1
      %v4569 = vsel %vm491, %v4564, %v4568
      %v4570 = vshrl.u32 %v4402, 16
      %v4572 = vor.u32 %v4570, %v4568
      %v4574 = vshll.u32 %v4403, 16
      %v4576 = vrot.slane %v4574, 1
      %v4577 = vsel %vm491, %v4572, %v4576
      %v4578 = vshrl.u32 %v4403, 16
      %v4580 = vor.u32 %v4578, %v4576
      %v4582 = vshll.u32 %v4420, 16
      %v4584 = vrot.slane %v4582, 1
      %v4585 = vsel %vm491, %v4580, %v4584
      %v4620 = vunpack.c.l.b16 %v4422
      %v4621 = vunpack.c.l.b16 %v4423
      %v4622 = vunpack.c.l.b16 %v4424
      %v4623 = vunpack.c.l.b16 %v4425
      %v4624 = vunpack.c.l.b16 %v4426
      %v4625 = vunpack.c.l.b16 %v4427
      %v4626 = vunpack.c.l.b16 %v4428
      %v4627 = vunpack.c.l.b16 %v4429
      %v4628 = vunpack.c.l.b16 %v4430
      %v4629 = vunpack.c.l.b16 %v4431
      %v4630 = vunpack.c.l.b16 %v4432
      %v4631 = vunpack.c.l.b16 %v4433
      %v4632 = vunpack.c.l.b16 %v4434
      %v4633 = vunpack.c.l.b16 %v4435
      %v4634 = vunpack.c.l.b16 %v4436
      %v4635 = vunpack.c.l.b16 %v4437
      %v4636 = vpack.c.b16 %v4621, %v4620
      %v4637 = vpack.c.b16 %v4623, %v4622
      %v4638 = vpack.c.b16 %v4625, %v4624
      %v4639 = vpack.c.b16 %v4627, %v4626
      %v4640 = vpack.c.b16 %v4629, %v4628
      %v4641 = vpack.c.b16 %v4631, %v4630
      %v4642 = vpack.c.b16 %v4633, %v4632
      %v4643 = vpack.c.b16 %v4635, %v4634
      %4652 = vmatprep.subr.bf16.mxu0 0
      %4653 = vmatpush1.bf16.msra.mxu0 %v4636
      %4654 = vmatprep.subr.bf16.mxu0 0
      %4655 = vmatpush1.bf16.msra.mxu0 %v4637
      %4656 = vmatprep.subr.bf16.mxu0 0
      %4657 = vmatpush1.bf16.msra.mxu0 %v4638
      %4658 = vmatprep.subr.bf16.mxu0 0
      %4659 = vmatpush1.bf16.msra.mxu0 %v4639
      %4660 = vmatprep.subr.bf16.mxu0 0
      %4661 = vmatpush1.bf16.msra.mxu0 %v4640
      %4662 = vmatprep.subr.bf16.mxu0 0
      %4663 = vmatpush1.bf16.msra.mxu0 %v4641
      %4664 = vmatprep.subr.bf16.mxu0 0
      %4665 = vmatpush1.bf16.msra.mxu0 %v4642
      %4666 = vmatprep.subr.bf16.mxu0 0
      %4667 = vmatpush1.bf16.msra.mxu0 %v4643
      %4668 = vmatprep.subr.bf16.mxu0 0
      %4669 = vmatpush1.bf16.msra.mxu0 0
      %4670 = vmatprep.subr.bf16.mxu0 0
      %4671 = vmatpush1.bf16.msra.mxu0 0
      %4672 = vmatprep.subr.bf16.mxu0 0
      %4673 = vmatpush1.bf16.msra.mxu0 0
      %4674 = vmatprep.subr.bf16.mxu0 0
      %4675 = vmatpush1.bf16.msra.mxu0 0
      %4676 = vmatprep.subr.bf16.mxu0 0
      %4677 = vmatpush1.bf16.msra.mxu0 0
      %4678 = vmatprep.subr.bf16.mxu0 0
      %4679 = vmatpush1.bf16.msra.mxu0 0
      %4680 = vmatprep.subr.bf16.mxu0 0
      %4681 = vmatpush1.bf16.msra.mxu0 0
      %4682 = vmatprep.subr.bf16.mxu0 0
      %4683 = vmatpush1.bf16.msra.mxu0 0
      %4684 = vmatprep.mubr.bf16.mxu0 0
      %4685 = vmatmul.mubr.bf16.gmra.mrb[0].mxu0 %v4449
      %v4686 = vpop.f32.mrb[0].mxu0
      %v4687 = vadd.f32 0.0, %v4686
      %v4688 = vpop.f32.mrb[0].mxu0
      %v4689 = vpop.f32.mrb[0].mxu0
      %v4690 = vadd.f32 0.0, %v4689
      %v4691 = vpop.f32.mrb[0].mxu0
      %4692 = vmatprep.mubr.bf16.mxu0 0
      %4693 = vmatmul.mubr.bf16.gmra.mrb[0].mxu0 %v4457
      %v4694 = vpop.f32.mrb[0].mxu0
      %v4695 = vadd.f32 0.0, %v4694
      %v4696 = vpop.f32.mrb[0].mxu0
      %v4697 = vpop.f32.mrb[0].mxu0
      %v4698 = vadd.f32 0.0, %v4697
      %v4699 = vpop.f32.mrb[0].mxu0
      %4700 = vmatprep.mubr.bf16.mxu0 0
      %4701 = vmatmul.mubr.bf16.gmra.mrb[0].mxu0 %v4465
      %v4702 = vpop.f32.mrb[0].mxu0
      %v4703 = vadd.f32 0.0, %v4702
      %v4704 = vpop.f32.mrb[0].mxu0
      %v4705 = vpop.f32.mrb[0].mxu0
      %v4706 = vadd.f32 0.0, %v4705
      %v4707 = vpop.f32.mrb[0].mxu0
      %4708 = vmatprep.mubr.bf16.mxu0 0
      %4709 = vmatmul.mubr.bf16.gmra.mrb[0].mxu0 %v4473
      %v4710 = vpop.f32.mrb[0].mxu0
      %v4711 = vadd.f32 0.0, %v4710
      %v4712 = vpop.f32.mrb[0].mxu0
      %v4713 = vpop.f32.mrb[0].mxu0
      %v4714 = vadd.f32 0.0, %v4713
      %v4715 = vpop.f32.mrb[0].mxu0
      %4716 = vmatprep.mubr.bf16.mxu0 0
      %4717 = vmatmul.mubr.bf16.gmra.mrb[0].mxu0 %v4481
      %v4718 = vpop.f32.mrb[0].mxu0
      %v4719 = vadd.f32 0.0, %v4718
      %v4720 = vpop.f32.mrb[0].mxu0
      %v4721 = vpop.f32.mrb[0].mxu0
      %v4722 = vadd.f32 0.0, %v4721
      %v4723 = vpop.f32.mrb[0].mxu0
      %4724 = vmatprep.mubr.bf16.mxu0 0
      %4725 = vmatmul.mubr.bf16.gmra.mrb[0].mxu0 %v4489
      %v4726 = vpop.f32.mrb[0].mxu0
      %v4727 = vadd.f32 0.0, %v4726
      %v4728 = vpop.f32.mrb[0].mxu0
      %v4729 = vpop.f32.mrb[0].mxu0
      %v4730 = vadd.f32 0.0, %v4729
      %v4731 = vpop.f32.mrb[0].mxu0
      %4732 = vmatprep.mubr.bf16.mxu0 0
      %4733 = vmatmul.mubr.bf16.gmra.mrb[0].mxu0 %v4497
      %v4734 = vpop.f32.mrb[0].mxu0
      %v4735 = vadd.f32 0.0, %v4734
      %v4736 = vpop.f32.mrb[0].mxu0
      %v4737 = vpop.f32.mrb[0].mxu0
      %v4738 = vadd.f32 0.0, %v4737
      %v4739 = vpop.f32.mrb[0].mxu0
      %4740 = vmatprep.mubr.bf16.mxu0 0
      %4741 = vmatmul.mubr.bf16.gmra.mrb[0].mxu0 %v4505
      %v4742 = vpop.f32.mrb[0].mxu0
      %v4743 = vadd.f32 0.0, %v4742
      %v4744 = vpop.f32.mrb[0].mxu0
      %v4745 = vpop.f32.mrb[0].mxu0
      %v4746 = vadd.f32 0.0, %v4745
      %v4747 = vpop.f32.mrb[0].mxu0
      %4748 = vmatprep.mubr.bf16.mxu0 0
      %4749 = vmatmul.mubr.bf16.gmra.mrb[0].mxu0 %v4513
      %v4750 = vpop.f32.mrb[0].mxu0
      %v4751 = vadd.f32 0.0, %v4750
      %v4752 = vpop.f32.mrb[0].mxu0
      %v4753 = vpop.f32.mrb[0].mxu0
      %v4754 = vadd.f32 0.0, %v4753
      %v4755 = vpop.f32.mrb[0].mxu0
      %4756 = vmatprep.mubr.bf16.mxu0 0
      %4757 = vmatmul.mubr.bf16.gmra.mrb[0].mxu0 %v4521
      %v4758 = vpop.f32.mrb[0].mxu0
      %v4759 = vadd.f32 0.0, %v4758
      %v4760 = vpop.f32.mrb[0].mxu0
      %v4761 = vpop.f32.mrb[0].mxu0
      %v4762 = vadd.f32 0.0, %v4761
      %v4763 = vpop.f32.mrb[0].mxu0
      %4764 = vmatprep.mubr.bf16.mxu0 0
      %4765 = vmatmul.mubr.bf16.gmra.mrb[0].mxu0 %v4529
      %v4766 = vpop.f32.mrb[0].mxu0
      %v4767 = vadd.f32 0.0, %v4766
      %v4768 = vpop.f32.mrb[0].mxu0
      %v4769 = vpop.f32.mrb[0].mxu0
      %v4770 = vadd.f32 0.0, %v4769
      %v4771 = vpop.f32.mrb[0].mxu0
      %4772 = vmatprep.mubr.bf16.mxu0 0
      %4773 = vmatmul.mubr.bf16.gmra.mrb[0].mxu0 %v4537
      %v4774 = vpop.f32.mrb[0].mxu0
      %v4775 = vadd.f32 0.0, %v4774
      %v4776 = vpop.f32.mrb[0].mxu0
      %v4777 = vpop.f32.mrb[0].mxu0
      %v4778 = vadd.f32 0.0, %v4777
      %v4779 = vpop.f32.mrb[0].mxu0
      %4780 = vmatprep.mubr.bf16.mxu0 0
      %4781 = vmatmul.mubr.bf16.gmra.mrb[0].mxu0 %v4545
      %v4782 = vpop.f32.mrb[0].mxu0
      %v4783 = vadd.f32 0.0, %v4782
      %v4784 = vpop.f32.mrb[0].mxu0
      %v4785 = vpop.f32.mrb[0].mxu0
      %v4786 = vadd.f32 0.0, %v4785
      %v4787 = vpop.f32.mrb[0].mxu0
      %4788 = vmatprep.mubr.bf16.mxu0 0
      %4789 = vmatmul.mubr.bf16.gmra.mrb[0].mxu0 %v4553
      %v4790 = vpop.f32.mrb[0].mxu0
      %v4791 = vadd.f32 0.0, %v4790
      %v4792 = vpop.f32.mrb[0].mxu0
      %v4793 = vpop.f32.mrb[0].mxu0
      %v4794 = vadd.f32 0.0, %v4793
      %v4795 = vpop.f32.mrb[0].mxu0
      %4796 = vmatprep.mubr.bf16.mxu0 0
      %4797 = vmatmul.mubr.bf16.gmra.mrb[0].mxu0 %v4561
      %v4798 = vpop.f32.mrb[0].mxu0
      %v4799 = vadd.f32 0.0, %v4798
      %v4800 = vpop.f32.mrb[0].mxu0
      %v4801 = vpop.f32.mrb[0].mxu0
      %v4802 = vadd.f32 0.0, %v4801
      %v4803 = vpop.f32.mrb[0].mxu0
      %4804 = vmatprep.mubr.bf16.mxu0 0
      %4805 = vmatmul.mubr.bf16.gmra.mrb[0].mxu0 %v4569
      %v4806 = vpop.f32.mrb[0].mxu0
      %v4807 = vadd.f32 0.0, %v4806
      %v4808 = vpop.f32.mrb[0].mxu0
      %v4809 = vpop.f32.mrb[0].mxu0
      %v4810 = vadd.f32 0.0, %v4809
      %v4811 = vpop.f32.mrb[0].mxu0
      %4812 = vmatprep.mubr.bf16.mxu0 0
      %4813 = vmatmul.mubr.bf16.gmra.mrb[0].mxu0 %v4577
      %v4814 = vpop.f32.mrb[0].mxu0
      %v4815 = vadd.f32 0.0, %v4814
      %v4816 = vpop.f32.mrb[0].mxu0
      %v4817 = vpop.f32.mrb[0].mxu0
      %v4818 = vadd.f32 0.0, %v4817
      %v4819 = vpop.f32.mrb[0].mxu0
      %4820 = vmatprep.mubr.bf16.mxu0 0
      %4821 = vmatmul.mubr.bf16.gmra.mrb[0].mxu0 %v4585
      %v4822 = vpop.f32.mrb[0].mxu0
      %v4823 = vadd.f32 0.0, %v4822
      %v4824 = vpop.f32.mrb[0].mxu0
      %v4825 = vpop.f32.mrb[0].mxu0
      %v4826 = vadd.f32 0.0, %v4825
      %v4827 = vpop.f32.mrb[0].mxu0
      %4828 = vdwg.mxu0
      %v4845 = vunpack.c.l.b16 %v4404
      %v4846 = vunpack.c.l.b16 %v4405
      %v4847 = vunpack.c.l.b16 %v4406
      %v4848 = vunpack.c.l.b16 %v4407
      %v4849 = vunpack.c.l.b16 %v4408
      %v4850 = vunpack.c.l.b16 %v4409
      %v4851 = vunpack.c.l.b16 %v4410
      %v4852 = vunpack.c.l.b16 %v4411
      %v4853 = vunpack.c.l.b16 %v4412
      %v4854 = vunpack.c.l.b16 %v4413
      %v4855 = vunpack.c.l.b16 %v4414
      %v4856 = vunpack.c.l.b16 %v4415
      %v4857 = vunpack.c.l.b16 %v4416
      %v4858 = vunpack.c.l.b16 %v4417
      %v4859 = vunpack.c.l.b16 %v4418
      %v4860 = vunpack.c.l.b16 %v4419
      %v4861 = vpack.c.b16 %v4846, %v4845
      %v4862 = vpack.c.b16 %v4848, %v4847
      %v4863 = vpack.c.b16 %v4850, %v4849
      %v4864 = vpack.c.b16 %v4852, %v4851
      %v4865 = vpack.c.b16 %v4854, %v4853
      %v4866 = vpack.c.b16 %v4856, %v4855
      %v4867 = vpack.c.b16 %v4858, %v4857
      %v4868 = vpack.c.b16 %v4860, %v4859
      %4877 = vmatprep.subr.bf16.mxu0 0
      %4878 = vmatpush1.bf16.msra.mxu0 %v4861
      %4879 = vmatprep.subr.bf16.mxu0 0
      %4880 = vmatpush1.bf16.msra.mxu0 %v4862
      %4881 = vmatprep.subr.bf16.mxu0 0
      %4882 = vmatpush1.bf16.msra.mxu0 %v4863
      %4883 = vmatprep.subr.bf16.mxu0 0
      %4884 = vmatpush1.bf16.msra.mxu0 %v4864
      %4885 = vmatprep.subr.bf16.mxu0 0
      %4886 = vmatpush1.bf16.msra.mxu0 %v4865
      %4887 = vmatprep.subr.bf16.mxu0 0
      %4888 = vmatpush1.bf16.msra.mxu0 %v4866
      %4889 = vmatprep.subr.bf16.mxu0 0
      %4890 = vmatpush1.bf16.msra.mxu0 %v4867
      %4891 = vmatprep.subr.bf16.mxu0 0
      %4892 = vmatpush1.bf16.msra.mxu0 %v4868
      %4893 = vmatprep.subr.bf16.mxu0 0
      %4894 = vmatpush1.bf16.msra.mxu0 0
      %4895 = vmatprep.subr.bf16.mxu0 0
      %4896 = vmatpush1.bf16.msra.mxu0 0
      %4897 = vmatprep.subr.bf16.mxu0 0
      %4898 = vmatpush1.bf16.msra.mxu0 0
      %4899 = vmatprep.subr.bf16.mxu0 0
      %4900 = vmatpush1.bf16.msra.mxu0 0
      %4901 = vmatprep.subr.bf16.mxu0 0
      %4902 = vmatpush1.bf16.msra.mxu0 0
      %4903 = vmatprep.subr.bf16.mxu0 0
      %4904 = vmatpush1.bf16.msra.mxu0 0
      %4905 = vmatprep.subr.bf16.mxu0 0
      %4906 = vmatpush1.bf16.msra.mxu0 0
      %4907 = vmatprep.subr.bf16.mxu0 0
      %4908 = vmatpush1.bf16.msra.mxu0 0
      %4909 = vmatprep.mubr.bf16.mxu0 0
      %4910 = vmatmul.mubr.bf16.gmra.mrb[0].mxu0 %v4386
      %v4911 = vpop.f32.mrb[0].mxu0
      %v4912 = vadd.f32 %v4687, %v4911
      %v4913 = vpop.f32.mrb[0].mxu0
      %v4914 = vpop.f32.mrb[0].mxu0
      %v4915 = vadd.f32 %v4690, %v4914
      %v4916 = vpop.f32.mrb[0].mxu0
      %4917 = vmatprep.mubr.bf16.mxu0 0
      %4918 = vmatmul.mubr.bf16.gmra.mrb[0].mxu0 %v4387
      %v4919 = vpop.f32.mrb[0].mxu0
      %v4920 = vadd.f32 %v4695, %v4919
      %v4921 = vpop.f32.mrb[0].mxu0
      %v4922 = vpop.f32.mrb[0].mxu0
      %v4923 = vadd.f32 %v4698, %v4922
      %v4924 = vpop.f32.mrb[0].mxu0
      %4925 = vmatprep.mubr.bf16.mxu0 0
      %4926 = vmatmul.mubr.bf16.gmra.mrb[0].mxu0 %v4388
      %v4927 = vpop.f32.mrb[0].mxu0
      %v4928 = vadd.f32 %v4703, %v4927
      %v4929 = vpop.f32.mrb[0].mxu0
      %v4930 = vpop.f32.mrb[0].mxu0
      %v4931 = vadd.f32 %v4706, %v4930
      %v4932 = vpop.f32.mrb[0].mxu0
      %4933 = vmatprep.mubr.bf16.mxu0 0
      %4934 = vmatmul.mubr.bf16.gmra.mrb[0].mxu0 %v4389
      %v4935 = vpop.f32.mrb[0].mxu0
      %v4936 = vadd.f32 %v4711, %v4935
      %v4937 = vpop.f32.mrb[0].mxu0
      %v4938 = vpop.f32.mrb[0].mxu0
      %v4939 = vadd.f32 %v4714, %v4938
      %v4940 = vpop.f32.mrb[0].mxu0
      %4941 = vmatprep.mubr.bf16.mxu0 0
      %4942 = vmatmul.mubr.bf16.gmra.mrb[0].mxu0 %v4390
      %v4943 = vpop.f32.mrb[0].mxu0
      %v4944 = vadd.f32 %v4719, %v4943
      %v4945 = vpop.f32.mrb[0].mxu0
      %v4946 = vpop.f32.mrb[0].mxu0
      %v4947 = vadd.f32 %v4722, %v4946
      %v4948 = vpop.f32.mrb[0].mxu0
      %4949 = vmatprep.mubr.bf16.mxu0 0
      %4950 = vmatmul.mubr.bf16.gmra.mrb[0].mxu0 %v4391
      %v4951 = vpop.f32.mrb[0].mxu0
      %v4952 = vadd.f32 %v4727, %v4951
      %v4953 = vpop.f32.mrb[0].mxu0
      %v4954 = vpop.f32.mrb[0].mxu0
      %v4955 = vadd.f32 %v4730, %v4954
      %v4956 = vpop.f32.mrb[0].mxu0
      %4957 = vmatprep.mubr.bf16.mxu0 0
      %4958 = vmatmul.mubr.bf16.gmra.mrb[0].mxu0 %v4392
      %v4959 = vpop.f32.mrb[0].mxu0
      %v4960 = vadd.f32 %v4735, %v4959
      %v4961 = vpop.f32.mrb[0].mxu0
      %v4962 = vpop.f32.mrb[0].mxu0
      %v4963 = vadd.f32 %v4738, %v4962
      %v4964 = vpop.f32.mrb[0].mxu0
      %4965 = vmatprep.mubr.bf16.mxu0 0
      %4966 = vmatmul.mubr.bf16.gmra.mrb[0].mxu0 %v4393
      %v4967 = vpop.f32.mrb[0].mxu0
      %v4968 = vadd.f32 %v4743, %v4967
      %v4969 = vpop.f32.mrb[0].mxu0
      %v4970 = vpop.f32.mrb[0].mxu0
      %v4971 = vadd.f32 %v4746, %v4970
      %v4972 = vpop.f32.mrb[0].mxu0
      %4973 = vmatprep.mubr.bf16.mxu0 0
      %4974 = vmatmul.mubr.bf16.gmra.mrb[0].mxu0 %v4394
      %v4975 = vpop.f32.mrb[0].mxu0
      %v4976 = vadd.f32 %v4751, %v4975
      %v4977 = vpop.f32.mrb[0].mxu0
      %v4978 = vpop.f32.mrb[0].mxu0
      %v4979 = vadd.f32 %v4754, %v4978
      %v4980 = vpop.f32.mrb[0].mxu0
      %4981 = vmatprep.mubr.bf16.mxu0 0
      %4982 = vmatmul.mubr.bf16.gmra.mrb[0].mxu0 %v4395
      %v4983 = vpop.f32.mrb[0].mxu0
      %v4984 = vadd.f32 %v4759, %v4983
      %v4985 = vpop.f32.mrb[0].mxu0
      %v4986 = vpop.f32.mrb[0].mxu0
      %v4987 = vadd.f32 %v4762, %v4986
      %v4988 = vpop.f32.mrb[0].mxu0
      %4989 = vmatprep.mubr.bf16.mxu0 0
      %4990 = vmatmul.mubr.bf16.gmra.mrb[0].mxu0 %v4396
      %v4991 = vpop.f32.mrb[0].mxu0
      %v4992 = vadd.f32 %v4767, %v4991
      %v4993 = vpop.f32.mrb[0].mxu0
      %v4994 = vpop.f32.mrb[0].mxu0
      %v4995 = vadd.f32 %v4770, %v4994
      %v4996 = vpop.f32.mrb[0].mxu0
      %4997 = vmatprep.mubr.bf16.mxu0 0
      %4998 = vmatmul.mubr.bf16.gmra.mrb[0].mxu0 %v4397
      %v4999 = vpop.f32.mrb[0].mxu0
      %v5000 = vadd.f32 %v4775, %v4999
      %v5001 = vpop.f32.mrb[0].mxu0
      %v5002 = vpop.f32.mrb[0].mxu0
      %v5003 = vadd.f32 %v4778, %v5002
      %v5004 = vpop.f32.mrb[0].mxu0
      %5005 = vmatprep.mubr.bf16.mxu0 0
      %5006 = vmatmul.mubr.bf16.gmra.mrb[0].mxu0 %v4398
      %v5007 = vpop.f32.mrb[0].mxu0
      %v5008 = vadd.f32 %v4783, %v5007
      %v5009 = vpop.f32.mrb[0].mxu0
      %v5010 = vpop.f32.mrb[0].mxu0
      %v5011 = vadd.f32 %v4786, %v5010
      %v5012 = vpop.f32.mrb[0].mxu0
      %5013 = vmatprep.mubr.bf16.mxu0 0
      %5014 = vmatmul.mubr.bf16.gmra.mrb[0].mxu0 %v4399
      %v5015 = vpop.f32.mrb[0].mxu0
      %v5016 = vadd.f32 %v4791, %v5015
      %v5017 = vpop.f32.mrb[0].mxu0
      %v5018 = vpop.f32.mrb[0].mxu0
      %v5019 = vadd.f32 %v4794, %v5018
      %v5020 = vpop.f32.mrb[0].mxu0
      %5021 = vmatprep.mubr.bf16.mxu0 0
      %5022 = vmatmul.mubr.bf16.gmra.mrb[0].mxu0 %v4400
      %v5023 = vpop.f32.mrb[0].mxu0
      %v5024 = vadd.f32 %v4799, %v5023
      %v5025 = vpop.f32.mrb[0].mxu0
      %v5026 = vpop.f32.mrb[0].mxu0
      %v5027 = vadd.f32 %v4802, %v5026
      %v5028 = vpop.f32.mrb[0].mxu0
      %5029 = vmatprep.mubr.bf16.mxu0 0
      %5030 = vmatmul.mubr.bf16.gmra.mrb[0].mxu0 %v4401
      %v5031 = vpop.f32.mrb[0].mxu0
      %v5032 = vadd.f32 %v4807, %v5031
      %v5033 = vpop.f32.mrb[0].mxu0
      %v5034 = vpop.f32.mrb[0].mxu0
      %v5035 = vadd.f32 %v4810, %v5034
      %v5036 = vpop.f32.mrb[0].mxu0
      %5037 = vmatprep.mubr.bf16.mxu0 0
      %5038 = vmatmul.mubr.bf16.gmra.mrb[0].mxu0 %v4402
      %v5039 = vpop.f32.mrb[0].mxu0
      %v5040 = vadd.f32 %v4815, %v5039
      %v5041 = vpop.f32.mrb[0].mxu0
      %v5042 = vpop.f32.mrb[0].mxu0
      %v5043 = vadd.f32 %v4818, %v5042
      %v5044 = vpop.f32.mrb[0].mxu0
      %5045 = vmatprep.mubr.bf16.mxu0 0
      %5046 = vmatmul.mubr.bf16.gmra.mrb[0].mxu0 %v4403
      %v5047 = vpop.f32.mrb[0].mxu0
      %v5048 = vadd.f32 %v4823, %v5047
      %v5049 = vpop.f32.mrb[0].mxu0
      %v5050 = vpop.f32.mrb[0].mxu0
      %v5051 = vadd.f32 %v4826, %v5050
      %v5052 = vpop.f32.mrb[0].mxu0
      %5053 = vdwg.mxu0
      %v5054 = vld [vmem:[#allocation2] sm:$0xfe]
      %s5055 = scalar_lea.vmem %s4, 128
      %v5056 = vld [vmem:[%s5055] sm:$0xf]
      %v5057 = vld [vmem:[%s5055 + $0x4] sm:$0xf]
      %v5058 = vld [vmem:[%s5055 + $0x8] sm:$0xf]
      %v5059 = vld [vmem:[%s5055 + $0xc] sm:$0xf]
      %v5060 = vld [vmem:[%s5055 + $0x10] sm:$0xf]
      %v5061 = vld [vmem:[%s5055 + $0x14] sm:$0xf]
      %v5062 = vld [vmem:[%s5055 + $0x18] sm:$0xf]
      %v5063 = vld [vmem:[%s5055 + $0x1c] sm:$0xf]
      %v5064 = vld [vmem:[%s5055 + $0x20] sm:$0xf]
      %v5065 = vld [vmem:[%s5055 + $0x24] sm:$0xf]
      %v5066 = vld [vmem:[%s5055 + $0x28] sm:$0xf]
      %v5067 = vld [vmem:[%s5055 + $0x2c] sm:$0xf]
      %v5068 = vld [vmem:[%s5055 + $0x30] sm:$0xf]
      %v5069 = vld [vmem:[%s5055 + $0x34] sm:$0xf]
      %v5070 = vld [vmem:[%s5055 + $0x38] sm:$0xf]
      %v5071 = vld [vmem:[%s5055 + $0x3c] sm:$0xf]
      %v5091 = vrot.slane %v5054, 1
      %v5092 = vrot.slane %v4387, 1
      %v5093 = vsel %vm1147, %v5091, %v5092
      %v5094 = vrot.slane %v4388, 1
      %v5095 = vsel %vm1147, %v5092, %v5094
      %v5096 = vrot.slane %v4389, 1
      %v5097 = vsel %vm1147, %v5094, %v5096
      %v5098 = vrot.slane %v4390, 1
      %v5099 = vsel %vm1147, %v5096, %v5098
      %v5100 = vrot.slane %v4391, 1
      %v5101 = vsel %vm1147, %v5098, %v5100
      %v5102 = vrot.slane %v4392, 1
      %v5103 = vsel %vm1147, %v5100, %v5102
      %v5104 = vrot.slane %v4393, 1
      %v5105 = vsel %vm1147, %v5102, %v5104
      %v5106 = vrot.slane %v4394, 1
      %v5107 = vsel %vm1147, %v5104, %v5106
      %v5108 = vrot.slane %v4395, 1
      %v5109 = vsel %vm1147, %v5106, %v5108
      %v5110 = vrot.slane %v4396, 1
      %v5111 = vsel %vm1147, %v5108, %v5110
      %v5112 = vrot.slane %v4397, 1
      %v5113 = vsel %vm1147, %v5110, %v5112
      %v5114 = vrot.slane %v4398, 1
      %v5115 = vsel %vm1147, %v5112, %v5114
      %v5116 = vrot.slane %v4399, 1
      %v5117 = vsel %vm1147, %v5114, %v5116
      %v5118 = vrot.slane %v4400, 1
      %v5119 = vsel %vm1147, %v5116, %v5118
      %v5120 = vrot.slane %v4401, 1
      %v5121 = vsel %vm1147, %v5118, %v5120
      %v5122 = vrot.slane %v4402, 1
      %v5123 = vsel %vm1147, %v5120, %v5122
      %v5124 = vrot.slane %v4403, 1
      %v5125 = vsel %vm1147, %v5122, %v5124
      %v5126 = vrot.slane %v4420, 1
      %v5127 = vsel %vm1147, %v5124, %v5126
      %v5162 = vunpack.c.l.b16 %v5056
      %v5163 = vunpack.c.l.b16 %v5057
      %v5164 = vunpack.c.l.b16 %v5058
      %v5165 = vunpack.c.l.b16 %v5059
      %v5166 = vunpack.c.l.b16 %v5060
      %v5167 = vunpack.c.l.b16 %v5061
      %v5168 = vunpack.c.l.b16 %v5062
      %v5169 = vunpack.c.l.b16 %v5063
      %v5170 = vunpack.c.l.b16 %v5064
      %v5171 = vunpack.c.l.b16 %v5065
      %v5172 = vunpack.c.l.b16 %v5066
      %v5173 = vunpack.c.l.b16 %v5067
      %v5174 = vunpack.c.l.b16 %v5068
      %v5175 = vunpack.c.l.b16 %v5069
      %v5176 = vunpack.c.l.b16 %v5070
      %v5177 = vunpack.c.l.b16 %v5071
      %v5178 = vpack.c.b16 %v5163, %v5162
      %v5179 = vpack.c.b16 %v5165, %v5164
      %v5180 = vpack.c.b16 %v5167, %v5166
      %v5181 = vpack.c.b16 %v5169, %v5168
      %v5182 = vpack.c.b16 %v5171, %v5170
      %v5183 = vpack.c.b16 %v5173, %v5172
      %v5184 = vpack.c.b16 %v5175, %v5174
      %v5185 = vpack.c.b16 %v5177, %v5176
      %5194 = vmatprep.subr.bf16.mxu0 0
      %5195 = vmatpush1.bf16.msra.mxu0 %v5178
      %5196 = vmatprep.subr.bf16.mxu0 0
      %5197 = vmatpush1.bf16.msra.mxu0 %v5179
      %5198 = vmatprep.subr.bf16.mxu0 0
      %5199 = vmatpush1.bf16.msra.mxu0 %v5180
      %5200 = vmatprep.subr.bf16.mxu0 0
      %5201 = vmatpush1.bf16.msra.mxu0 %v5181
      %5202 = vmatprep.subr.bf16.mxu0 0
      %5203 = vmatpush1.bf16.msra.mxu0 %v5182
      %5204 = vmatprep.subr.bf16.mxu0 0
      %5205 = vmatpush1.bf16.msra.mxu0 %v5183
      %5206 = vmatprep.subr.bf16.mxu0 0
      %5207 = vmatpush1.bf16.msra.mxu0 %v5184
      %5208 = vmatprep.subr.bf16.mxu0 0
      %5209 = vmatpush1.bf16.msra.mxu0 %v5185
      %5210 = vmatprep.subr.bf16.mxu0 0
      %5211 = vmatpush1.bf16.msra.mxu0 0
      %5212 = vmatprep.subr.bf16.mxu0 0
      %5213 = vmatpush1.bf16.msra.mxu0 0
      %5214 = vmatprep.subr.bf16.mxu0 0
      %5215 = vmatpush1.bf16.msra.mxu0 0
      %5216 = vmatprep.subr.bf16.mxu0 0
      %5217 = vmatpush1.bf16.msra.mxu0 0
      %5218 = vmatprep.subr.bf16.mxu0 0
      %5219 = vmatpush1.bf16.msra.mxu0 0
      %5220 = vmatprep.subr.bf16.mxu0 0
      %5221 = vmatpush1.bf16.msra.mxu0 0
      %5222 = vmatprep.subr.bf16.mxu0 0
      %5223 = vmatpush1.bf16.msra.mxu0 0
      %5224 = vmatprep.subr.bf16.mxu0 0
      %5225 = vmatpush1.bf16.msra.mxu0 0
      %5226 = vmatprep.mubr.bf16.mxu0 0
      %5227 = vmatmul.mubr.bf16.gmra.mrb[0].mxu0 %v5093
      %v5228 = vpop.f32.mrb[0].mxu0
      %v5229 = vadd.f32 0.0, %v5228
      %v5230 = vpop.f32.mrb[0].mxu0
      %v5231 = vpop.f32.mrb[0].mxu0
      %v5232 = vadd.f32 0.0, %v5231
      %v5233 = vpop.f32.mrb[0].mxu0
      %5234 = vmatprep.mubr.bf16.mxu0 0
      %5235 = vmatmul.mubr.bf16.gmra.mrb[0].mxu0 %v5095
      %v5236 = vpop.f32.mrb[0].mxu0
      %v5237 = vadd.f32 0.0, %v5236
      %v5238 = vpop.f32.mrb[0].mxu0
      %v5239 = vpop.f32.mrb[0].mxu0
      %v5240 = vadd.f32 0.0, %v5239
      %v5241 = vpop.f32.mrb[0].mxu0
      %5242 = vmatprep.mubr.bf16.mxu0 0
      %5243 = vmatmul.mubr.bf16.gmra.mrb[0].mxu0 %v5097
      %v5244 = vpop.f32.mrb[0].mxu0
      %v5245 = vadd.f32 0.0, %v5244
      %v5246 = vpop.f32.mrb[0].mxu0
      %v5247 = vpop.f32.mrb[0].mxu0
      %v5248 = vadd.f32 0.0, %v5247
      %v5249 = vpop.f32.mrb[0].mxu0
      %5250 = vmatprep.mubr.bf16.mxu0 0
      %5251 = vmatmul.mubr.bf16.gmra.mrb[0].mxu0 %v5099
      %v5252 = vpop.f32.mrb[0].mxu0
      %v5253 = vadd.f32 0.0, %v5252
      %v5254 = vpop.f32.mrb[0].mxu0
      %v5255 = vpop.f32.mrb[0].mxu0
      %v5256 = vadd.f32 0.0, %v5255
      %v5257 = vpop.f32.mrb[0].mxu0
      %5258 = vmatprep.mubr.bf16.mxu0 0
      %5259 = vmatmul.mubr.bf16.gmra.mrb[0].mxu0 %v5101
      %v5260 = vpop.f32.mrb[0].mxu0
      %v5261 = vadd.f32 0.0, %v5260
      %v5262 = vpop.f32.mrb[0].mxu0
      %v5263 = vpop.f32.mrb[0].mxu0
      %v5264 = vadd.f32 0.0, %v5263
      %v5265 = vpop.f32.mrb[0].mxu0
      %5266 = vmatprep.mubr.bf16.mxu0 0
      %5267 = vmatmul.mubr.bf16.gmra.mrb[0].mxu0 %v5103
      %v5268 = vpop.f32.mrb[0].mxu0
      %v5269 = vadd.f32 0.0, %v5268
      %v5270 = vpop.f32.mrb[0].mxu0
      %v5271 = vpop.f32.mrb[0].mxu0
      %v5272 = vadd.f32 0.0, %v5271
      %v5273 = vpop.f32.mrb[0].mxu0
      %5274 = vmatprep.mubr.bf16.mxu0 0
      %5275 = vmatmul.mubr.bf16.gmra.mrb[0].mxu0 %v5105
      %v5276 = vpop.f32.mrb[0].mxu0
      %v5277 = vadd.f32 0.0, %v5276
      %v5278 = vpop.f32.mrb[0].mxu0
      %v5279 = vpop.f32.mrb[0].mxu0
      %v5280 = vadd.f32 0.0, %v5279
      %v5281 = vpop.f32.mrb[0].mxu0
      %5282 = vmatprep.mubr.bf16.mxu0 0
      %5283 = vmatmul.mubr.bf16.gmra.mrb[0].mxu0 %v5107
      %v5284 = vpop.f32.mrb[0].mxu0
      %v5285 = vadd.f32 0.0, %v5284
      %v5286 = vpop.f32.mrb[0].mxu0
      %v5287 = vpop.f32.mrb[0].mxu0
      %v5288 = vadd.f32 0.0, %v5287
      %v5289 = vpop.f32.mrb[0].mxu0
      %5290 = vmatprep.mubr.bf16.mxu0 0
      %5291 = vmatmul.mubr.bf16.gmra.mrb[0].mxu0 %v5109
      %v5292 = vpop.f32.mrb[0].mxu0
      %v5293 = vadd.f32 0.0, %v5292
      %v5294 = vpop.f32.mrb[0].mxu0
      %v5295 = vpop.f32.mrb[0].mxu0
      %v5296 = vadd.f32 0.0, %v5295
      %v5297 = vpop.f32.mrb[0].mxu0
      %5298 = vmatprep.mubr.bf16.mxu0 0
      %5299 = vmatmul.mubr.bf16.gmra.mrb[0].mxu0 %v5111
      %v5300 = vpop.f32.mrb[0].mxu0
      %v5301 = vadd.f32 0.0, %v5300
      %v5302 = vpop.f32.mrb[0].mxu0
      %v5303 = vpop.f32.mrb[0].mxu0
      %v5304 = vadd.f32 0.0, %v5303
      %v5305 = vpop.f32.mrb[0].mxu0
      %5306 = vmatprep.mubr.bf16.mxu0 0
      %5307 = vmatmul.mubr.bf16.gmra.mrb[0].mxu0 %v5113
      %v5308 = vpop.f32.mrb[0].mxu0
      %v5309 = vadd.f32 0.0, %v5308
      %v5310 = vpop.f32.mrb[0].mxu0
      %v5311 = vpop.f32.mrb[0].mxu0
      %v5312 = vadd.f32 0.0, %v5311
      %v5313 = vpop.f32.mrb[0].mxu0
      %5314 = vmatprep.mubr.bf16.mxu0 0
      %5315 = vmatmul.mubr.bf16.gmra.mrb[0].mxu0 %v5115
      %v5316 = vpop.f32.mrb[0].mxu0
      %v5317 = vadd.f32 0.0, %v5316
      %v5318 = vpop.f32.mrb[0].mxu0
      %v5319 = vpop.f32.mrb[0].mxu0
      %v5320 = vadd.f32 0.0, %v5319
      %v5321 = vpop.f32.mrb[0].mxu0
      %5322 = vmatprep.mubr.bf16.mxu0 0
      %5323 = vmatmul.mubr.bf16.gmra.mrb[0].mxu0 %v5117
      %v5324 = vpop.f32.mrb[0].mxu0
      %v5325 = vadd.f32 0.0, %v5324
      %v5326 = vpop.f32.mrb[0].mxu0
      %v5327 = vpop.f32.mrb[0].mxu0
      %v5328 = vadd.f32 0.0, %v5327
      %v5329 = vpop.f32.mrb[0].mxu0
      %5330 = vmatprep.mubr.bf16.mxu0 0
      %5331 = vmatmul.mubr.bf16.gmra.mrb[0].mxu0 %v5119
      %v5332 = vpop.f32.mrb[0].mxu0
      %v5333 = vadd.f32 0.0, %v5332
      %v5334 = vpop.f32.mrb[0].mxu0
      %v5335 = vpop.f32.mrb[0].mxu0
      %v5336 = vadd.f32 0.0, %v5335
      %v5337 = vpop.f32.mrb[0].mxu0
      %5338 = vmatprep.mubr.bf16.mxu0 0
      %5339 = vmatmul.mubr.bf16.gmra.mrb[0].mxu0 %v5121
      %v5340 = vpop.f32.mrb[0].mxu0
      %v5341 = vadd.f32 0.0, %v5340
      %v5342 = vpop.f32.mrb[0].mxu0
      %v5343 = vpop.f32.mrb[0].mxu0
      %v5344 = vadd.f32 0.0, %v5343
      %v5345 = vpop.f32.mrb[0].mxu0
      %5346 = vmatprep.mubr.bf16.mxu0 0
      %5347 = vmatmul.mubr.bf16.gmra.mrb[0].mxu0 %v5123
      %v5348 = vpop.f32.mrb[0].mxu0
      %v5349 = vadd.f32 0.0, %v5348
      %v5350 = vpop.f32.mrb[0].mxu0
      %v5351 = vpop.f32.mrb[0].mxu0
      %v5352 = vadd.f32 0.0, %v5351
      %v5353 = vpop.f32.mrb[0].mxu0
      %5354 = vmatprep.mubr.bf16.mxu0 0
      %5355 = vmatmul.mubr.bf16.gmra.mrb[0].mxu0 %v5125
      %v5356 = vpop.f32.mrb[0].mxu0
      %v5357 = vadd.f32 0.0, %v5356
      %v5358 = vpop.f32.mrb[0].mxu0
      %v5359 = vpop.f32.mrb[0].mxu0
      %v5360 = vadd.f32 0.0, %v5359
      %v5361 = vpop.f32.mrb[0].mxu0
      %5362 = vmatprep.mubr.bf16.mxu0 0
      %5363 = vmatmul.mubr.bf16.gmra.mrb[0].mxu0 %v5127
      %v5364 = vpop.f32.mrb[0].mxu0
      %v5365 = vadd.f32 0.0, %v5364
      %v5366 = vpop.f32.mrb[0].mxu0
      %v5367 = vpop.f32.mrb[0].mxu0
      %v5368 = vadd.f32 0.0, %v5367
      %v5369 = vpop.f32.mrb[0].mxu0
      %5370 = vdwg.mxu0
      %v5371 = vadd.f32 %v4912, %v5229
      %v5372 = vadd.f32 %v4915, %v5232
      %v5373 = vadd.f32 %v4920, %v5237
      %v5374 = vadd.f32 %v4923, %v5240
      %v5375 = vadd.f32 %v4928, %v5245
      %v5376 = vadd.f32 %v4931, %v5248
      %v5377 = vadd.f32 %v4936, %v5253
      %v5378 = vadd.f32 %v4939, %v5256
      %v5379 = vadd.f32 %v4944, %v5261
      %v5380 = vadd.f32 %v4947, %v5264
      %v5381 = vadd.f32 %v4952, %v5269
      %v5382 = vadd.f32 %v4955, %v5272
      %v5383 = vadd.f32 %v4960, %v5277
      %v5384 = vadd.f32 %v4963, %v5280
      %v5385 = vadd.f32 %v4968, %v5285
      %v5386 = vadd.f32 %v4971, %v5288
      %v5387 = vadd.f32 %v4976, %v5293
      %v5388 = vadd.f32 %v4979, %v5296
      %v5389 = vadd.f32 %v4984, %v5301
      %v5390 = vadd.f32 %v4987, %v5304
      %v5391 = vadd.f32 %v4992, %v5309
      %v5392 = vadd.f32 %v4995, %v5312
      %v5393 = vadd.f32 %v5000, %v5317
      %v5394 = vadd.f32 %v5003, %v5320
      %v5395 = vadd.f32 %v5008, %v5325
      %v5396 = vadd.f32 %v5011, %v5328
      %v5397 = vadd.f32 %v5016, %v5333
      %v5398 = vadd.f32 %v5019, %v5336
      %v5399 = vadd.f32 %v5024, %v5341
      %v5400 = vadd.f32 %v5027, %v5344
      %v5401 = vadd.f32 %v5032, %v5349
      %v5402 = vadd.f32 %v5035, %v5352
      %v5403 = vadd.f32 %v5040, %v5357
      %v5404 = vadd.f32 %v5043, %v5360
      %v5405 = vadd.f32 %v5048, %v5365
      %v5406 = vadd.f32 %v5051, %v5368
      %v5407 = vld [vmem:[#allocation2 + $0x8] sm:$0xfe]
      %v5408 = vld [vmem:[#allocation2 + $0x10] sm:$0xff]
      %v5409 = vld [vmem:[#allocation2 + $0x18] sm:$0xff]
      %v5410 = vld [vmem:[#allocation2 + $0x20] sm:$0xff]
      %v5411 = vld [vmem:[#allocation2 + $0x28] sm:$0xff]
      %v5412 = vld [vmem:[#allocation2 + $0x30] sm:$0xff]
      %v5413 = vld [vmem:[#allocation2 + $0x38] sm:$0xff]
      %v5414 = vld [vmem:[#allocation2 + $0x40] sm:$0xff]
      %v5415 = vld [vmem:[#allocation2 + $0x48] sm:$0xff]
      %v5416 = vld [vmem:[#allocation2 + $0x50] sm:$0xff]
      %v5417 = vld [vmem:[#allocation2 + $0x58] sm:$0xff]
      %v5418 = vld [vmem:[#allocation2 + $0x60] sm:$0xff]
      %v5419 = vld [vmem:[#allocation2 + $0x68] sm:$0xff]
      %v5420 = vld [vmem:[#allocation2 + $0x70] sm:$0xff]
      %v5421 = vld [vmem:[#allocation2 + $0x78] sm:$0xff]
      %v5422 = vld [vmem:[#allocation2 + $0x80] sm:$0xff]
      %v5423 = vld [vmem:[#allocation2 + $0x88] sm:$0xff]
      %v5424 = vld [vmem:[#allocation2 + $0x90] sm:$0xff]
      %v5425 = vld [vmem:[#allocation2 + $0x98] sm:$0x1]
      %s5426 = scalar_lea.vmem %s4, 192
      %v5427 = vld [vmem:[%s5426] sm:$0xf]
      %v5428 = vld [vmem:[%s5426 + $0x4] sm:$0xf]
      %v5429 = vld [vmem:[%s5426 + $0x8] sm:$0xf]
      %v5430 = vld [vmem:[%s5426 + $0xc] sm:$0xf]
      %v5431 = vld [vmem:[%s5426 + $0x10] sm:$0xf]
      %v5432 = vld [vmem:[%s5426 + $0x14] sm:$0xf]
      %v5433 = vld [vmem:[%s5426 + $0x18] sm:$0xf]
      %v5434 = vld [vmem:[%s5426 + $0x1c] sm:$0xf]
      %v5435 = vld [vmem:[%s5426 + $0x20] sm:$0xf]
      %v5436 = vld [vmem:[%s5426 + $0x24] sm:$0xf]
      %v5437 = vld [vmem:[%s5426 + $0x28] sm:$0xf]
      %v5438 = vld [vmem:[%s5426 + $0x2c] sm:$0xf]
      %v5439 = vld [vmem:[%s5426 + $0x30] sm:$0xf]
      %v5440 = vld [vmem:[%s5426 + $0x34] sm:$0xf]
      %v5441 = vld [vmem:[%s5426 + $0x38] sm:$0xf]
      %v5442 = vld [vmem:[%s5426 + $0x3c] sm:$0xf]
      %v5462 = vrot.slane %v5407, 1
      %v5463 = vrot.slane %v5408, 1
      %v5464 = vsel %vm1147, %v5462, %v5463
      %v5465 = vrot.slane %v5409, 1
      %v5466 = vsel %vm1147, %v5463, %v5465
      %v5467 = vrot.slane %v5410, 1
      %v5468 = vsel %vm1147, %v5465, %v5467
      %v5469 = vrot.slane %v5411, 1
      %v5470 = vsel %vm1147, %v5467, %v5469
      %v5471 = vrot.slane %v5412, 1
      %v5472 = vsel %vm1147, %v5469, %v5471
      %v5473 = vrot.slane %v5413, 1
      %v5474 = vsel %vm1147, %v5471, %v5473
      %v5475 = vrot.slane %v5414, 1
      %v5476 = vsel %vm1147, %v5473, %v5475
      %v5477 = vrot.slane %v5415, 1
      %v5478 = vsel %vm1147, %v5475, %v5477
      %v5479 = vrot.slane %v5416, 1
      %v5480 = vsel %vm1147, %v5477, %v5479
      %v5481 = vrot.slane %v5417, 1
      %v5482 = vsel %vm1147, %v5479, %v5481
      %v5483 = vrot.slane %v5418, 1
      %v5484 = vsel %vm1147, %v5481, %v5483
      %v5485 = vrot.slane %v5419, 1
      %v5486 = vsel %vm1147, %v5483, %v5485
      %v5487 = vrot.slane %v5420, 1
      %v5488 = vsel %vm1147, %v5485, %v5487
      %v5489 = vrot.slane %v5421, 1
      %v5490 = vsel %vm1147, %v5487, %v5489
      %v5491 = vrot.slane %v5422, 1
      %v5492 = vsel %vm1147, %v5489, %v5491
      %v5493 = vrot.slane %v5423, 1
      %v5494 = vsel %vm1147, %v5491, %v5493
      %v5495 = vrot.slane %v5424, 1
      %v5496 = vsel %vm1147, %v5493, %v5495
      %v5497 = vrot.slane %v5425, 1
      %v5498 = vsel %vm1147, %v5495, %v5497
      %v5533 = vunpack.c.l.b16 %v5427
      %v5534 = vunpack.c.l.b16 %v5428
      %v5535 = vunpack.c.l.b16 %v5429
      %v5536 = vunpack.c.l.b16 %v5430
      %v5537 = vunpack.c.l.b16 %v5431
      %v5538 = vunpack.c.l.b16 %v5432
      %v5539 = vunpack.c.l.b16 %v5433
      %v5540 = vunpack.c.l.b16 %v5434
      %v5541 = vunpack.c.l.b16 %v5435
      %v5542 = vunpack.c.l.b16 %v5436
      %v5543 = vunpack.c.l.b16 %v5437
      %v5544 = vunpack.c.l.b16 %v5438
      %v5545 = vunpack.c.l.b16 %v5439
      %v5546 = vunpack.c.l.b16 %v5440
      %v5547 = vunpack.c.l.b16 %v5441
      %v5548 = vunpack.c.l.b16 %v5442
      %v5549 = vpack.c.b16 %v5534, %v5533
      %v5550 = vpack.c.b16 %v5536, %v5535
      %v5551 = vpack.c.b16 %v5538, %v5537
      %v5552 = vpack.c.b16 %v5540, %v5539
      %v5553 = vpack.c.b16 %v5542, %v5541
      %v5554 = vpack.c.b16 %v5544, %v5543
      %v5555 = vpack.c.b16 %v5546, %v5545
      %v5556 = vpack.c.b16 %v5548, %v5547
      %5565 = vmatprep.subr.bf16.mxu0 0
      %5566 = vmatpush1.bf16.msra.mxu0 %v5549
      %5567 = vmatprep.subr.bf16.mxu0 0
      %5568 = vmatpush1.bf16.msra.mxu0 %v5550
      %5569 = vmatprep.subr.bf16.mxu0 0
      %5570 = vmatpush1.bf16.msra.mxu0 %v5551
      %5571 = vmatprep.subr.bf16.mxu0 0
      %5572 = vmatpush1.bf16.msra.mxu0 %v5552
      %5573 = vmatprep.subr.bf16.mxu0 0
      %5574 = vmatpush1.bf16.msra.mxu0 %v5553
      %5575 = vmatprep.subr.bf16.mxu0 0
      %5576 = vmatpush1.bf16.msra.mxu0 %v5554
      %5577 = vmatprep.subr.bf16.mxu0 0
      %5578 = vmatpush1.bf16.msra.mxu0 %v5555
      %5579 = vmatprep.subr.bf16.mxu0 0
      %5580 = vmatpush1.bf16.msra.mxu0 %v5556
      %5581 = vmatprep.subr.bf16.mxu0 0
      %5582 = vmatpush1.bf16.msra.mxu0 0
      %5583 = vmatprep.subr.bf16.mxu0 0
      %5584 = vmatpush1.bf16.msra.mxu0 0
      %5585 = vmatprep.subr.bf16.mxu0 0
      %5586 = vmatpush1.bf16.msra.mxu0 0
      %5587 = vmatprep.subr.bf16.mxu0 0
      %5588 = vmatpush1.bf16.msra.mxu0 0
      %5589 = vmatprep.subr.bf16.mxu0 0
      %5590 = vmatpush1.bf16.msra.mxu0 0
      %5591 = vmatprep.subr.bf16.mxu0 0
      %5592 = vmatpush1.bf16.msra.mxu0 0
      %5593 = vmatprep.subr.bf16.mxu0 0
      %5594 = vmatpush1.bf16.msra.mxu0 0
      %5595 = vmatprep.subr.bf16.mxu0 0
      %5596 = vmatpush1.bf16.msra.mxu0 0
      %5597 = vmatprep.mubr.bf16.mxu0 0
      %5598 = vmatmul.mubr.bf16.gmra.mrb[0].mxu0 %v5464
      %v5599 = vpop.f32.mrb[0].mxu0
      %v5600 = vadd.f32 0.0, %v5599
      %v5601 = vpop.f32.mrb[0].mxu0
      %v5602 = vpop.f32.mrb[0].mxu0
      %v5603 = vadd.f32 0.0, %v5602
      %v5604 = vpop.f32.mrb[0].mxu0
      %5605 = vmatprep.mubr.bf16.mxu0 0
      %5606 = vmatmul.mubr.bf16.gmra.mrb[0].mxu0 %v5466
      %v5607 = vpop.f32.mrb[0].mxu0
      %v5608 = vadd.f32 0.0, %v5607
      %v5609 = vpop.f32.mrb[0].mxu0
      %v5610 = vpop.f32.mrb[0].mxu0
      %v5611 = vadd.f32 0.0, %v5610
      %v5612 = vpop.f32.mrb[0].mxu0
      %5613 = vmatprep.mubr.bf16.mxu0 0
      %5614 = vmatmul.mubr.bf16.gmra.mrb[0].mxu0 %v5468
      %v5615 = vpop.f32.mrb[0].mxu0
      %v5616 = vadd.f32 0.0, %v5615
      %v5617 = vpop.f32.mrb[0].mxu0
      %v5618 = vpop.f32.mrb[0].mxu0
      %v5619 = vadd.f32 0.0, %v5618
      %v5620 = vpop.f32.mrb[0].mxu0
      %5621 = vmatprep.mubr.bf16.mxu0 0
      %5622 = vmatmul.mubr.bf16.gmra.mrb[0].mxu0 %v5470
      %v5623 = vpop.f32.mrb[0].mxu0
      %v5624 = vadd.f32 0.0, %v5623
      %v5625 = vpop.f32.mrb[0].mxu0
      %v5626 = vpop.f32.mrb[0].mxu0
      %v5627 = vadd.f32 0.0, %v5626
      %v5628 = vpop.f32.mrb[0].mxu0
      %5629 = vmatprep.mubr.bf16.mxu0 0
      %5630 = vmatmul.mubr.bf16.gmra.mrb[0].mxu0 %v5472
      %v5631 = vpop.f32.mrb[0].mxu0
      %v5632 = vadd.f32 0.0, %v5631
      %v5633 = vpop.f32.mrb[0].mxu0
      %v5634 = vpop.f32.mrb[0].mxu0
      %v5635 = vadd.f32 0.0, %v5634
      %v5636 = vpop.f32.mrb[0].mxu0
      %5637 = vmatprep.mubr.bf16.mxu0 0
      %5638 = vmatmul.mubr.bf16.gmra.mrb[0].mxu0 %v5474
      %v5639 = vpop.f32.mrb[0].mxu0
      %v5640 = vadd.f32 0.0, %v5639
      %v5641 = vpop.f32.mrb[0].mxu0
      %v5642 = vpop.f32.mrb[0].mxu0
      %v5643 = vadd.f32 0.0, %v5642
      %v5644 = vpop.f32.mrb[0].mxu0
      %5645 = vmatprep.mubr.bf16.mxu0 0
      %5646 = vmatmul.mubr.bf16.gmra.mrb[0].mxu0 %v5476
      %v5647 = vpop.f32.mrb[0].mxu0
      %v5648 = vadd.f32 0.0, %v5647
      %v5649 = vpop.f32.mrb[0].mxu0
      %v5650 = vpop.f32.mrb[0].mxu0
      %v5651 = vadd.f32 0.0, %v5650
      %v5652 = vpop.f32.mrb[0].mxu0
      %5653 = vmatprep.mubr.bf16.mxu0 0
      %5654 = vmatmul.mubr.bf16.gmra.mrb[0].mxu0 %v5478
      %v5655 = vpop.f32.mrb[0].mxu0
      %v5656 = vadd.f32 0.0, %v5655
      %v5657 = vpop.f32.mrb[0].mxu0
      %v5658 = vpop.f32.mrb[0].mxu0
      %v5659 = vadd.f32 0.0, %v5658
      %v5660 = vpop.f32.mrb[0].mxu0
      %5661 = vmatprep.mubr.bf16.mxu0 0
      %5662 = vmatmul.mubr.bf16.gmra.mrb[0].mxu0 %v5480
      %v5663 = vpop.f32.mrb[0].mxu0
      %v5664 = vadd.f32 0.0, %v5663
      %v5665 = vpop.f32.mrb[0].mxu0
      %v5666 = vpop.f32.mrb[0].mxu0
      %v5667 = vadd.f32 0.0, %v5666
      %v5668 = vpop.f32.mrb[0].mxu0
      %5669 = vmatprep.mubr.bf16.mxu0 0
      %5670 = vmatmul.mubr.bf16.gmra.mrb[0].mxu0 %v5482
      %v5671 = vpop.f32.mrb[0].mxu0
      %v5672 = vadd.f32 0.0, %v5671
      %v5673 = vpop.f32.mrb[0].mxu0
      %v5674 = vpop.f32.mrb[0].mxu0
      %v5675 = vadd.f32 0.0, %v5674
      %v5676 = vpop.f32.mrb[0].mxu0
      %5677 = vmatprep.mubr.bf16.mxu0 0
      %5678 = vmatmul.mubr.bf16.gmra.mrb[0].mxu0 %v5484
      %v5679 = vpop.f32.mrb[0].mxu0
      %v5680 = vadd.f32 0.0, %v5679
      %v5681 = vpop.f32.mrb[0].mxu0
      %v5682 = vpop.f32.mrb[0].mxu0
      %v5683 = vadd.f32 0.0, %v5682
      %v5684 = vpop.f32.mrb[0].mxu0
      %5685 = vmatprep.mubr.bf16.mxu0 0
      %5686 = vmatmul.mubr.bf16.gmra.mrb[0].mxu0 %v5486
      %v5687 = vpop.f32.mrb[0].mxu0
      %v5688 = vadd.f32 0.0, %v5687
      %v5689 = vpop.f32.mrb[0].mxu0
      %v5690 = vpop.f32.mrb[0].mxu0
      %v5691 = vadd.f32 0.0, %v5690
      %v5692 = vpop.f32.mrb[0].mxu0
      %5693 = vmatprep.mubr.bf16.mxu0 0
      %5694 = vmatmul.mubr.bf16.gmra.mrb[0].mxu0 %v5488
      %v5695 = vpop.f32.mrb[0].mxu0
      %v5696 = vadd.f32 0.0, %v5695
      %v5697 = vpop.f32.mrb[0].mxu0
      %v5698 = vpop.f32.mrb[0].mxu0
      %v5699 = vadd.f32 0.0, %v5698
      %v5700 = vpop.f32.mrb[0].mxu0
      %5701 = vmatprep.mubr.bf16.mxu0 0
      %5702 = vmatmul.mubr.bf16.gmra.mrb[0].mxu0 %v5490
      %v5703 = vpop.f32.mrb[0].mxu0
      %v5704 = vadd.f32 0.0, %v5703
      %v5705 = vpop.f32.mrb[0].mxu0
      %v5706 = vpop.f32.mrb[0].mxu0
      %v5707 = vadd.f32 0.0, %v5706
      %v5708 = vpop.f32.mrb[0].mxu0
      %5709 = vmatprep.mubr.bf16.mxu0 0
      %5710 = vmatmul.mubr.bf16.gmra.mrb[0].mxu0 %v5492
      %v5711 = vpop.f32.mrb[0].mxu0
      %v5712 = vadd.f32 0.0, %v5711
      %v5713 = vpop.f32.mrb[0].mxu0
      %v5714 = vpop.f32.mrb[0].mxu0
      %v5715 = vadd.f32 0.0, %v5714
      %v5716 = vpop.f32.mrb[0].mxu0
      %5717 = vmatprep.mubr.bf16.mxu0 0
      %5718 = vmatmul.mubr.bf16.gmra.mrb[0].mxu0 %v5494
      %v5719 = vpop.f32.mrb[0].mxu0
      %v5720 = vadd.f32 0.0, %v5719
      %v5721 = vpop.f32.mrb[0].mxu0
      %v5722 = vpop.f32.mrb[0].mxu0
      %v5723 = vadd.f32 0.0, %v5722
      %v5724 = vpop.f32.mrb[0].mxu0
      %5725 = vmatprep.mubr.bf16.mxu0 0
      %5726 = vmatmul.mubr.bf16.gmra.mrb[0].mxu0 %v5496
      %v5727 = vpop.f32.mrb[0].mxu0
      %v5728 = vadd.f32 0.0, %v5727
      %v5729 = vpop.f32.mrb[0].mxu0
      %v5730 = vpop.f32.mrb[0].mxu0
      %v5731 = vadd.f32 0.0, %v5730
      %v5732 = vpop.f32.mrb[0].mxu0
      %5733 = vmatprep.mubr.bf16.mxu0 0
      %5734 = vmatmul.mubr.bf16.gmra.mrb[0].mxu0 %v5498
      %v5735 = vpop.f32.mrb[0].mxu0
      %v5736 = vadd.f32 0.0, %v5735
      %v5737 = vpop.f32.mrb[0].mxu0
      %v5738 = vpop.f32.mrb[0].mxu0
      %v5739 = vadd.f32 0.0, %v5738
      %v5740 = vpop.f32.mrb[0].mxu0
      %5741 = vdwg.mxu0
      %v5742 = vadd.f32 %v5371, %v5600
      %v5743 = vadd.f32 %v5372, %v5603
      %v5744 = vadd.f32 %v5373, %v5608
      %v5745 = vadd.f32 %v5374, %v5611
      %v5746 = vadd.f32 %v5375, %v5616
      %v5747 = vadd.f32 %v5376, %v5619
      %v5748 = vadd.f32 %v5377, %v5624
      %v5749 = vadd.f32 %v5378, %v5627
      %v5750 = vadd.f32 %v5379, %v5632
      %v5751 = vadd.f32 %v5380, %v5635
      %v5752 = vadd.f32 %v5381, %v5640
      %v5753 = vadd.f32 %v5382, %v5643
      %v5754 = vadd.f32 %v5383, %v5648
      %v5755 = vadd.f32 %v5384, %v5651
      %v5756 = vadd.f32 %v5385, %v5656
      %v5757 = vadd.f32 %v5386, %v5659
      %v5758 = vadd.f32 %v5387, %v5664
      %v5759 = vadd.f32 %v5388, %v5667
      %v5760 = vadd.f32 %v5389, %v5672
      %v5761 = vadd.f32 %v5390, %v5675
      %v5762 = vadd.f32 %v5391, %v5680
      %v5763 = vadd.f32 %v5392, %v5683
      %v5764 = vadd.f32 %v5393, %v5688
      %v5765 = vadd.f32 %v5394, %v5691
      %v5766 = vadd.f32 %v5395, %v5696
      %v5767 = vadd.f32 %v5396, %v5699
      %v5768 = vadd.f32 %v5397, %v5704
      %v5769 = vadd.f32 %v5398, %v5707
      %v5770 = vadd.f32 %v5399, %v5712
      %v5771 = vadd.f32 %v5400, %v5715
      %v5772 = vadd.f32 %v5401, %v5720
      %v5773 = vadd.f32 %v5402, %v5723
      %v5774 = vadd.f32 %v5403, %v5728
      %v5775 = vadd.f32 %v5404, %v5731
      %v5776 = vadd.f32 %v5405, %v5736
      %v5777 = vadd.f32 %v5406, %v5739
      %v5778 = vld [vmem:[#allocation2 + $0x98] sm:$0x3]
      %s5779 = scalar_lea.vmem %s4, 256
      %v5780 = vld [vmem:[%s5779] sm:$0xf]
      %v5781 = vld [vmem:[%s5779 + $0x4] sm:$0xf]
      %v5782 = vld [vmem:[%s5779 + $0x8] sm:$0xf]
      %v5783 = vld [vmem:[%s5779 + $0xc] sm:$0xf]
      %v5784 = vld [vmem:[%s5779 + $0x10] sm:$0xf]
      %v5785 = vld [vmem:[%s5779 + $0x14] sm:$0xf]
      %v5786 = vld [vmem:[%s5779 + $0x18] sm:$0xf]
      %v5787 = vld [vmem:[%s5779 + $0x1c] sm:$0xf]
      %v5788 = vld [vmem:[%s5779 + $0x20] sm:$0xf]
      %v5789 = vld [vmem:[%s5779 + $0x24] sm:$0xf]
      %v5790 = vld [vmem:[%s5779 + $0x28] sm:$0xf]
      %v5791 = vld [vmem:[%s5779 + $0x2c] sm:$0xf]
      %v5792 = vld [vmem:[%s5779 + $0x30] sm:$0xf]
      %v5793 = vld [vmem:[%s5779 + $0x34] sm:$0xf]
      %v5794 = vld [vmem:[%s5779 + $0x38] sm:$0xf]
      %v5795 = vld [vmem:[%s5779 + $0x3c] sm:$0xf]
      %v5797 = vshrl.u32 %v5407, 16
      %v5799 = vrot.slane %v5797, 1
      %v5800 = vshll.u32 %v5407, 16
      %v5802 = vrot.slane %v5800, 2
      %v5803 = vor.u32 %v5799, %v5802
      %v5805 = vshrl.u32 %v5408, 16
      %v5807 = vrot.slane %v5805, 1
      %v5808 = vshll.u32 %v5408, 16
      %v5810 = vrot.slane %v5808, 2
      %v5811 = vor.u32 %v5807, %v5810
      %v5812 = vsel %vm1948, %v5803, %v5811
      %v5814 = vshrl.u32 %v5409, 16
      %v5816 = vrot.slane %v5814, 1
      %v5817 = vshll.u32 %v5409, 16
      %v5819 = vrot.slane %v5817, 2
      %v5820 = vor.u32 %v5816, %v5819
      %v5821 = vsel %vm1948, %v5811, %v5820
      %v5823 = vshrl.u32 %v5410, 16
      %v5825 = vrot.slane %v5823, 1
      %v5826 = vshll.u32 %v5410, 16
      %v5828 = vrot.slane %v5826, 2
      %v5829 = vor.u32 %v5825, %v5828
      %v5830 = vsel %vm1948, %v5820, %v5829
      %v5832 = vshrl.u32 %v5411, 16
      %v5834 = vrot.slane %v5832, 1
      %v5835 = vshll.u32 %v5411, 16
      %v5837 = vrot.slane %v5835, 2
      %v5838 = vor.u32 %v5834, %v5837
      %v5839 = vsel %vm1948, %v5829, %v5838
      %v5841 = vshrl.u32 %v5412, 16
      %v5843 = vrot.slane %v5841, 1
      %v5844 = vshll.u32 %v5412, 16
      %v5846 = vrot.slane %v5844, 2
      %v5847 = vor.u32 %v5843, %v5846
      %v5848 = vsel %vm1948, %v5838, %v5847
      %v5850 = vshrl.u32 %v5413, 16
      %v5852 = vrot.slane %v5850, 1
      %v5853 = vshll.u32 %v5413, 16
      %v5855 = vrot.slane %v5853, 2
      %v5856 = vor.u32 %v5852, %v5855
      %v5857 = vsel %vm1948, %v5847, %v5856
      %v5859 = vshrl.u32 %v5414, 16
      %v5861 = vrot.slane %v5859, 1
      %v5862 = vshll.u32 %v5414, 16
      %v5864 = vrot.slane %v5862, 2
      %v5865 = vor.u32 %v5861, %v5864
      %v5866 = vsel %vm1948, %v5856, %v5865
      %v5868 = vshrl.u32 %v5415, 16
      %v5870 = vrot.slane %v5868, 1
      %v5871 = vshll.u32 %v5415, 16
      %v5873 = vrot.slane %v5871, 2
      %v5874 = vor.u32 %v5870, %v5873
      %v5875 = vsel %vm1948, %v5865, %v5874
      %v5877 = vshrl.u32 %v5416, 16
      %v5879 = vrot.slane %v5877, 1
      %v5880 = vshll.u32 %v5416, 16
      %v5882 = vrot.slane %v5880, 2
      %v5883 = vor.u32 %v5879, %v5882
      %v5884 = vsel %vm1948, %v5874, %v5883
      %v5886 = vshrl.u32 %v5417, 16
      %v5888 = vrot.slane %v5886, 1
      %v5889 = vshll.u32 %v5417, 16
      %v5891 = vrot.slane %v5889, 2
      %v5892 = vor.u32 %v5888, %v5891
      %v5893 = vsel %vm1948, %v5883, %v5892
      %v5895 = vshrl.u32 %v5418, 16
      %v5897 = vrot.slane %v5895, 1
      %v5898 = vshll.u32 %v5418, 16
      %v5900 = vrot.slane %v5898, 2
      %v5901 = vor.u32 %v5897, %v5900
      %v5902 = vsel %vm1948, %v5892, %v5901
      %v5904 = vshrl.u32 %v5419, 16
      %v5906 = vrot.slane %v5904, 1
      %v5907 = vshll.u32 %v5419, 16
      %v5909 = vrot.slane %v5907, 2
      %v5910 = vor.u32 %v5906, %v5909
      %v5911 = vsel %vm1948, %v5901, %v5910
      %v5913 = vshrl.u32 %v5420, 16
      %v5915 = vrot.slane %v5913, 1
      %v5916 = vshll.u32 %v5420, 16
      %v5918 = vrot.slane %v5916, 2
      %v5919 = vor.u32 %v5915, %v5918
      %v5920 = vsel %vm1948, %v5910, %v5919
      %v5922 = vshrl.u32 %v5421, 16
      %v5924 = vrot.slane %v5922, 1
      %v5925 = vshll.u32 %v5421, 16
      %v5927 = vrot.slane %v5925, 2
      %v5928 = vor.u32 %v5924, %v5927
      %v5929 = vsel %vm1948, %v5919, %v5928
      %v5931 = vshrl.u32 %v5422, 16
      %v5933 = vrot.slane %v5931, 1
      %v5934 = vshll.u32 %v5422, 16
      %v5936 = vrot.slane %v5934, 2
      %v5937 = vor.u32 %v5933, %v5936
      %v5938 = vsel %vm1948, %v5928, %v5937
      %v5940 = vshrl.u32 %v5423, 16
      %v5942 = vrot.slane %v5940, 1
      %v5943 = vshll.u32 %v5423, 16
      %v5945 = vrot.slane %v5943, 2
      %v5946 = vor.u32 %v5942, %v5945
      %v5947 = vsel %vm1948, %v5937, %v5946
      %v5949 = vshrl.u32 %v5424, 16
      %v5951 = vrot.slane %v5949, 1
      %v5952 = vshll.u32 %v5424, 16
      %v5954 = vrot.slane %v5952, 2
      %v5955 = vor.u32 %v5951, %v5954
      %v5956 = vsel %vm1948, %v5946, %v5955
      %v5958 = vshrl.u32 %v5778, 16
      %v5960 = vrot.slane %v5958, 1
      %v5961 = vshll.u32 %v5778, 16
      %v5963 = vrot.slane %v5961, 2
      %v5964 = vor.u32 %v5960, %v5963
      %v5965 = vsel %vm1948, %v5955, %v5964
      %v6000 = vunpack.c.l.b16 %v5780
      %v6001 = vunpack.c.l.b16 %v5781
      %v6002 = vunpack.c.l.b16 %v5782
      %v6003 = vunpack.c.l.b16 %v5783
      %v6004 = vunpack.c.l.b16 %v5784
      %v6005 = vunpack.c.l.b16 %v5785
      %v6006 = vunpack.c.l.b16 %v5786
      %v6007 = vunpack.c.l.b16 %v5787
      %v6008 = vunpack.c.l.b16 %v5788
      %v6009 = vunpack.c.l.b16 %v5789
      %v6010 = vunpack.c.l.b16 %v5790
      %v6011 = vunpack.c.l.b16 %v5791
      %v6012 = vunpack.c.l.b16 %v5792
      %v6013 = vunpack.c.l.b16 %v5793
      %v6014 = vunpack.c.l.b16 %v5794
      %v6015 = vunpack.c.l.b16 %v5795
      %v6016 = vpack.c.b16 %v6001, %v6000
      %v6017 = vpack.c.b16 %v6003, %v6002
      %v6018 = vpack.c.b16 %v6005, %v6004
      %v6019 = vpack.c.b16 %v6007, %v6006
      %v6020 = vpack.c.b16 %v6009, %v6008
      %v6021 = vpack.c.b16 %v6011, %v6010
      %v6022 = vpack.c.b16 %v6013, %v6012
      %v6023 = vpack.c.b16 %v6015, %v6014
      %6032 = vmatprep.subr.bf16.mxu0 0
      %6033 = vmatpush1.bf16.msra.mxu0 %v6016
      %6034 = vmatprep.subr.bf16.mxu0 0
      %6035 = vmatpush1.bf16.msra.mxu0 %v6017
      %6036 = vmatprep.subr.bf16.mxu0 0
      %6037 = vmatpush1.bf16.msra.mxu0 %v6018
      %6038 = vmatprep.subr.bf16.mxu0 0
      %6039 = vmatpush1.bf16.msra.mxu0 %v6019
      %6040 = vmatprep.subr.bf16.mxu0 0
      %6041 = vmatpush1.bf16.msra.mxu0 %v6020
      %6042 = vmatprep.subr.bf16.mxu0 0
      %6043 = vmatpush1.bf16.msra.mxu0 %v6021
      %6044 = vmatprep.subr.bf16.mxu0 0
      %6045 = vmatpush1.bf16.msra.mxu0 %v6022
      %6046 = vmatprep.subr.bf16.mxu0 0
      %6047 = vmatpush1.bf16.msra.mxu0 %v6023
      %6048 = vmatprep.subr.bf16.mxu0 0
      %6049 = vmatpush1.bf16.msra.mxu0 0
      %6050 = vmatprep.subr.bf16.mxu0 0
      %6051 = vmatpush1.bf16.msra.mxu0 0
      %6052 = vmatprep.subr.bf16.mxu0 0
      %6053 = vmatpush1.bf16.msra.mxu0 0
      %6054 = vmatprep.subr.bf16.mxu0 0
      %6055 = vmatpush1.bf16.msra.mxu0 0
      %6056 = vmatprep.subr.bf16.mxu0 0
      %6057 = vmatpush1.bf16.msra.mxu0 0
      %6058 = vmatprep.subr.bf16.mxu0 0
      %6059 = vmatpush1.bf16.msra.mxu0 0
      %6060 = vmatprep.subr.bf16.mxu0 0
      %6061 = vmatpush1.bf16.msra.mxu0 0
      %6062 = vmatprep.subr.bf16.mxu0 0
      %6063 = vmatpush1.bf16.msra.mxu0 0
      %6064 = vmatprep.mubr.bf16.mxu0 0
      %6065 = vmatmul.mubr.bf16.gmra.mrb[0].mxu0 %v5812
      %v6066 = vpop.f32.mrb[0].mxu0
      %v6067 = vadd.f32 0.0, %v6066
      %v6068 = vpop.f32.mrb[0].mxu0
      %v6069 = vpop.f32.mrb[0].mxu0
      %v6070 = vadd.f32 0.0, %v6069
      %v6071 = vpop.f32.mrb[0].mxu0
      %6072 = vmatprep.mubr.bf16.mxu0 0
      %6073 = vmatmul.mubr.bf16.gmra.mrb[0].mxu0 %v5821
      %v6074 = vpop.f32.mrb[0].mxu0
      %v6075 = vadd.f32 0.0, %v6074
      %v6076 = vpop.f32.mrb[0].mxu0
      %v6077 = vpop.f32.mrb[0].mxu0
      %v6078 = vadd.f32 0.0, %v6077
      %v6079 = vpop.f32.mrb[0].mxu0
      %6080 = vmatprep.mubr.bf16.mxu0 0
      %6081 = vmatmul.mubr.bf16.gmra.mrb[0].mxu0 %v5830
      %v6082 = vpop.f32.mrb[0].mxu0
      %v6083 = vadd.f32 0.0, %v6082
      %v6084 = vpop.f32.mrb[0].mxu0
      %v6085 = vpop.f32.mrb[0].mxu0
      %v6086 = vadd.f32 0.0, %v6085
      %v6087 = vpop.f32.mrb[0].mxu0
      %6088 = vmatprep.mubr.bf16.mxu0 0
      %6089 = vmatmul.mubr.bf16.gmra.mrb[0].mxu0 %v5839
      %v6090 = vpop.f32.mrb[0].mxu0
      %v6091 = vadd.f32 0.0, %v6090
      %v6092 = vpop.f32.mrb[0].mxu0
      %v6093 = vpop.f32.mrb[0].mxu0
      %v6094 = vadd.f32 0.0, %v6093
      %v6095 = vpop.f32.mrb[0].mxu0
      %6096 = vmatprep.mubr.bf16.mxu0 0
      %6097 = vmatmul.mubr.bf16.gmra.mrb[0].mxu0 %v5848
      %v6098 = vpop.f32.mrb[0].mxu0
      %v6099 = vadd.f32 0.0, %v6098
      %v6100 = vpop.f32.mrb[0].mxu0
      %v6101 = vpop.f32.mrb[0].mxu0
      %v6102 = vadd.f32 0.0, %v6101
      %v6103 = vpop.f32.mrb[0].mxu0
      %6104 = vmatprep.mubr.bf16.mxu0 0
      %6105 = vmatmul.mubr.bf16.gmra.mrb[0].mxu0 %v5857
      %v6106 = vpop.f32.mrb[0].mxu0
      %v6107 = vadd.f32 0.0, %v6106
      %v6108 = vpop.f32.mrb[0].mxu0
      %v6109 = vpop.f32.mrb[0].mxu0
      %v6110 = vadd.f32 0.0, %v6109
      %v6111 = vpop.f32.mrb[0].mxu0
      %6112 = vmatprep.mubr.bf16.mxu0 0
      %6113 = vmatmul.mubr.bf16.gmra.mrb[0].mxu0 %v5866
      %v6114 = vpop.f32.mrb[0].mxu0
      %v6115 = vadd.f32 0.0, %v6114
      %v6116 = vpop.f32.mrb[0].mxu0
      %v6117 = vpop.f32.mrb[0].mxu0
      %v6118 = vadd.f32 0.0, %v6117
      %v6119 = vpop.f32.mrb[0].mxu0
      %6120 = vmatprep.mubr.bf16.mxu0 0
      %6121 = vmatmul.mubr.bf16.gmra.mrb[0].mxu0 %v5875
      %v6122 = vpop.f32.mrb[0].mxu0
      %v6123 = vadd.f32 0.0, %v6122
      %v6124 = vpop.f32.mrb[0].mxu0
      %v6125 = vpop.f32.mrb[0].mxu0
      %v6126 = vadd.f32 0.0, %v6125
      %v6127 = vpop.f32.mrb[0].mxu0
      %6128 = vmatprep.mubr.bf16.mxu0 0
      %6129 = vmatmul.mubr.bf16.gmra.mrb[0].mxu0 %v5884
      %v6130 = vpop.f32.mrb[0].mxu0
      %v6131 = vadd.f32 0.0, %v6130
      %v6132 = vpop.f32.mrb[0].mxu0
      %v6133 = vpop.f32.mrb[0].mxu0
      %v6134 = vadd.f32 0.0, %v6133
      %v6135 = vpop.f32.mrb[0].mxu0
      %6136 = vmatprep.mubr.bf16.mxu0 0
      %6137 = vmatmul.mubr.bf16.gmra.mrb[0].mxu0 %v5893
      %v6138 = vpop.f32.mrb[0].mxu0
      %v6139 = vadd.f32 0.0, %v6138
      %v6140 = vpop.f32.mrb[0].mxu0
      %v6141 = vpop.f32.mrb[0].mxu0
      %v6142 = vadd.f32 0.0, %v6141
      %v6143 = vpop.f32.mrb[0].mxu0
      %6144 = vmatprep.mubr.bf16.mxu0 0
      %6145 = vmatmul.mubr.bf16.gmra.mrb[0].mxu0 %v5902
      %v6146 = vpop.f32.mrb[0].mxu0
      %v6147 = vadd.f32 0.0, %v6146
      %v6148 = vpop.f32.mrb[0].mxu0
      %v6149 = vpop.f32.mrb[0].mxu0
      %v6150 = vadd.f32 0.0, %v6149
      %v6151 = vpop.f32.mrb[0].mxu0
      %6152 = vmatprep.mubr.bf16.mxu0 0
      %6153 = vmatmul.mubr.bf16.gmra.mrb[0].mxu0 %v5911
      %v6154 = vpop.f32.mrb[0].mxu0
      %v6155 = vadd.f32 0.0, %v6154
      %v6156 = vpop.f32.mrb[0].mxu0
      %v6157 = vpop.f32.mrb[0].mxu0
      %v6158 = vadd.f32 0.0, %v6157
      %v6159 = vpop.f32.mrb[0].mxu0
      %6160 = vmatprep.mubr.bf16.mxu0 0
      %6161 = vmatmul.mubr.bf16.gmra.mrb[0].mxu0 %v5920
      %v6162 = vpop.f32.mrb[0].mxu0
      %v6163 = vadd.f32 0.0, %v6162
      %v6164 = vpop.f32.mrb[0].mxu0
      %v6165 = vpop.f32.mrb[0].mxu0
      %v6166 = vadd.f32 0.0, %v6165
      %v6167 = vpop.f32.mrb[0].mxu0
      %6168 = vmatprep.mubr.bf16.mxu0 0
      %6169 = vmatmul.mubr.bf16.gmra.mrb[0].mxu0 %v5929
      %v6170 = vpop.f32.mrb[0].mxu0
      %v6171 = vadd.f32 0.0, %v6170
      %v6172 = vpop.f32.mrb[0].mxu0
      %v6173 = vpop.f32.mrb[0].mxu0
      %v6174 = vadd.f32 0.0, %v6173
      %v6175 = vpop.f32.mrb[0].mxu0
      %6176 = vmatprep.mubr.bf16.mxu0 0
      %6177 = vmatmul.mubr.bf16.gmra.mrb[0].mxu0 %v5938
      %v6178 = vpop.f32.mrb[0].mxu0
      %v6179 = vadd.f32 0.0, %v6178
      %v6180 = vpop.f32.mrb[0].mxu0
      %v6181 = vpop.f32.mrb[0].mxu0
      %v6182 = vadd.f32 0.0, %v6181
      %v6183 = vpop.f32.mrb[0].mxu0
      %6184 = vmatprep.mubr.bf16.mxu0 0
      %6185 = vmatmul.mubr.bf16.gmra.mrb[0].mxu0 %v5947
      %v6186 = vpop.f32.mrb[0].mxu0
      %v6187 = vadd.f32 0.0, %v6186
      %v6188 = vpop.f32.mrb[0].mxu0
      %v6189 = vpop.f32.mrb[0].mxu0
      %v6190 = vadd.f32 0.0, %v6189
      %v6191 = vpop.f32.mrb[0].mxu0
      %6192 = vmatprep.mubr.bf16.mxu0 0
      %6193 = vmatmul.mubr.bf16.gmra.mrb[0].mxu0 %v5956
      %v6194 = vpop.f32.mrb[0].mxu0
      %v6195 = vadd.f32 0.0, %v6194
      %v6196 = vpop.f32.mrb[0].mxu0
      %v6197 = vpop.f32.mrb[0].mxu0
      %v6198 = vadd.f32 0.0, %v6197
      %v6199 = vpop.f32.mrb[0].mxu0
      %6200 = vmatprep.mubr.bf16.mxu0 0
      %6201 = vmatmul.mubr.bf16.gmra.mrb[0].mxu0 %v5965
      %v6202 = vpop.f32.mrb[0].mxu0
      %v6203 = vadd.f32 0.0, %v6202
      %v6204 = vpop.f32.mrb[0].mxu0
      %v6205 = vpop.f32.mrb[0].mxu0
      %v6206 = vadd.f32 0.0, %v6205
      %v6207 = vpop.f32.mrb[0].mxu0
      %6208 = vdwg.mxu0
      %v6209 = vadd.f32 %v5742, %v6067
      %v6210 = vadd.f32 %v5743, %v6070
      %v6211 = vadd.f32 %v5744, %v6075
      %v6212 = vadd.f32 %v5745, %v6078
      %v6213 = vadd.f32 %v5746, %v6083
      %v6214 = vadd.f32 %v5747, %v6086
      %v6215 = vadd.f32 %v5748, %v6091
      %v6216 = vadd.f32 %v5749, %v6094
      %v6217 = vadd.f32 %v5750, %v6099
      %v6218 = vadd.f32 %v5751, %v6102
      %v6219 = vadd.f32 %v5752, %v6107
      %v6220 = vadd.f32 %v5753, %v6110
      %v6221 = vadd.f32 %v5754, %v6115
      %v6222 = vadd.f32 %v5755, %v6118
      %v6223 = vadd.f32 %v5756, %v6123
      %v6224 = vadd.f32 %v5757, %v6126
      %v6225 = vadd.f32 %v5758, %v6131
      %v6226 = vadd.f32 %v5759, %v6134
      %v6227 = vadd.f32 %v5760, %v6139
      %v6228 = vadd.f32 %v5761, %v6142
      %v6229 = vadd.f32 %v5762, %v6147
      %v6230 = vadd.f32 %v5763, %v6150
      %v6231 = vadd.f32 %v5764, %v6155
      %v6232 = vadd.f32 %v5765, %v6158
      %v6233 = vadd.f32 %v5766, %v6163
      %v6234 = vadd.f32 %v5767, %v6166
      %v6235 = vadd.f32 %v5768, %v6171
      %v6236 = vadd.f32 %v5769, %v6174
      %v6237 = vadd.f32 %v5770, %v6179
      %v6238 = vadd.f32 %v5771, %v6182
      %v6239 = vadd.f32 %v5772, %v6187
      %v6240 = vadd.f32 %v5773, %v6190
      %v6241 = vadd.f32 %v5774, %v6195
      %v6242 = vadd.f32 %v5775, %v6198
      %v6243 = vadd.f32 %v5776, %v6203
      %v6244 = vadd.f32 %v5777, %v6206
      %v6245 = vld [vmem:[#allocation2 + $0x8] sm:$0xfc]
      %s6246 = scalar_lea.vmem %s4, 320
      %v6247 = vld [vmem:[%s6246] sm:$0xf]
      %v6248 = vld [vmem:[%s6246 + $0x4] sm:$0xf]
      %v6249 = vld [vmem:[%s6246 + $0x8] sm:$0xf]
      %v6250 = vld [vmem:[%s6246 + $0xc] sm:$0xf]
      %v6251 = vld [vmem:[%s6246 + $0x10] sm:$0xf]
      %v6252 = vld [vmem:[%s6246 + $0x14] sm:$0xf]
      %v6253 = vld [vmem:[%s6246 + $0x18] sm:$0xf]
      %v6254 = vld [vmem:[%s6246 + $0x1c] sm:$0xf]
      %v6255 = vld [vmem:[%s6246 + $0x20] sm:$0xf]
      %v6256 = vld [vmem:[%s6246 + $0x24] sm:$0xf]
      %v6257 = vld [vmem:[%s6246 + $0x28] sm:$0xf]
      %v6258 = vld [vmem:[%s6246 + $0x2c] sm:$0xf]
      %v6259 = vld [vmem:[%s6246 + $0x30] sm:$0xf]
      %v6260 = vld [vmem:[%s6246 + $0x34] sm:$0xf]
      %v6261 = vld [vmem:[%s6246 + $0x38] sm:$0xf]
      %v6262 = vld [vmem:[%s6246 + $0x3c] sm:$0xf]
      %v6265 = vrot.slane %v6245, 2
      %v6266 = vrot.slane %v5408, 2
      %v6267 = vsel %vm2419, %v6265, %v6266
      %v6268 = vrot.slane %v5409, 2
      %v6269 = vsel %vm2419, %v6266, %v6268
      %v6270 = vrot.slane %v5410, 2
      %v6271 = vsel %vm2419, %v6268, %v6270
      %v6272 = vrot.slane %v5411, 2
      %v6273 = vsel %vm2419, %v6270, %v6272
      %v6274 = vrot.slane %v5412, 2
      %v6275 = vsel %vm2419, %v6272, %v6274
      %v6276 = vrot.slane %v5413, 2
      %v6277 = vsel %vm2419, %v6274, %v6276
      %v6278 = vrot.slane %v5414, 2
      %v6279 = vsel %vm2419, %v6276, %v6278
      %v6280 = vrot.slane %v5415, 2
      %v6281 = vsel %vm2419, %v6278, %v6280
      %v6282 = vrot.slane %v5416, 2
      %v6283 = vsel %vm2419, %v6280, %v6282
      %v6284 = vrot.slane %v5417, 2
      %v6285 = vsel %vm2419, %v6282, %v6284
      %v6286 = vrot.slane %v5418, 2
      %v6287 = vsel %vm2419, %v6284, %v6286
      %v6288 = vrot.slane %v5419, 2
      %v6289 = vsel %vm2419, %v6286, %v6288
      %v6290 = vrot.slane %v5420, 2
      %v6291 = vsel %vm2419, %v6288, %v6290
      %v6292 = vrot.slane %v5421, 2
      %v6293 = vsel %vm2419, %v6290, %v6292
      %v6294 = vrot.slane %v5422, 2
      %v6295 = vsel %vm2419, %v6292, %v6294
      %v6296 = vrot.slane %v5423, 2
      %v6297 = vsel %vm2419, %v6294, %v6296
      %v6298 = vrot.slane %v5424, 2
      %v6299 = vsel %vm2419, %v6296, %v6298
      %v6300 = vrot.slane %v5778, 2
      %v6301 = vsel %vm2419, %v6298, %v6300
      %v6336 = vunpack.c.l.b16 %v6247
      %v6337 = vunpack.c.l.b16 %v6248
      %v6338 = vunpack.c.l.b16 %v6249
      %v6339 = vunpack.c.l.b16 %v6250
      %v6340 = vunpack.c.l.b16 %v6251
      %v6341 = vunpack.c.l.b16 %v6252
      %v6342 = vunpack.c.l.b16 %v6253
      %v6343 = vunpack.c.l.b16 %v6254
      %v6344 = vunpack.c.l.b16 %v6255
      %v6345 = vunpack.c.l.b16 %v6256
      %v6346 = vunpack.c.l.b16 %v6257
      %v6347 = vunpack.c.l.b16 %v6258
      %v6348 = vunpack.c.l.b16 %v6259
      %v6349 = vunpack.c.l.b16 %v6260
      %v6350 = vunpack.c.l.b16 %v6261
      %v6351 = vunpack.c.l.b16 %v6262
      %v6352 = vpack.c.b16 %v6337, %v6336
      %v6353 = vpack.c.b16 %v6339, %v6338
      %v6354 = vpack.c.b16 %v6341, %v6340
      %v6355 = vpack.c.b16 %v6343, %v6342
      %v6356 = vpack.c.b16 %v6345, %v6344
      %v6357 = vpack.c.b16 %v6347, %v6346
      %v6358 = vpack.c.b16 %v6349, %v6348
      %v6359 = vpack.c.b16 %v6351, %v6350
      %6368 = vmatprep.subr.bf16.mxu0 0
      %6369 = vmatpush1.bf16.msra.mxu0 %v6352
      %6370 = vmatprep.subr.bf16.mxu0 0
      %6371 = vmatpush1.bf16.msra.mxu0 %v6353
      %6372 = vmatprep.subr.bf16.mxu0 0
      %6373 = vmatpush1.bf16.msra.mxu0 %v6354
      %6374 = vmatprep.subr.bf16.mxu0 0
      %6375 = vmatpush1.bf16.msra.mxu0 %v6355
      %6376 = vmatprep.subr.bf16.mxu0 0
      %6377 = vmatpush1.bf16.msra.mxu0 %v6356
      %6378 = vmatprep.subr.bf16.mxu0 0
      %6379 = vmatpush1.bf16.msra.mxu0 %v6357
      %6380 = vmatprep.subr.bf16.mxu0 0
      %6381 = vmatpush1.bf16.msra.mxu0 %v6358
      %6382 = vmatprep.subr.bf16.mxu0 0
      %6383 = vmatpush1.bf16.msra.mxu0 %v6359
      %6384 = vmatprep.subr.bf16.mxu0 0
      %6385 = vmatpush1.bf16.msra.mxu0 0
      %6386 = vmatprep.subr.bf16.mxu0 0
      %6387 = vmatpush1.bf16.msra.mxu0 0
      %6388 = vmatprep.subr.bf16.mxu0 0
      %6389 = vmatpush1.bf16.msra.mxu0 0
      %6390 = vmatprep.subr.bf16.mxu0 0
      %6391 = vmatpush1.bf16.msra.mxu0 0
      %6392 = vmatprep.subr.bf16.mxu0 0
      %6393 = vmatpush1.bf16.msra.mxu0 0
      %6394 = vmatprep.subr.bf16.mxu0 0
      %6395 = vmatpush1.bf16.msra.mxu0 0
      %6396 = vmatprep.subr.bf16.mxu0 0
      %6397 = vmatpush1.bf16.msra.mxu0 0
      %6398 = vmatprep.subr.bf16.mxu0 0
      %6399 = vmatpush1.bf16.msra.mxu0 0
      %6400 = vmatprep.mubr.bf16.mxu0 0
      %6401 = vmatmul.mubr.bf16.gmra.mrb[0].mxu0 %v6267
      %v6402 = vpop.f32.mrb[0].mxu0
      %v6403 = vadd.f32 0.0, %v6402
      %v6404 = vpop.f32.mrb[0].mxu0
      %v6405 = vpop.f32.mrb[0].mxu0
      %v6406 = vadd.f32 0.0, %v6405
      %v6407 = vpop.f32.mrb[0].mxu0
      %6408 = vmatprep.mubr.bf16.mxu0 0
      %6409 = vmatmul.mubr.bf16.gmra.mrb[0].mxu0 %v6269
      %v6410 = vpop.f32.mrb[0].mxu0
      %v6411 = vadd.f32 0.0, %v6410
      %v6412 = vpop.f32.mrb[0].mxu0
      %v6413 = vpop.f32.mrb[0].mxu0
      %v6414 = vadd.f32 0.0, %v6413
      %v6415 = vpop.f32.mrb[0].mxu0
      %6416 = vmatprep.mubr.bf16.mxu0 0
      %6417 = vmatmul.mubr.bf16.gmra.mrb[0].mxu0 %v6271
      %v6418 = vpop.f32.mrb[0].mxu0
      %v6419 = vadd.f32 0.0, %v6418
      %v6420 = vpop.f32.mrb[0].mxu0
      %v6421 = vpop.f32.mrb[0].mxu0
      %v6422 = vadd.f32 0.0, %v6421
      %v6423 = vpop.f32.mrb[0].mxu0
      %6424 = vmatprep.mubr.bf16.mxu0 0
      %6425 = vmatmul.mubr.bf16.gmra.mrb[0].mxu0 %v6273
      %v6426 = vpop.f32.mrb[0].mxu0
      %v6427 = vadd.f32 0.0, %v6426
      %v6428 = vpop.f32.mrb[0].mxu0
      %v6429 = vpop.f32.mrb[0].mxu0
      %v6430 = vadd.f32 0.0, %v6429
      %v6431 = vpop.f32.mrb[0].mxu0
      %6432 = vmatprep.mubr.bf16.mxu0 0
      %6433 = vmatmul.mubr.bf16.gmra.mrb[0].mxu0 %v6275
      %v6434 = vpop.f32.mrb[0].mxu0
      %v6435 = vadd.f32 0.0, %v6434
      %v6436 = vpop.f32.mrb[0].mxu0
      %v6437 = vpop.f32.mrb[0].mxu0
      %v6438 = vadd.f32 0.0, %v6437
      %v6439 = vpop.f32.mrb[0].mxu0
      %6440 = vmatprep.mubr.bf16.mxu0 0
      %6441 = vmatmul.mubr.bf16.gmra.mrb[0].mxu0 %v6277
      %v6442 = vpop.f32.mrb[0].mxu0
      %v6443 = vadd.f32 0.0, %v6442
      %v6444 = vpop.f32.mrb[0].mxu0
      %v6445 = vpop.f32.mrb[0].mxu0
      %v6446 = vadd.f32 0.0, %v6445
      %v6447 = vpop.f32.mrb[0].mxu0
      %6448 = vmatprep.mubr.bf16.mxu0 0
      %6449 = vmatmul.mubr.bf16.gmra.mrb[0].mxu0 %v6279
      %v6450 = vpop.f32.mrb[0].mxu0
      %v6451 = vadd.f32 0.0, %v6450
      %v6452 = vpop.f32.mrb[0].mxu0
      %v6453 = vpop.f32.mrb[0].mxu0
      %v6454 = vadd.f32 0.0, %v6453
      %v6455 = vpop.f32.mrb[0].mxu0
      %6456 = vmatprep.mubr.bf16.mxu0 0
      %6457 = vmatmul.mubr.bf16.gmra.mrb[0].mxu0 %v6281
      %v6458 = vpop.f32.mrb[0].mxu0
      %v6459 = vadd.f32 0.0, %v6458
      %v6460 = vpop.f32.mrb[0].mxu0
      %v6461 = vpop.f32.mrb[0].mxu0
      %v6462 = vadd.f32 0.0, %v6461
      %v6463 = vpop.f32.mrb[0].mxu0
      %6464 = vmatprep.mubr.bf16.mxu0 0
      %6465 = vmatmul.mubr.bf16.gmra.mrb[0].mxu0 %v6283
      %v6466 = vpop.f32.mrb[0].mxu0
      %v6467 = vadd.f32 0.0, %v6466
      %v6468 = vpop.f32.mrb[0].mxu0
      %v6469 = vpop.f32.mrb[0].mxu0
      %v6470 = vadd.f32 0.0, %v6469
      %v6471 = vpop.f32.mrb[0].mxu0
      %6472 = vmatprep.mubr.bf16.mxu0 0
      %6473 = vmatmul.mubr.bf16.gmra.mrb[0].mxu0 %v6285
      %v6474 = vpop.f32.mrb[0].mxu0
      %v6475 = vadd.f32 0.0, %v6474
      %v6476 = vpop.f32.mrb[0].mxu0
      %v6477 = vpop.f32.mrb[0].mxu0
      %v6478 = vadd.f32 0.0, %v6477
      %v6479 = vpop.f32.mrb[0].mxu0
      %6480 = vmatprep.mubr.bf16.mxu0 0
      %6481 = vmatmul.mubr.bf16.gmra.mrb[0].mxu0 %v6287
      %v6482 = vpop.f32.mrb[0].mxu0
      %v6483 = vadd.f32 0.0, %v6482
      %v6484 = vpop.f32.mrb[0].mxu0
      %v6485 = vpop.f32.mrb[0].mxu0
      %v6486 = vadd.f32 0.0, %v6485
      %v6487 = vpop.f32.mrb[0].mxu0
      %6488 = vmatprep.mubr.bf16.mxu0 0
      %6489 = vmatmul.mubr.bf16.gmra.mrb[0].mxu0 %v6289
      %v6490 = vpop.f32.mrb[0].mxu0
      %v6491 = vadd.f32 0.0, %v6490
      %v6492 = vpop.f32.mrb[0].mxu0
      %v6493 = vpop.f32.mrb[0].mxu0
      %v6494 = vadd.f32 0.0, %v6493
      %v6495 = vpop.f32.mrb[0].mxu0
      %6496 = vmatprep.mubr.bf16.mxu0 0
      %6497 = vmatmul.mubr.bf16.gmra.mrb[0].mxu0 %v6291
      %v6498 = vpop.f32.mrb[0].mxu0
      %v6499 = vadd.f32 0.0, %v6498
      %v6500 = vpop.f32.mrb[0].mxu0
      %v6501 = vpop.f32.mrb[0].mxu0
      %v6502 = vadd.f32 0.0, %v6501
      %v6503 = vpop.f32.mrb[0].mxu0
      %6504 = vmatprep.mubr.bf16.mxu0 0
      %6505 = vmatmul.mubr.bf16.gmra.mrb[0].mxu0 %v6293
      %v6506 = vpop.f32.mrb[0].mxu0
      %v6507 = vadd.f32 0.0, %v6506
      %v6508 = vpop.f32.mrb[0].mxu0
      %v6509 = vpop.f32.mrb[0].mxu0
      %v6510 = vadd.f32 0.0, %v6509
      %v6511 = vpop.f32.mrb[0].mxu0
      %6512 = vmatprep.mubr.bf16.mxu0 0
      %6513 = vmatmul.mubr.bf16.gmra.mrb[0].mxu0 %v6295
      %v6514 = vpop.f32.mrb[0].mxu0
      %v6515 = vadd.f32 0.0, %v6514
      %v6516 = vpop.f32.mrb[0].mxu0
      %v6517 = vpop.f32.mrb[0].mxu0
      %v6518 = vadd.f32 0.0, %v6517
      %v6519 = vpop.f32.mrb[0].mxu0
      %6520 = vmatprep.mubr.bf16.mxu0 0
      %6521 = vmatmul.mubr.bf16.gmra.mrb[0].mxu0 %v6297
      %v6522 = vpop.f32.mrb[0].mxu0
      %v6523 = vadd.f32 0.0, %v6522
      %v6524 = vpop.f32.mrb[0].mxu0
      %v6525 = vpop.f32.mrb[0].mxu0
      %v6526 = vadd.f32 0.0, %v6525
      %v6527 = vpop.f32.mrb[0].mxu0
      %6528 = vmatprep.mubr.bf16.mxu0 0
      %6529 = vmatmul.mubr.bf16.gmra.mrb[0].mxu0 %v6299
      %v6530 = vpop.f32.mrb[0].mxu0
      %v6531 = vadd.f32 0.0, %v6530
      %v6532 = vpop.f32.mrb[0].mxu0
      %v6533 = vpop.f32.mrb[0].mxu0
      %v6534 = vadd.f32 0.0, %v6533
      %v6535 = vpop.f32.mrb[0].mxu0
      %6536 = vmatprep.mubr.bf16.mxu0 0
      %6537 = vmatmul.mubr.bf16.gmra.mrb[0].mxu0 %v6301
      %v6538 = vpop.f32.mrb[0].mxu0
      %v6539 = vadd.f32 0.0, %v6538
      %v6540 = vpop.f32.mrb[0].mxu0
      %v6541 = vpop.f32.mrb[0].mxu0
      %v6542 = vadd.f32 0.0, %v6541
      %v6543 = vpop.f32.mrb[0].mxu0
      %6544 = vdwg.mxu0
      %v6545 = vadd.f32 %v6209, %v6403
      %v6546 = vadd.f32 %v6210, %v6406
      %v6547 = vadd.f32 %v6211, %v6411
      %v6548 = vadd.f32 %v6212, %v6414
      %v6549 = vadd.f32 %v6213, %v6419
      %v6550 = vadd.f32 %v6214, %v6422
      %v6551 = vadd.f32 %v6215, %v6427
      %v6552 = vadd.f32 %v6216, %v6430
      %v6553 = vadd.f32 %v6217, %v6435
      %v6554 = vadd.f32 %v6218, %v6438
      %v6555 = vadd.f32 %v6219, %v6443
      %v6556 = vadd.f32 %v6220, %v6446
      %v6557 = vadd.f32 %v6221, %v6451
      %v6558 = vadd.f32 %v6222, %v6454
      %v6559 = vadd.f32 %v6223, %v6459
      %v6560 = vadd.f32 %v6224, %v6462
      %v6561 = vadd.f32 %v6225, %v6467
      %v6562 = vadd.f32 %v6226, %v6470
      %v6563 = vadd.f32 %v6227, %v6475
      %v6564 = vadd.f32 %v6228, %v6478
      %v6565 = vadd.f32 %v6229, %v6483
      %v6566 = vadd.f32 %v6230, %v6486
      %v6567 = vadd.f32 %v6231, %v6491
      %v6568 = vadd.f32 %v6232, %v6494
      %v6569 = vadd.f32 %v6233, %v6499
      %v6570 = vadd.f32 %v6234, %v6502
      %v6571 = vadd.f32 %v6235, %v6507
      %v6572 = vadd.f32 %v6236, %v6510
      %v6573 = vadd.f32 %v6237, %v6515
      %v6574 = vadd.f32 %v6238, %v6518
      %v6575 = vadd.f32 %v6239, %v6523
      %v6576 = vadd.f32 %v6240, %v6526
      %v6577 = vadd.f32 %v6241, %v6531
      %v6578 = vadd.f32 %v6242, %v6534
      %v6579 = vadd.f32 %v6243, %v6539
      %v6580 = vadd.f32 %v6244, %v6542
      %v6581 = vld [vmem:[#allocation2 + $0x10] sm:$0xfc]
      %v6582 = vld [vmem:[#allocation2 + $0x18] sm:$0xff]
      %v6583 = vld [vmem:[#allocation2 + $0x20] sm:$0xff]
      %v6584 = vld [vmem:[#allocation2 + $0x28] sm:$0xff]
      %v6585 = vld [vmem:[#allocation2 + $0x30] sm:$0xff]
      %v6586 = vld [vmem:[#allocation2 + $0x38] sm:$0xff]
      %v6587 = vld [vmem:[#allocation2 + $0x40] sm:$0xff]
      %v6588 = vld [vmem:[#allocation2 + $0x48] sm:$0xff]
      %v6589 = vld [vmem:[#allocation2 + $0x50] sm:$0xff]
      %v6590 = vld [vmem:[#allocation2 + $0x58] sm:$0xff]
      %v6591 = vld [vmem:[#allocation2 + $0x60] sm:$0xff]
      %v6592 = vld [vmem:[#allocation2 + $0x68] sm:$0xff]
      %v6593 = vld [vmem:[#allocation2 + $0x70] sm:$0xff]
      %v6594 = vld [vmem:[#allocation2 + $0x78] sm:$0xff]
      %v6595 = vld [vmem:[#allocation2 + $0x80] sm:$0xff]
      %v6596 = vld [vmem:[#allocation2 + $0x88] sm:$0xff]
      %v6597 = vld [vmem:[#allocation2 + $0x90] sm:$0xff]
      %v6598 = vld [vmem:[#allocation2 + $0x98] sm:$0xff]
      %v6599 = vld [vmem:[#allocation2 + $0xa0] sm:$0x3]
      %s6600 = scalar_lea.vmem %s4, 384
      %v6601 = vld [vmem:[%s6600] sm:$0xf]
      %v6602 = vld [vmem:[%s6600 + $0x4] sm:$0xf]
      %v6603 = vld [vmem:[%s6600 + $0x8] sm:$0xf]
      %v6604 = vld [vmem:[%s6600 + $0xc] sm:$0xf]
      %v6605 = vld [vmem:[%s6600 + $0x10] sm:$0xf]
      %v6606 = vld [vmem:[%s6600 + $0x14] sm:$0xf]
      %v6607 = vld [vmem:[%s6600 + $0x18] sm:$0xf]
      %v6608 = vld [vmem:[%s6600 + $0x1c] sm:$0xf]
      %v6609 = vld [vmem:[%s6600 + $0x20] sm:$0xf]
      %v6610 = vld [vmem:[%s6600 + $0x24] sm:$0xf]
      %v6611 = vld [vmem:[%s6600 + $0x28] sm:$0xf]
      %v6612 = vld [vmem:[%s6600 + $0x2c] sm:$0xf]
      %v6613 = vld [vmem:[%s6600 + $0x30] sm:$0xf]
      %v6614 = vld [vmem:[%s6600 + $0x34] sm:$0xf]
      %v6615 = vld [vmem:[%s6600 + $0x38] sm:$0xf]
      %v6616 = vld [vmem:[%s6600 + $0x3c] sm:$0xf]
      %v6636 = vrot.slane %v6581, 2
      %v6637 = vrot.slane %v6582, 2
      %v6638 = vsel %vm2419, %v6636, %v6637
      %v6639 = vrot.slane %v6583, 2
      %v6640 = vsel %vm2419, %v6637, %v6639
      %v6641 = vrot.slane %v6584, 2
      %v6642 = vsel %vm2419, %v6639, %v6641
      %v6643 = vrot.slane %v6585, 2
      %v6644 = vsel %vm2419, %v6641, %v6643
      %v6645 = vrot.slane %v6586, 2
      %v6646 = vsel %vm2419, %v6643, %v6645
      %v6647 = vrot.slane %v6587, 2
      %v6648 = vsel %vm2419, %v6645, %v6647
      %v6649 = vrot.slane %v6588, 2
      %v6650 = vsel %vm2419, %v6647, %v6649
      %v6651 = vrot.slane %v6589, 2
      %v6652 = vsel %vm2419, %v6649, %v6651
      %v6653 = vrot.slane %v6590, 2
      %v6654 = vsel %vm2419, %v6651, %v6653
      %v6655 = vrot.slane %v6591, 2
      %v6656 = vsel %vm2419, %v6653, %v6655
      %v6657 = vrot.slane %v6592, 2
      %v6658 = vsel %vm2419, %v6655, %v6657
      %v6659 = vrot.slane %v6593, 2
      %v6660 = vsel %vm2419, %v6657, %v6659
      %v6661 = vrot.slane %v6594, 2
      %v6662 = vsel %vm2419, %v6659, %v6661
      %v6663 = vrot.slane %v6595, 2
      %v6664 = vsel %vm2419, %v6661, %v6663
      %v6665 = vrot.slane %v6596, 2
      %v6666 = vsel %vm2419, %v6663, %v6665
      %v6667 = vrot.slane %v6597, 2
      %v6668 = vsel %vm2419, %v6665, %v6667
      %v6669 = vrot.slane %v6598, 2
      %v6670 = vsel %vm2419, %v6667, %v6669
      %v6671 = vrot.slane %v6599, 2
      %v6672 = vsel %vm2419, %v6669, %v6671
      %v6707 = vunpack.c.l.b16 %v6601
      %v6708 = vunpack.c.l.b16 %v6602
      %v6709 = vunpack.c.l.b16 %v6603
      %v6710 = vunpack.c.l.b16 %v6604
      %v6711 = vunpack.c.l.b16 %v6605
      %v6712 = vunpack.c.l.b16 %v6606
      %v6713 = vunpack.c.l.b16 %v6607
      %v6714 = vunpack.c.l.b16 %v6608
      %v6715 = vunpack.c.l.b16 %v6609
      %v6716 = vunpack.c.l.b16 %v6610
      %v6717 = vunpack.c.l.b16 %v6611
      %v6718 = vunpack.c.l.b16 %v6612
      %v6719 = vunpack.c.l.b16 %v6613
      %v6720 = vunpack.c.l.b16 %v6614
      %v6721 = vunpack.c.l.b16 %v6615
      %v6722 = vunpack.c.l.b16 %v6616
      %v6723 = vpack.c.b16 %v6708, %v6707
      %v6724 = vpack.c.b16 %v6710, %v6709
      %v6725 = vpack.c.b16 %v6712, %v6711
      %v6726 = vpack.c.b16 %v6714, %v6713
      %v6727 = vpack.c.b16 %v6716, %v6715
      %v6728 = vpack.c.b16 %v6718, %v6717
      %v6729 = vpack.c.b16 %v6720, %v6719
      %v6730 = vpack.c.b16 %v6722, %v6721
      %6739 = vmatprep.subr.bf16.mxu0 0
      %6740 = vmatpush1.bf16.msra.mxu0 %v6723
      %6741 = vmatprep.subr.bf16.mxu0 0
      %6742 = vmatpush1.bf16.msra.mxu0 %v6724
      %6743 = vmatprep.subr.bf16.mxu0 0
      %6744 = vmatpush1.bf16.msra.mxu0 %v6725
      %6745 = vmatprep.subr.bf16.mxu0 0
      %6746 = vmatpush1.bf16.msra.mxu0 %v6726
      %6747 = vmatprep.subr.bf16.mxu0 0
      %6748 = vmatpush1.bf16.msra.mxu0 %v6727
      %6749 = vmatprep.subr.bf16.mxu0 0
      %6750 = vmatpush1.bf16.msra.mxu0 %v6728
      %6751 = vmatprep.subr.bf16.mxu0 0
      %6752 = vmatpush1.bf16.msra.mxu0 %v6729
      %6753 = vmatprep.subr.bf16.mxu0 0
      %6754 = vmatpush1.bf16.msra.mxu0 %v6730
      %6755 = vmatprep.subr.bf16.mxu0 0
      %6756 = vmatpush1.bf16.msra.mxu0 0
      %6757 = vmatprep.subr.bf16.mxu0 0
      %6758 = vmatpush1.bf16.msra.mxu0 0
      %6759 = vmatprep.subr.bf16.mxu0 0
      %6760 = vmatpush1.bf16.msra.mxu0 0
      %6761 = vmatprep.subr.bf16.mxu0 0
      %6762 = vmatpush1.bf16.msra.mxu0 0
      %6763 = vmatprep.subr.bf16.mxu0 0
      %6764 = vmatpush1.bf16.msra.mxu0 0
      %6765 = vmatprep.subr.bf16.mxu0 0
      %6766 = vmatpush1.bf16.msra.mxu0 0
      %6767 = vmatprep.subr.bf16.mxu0 0
      %6768 = vmatpush1.bf16.msra.mxu0 0
      %6769 = vmatprep.subr.bf16.mxu0 0
      %6770 = vmatpush1.bf16.msra.mxu0 0
      %6771 = vmatprep.mubr.bf16.mxu0 0
      %6772 = vmatmul.mubr.bf16.gmra.mrb[0].mxu0 %v6638
      %v6773 = vpop.f32.mrb[0].mxu0
      %v6774 = vadd.f32 0.0, %v6773
      %v6775 = vpop.f32.mrb[0].mxu0
      %v6776 = vpop.f32.mrb[0].mxu0
      %v6777 = vadd.f32 0.0, %v6776
      %v6778 = vpop.f32.mrb[0].mxu0
      %6779 = vmatprep.mubr.bf16.mxu0 0
      %6780 = vmatmul.mubr.bf16.gmra.mrb[0].mxu0 %v6640
      %v6781 = vpop.f32.mrb[0].mxu0
      %v6782 = vadd.f32 0.0, %v6781
      %v6783 = vpop.f32.mrb[0].mxu0
      %v6784 = vpop.f32.mrb[0].mxu0
      %v6785 = vadd.f32 0.0, %v6784
      %v6786 = vpop.f32.mrb[0].mxu0
      %6787 = vmatprep.mubr.bf16.mxu0 0
      %6788 = vmatmul.mubr.bf16.gmra.mrb[0].mxu0 %v6642
      %v6789 = vpop.f32.mrb[0].mxu0
      %v6790 = vadd.f32 0.0, %v6789
      %v6791 = vpop.f32.mrb[0].mxu0
      %v6792 = vpop.f32.mrb[0].mxu0
      %v6793 = vadd.f32 0.0, %v6792
      %v6794 = vpop.f32.mrb[0].mxu0
      %6795 = vmatprep.mubr.bf16.mxu0 0
      %6796 = vmatmul.mubr.bf16.gmra.mrb[0].mxu0 %v6644
      %v6797 = vpop.f32.mrb[0].mxu0
      %v6798 = vadd.f32 0.0, %v6797
      %v6799 = vpop.f32.mrb[0].mxu0
      %v6800 = vpop.f32.mrb[0].mxu0
      %v6801 = vadd.f32 0.0, %v6800
      %v6802 = vpop.f32.mrb[0].mxu0
      %6803 = vmatprep.mubr.bf16.mxu0 0
      %6804 = vmatmul.mubr.bf16.gmra.mrb[0].mxu0 %v6646
      %v6805 = vpop.f32.mrb[0].mxu0
      %v6806 = vadd.f32 0.0, %v6805
      %v6807 = vpop.f32.mrb[0].mxu0
      %v6808 = vpop.f32.mrb[0].mxu0
      %v6809 = vadd.f32 0.0, %v6808
      %v6810 = vpop.f32.mrb[0].mxu0
      %6811 = vmatprep.mubr.bf16.mxu0 0
      %6812 = vmatmul.mubr.bf16.gmra.mrb[0].mxu0 %v6648
      %v6813 = vpop.f32.mrb[0].mxu0
      %v6814 = vadd.f32 0.0, %v6813
      %v6815 = vpop.f32.mrb[0].mxu0
      %v6816 = vpop.f32.mrb[0].mxu0
      %v6817 = vadd.f32 0.0, %v6816
      %v6818 = vpop.f32.mrb[0].mxu0
      %6819 = vmatprep.mubr.bf16.mxu0 0
      %6820 = vmatmul.mubr.bf16.gmra.mrb[0].mxu0 %v6650
      %v6821 = vpop.f32.mrb[0].mxu0
      %v6822 = vadd.f32 0.0, %v6821
      %v6823 = vpop.f32.mrb[0].mxu0
      %v6824 = vpop.f32.mrb[0].mxu0
      %v6825 = vadd.f32 0.0, %v6824
      %v6826 = vpop.f32.mrb[0].mxu0
      %6827 = vmatprep.mubr.bf16.mxu0 0
      %6828 = vmatmul.mubr.bf16.gmra.mrb[0].mxu0 %v6652
      %v6829 = vpop.f32.mrb[0].mxu0
      %v6830 = vadd.f32 0.0, %v6829
      %v6831 = vpop.f32.mrb[0].mxu0
      %v6832 = vpop.f32.mrb[0].mxu0
      %v6833 = vadd.f32 0.0, %v6832
      %v6834 = vpop.f32.mrb[0].mxu0
      %6835 = vmatprep.mubr.bf16.mxu0 0
      %6836 = vmatmul.mubr.bf16.gmra.mrb[0].mxu0 %v6654
      %v6837 = vpop.f32.mrb[0].mxu0
      %v6838 = vadd.f32 0.0, %v6837
      %v6839 = vpop.f32.mrb[0].mxu0
      %v6840 = vpop.f32.mrb[0].mxu0
      %v6841 = vadd.f32 0.0, %v6840
      %v6842 = vpop.f32.mrb[0].mxu0
      %6843 = vmatprep.mubr.bf16.mxu0 0
      %6844 = vmatmul.mubr.bf16.gmra.mrb[0].mxu0 %v6656
      %v6845 = vpop.f32.mrb[0].mxu0
      %v6846 = vadd.f32 0.0, %v6845
      %v6847 = vpop.f32.mrb[0].mxu0
      %v6848 = vpop.f32.mrb[0].mxu0
      %v6849 = vadd.f32 0.0, %v6848
      %v6850 = vpop.f32.mrb[0].mxu0
      %6851 = vmatprep.mubr.bf16.mxu0 0
      %6852 = vmatmul.mubr.bf16.gmra.mrb[0].mxu0 %v6658
      %v6853 = vpop.f32.mrb[0].mxu0
      %v6854 = vadd.f32 0.0, %v6853
      %v6855 = vpop.f32.mrb[0].mxu0
      %v6856 = vpop.f32.mrb[0].mxu0
      %v6857 = vadd.f32 0.0, %v6856
      %v6858 = vpop.f32.mrb[0].mxu0
      %6859 = vmatprep.mubr.bf16.mxu0 0
      %6860 = vmatmul.mubr.bf16.gmra.mrb[0].mxu0 %v6660
      %v6861 = vpop.f32.mrb[0].mxu0
      %v6862 = vadd.f32 0.0, %v6861
      %v6863 = vpop.f32.mrb[0].mxu0
      %v6864 = vpop.f32.mrb[0].mxu0
      %v6865 = vadd.f32 0.0, %v6864
      %v6866 = vpop.f32.mrb[0].mxu0
      %6867 = vmatprep.mubr.bf16.mxu0 0
      %6868 = vmatmul.mubr.bf16.gmra.mrb[0].mxu0 %v6662
      %v6869 = vpop.f32.mrb[0].mxu0
      %v6870 = vadd.f32 0.0, %v6869
      %v6871 = vpop.f32.mrb[0].mxu0
      %v6872 = vpop.f32.mrb[0].mxu0
      %v6873 = vadd.f32 0.0, %v6872
      %v6874 = vpop.f32.mrb[0].mxu0
      %6875 = vmatprep.mubr.bf16.mxu0 0
      %6876 = vmatmul.mubr.bf16.gmra.mrb[0].mxu0 %v6664
      %v6877 = vpop.f32.mrb[0].mxu0
      %v6878 = vadd.f32 0.0, %v6877
      %v6879 = vpop.f32.mrb[0].mxu0
      %v6880 = vpop.f32.mrb[0].mxu0
      %v6881 = vadd.f32 0.0, %v6880
      %v6882 = vpop.f32.mrb[0].mxu0
      %6883 = vmatprep.mubr.bf16.mxu0 0
      %6884 = vmatmul.mubr.bf16.gmra.mrb[0].mxu0 %v6666
      %v6885 = vpop.f32.mrb[0].mxu0
      %v6886 = vadd.f32 0.0, %v6885
      %v6887 = vpop.f32.mrb[0].mxu0
      %v6888 = vpop.f32.mrb[0].mxu0
      %v6889 = vadd.f32 0.0, %v6888
      %v6890 = vpop.f32.mrb[0].mxu0
      %6891 = vmatprep.mubr.bf16.mxu0 0
      %6892 = vmatmul.mubr.bf16.gmra.mrb[0].mxu0 %v6668
      %v6893 = vpop.f32.mrb[0].mxu0
      %v6894 = vadd.f32 0.0, %v6893
      %v6895 = vpop.f32.mrb[0].mxu0
      %v6896 = vpop.f32.mrb[0].mxu0
      %v6897 = vadd.f32 0.0, %v6896
      %v6898 = vpop.f32.mrb[0].mxu0
      %6899 = vmatprep.mubr.bf16.mxu0 0
      %6900 = vmatmul.mubr.bf16.gmra.mrb[0].mxu0 %v6670
      %v6901 = vpop.f32.mrb[0].mxu0
      %v6902 = vadd.f32 0.0, %v6901
      %v6903 = vpop.f32.mrb[0].mxu0
      %v6904 = vpop.f32.mrb[0].mxu0
      %v6905 = vadd.f32 0.0, %v6904
      %v6906 = vpop.f32.mrb[0].mxu0
      %6907 = vmatprep.mubr.bf16.mxu0 0
      %6908 = vmatmul.mubr.bf16.gmra.mrb[0].mxu0 %v6672
      %v6909 = vpop.f32.mrb[0].mxu0
      %v6910 = vadd.f32 0.0, %v6909
      %v6911 = vpop.f32.mrb[0].mxu0
      %v6912 = vpop.f32.mrb[0].mxu0
      %v6913 = vadd.f32 0.0, %v6912
      %v6914 = vpop.f32.mrb[0].mxu0
      %6915 = vdwg.mxu0
      %v6916 = vadd.f32 %v6545, %v6774
      %v6917 = vadd.f32 %v6546, %v6777
      %v6918 = vadd.f32 %v6547, %v6782
      %v6919 = vadd.f32 %v6548, %v6785
      %v6920 = vadd.f32 %v6549, %v6790
      %v6921 = vadd.f32 %v6550, %v6793
      %v6922 = vadd.f32 %v6551, %v6798
      %v6923 = vadd.f32 %v6552, %v6801
      %v6924 = vadd.f32 %v6553, %v6806
      %v6925 = vadd.f32 %v6554, %v6809
      %v6926 = vadd.f32 %v6555, %v6814
      %v6927 = vadd.f32 %v6556, %v6817
      %v6928 = vadd.f32 %v6557, %v6822
      %v6929 = vadd.f32 %v6558, %v6825
      %v6930 = vadd.f32 %v6559, %v6830
      %v6931 = vadd.f32 %v6560, %v6833
      %v6932 = vadd.f32 %v6561, %v6838
      %v6933 = vadd.f32 %v6562, %v6841
      %v6934 = vadd.f32 %v6563, %v6846
      %v6935 = vadd.f32 %v6564, %v6849
      %v6936 = vadd.f32 %v6565, %v6854
      %v6937 = vadd.f32 %v6566, %v6857
      %v6938 = vadd.f32 %v6567, %v6862
      %v6939 = vadd.f32 %v6568, %v6865
      %v6940 = vadd.f32 %v6569, %v6870
      %v6941 = vadd.f32 %v6570, %v6873
      %v6942 = vadd.f32 %v6571, %v6878
      %v6943 = vadd.f32 %v6572, %v6881
      %v6944 = vadd.f32 %v6573, %v6886
      %v6945 = vadd.f32 %v6574, %v6889
      %v6946 = vadd.f32 %v6575, %v6894
      %v6947 = vadd.f32 %v6576, %v6897
      %v6948 = vadd.f32 %v6577, %v6902
      %v6949 = vadd.f32 %v6578, %v6905
      %v6950 = vadd.f32 %v6579, %v6910
      %v6951 = vadd.f32 %v6580, %v6913
      %v6952 = vld [vmem:[#allocation2 + $0xa0] sm:$0x7]
      %s6953 = scalar_lea.vmem %s4, 448
      %v6954 = vld [vmem:[%s6953] sm:$0xf]
      %v6955 = vld [vmem:[%s6953 + $0x4] sm:$0xf]
      %v6956 = vld [vmem:[%s6953 + $0x8] sm:$0xf]
      %v6957 = vld [vmem:[%s6953 + $0xc] sm:$0xf]
      %v6958 = vld [vmem:[%s6953 + $0x10] sm:$0xf]
      %v6959 = vld [vmem:[%s6953 + $0x14] sm:$0xf]
      %v6960 = vld [vmem:[%s6953 + $0x18] sm:$0xf]
      %v6961 = vld [vmem:[%s6953 + $0x1c] sm:$0xf]
      %v6962 = vld [vmem:[%s6953 + $0x20] sm:$0xf]
      %v6963 = vld [vmem:[%s6953 + $0x24] sm:$0xf]
      %v6964 = vld [vmem:[%s6953 + $0x28] sm:$0xf]
      %v6965 = vld [vmem:[%s6953 + $0x2c] sm:$0xf]
      %v6966 = vld [vmem:[%s6953 + $0x30] sm:$0xf]
      %v6967 = vld [vmem:[%s6953 + $0x34] sm:$0xf]
      %v6968 = vld [vmem:[%s6953 + $0x38] sm:$0xf]
      %v6969 = vld [vmem:[%s6953 + $0x3c] sm:$0xf]
      %v6971 = vshrl.u32 %v6581, 16
      %v6973 = vrot.slane %v6971, 2
      %v6974 = vshll.u32 %v6581, 16
      %v6976 = vrot.slane %v6974, 3
      %v6977 = vor.u32 %v6973, %v6976
      %v6979 = vshrl.u32 %v6582, 16
      %v6981 = vrot.slane %v6979, 2
      %v6982 = vshll.u32 %v6582, 16
      %v6984 = vrot.slane %v6982, 3
      %v6985 = vor.u32 %v6981, %v6984
      %v6986 = vsel %vm3220, %v6977, %v6985
      %v6988 = vshrl.u32 %v6583, 16
      %v6990 = vrot.slane %v6988, 2
      %v6991 = vshll.u32 %v6583, 16
      %v6993 = vrot.slane %v6991, 3
      %v6994 = vor.u32 %v6990, %v6993
      %v6995 = vsel %vm3220, %v6985, %v6994
      %v6997 = vshrl.u32 %v6584, 16
      %v6999 = vrot.slane %v6997, 2
      %v7000 = vshll.u32 %v6584, 16
      %v7002 = vrot.slane %v7000, 3
      %v7003 = vor.u32 %v6999, %v7002
      %v7004 = vsel %vm3220, %v6994, %v7003
      %v7006 = vshrl.u32 %v6585, 16
      %v7008 = vrot.slane %v7006, 2
      %v7009 = vshll.u32 %v6585, 16
      %v7011 = vrot.slane %v7009, 3
      %v7012 = vor.u32 %v7008, %v7011
      %v7013 = vsel %vm3220, %v7003, %v7012
      %v7015 = vshrl.u32 %v6586, 16
      %v7017 = vrot.slane %v7015, 2
      %v7018 = vshll.u32 %v6586, 16
      %v7020 = vrot.slane %v7018, 3
      %v7021 = vor.u32 %v7017, %v7020
      %v7022 = vsel %vm3220, %v7012, %v7021
      %v7024 = vshrl.u32 %v6587, 16
      %v7026 = vrot.slane %v7024, 2
      %v7027 = vshll.u32 %v6587, 16
      %v7029 = vrot.slane %v7027, 3
      %v7030 = vor.u32 %v7026, %v7029
      %v7031 = vsel %vm3220, %v7021, %v7030
      %v7033 = vshrl.u32 %v6588, 16
      %v7035 = vrot.slane %v7033, 2
      %v7036 = vshll.u32 %v6588, 16
      %v7038 = vrot.slane %v7036, 3
      %v7039 = vor.u32 %v7035, %v7038
      %v7040 = vsel %vm3220, %v7030, %v7039
      %v7042 = vshrl.u32 %v6589, 16
      %v7044 = vrot.slane %v7042, 2
      %v7045 = vshll.u32 %v6589, 16
      %v7047 = vrot.slane %v7045, 3
      %v7048 = vor.u32 %v7044, %v7047
      %v7049 = vsel %vm3220, %v7039, %v7048
      %v7051 = vshrl.u32 %v6590, 16
      %v7053 = vrot.slane %v7051, 2
      %v7054 = vshll.u32 %v6590, 16
      %v7056 = vrot.slane %v7054, 3
      %v7057 = vor.u32 %v7053, %v7056
      %v7058 = vsel %vm3220, %v7048, %v7057
      %v7060 = vshrl.u32 %v6591, 16
      %v7062 = vrot.slane %v7060, 2
      %v7063 = vshll.u32 %v6591, 16
      %v7065 = vrot.slane %v7063, 3
      %v7066 = vor.u32 %v7062, %v7065
      %v7067 = vsel %vm3220, %v7057, %v7066
      %v7069 = vshrl.u32 %v6592, 16
      %v7071 = vrot.slane %v7069, 2
      %v7072 = vshll.u32 %v6592, 16
      %v7074 = vrot.slane %v7072, 3
      %v7075 = vor.u32 %v7071, %v7074
      %v7076 = vsel %vm3220, %v7066, %v7075
      %v7078 = vshrl.u32 %v6593, 16
      %v7080 = vrot.slane %v7078, 2
      %v7081 = vshll.u32 %v6593, 16
      %v7083 = vrot.slane %v7081, 3
      %v7084 = vor.u32 %v7080, %v7083
      %v7085 = vsel %vm3220, %v7075, %v7084
      %v7087 = vshrl.u32 %v6594, 16
      %v7089 = vrot.slane %v7087, 2
      %v7090 = vshll.u32 %v6594, 16
      %v7092 = vrot.slane %v7090, 3
      %v7093 = vor.u32 %v7089, %v7092
      %v7094 = vsel %vm3220, %v7084, %v7093
      %v7096 = vshrl.u32 %v6595, 16
      %v7098 = vrot.slane %v7096, 2
      %v7099 = vshll.u32 %v6595, 16
      %v7101 = vrot.slane %v7099, 3
      %v7102 = vor.u32 %v7098, %v7101
      %v7103 = vsel %vm3220, %v7093, %v7102
      %v7105 = vshrl.u32 %v6596, 16
      %v7107 = vrot.slane %v7105, 2
      %v7108 = vshll.u32 %v6596, 16
      %v7110 = vrot.slane %v7108, 3
      %v7111 = vor.u32 %v7107, %v7110
      %v7112 = vsel %vm3220, %v7102, %v7111
      %v7114 = vshrl.u32 %v6597, 16
      %v7116 = vrot.slane %v7114, 2
      %v7117 = vshll.u32 %v6597, 16
      %v7119 = vrot.slane %v7117, 3
      %v7120 = vor.u32 %v7116, %v7119
      %v7121 = vsel %vm3220, %v7111, %v7120
      %v7123 = vshrl.u32 %v6598, 16
      %v7125 = vrot.slane %v7123, 2
      %v7126 = vshll.u32 %v6598, 16
      %v7128 = vrot.slane %v7126, 3
      %v7129 = vor.u32 %v7125, %v7128
      %v7130 = vsel %vm3220, %v7120, %v7129
      %v7132 = vshrl.u32 %v6952, 16
      %v7134 = vrot.slane %v7132, 2
      %v7135 = vshll.u32 %v6952, 16
      %v7137 = vrot.slane %v7135, 3
      %v7138 = vor.u32 %v7134, %v7137
      %v7139 = vsel %vm3220, %v7129, %v7138
      %v7174 = vunpack.c.l.b16 %v6954
      %v7175 = vunpack.c.l.b16 %v6955
      %v7176 = vunpack.c.l.b16 %v6956
      %v7177 = vunpack.c.l.b16 %v6957
      %v7178 = vunpack.c.l.b16 %v6958
      %v7179 = vunpack.c.l.b16 %v6959
      %v7180 = vunpack.c.l.b16 %v6960
      %v7181 = vunpack.c.l.b16 %v6961
      %v7182 = vunpack.c.l.b16 %v6962
      %v7183 = vunpack.c.l.b16 %v6963
      %v7184 = vunpack.c.l.b16 %v6964
      %v7185 = vunpack.c.l.b16 %v6965
      %v7186 = vunpack.c.l.b16 %v6966
      %v7187 = vunpack.c.l.b16 %v6967
      %v7188 = vunpack.c.l.b16 %v6968
      %v7189 = vunpack.c.l.b16 %v6969
      %v7190 = vpack.c.b16 %v7175, %v7174
      %v7191 = vpack.c.b16 %v7177, %v7176
      %v7192 = vpack.c.b16 %v7179, %v7178
      %v7193 = vpack.c.b16 %v7181, %v7180
      %v7194 = vpack.c.b16 %v7183, %v7182
      %v7195 = vpack.c.b16 %v7185, %v7184
      %v7196 = vpack.c.b16 %v7187, %v7186
      %v7197 = vpack.c.b16 %v7189, %v7188
      %7206 = vmatprep.subr.bf16.mxu0 0
      %7207 = vmatpush1.bf16.msra.mxu0 %v7190
      %7208 = vmatprep.subr.bf16.mxu0 0
      %7209 = vmatpush1.bf16.msra.mxu0 %v7191
      %7210 = vmatprep.subr.bf16.mxu0 0
      %7211 = vmatpush1.bf16.msra.mxu0 %v7192
      %7212 = vmatprep.subr.bf16.mxu0 0
      %7213 = vmatpush1.bf16.msra.mxu0 %v7193
      %7214 = vmatprep.subr.bf16.mxu0 0
      %7215 = vmatpush1.bf16.msra.mxu0 %v7194
      %7216 = vmatprep.subr.bf16.mxu0 0
      %7217 = vmatpush1.bf16.msra.mxu0 %v7195
      %7218 = vmatprep.subr.bf16.mxu0 0
      %7219 = vmatpush1.bf16.msra.mxu0 %v7196
      %7220 = vmatprep.subr.bf16.mxu0 0
      %7221 = vmatpush1.bf16.msra.mxu0 %v7197
      %7222 = vmatprep.subr.bf16.mxu0 0
      %7223 = vmatpush1.bf16.msra.mxu0 0
      %7224 = vmatprep.subr.bf16.mxu0 0
      %7225 = vmatpush1.bf16.msra.mxu0 0
      %7226 = vmatprep.subr.bf16.mxu0 0
      %7227 = vmatpush1.bf16.msra.mxu0 0
      %7228 = vmatprep.subr.bf16.mxu0 0
      %7229 = vmatpush1.bf16.msra.mxu0 0
      %7230 = vmatprep.subr.bf16.mxu0 0
      %7231 = vmatpush1.bf16.msra.mxu0 0
      %7232 = vmatprep.subr.bf16.mxu0 0
      %7233 = vmatpush1.bf16.msra.mxu0 0
      %7234 = vmatprep.subr.bf16.mxu0 0
      %7235 = vmatpush1.bf16.msra.mxu0 0
      %7236 = vmatprep.subr.bf16.mxu0 0
      %7237 = vmatpush1.bf16.msra.mxu0 0
      %7238 = vmatprep.mubr.bf16.mxu0 0
      %7239 = vmatmul.mubr.bf16.gmra.mrb[0].mxu0 %v6986
      %v7240 = vpop.f32.mrb[0].mxu0
      %v7241 = vadd.f32 0.0, %v7240
      %v7242 = vpop.f32.mrb[0].mxu0
      %v7243 = vpop.f32.mrb[0].mxu0
      %v7244 = vadd.f32 0.0, %v7243
      %v7245 = vpop.f32.mrb[0].mxu0
      %7246 = vmatprep.mubr.bf16.mxu0 0
      %7247 = vmatmul.mubr.bf16.gmra.mrb[0].mxu0 %v6995
      %v7248 = vpop.f32.mrb[0].mxu0
      %v7249 = vadd.f32 0.0, %v7248
      %v7250 = vpop.f32.mrb[0].mxu0
      %v7251 = vpop.f32.mrb[0].mxu0
      %v7252 = vadd.f32 0.0, %v7251
      %v7253 = vpop.f32.mrb[0].mxu0
      %7254 = vmatprep.mubr.bf16.mxu0 0
      %7255 = vmatmul.mubr.bf16.gmra.mrb[0].mxu0 %v7004
      %v7256 = vpop.f32.mrb[0].mxu0
      %v7257 = vadd.f32 0.0, %v7256
      %v7258 = vpop.f32.mrb[0].mxu0
      %v7259 = vpop.f32.mrb[0].mxu0
      %v7260 = vadd.f32 0.0, %v7259
      %v7261 = vpop.f32.mrb[0].mxu0
      %7262 = vmatprep.mubr.bf16.mxu0 0
      %7263 = vmatmul.mubr.bf16.gmra.mrb[0].mxu0 %v7013
      %v7264 = vpop.f32.mrb[0].mxu0
      %v7265 = vadd.f32 0.0, %v7264
      %v7266 = vpop.f32.mrb[0].mxu0
      %v7267 = vpop.f32.mrb[0].mxu0
      %v7268 = vadd.f32 0.0, %v7267
      %v7269 = vpop.f32.mrb[0].mxu0
      %7270 = vmatprep.mubr.bf16.mxu0 0
      %7271 = vmatmul.mubr.bf16.gmra.mrb[0].mxu0 %v7022
      %v7272 = vpop.f32.mrb[0].mxu0
      %v7273 = vadd.f32 0.0, %v7272
      %v7274 = vpop.f32.mrb[0].mxu0
      %v7275 = vpop.f32.mrb[0].mxu0
      %v7276 = vadd.f32 0.0, %v7275
      %v7277 = vpop.f32.mrb[0].mxu0
      %7278 = vmatprep.mubr.bf16.mxu0 0
      %7279 = vmatmul.mubr.bf16.gmra.mrb[0].mxu0 %v7031
      %v7280 = vpop.f32.mrb[0].mxu0
      %v7281 = vadd.f32 0.0, %v7280
      %v7282 = vpop.f32.mrb[0].mxu0
      %v7283 = vpop.f32.mrb[0].mxu0
      %v7284 = vadd.f32 0.0, %v7283
      %v7285 = vpop.f32.mrb[0].mxu0
      %7286 = vmatprep.mubr.bf16.mxu0 0
      %7287 = vmatmul.mubr.bf16.gmra.mrb[0].mxu0 %v7040
      %v7288 = vpop.f32.mrb[0].mxu0
      %v7289 = vadd.f32 0.0, %v7288
      %v7290 = vpop.f32.mrb[0].mxu0
      %v7291 = vpop.f32.mrb[0].mxu0
      %v7292 = vadd.f32 0.0, %v7291
      %v7293 = vpop.f32.mrb[0].mxu0
      %7294 = vmatprep.mubr.bf16.mxu0 0
      %7295 = vmatmul.mubr.bf16.gmra.mrb[0].mxu0 %v7049
      %v7296 = vpop.f32.mrb[0].mxu0
      %v7297 = vadd.f32 0.0, %v7296
      %v7298 = vpop.f32.mrb[0].mxu0
      %v7299 = vpop.f32.mrb[0].mxu0
      %v7300 = vadd.f32 0.0, %v7299
      %v7301 = vpop.f32.mrb[0].mxu0
      %7302 = vmatprep.mubr.bf16.mxu0 0
      %7303 = vmatmul.mubr.bf16.gmra.mrb[0].mxu0 %v7058
      %v7304 = vpop.f32.mrb[0].mxu0
      %v7305 = vadd.f32 0.0, %v7304
      %v7306 = vpop.f32.mrb[0].mxu0
      %v7307 = vpop.f32.mrb[0].mxu0
      %v7308 = vadd.f32 0.0, %v7307
      %v7309 = vpop.f32.mrb[0].mxu0
      %7310 = vmatprep.mubr.bf16.mxu0 0
      %7311 = vmatmul.mubr.bf16.gmra.mrb[0].mxu0 %v7067
      %v7312 = vpop.f32.mrb[0].mxu0
      %v7313 = vadd.f32 0.0, %v7312
      %v7314 = vpop.f32.mrb[0].mxu0
      %v7315 = vpop.f32.mrb[0].mxu0
      %v7316 = vadd.f32 0.0, %v7315
      %v7317 = vpop.f32.mrb[0].mxu0
      %7318 = vmatprep.mubr.bf16.mxu0 0
      %7319 = vmatmul.mubr.bf16.gmra.mrb[0].mxu0 %v7076
      %v7320 = vpop.f32.mrb[0].mxu0
      %v7321 = vadd.f32 0.0, %v7320
      %v7322 = vpop.f32.mrb[0].mxu0
      %v7323 = vpop.f32.mrb[0].mxu0
      %v7324 = vadd.f32 0.0, %v7323
      %v7325 = vpop.f32.mrb[0].mxu0
      %7326 = vmatprep.mubr.bf16.mxu0 0
      %7327 = vmatmul.mubr.bf16.gmra.mrb[0].mxu0 %v7085
      %v7328 = vpop.f32.mrb[0].mxu0
      %v7329 = vadd.f32 0.0, %v7328
      %v7330 = vpop.f32.mrb[0].mxu0
      %v7331 = vpop.f32.mrb[0].mxu0
      %v7332 = vadd.f32 0.0, %v7331
      %v7333 = vpop.f32.mrb[0].mxu0
      %7334 = vmatprep.mubr.bf16.mxu0 0
      %7335 = vmatmul.mubr.bf16.gmra.mrb[0].mxu0 %v7094
      %v7336 = vpop.f32.mrb[0].mxu0
      %v7337 = vadd.f32 0.0, %v7336
      %v7338 = vpop.f32.mrb[0].mxu0
      %v7339 = vpop.f32.mrb[0].mxu0
      %v7340 = vadd.f32 0.0, %v7339
      %v7341 = vpop.f32.mrb[0].mxu0
      %7342 = vmatprep.mubr.bf16.mxu0 0
      %7343 = vmatmul.mubr.bf16.gmra.mrb[0].mxu0 %v7103
      %v7344 = vpop.f32.mrb[0].mxu0
      %v7345 = vadd.f32 0.0, %v7344
      %v7346 = vpop.f32.mrb[0].mxu0
      %v7347 = vpop.f32.mrb[0].mxu0
      %v7348 = vadd.f32 0.0, %v7347
      %v7349 = vpop.f32.mrb[0].mxu0
      %7350 = vmatprep.mubr.bf16.mxu0 0
      %7351 = vmatmul.mubr.bf16.gmra.mrb[0].mxu0 %v7112
      %v7352 = vpop.f32.mrb[0].mxu0
      %v7353 = vadd.f32 0.0, %v7352
      %v7354 = vpop.f32.mrb[0].mxu0
      %v7355 = vpop.f32.mrb[0].mxu0
      %v7356 = vadd.f32 0.0, %v7355
      %v7357 = vpop.f32.mrb[0].mxu0
      %7358 = vmatprep.mubr.bf16.mxu0 0
      %7359 = vmatmul.mubr.bf16.gmra.mrb[0].mxu0 %v7121
      %v7360 = vpop.f32.mrb[0].mxu0
      %v7361 = vadd.f32 0.0, %v7360
      %v7362 = vpop.f32.mrb[0].mxu0
      %v7363 = vpop.f32.mrb[0].mxu0
      %v7364 = vadd.f32 0.0, %v7363
      %v7365 = vpop.f32.mrb[0].mxu0
      %7366 = vmatprep.mubr.bf16.mxu0 0
      %7367 = vmatmul.mubr.bf16.gmra.mrb[0].mxu0 %v7130
      %v7368 = vpop.f32.mrb[0].mxu0
      %v7369 = vadd.f32 0.0, %v7368
      %v7370 = vpop.f32.mrb[0].mxu0
      %v7371 = vpop.f32.mrb[0].mxu0
      %v7372 = vadd.f32 0.0, %v7371
      %v7373 = vpop.f32.mrb[0].mxu0
      %7374 = vmatprep.mubr.bf16.mxu0 0
      %7375 = vmatmul.mubr.bf16.gmra.mrb[0].mxu0 %v7139
      %v7376 = vpop.f32.mrb[0].mxu0
      %v7377 = vadd.f32 0.0, %v7376
      %v7378 = vpop.f32.mrb[0].mxu0
      %v7379 = vpop.f32.mrb[0].mxu0
      %v7380 = vadd.f32 0.0, %v7379
      %v7381 = vpop.f32.mrb[0].mxu0
      %7382 = vdwg.mxu0
      %v7383 = vadd.f32 %v6916, %v7241
      %v7384 = vadd.f32 %v6917, %v7244
      %v7385 = vadd.f32 %v6918, %v7249
      %v7386 = vadd.f32 %v6919, %v7252
      %v7387 = vadd.f32 %v6920, %v7257
      %v7388 = vadd.f32 %v6921, %v7260
      %v7389 = vadd.f32 %v6922, %v7265
      %v7390 = vadd.f32 %v6923, %v7268
      %v7391 = vadd.f32 %v6924, %v7273
      %v7392 = vadd.f32 %v6925, %v7276
      %v7393 = vadd.f32 %v6926, %v7281
      %v7394 = vadd.f32 %v6927, %v7284
      %v7395 = vadd.f32 %v6928, %v7289
      %v7396 = vadd.f32 %v6929, %v7292
      %v7397 = vadd.f32 %v6930, %v7297
      %v7398 = vadd.f32 %v6931, %v7300
      %v7399 = vadd.f32 %v6932, %v7305
      %v7400 = vadd.f32 %v6933, %v7308
      %v7401 = vadd.f32 %v6934, %v7313
      %v7402 = vadd.f32 %v6935, %v7316
      %v7403 = vadd.f32 %v6936, %v7321
      %v7404 = vadd.f32 %v6937, %v7324
      %v7405 = vadd.f32 %v6938, %v7329
      %v7406 = vadd.f32 %v6939, %v7332
      %v7407 = vadd.f32 %v6940, %v7337
      %v7408 = vadd.f32 %v6941, %v7340
      %v7409 = vadd.f32 %v6942, %v7345
      %v7410 = vadd.f32 %v6943, %v7348
      %v7411 = vadd.f32 %v6944, %v7353
      %v7412 = vadd.f32 %v6945, %v7356
      %v7413 = vadd.f32 %v6946, %v7361
      %v7414 = vadd.f32 %v6947, %v7364
      %v7415 = vadd.f32 %v6948, %v7369
      %v7416 = vadd.f32 %v6949, %v7372
      %v7417 = vadd.f32 %v6950, %v7377
      %v7418 = vadd.f32 %v6951, %v7380
      %v7419 = vld [vmem:[#allocation2 + $0x10] sm:$0xf8]
      %s7420 = scalar_lea.vmem %s4, 512
      %v7421 = vld [vmem:[%s7420] sm:$0xf]
      %v7422 = vld [vmem:[%s7420 + $0x4] sm:$0xf]
      %v7423 = vld [vmem:[%s7420 + $0x8] sm:$0xf]
      %v7424 = vld [vmem:[%s7420 + $0xc] sm:$0xf]
      %v7425 = vld [vmem:[%s7420 + $0x10] sm:$0xf]
      %v7426 = vld [vmem:[%s7420 + $0x14] sm:$0xf]
      %v7427 = vld [vmem:[%s7420 + $0x18] sm:$0xf]
      %v7428 = vld [vmem:[%s7420 + $0x1c] sm:$0xf]
      %v7429 = vld [vmem:[%s7420 + $0x20] sm:$0xf]
      %v7430 = vld [vmem:[%s7420 + $0x24] sm:$0xf]
      %v7431 = vld [vmem:[%s7420 + $0x28] sm:$0xf]
      %v7432 = vld [vmem:[%s7420 + $0x2c] sm:$0xf]
      %v7433 = vld [vmem:[%s7420 + $0x30] sm:$0xf]
      %v7434 = vld [vmem:[%s7420 + $0x34] sm:$0xf]
      %v7435 = vld [vmem:[%s7420 + $0x38] sm:$0xf]
      %v7436 = vld [vmem:[%s7420 + $0x3c] sm:$0xf]
      %v7439 = vrot.slane %v7419, 3
      %v7440 = vrot.slane %v6582, 3
      %v7441 = vsel %vm3691, %v7439, %v7440
      %v7442 = vrot.slane %v6583, 3
      %v7443 = vsel %vm3691, %v7440, %v7442
      %v7444 = vrot.slane %v6584, 3
      %v7445 = vsel %vm3691, %v7442, %v7444
      %v7446 = vrot.slane %v6585, 3
      %v7447 = vsel %vm3691, %v7444, %v7446
      %v7448 = vrot.slane %v6586, 3
      %v7449 = vsel %vm3691, %v7446, %v7448
      %v7450 = vrot.slane %v6587, 3
      %v7451 = vsel %vm3691, %v7448, %v7450
      %v7452 = vrot.slane %v6588, 3
      %v7453 = vsel %vm3691, %v7450, %v7452
      %v7454 = vrot.slane %v6589, 3
      %v7455 = vsel %vm3691, %v7452, %v7454
      %v7456 = vrot.slane %v6590, 3
      %v7457 = vsel %vm3691, %v7454, %v7456
      %v7458 = vrot.slane %v6591, 3
      %v7459 = vsel %vm3691, %v7456, %v7458
      %v7460 = vrot.slane %v6592, 3
      %v7461 = vsel %vm3691, %v7458, %v7460
      %v7462 = vrot.slane %v6593, 3
      %v7463 = vsel %vm3691, %v7460, %v7462
      %v7464 = vrot.slane %v6594, 3
      %v7465 = vsel %vm3691, %v7462, %v7464
      %v7466 = vrot.slane %v6595, 3
      %v7467 = vsel %vm3691, %v7464, %v7466
      %v7468 = vrot.slane %v6596, 3
      %v7469 = vsel %vm3691, %v7466, %v7468
      %v7470 = vrot.slane %v6597, 3
      %v7471 = vsel %vm3691, %v7468, %v7470
      %v7472 = vrot.slane %v6598, 3
      %v7473 = vsel %vm3691, %v7470, %v7472
      %v7474 = vrot.slane %v6952, 3
      %v7475 = vsel %vm3691, %v7472, %v7474
      %v7510 = vunpack.c.l.b16 %v7421
      %v7511 = vunpack.c.l.b16 %v7422
      %v7512 = vunpack.c.l.b16 %v7423
      %v7513 = vunpack.c.l.b16 %v7424
      %v7514 = vunpack.c.l.b16 %v7425
      %v7515 = vunpack.c.l.b16 %v7426
      %v7516 = vunpack.c.l.b16 %v7427
      %v7517 = vunpack.c.l.b16 %v7428
      %v7518 = vunpack.c.l.b16 %v7429
      %v7519 = vunpack.c.l.b16 %v7430
      %v7520 = vunpack.c.l.b16 %v7431
      %v7521 = vunpack.c.l.b16 %v7432
      %v7522 = vunpack.c.l.b16 %v7433
      %v7523 = vunpack.c.l.b16 %v7434
      %v7524 = vunpack.c.l.b16 %v7435
      %v7525 = vunpack.c.l.b16 %v7436
      %v7526 = vpack.c.b16 %v7511, %v7510
      %v7527 = vpack.c.b16 %v7513, %v7512
      %v7528 = vpack.c.b16 %v7515, %v7514
      %v7529 = vpack.c.b16 %v7517, %v7516
      %v7530 = vpack.c.b16 %v7519, %v7518
      %v7531 = vpack.c.b16 %v7521, %v7520
      %v7532 = vpack.c.b16 %v7523, %v7522
      %v7533 = vpack.c.b16 %v7525, %v7524
      %7542 = vmatprep.subr.bf16.mxu0 0
      %7543 = vmatpush1.bf16.msra.mxu0 %v7526
      %7544 = vmatprep.subr.bf16.mxu0 0
      %7545 = vmatpush1.bf16.msra.mxu0 %v7527
      %7546 = vmatprep.subr.bf16.mxu0 0
      %7547 = vmatpush1.bf16.msra.mxu0 %v7528
      %7548 = vmatprep.subr.bf16.mxu0 0
      %7549 = vmatpush1.bf16.msra.mxu0 %v7529
      %7550 = vmatprep.subr.bf16.mxu0 0
      %7551 = vmatpush1.bf16.msra.mxu0 %v7530
      %7552 = vmatprep.subr.bf16.mxu0 0
      %7553 = vmatpush1.bf16.msra.mxu0 %v7531
      %7554 = vmatprep.subr.bf16.mxu0 0
      %7555 = vmatpush1.bf16.msra.mxu0 %v7532
      %7556 = vmatprep.subr.bf16.mxu0 0
      %7557 = vmatpush1.bf16.msra.mxu0 %v7533
      %7558 = vmatprep.subr.bf16.mxu0 0
      %7559 = vmatpush1.bf16.msra.mxu0 0
      %7560 = vmatprep.subr.bf16.mxu0 0
      %7561 = vmatpush1.bf16.msra.mxu0 0
      %7562 = vmatprep.subr.bf16.mxu0 0
      %7563 = vmatpush1.bf16.msra.mxu0 0
      %7564 = vmatprep.subr.bf16.mxu0 0
      %7565 = vmatpush1.bf16.msra.mxu0 0
      %7566 = vmatprep.subr.bf16.mxu0 0
      %7567 = vmatpush1.bf16.msra.mxu0 0
      %7568 = vmatprep.subr.bf16.mxu0 0
      %7569 = vmatpush1.bf16.msra.mxu0 0
      %7570 = vmatprep.subr.bf16.mxu0 0
      %7571 = vmatpush1.bf16.msra.mxu0 0
      %7572 = vmatprep.subr.bf16.mxu0 0
      %7573 = vmatpush1.bf16.msra.mxu0 0
      %7574 = vmatprep.mubr.bf16.mxu0 0
      %7575 = vmatmul.mubr.bf16.gmra.mrb[0].mxu0 %v7441
      %v7576 = vpop.f32.mrb[0].mxu0
      %v7577 = vadd.f32 0.0, %v7576
      %v7578 = vpop.f32.mrb[0].mxu0
      %v7579 = vpop.f32.mrb[0].mxu0
      %v7580 = vadd.f32 0.0, %v7579
      %v7581 = vpop.f32.mrb[0].mxu0
      %7582 = vmatprep.mubr.bf16.mxu0 0
      %7583 = vmatmul.mubr.bf16.gmra.mrb[0].mxu0 %v7443
      %v7584 = vpop.f32.mrb[0].mxu0
      %v7585 = vadd.f32 0.0, %v7584
      %v7586 = vpop.f32.mrb[0].mxu0
      %v7587 = vpop.f32.mrb[0].mxu0
      %v7588 = vadd.f32 0.0, %v7587
      %v7589 = vpop.f32.mrb[0].mxu0
      %7590 = vmatprep.mubr.bf16.mxu0 0
      %7591 = vmatmul.mubr.bf16.gmra.mrb[0].mxu0 %v7445
      %v7592 = vpop.f32.mrb[0].mxu0
      %v7593 = vadd.f32 0.0, %v7592
      %v7594 = vpop.f32.mrb[0].mxu0
      %v7595 = vpop.f32.mrb[0].mxu0
      %v7596 = vadd.f32 0.0, %v7595
      %v7597 = vpop.f32.mrb[0].mxu0
      %7598 = vmatprep.mubr.bf16.mxu0 0
      %7599 = vmatmul.mubr.bf16.gmra.mrb[0].mxu0 %v7447
      %v7600 = vpop.f32.mrb[0].mxu0
      %v7601 = vadd.f32 0.0, %v7600
      %v7602 = vpop.f32.mrb[0].mxu0
      %v7603 = vpop.f32.mrb[0].mxu0
      %v7604 = vadd.f32 0.0, %v7603
      %v7605 = vpop.f32.mrb[0].mxu0
      %7606 = vmatprep.mubr.bf16.mxu0 0
      %7607 = vmatmul.mubr.bf16.gmra.mrb[0].mxu0 %v7449
      %v7608 = vpop.f32.mrb[0].mxu0
      %v7609 = vadd.f32 0.0, %v7608
      %v7610 = vpop.f32.mrb[0].mxu0
      %v7611 = vpop.f32.mrb[0].mxu0
      %v7612 = vadd.f32 0.0, %v7611
      %v7613 = vpop.f32.mrb[0].mxu0
      %7614 = vmatprep.mubr.bf16.mxu0 0
      %7615 = vmatmul.mubr.bf16.gmra.mrb[0].mxu0 %v7451
      %v7616 = vpop.f32.mrb[0].mxu0
      %v7617 = vadd.f32 0.0, %v7616
      %v7618 = vpop.f32.mrb[0].mxu0
      %v7619 = vpop.f32.mrb[0].mxu0
      %v7620 = vadd.f32 0.0, %v7619
      %v7621 = vpop.f32.mrb[0].mxu0
      %7622 = vmatprep.mubr.bf16.mxu0 0
      %7623 = vmatmul.mubr.bf16.gmra.mrb[0].mxu0 %v7453
      %v7624 = vpop.f32.mrb[0].mxu0
      %v7625 = vadd.f32 0.0, %v7624
      %v7626 = vpop.f32.mrb[0].mxu0
      %v7627 = vpop.f32.mrb[0].mxu0
      %v7628 = vadd.f32 0.0, %v7627
      %v7629 = vpop.f32.mrb[0].mxu0
      %7630 = vmatprep.mubr.bf16.mxu0 0
      %7631 = vmatmul.mubr.bf16.gmra.mrb[0].mxu0 %v7455
      %v7632 = vpop.f32.mrb[0].mxu0
      %v7633 = vadd.f32 0.0, %v7632
      %v7634 = vpop.f32.mrb[0].mxu0
      %v7635 = vpop.f32.mrb[0].mxu0
      %v7636 = vadd.f32 0.0, %v7635
      %v7637 = vpop.f32.mrb[0].mxu0
      %7638 = vmatprep.mubr.bf16.mxu0 0
      %7639 = vmatmul.mubr.bf16.gmra.mrb[0].mxu0 %v7457
      %v7640 = vpop.f32.mrb[0].mxu0
      %v7641 = vadd.f32 0.0, %v7640
      %v7642 = vpop.f32.mrb[0].mxu0
      %v7643 = vpop.f32.mrb[0].mxu0
      %v7644 = vadd.f32 0.0, %v7643
      %v7645 = vpop.f32.mrb[0].mxu0
      %7646 = vmatprep.mubr.bf16.mxu0 0
      %7647 = vmatmul.mubr.bf16.gmra.mrb[0].mxu0 %v7459
      %v7648 = vpop.f32.mrb[0].mxu0
      %v7649 = vadd.f32 0.0, %v7648
      %v7650 = vpop.f32.mrb[0].mxu0
      %v7651 = vpop.f32.mrb[0].mxu0
      %v7652 = vadd.f32 0.0, %v7651
      %v7653 = vpop.f32.mrb[0].mxu0
      %7654 = vmatprep.mubr.bf16.mxu0 0
      %7655 = vmatmul.mubr.bf16.gmra.mrb[0].mxu0 %v7461
      %v7656 = vpop.f32.mrb[0].mxu0
      %v7657 = vadd.f32 0.0, %v7656
      %v7658 = vpop.f32.mrb[0].mxu0
      %v7659 = vpop.f32.mrb[0].mxu0
      %v7660 = vadd.f32 0.0, %v7659
      %v7661 = vpop.f32.mrb[0].mxu0
      %7662 = vmatprep.mubr.bf16.mxu0 0
      %7663 = vmatmul.mubr.bf16.gmra.mrb[0].mxu0 %v7463
      %v7664 = vpop.f32.mrb[0].mxu0
      %v7665 = vadd.f32 0.0, %v7664
      %v7666 = vpop.f32.mrb[0].mxu0
      %v7667 = vpop.f32.mrb[0].mxu0
      %v7668 = vadd.f32 0.0, %v7667
      %v7669 = vpop.f32.mrb[0].mxu0
      %7670 = vmatprep.mubr.bf16.mxu0 0
      %7671 = vmatmul.mubr.bf16.gmra.mrb[0].mxu0 %v7465
      %v7672 = vpop.f32.mrb[0].mxu0
      %v7673 = vadd.f32 0.0, %v7672
      %v7674 = vpop.f32.mrb[0].mxu0
      %v7675 = vpop.f32.mrb[0].mxu0
      %v7676 = vadd.f32 0.0, %v7675
      %v7677 = vpop.f32.mrb[0].mxu0
      %7678 = vmatprep.mubr.bf16.mxu0 0
      %7679 = vmatmul.mubr.bf16.gmra.mrb[0].mxu0 %v7467
      %v7680 = vpop.f32.mrb[0].mxu0
      %v7681 = vadd.f32 0.0, %v7680
      %v7682 = vpop.f32.mrb[0].mxu0
      %v7683 = vpop.f32.mrb[0].mxu0
      %v7684 = vadd.f32 0.0, %v7683
      %v7685 = vpop.f32.mrb[0].mxu0
      %7686 = vmatprep.mubr.bf16.mxu0 0
      %7687 = vmatmul.mubr.bf16.gmra.mrb[0].mxu0 %v7469
      %v7688 = vpop.f32.mrb[0].mxu0
      %v7689 = vadd.f32 0.0, %v7688
      %v7690 = vpop.f32.mrb[0].mxu0
      %v7691 = vpop.f32.mrb[0].mxu0
      %v7692 = vadd.f32 0.0, %v7691
      %v7693 = vpop.f32.mrb[0].mxu0
      %7694 = vmatprep.mubr.bf16.mxu0 0
      %7695 = vmatmul.mubr.bf16.gmra.mrb[0].mxu0 %v7471
      %v7696 = vpop.f32.mrb[0].mxu0
      %v7697 = vadd.f32 0.0, %v7696
      %v7698 = vpop.f32.mrb[0].mxu0
      %v7699 = vpop.f32.mrb[0].mxu0
      %v7700 = vadd.f32 0.0, %v7699
      %v7701 = vpop.f32.mrb[0].mxu0
      %7702 = vmatprep.mubr.bf16.mxu0 0
      %7703 = vmatmul.mubr.bf16.gmra.mrb[0].mxu0 %v7473
      %v7704 = vpop.f32.mrb[0].mxu0
      %v7705 = vadd.f32 0.0, %v7704
      %v7706 = vpop.f32.mrb[0].mxu0
      %v7707 = vpop.f32.mrb[0].mxu0
      %v7708 = vadd.f32 0.0, %v7707
      %v7709 = vpop.f32.mrb[0].mxu0
      %7710 = vmatprep.mubr.bf16.mxu0 0
      %7711 = vmatmul.mubr.bf16.gmra.mrb[0].mxu0 %v7475
      %v7712 = vpop.f32.mrb[0].mxu0
      %v7713 = vadd.f32 0.0, %v7712
      %v7714 = vpop.f32.mrb[0].mxu0
      %v7715 = vpop.f32.mrb[0].mxu0
      %v7716 = vadd.f32 0.0, %v7715
      %v7717 = vpop.f32.mrb[0].mxu0
      %7718 = vdwg.mxu0
      %v7719 = vadd.f32 %v7383, %v7577
      %v7720 = vadd.f32 %v7384, %v7580
      %v7721 = vadd.f32 %v7385, %v7585
      %v7722 = vadd.f32 %v7386, %v7588
      %v7723 = vadd.f32 %v7387, %v7593
      %v7724 = vadd.f32 %v7388, %v7596
      %v7725 = vadd.f32 %v7389, %v7601
      %v7726 = vadd.f32 %v7390, %v7604
      %v7727 = vadd.f32 %v7391, %v7609
      %v7728 = vadd.f32 %v7392, %v7612
      %v7729 = vadd.f32 %v7393, %v7617
      %v7730 = vadd.f32 %v7394, %v7620
      %v7731 = vadd.f32 %v7395, %v7625
      %v7732 = vadd.f32 %v7396, %v7628
      %v7733 = vadd.f32 %v7397, %v7633
      %v7734 = vadd.f32 %v7398, %v7636
      %v7735 = vadd.f32 %v7399, %v7641
      %v7736 = vadd.f32 %v7400, %v7644
      %v7737 = vadd.f32 %v7401, %v7649
      %v7738 = vadd.f32 %v7402, %v7652
      %v7739 = vadd.f32 %v7403, %v7657
      %v7740 = vadd.f32 %v7404, %v7660
      %v7741 = vadd.f32 %v7405, %v7665
      %v7742 = vadd.f32 %v7406, %v7668
      %v7743 = vadd.f32 %v7407, %v7673
      %v7744 = vadd.f32 %v7408, %v7676
      %v7745 = vadd.f32 %v7409, %v7681
      %v7746 = vadd.f32 %v7410, %v7684
      %v7747 = vadd.f32 %v7411, %v7689
      %v7748 = vadd.f32 %v7412, %v7692
      %v7749 = vadd.f32 %v7413, %v7697
      %v7750 = vadd.f32 %v7414, %v7700
      %v7751 = vadd.f32 %v7415, %v7705
      %v7752 = vadd.f32 %v7416, %v7708
      %v7753 = vadd.f32 %v7417, %v7713
      %v7754 = vadd.f32 %v7418, %v7716
      %v7755 = vld [vmem:[%s5] sm:$0x1]
      %v7757 = vlaneseq
      %v7758 = vshrl.u32 %v7757, 7
      %v7759 = vsub.s32 0, %v7758
      %v7760 = vrot.slane %v7755, %v7759
      %v7762 = vadd.f32 %v7719, %v7760
      %v7763 = vadd.f32 %v7720, %v7760
      %v7764 = vadd.f32 %v7721, %v7760
      %v7765 = vadd.f32 %v7722, %v7760
      %v7766 = vadd.f32 %v7723, %v7760
      %v7767 = vadd.f32 %v7724, %v7760
      %v7768 = vadd.f32 %v7725, %v7760
      %v7769 = vadd.f32 %v7726, %v7760
      %v7770 = vadd.f32 %v7727, %v7760
      %v7771 = vadd.f32 %v7728, %v7760
      %v7772 = vadd.f32 %v7729, %v7760
      %v7773 = vadd.f32 %v7730, %v7760
      %v7774 = vadd.f32 %v7731, %v7760
      %v7775 = vadd.f32 %v7732, %v7760
      %v7776 = vadd.f32 %v7733, %v7760
      %v7777 = vadd.f32 %v7734, %v7760
      %v7778 = vadd.f32 %v7735, %v7760
      %v7779 = vadd.f32 %v7736, %v7760
      %v7780 = vadd.f32 %v7737, %v7760
      %v7781 = vadd.f32 %v7738, %v7760
      %v7782 = vadd.f32 %v7739, %v7760
      %v7783 = vadd.f32 %v7740, %v7760
      %v7784 = vadd.f32 %v7741, %v7760
      %v7785 = vadd.f32 %v7742, %v7760
      %v7786 = vadd.f32 %v7743, %v7760
      %v7787 = vadd.f32 %v7744, %v7760
      %v7788 = vadd.f32 %v7745, %v7760
      %v7789 = vadd.f32 %v7746, %v7760
      %v7790 = vadd.f32 %v7747, %v7760
      %v7791 = vadd.f32 %v7748, %v7760
      %v7792 = vadd.f32 %v7749, %v7760
      %v7793 = vadd.f32 %v7750, %v7760
      %v7794 = vadd.f32 %v7751, %v7760
      %v7795 = vadd.f32 %v7752, %v7760
      %v7796 = vadd.f32 %v7753, %v7760
      %v7797 = vadd.f32 %v7754, %v7760
      %v7798 = vmax.f32 %v7762, 0.0
      %v7799 = vmax.f32 %v7763, 0.0
      %v7800 = vmax.f32 %v7764, 0.0
      %v7801 = vmax.f32 %v7765, 0.0
      %v7802 = vmax.f32 %v7766, 0.0
      %v7803 = vmax.f32 %v7767, 0.0
      %v7804 = vmax.f32 %v7768, 0.0
      %v7805 = vmax.f32 %v7769, 0.0
      %v7806 = vmax.f32 %v7770, 0.0
      %v7807 = vmax.f32 %v7771, 0.0
      %v7808 = vmax.f32 %v7772, 0.0
      %v7809 = vmax.f32 %v7773, 0.0
      %v7810 = vmax.f32 %v7774, 0.0
      %v7811 = vmax.f32 %v7775, 0.0
      %v7812 = vmax.f32 %v7776, 0.0
      %v7813 = vmax.f32 %v7777, 0.0
      %v7814 = vmax.f32 %v7778, 0.0
      %v7815 = vmax.f32 %v7779, 0.0
      %v7816 = vmax.f32 %v7780, 0.0
      %v7817 = vmax.f32 %v7781, 0.0
      %v7818 = vmax.f32 %v7782, 0.0
      %v7819 = vmax.f32 %v7783, 0.0
      %v7820 = vmax.f32 %v7784, 0.0
      %v7821 = vmax.f32 %v7785, 0.0
      %v7822 = vmax.f32 %v7786, 0.0
      %v7823 = vmax.f32 %v7787, 0.0
      %v7824 = vmax.f32 %v7788, 0.0
      %v7825 = vmax.f32 %v7789, 0.0
      %v7826 = vmax.f32 %v7790, 0.0
      %v7827 = vmax.f32 %v7791, 0.0
      %v7828 = vmax.f32 %v7792, 0.0
      %v7829 = vmax.f32 %v7793, 0.0
      %v7830 = vmax.f32 %v7794, 0.0
      %v7831 = vmax.f32 %v7795, 0.0
      %v7832 = vmax.f32 %v7796, 0.0
      %v7833 = vmax.f32 %v7797, 0.0
      %v7834 = vpack.c.bf16 %v7799, %v7798
      %v7835 = vpack.c.bf16 %v7801, %v7800
      %v7836 = vpack.c.bf16 %v7803, %v7802
      %v7837 = vpack.c.bf16 %v7805, %v7804
      %v7838 = vpack.c.bf16 %v7807, %v7806
      %v7839 = vpack.c.bf16 %v7809, %v7808
      %v7840 = vpack.c.bf16 %v7811, %v7810
      %v7841 = vpack.c.bf16 %v7813, %v7812
      %v7842 = vpack.c.bf16 %v7815, %v7814
      %v7843 = vpack.c.bf16 %v7817, %v7816
      %v7844 = vpack.c.bf16 %v7819, %v7818
      %v7845 = vpack.c.bf16 %v7821, %v7820
      %v7846 = vpack.c.bf16 %v7823, %v7822
      %v7847 = vpack.c.bf16 %v7825, %v7824
      %v7848 = vpack.c.bf16 %v7827, %v7826
      %v7849 = vpack.c.bf16 %v7829, %v7828
      %v7850 = vpack.c.bf16 %v7831, %v7830
      %v7851 = vpack.c.bf16 %v7833, %v7832
      %v7852 = vld [vmem:[%s6] sm:$0xf]
      %v7853 = vld [vmem:[%s6 + $0x4] sm:$0xf]
      %v7854 = vld [vmem:[%s6 + $0x8] sm:$0xf]
      %v7855 = vld [vmem:[%s6 + $0xc] sm:$0xf]
      %v7856 = vld [vmem:[%s6 + $0x10] sm:$0xf]
      %v7857 = vld [vmem:[%s6 + $0x14] sm:$0xf]
      %v7858 = vld [vmem:[%s6 + $0x18] sm:$0xf]
      %v7859 = vld [vmem:[%s6 + $0x1c] sm:$0xf]
      %v7860 = vld [vmem:[%s6 + $0x20] sm:$0xf]
      %v7861 = vld [vmem:[%s6 + $0x24] sm:$0xf]
      %v7862 = vld [vmem:[%s6 + $0x28] sm:$0xf]
      %v7863 = vld [vmem:[%s6 + $0x2c] sm:$0xf]
      %v7864 = vld [vmem:[%s6 + $0x30] sm:$0xf]
      %v7865 = vld [vmem:[%s6 + $0x34] sm:$0xf]
      %v7866 = vld [vmem:[%s6 + $0x38] sm:$0xf]
      %v7867 = vld [vmem:[%s6 + $0x3c] sm:$0xf]
      %v7868 = vld [vmem:[%s7] sm:$0x1]
      %v7870 = vlaneseq
      %v7871 = vshrl.u32 %v7870, 7
      %v7872 = vsub.s32 0, %v7871
      %v7873 = vrot.slane %v7868, %v7872
      %v7891 = vunpack.c.l.b16 %v7852
      %v7892 = vunpack.c.l.b16 %v7853
      %v7893 = vunpack.c.l.b16 %v7854
      %v7894 = vunpack.c.l.b16 %v7855
      %v7895 = vunpack.c.l.b16 %v7856
      %v7896 = vunpack.c.l.b16 %v7857
      %v7897 = vunpack.c.l.b16 %v7858
      %v7898 = vunpack.c.l.b16 %v7859
      %v7899 = vunpack.c.l.b16 %v7860
      %v7900 = vunpack.c.l.b16 %v7861
      %v7901 = vunpack.c.l.b16 %v7862
      %v7902 = vunpack.c.l.b16 %v7863
      %v7903 = vunpack.c.l.b16 %v7864
      %v7904 = vunpack.c.l.b16 %v7865
      %v7905 = vunpack.c.l.b16 %v7866
      %v7906 = vunpack.c.l.b16 %v7867
      %v7907 = vpack.c.b16 %v7892, %v7891
      %v7908 = vpack.c.b16 %v7894, %v7893
      %v7909 = vpack.c.b16 %v7896, %v7895
      %v7910 = vpack.c.b16 %v7898, %v7897
      %v7911 = vpack.c.b16 %v7900, %v7899
      %v7912 = vpack.c.b16 %v7902, %v7901
      %v7913 = vpack.c.b16 %v7904, %v7903
      %v7914 = vpack.c.b16 %v7906, %v7905
      %7923 = vmatprep.subr.bf16.mxu0 0
      %7924 = vmatpush1.bf16.msra.mxu0 %v7907
      %7925 = vmatprep.subr.bf16.mxu0 0
      %7926 = vmatpush1.bf16.msra.mxu0 %v7908
      %7927 = vmatprep.subr.bf16.mxu0 0
      %7928 = vmatpush1.bf16.msra.mxu0 %v7909
      %7929 = vmatprep.subr.bf16.mxu0 0
      %7930 = vmatpush1.bf16.msra.mxu0 %v7910
      %7931 = vmatprep.subr.bf16.mxu0 0
      %7932 = vmatpush1.bf16.msra.mxu0 %v7911
      %7933 = vmatprep.subr.bf16.mxu0 0
      %7934 = vmatpush1.bf16.msra.mxu0 %v7912
      %7935 = vmatprep.subr.bf16.mxu0 0
      %7936 = vmatpush1.bf16.msra.mxu0 %v7913
      %7937 = vmatprep.subr.bf16.mxu0 0
      %7938 = vmatpush1.bf16.msra.mxu0 %v7914
      %7939 = vmatprep.subr.bf16.mxu0 0
      %7940 = vmatpush1.bf16.msra.mxu0 0
      %7941 = vmatprep.subr.bf16.mxu0 0
      %7942 = vmatpush1.bf16.msra.mxu0 0
      %7943 = vmatprep.subr.bf16.mxu0 0
      %7944 = vmatpush1.bf16.msra.mxu0 0
      %7945 = vmatprep.subr.bf16.mxu0 0
      %7946 = vmatpush1.bf16.msra.mxu0 0
      %7947 = vmatprep.subr.bf16.mxu0 0
      %7948 = vmatpush1.bf16.msra.mxu0 0
      %7949 = vmatprep.subr.bf16.mxu0 0
      %7950 = vmatpush1.bf16.msra.mxu0 0
      %7951 = vmatprep.subr.bf16.mxu0 0
      %7952 = vmatpush1.bf16.msra.mxu0 0
      %7953 = vmatprep.subr.bf16.mxu0 0
      %7954 = vmatpush1.bf16.msra.mxu0 0
      %7955 = vmatprep.mubr.bf16.mxu0 0
      %7956 = vmatmul.mubr.bf16.gmra.mrb[0].mxu0 %v7834
      %v7957 = vpop.f32.mrb[0].mxu0
      %v7958 = vadd.f32 %v7873, %v7957
      %v7959 = vpop.f32.mrb[0].mxu0
      %v7960 = vpop.f32.mrb[0].mxu0
      %v7961 = vadd.f32 %v7873, %v7960
      %v7962 = vpop.f32.mrb[0].mxu0
      %7963 = vmatprep.mubr.bf16.mxu0 0
      %7964 = vmatmul.mubr.bf16.gmra.mrb[0].mxu0 %v7835
      %v7965 = vpop.f32.mrb[0].mxu0
      %v7966 = vadd.f32 %v7873, %v7965
      %v7967 = vpop.f32.mrb[0].mxu0
      %v7968 = vpop.f32.mrb[0].mxu0
      %v7969 = vadd.f32 %v7873, %v7968
      %v7970 = vpop.f32.mrb[0].mxu0
      %7971 = vmatprep.mubr.bf16.mxu0 0
      %7972 = vmatmul.mubr.bf16.gmra.mrb[0].mxu0 %v7836
      %v7973 = vpop.f32.mrb[0].mxu0
      %v7974 = vadd.f32 %v7873, %v7973
      %v7975 = vpop.f32.mrb[0].mxu0
      %v7976 = vpop.f32.mrb[0].mxu0
      %v7977 = vadd.f32 %v7873, %v7976
      %v7978 = vpop.f32.mrb[0].mxu0
      %7979 = vmatprep.mubr.bf16.mxu0 0
      %7980 = vmatmul.mubr.bf16.gmra.mrb[0].mxu0 %v7837
      %v7981 = vpop.f32.mrb[0].mxu0
      %v7982 = vadd.f32 %v7873, %v7981
      %v7983 = vpop.f32.mrb[0].mxu0
      %v7984 = vpop.f32.mrb[0].mxu0
      %v7985 = vadd.f32 %v7873, %v7984
      %v7986 = vpop.f32.mrb[0].mxu0
      %7987 = vmatprep.mubr.bf16.mxu0 0
      %7988 = vmatmul.mubr.bf16.gmra.mrb[0].mxu0 %v7838
      %v7989 = vpop.f32.mrb[0].mxu0
      %v7990 = vadd.f32 %v7873, %v7989
      %v7991 = vpop.f32.mrb[0].mxu0
      %v7992 = vpop.f32.mrb[0].mxu0
      %v7993 = vadd.f32 %v7873, %v7992
      %v7994 = vpop.f32.mrb[0].mxu0
      %7995 = vmatprep.mubr.bf16.mxu0 0
      %7996 = vmatmul.mubr.bf16.gmra.mrb[0].mxu0 %v7839
      %v7997 = vpop.f32.mrb[0].mxu0
      %v7998 = vadd.f32 %v7873, %v7997
      %v7999 = vpop.f32.mrb[0].mxu0
      %v8000 = vpop.f32.mrb[0].mxu0
      %v8001 = vadd.f32 %v7873, %v8000
      %v8002 = vpop.f32.mrb[0].mxu0
      %8003 = vmatprep.mubr.bf16.mxu0 0
      %8004 = vmatmul.mubr.bf16.gmra.mrb[0].mxu0 %v7840
      %v8005 = vpop.f32.mrb[0].mxu0
      %v8006 = vadd.f32 %v7873, %v8005
      %v8007 = vpop.f32.mrb[0].mxu0
      %v8008 = vpop.f32.mrb[0].mxu0
      %v8009 = vadd.f32 %v7873, %v8008
      %v8010 = vpop.f32.mrb[0].mxu0
      %8011 = vmatprep.mubr.bf16.mxu0 0
      %8012 = vmatmul.mubr.bf16.gmra.mrb[0].mxu0 %v7841
      %v8013 = vpop.f32.mrb[0].mxu0
      %v8014 = vadd.f32 %v7873, %v8013
      %v8015 = vpop.f32.mrb[0].mxu0
      %v8016 = vpop.f32.mrb[0].mxu0
      %v8017 = vadd.f32 %v7873, %v8016
      %v8018 = vpop.f32.mrb[0].mxu0
      %8019 = vmatprep.mubr.bf16.mxu0 0
      %8020 = vmatmul.mubr.bf16.gmra.mrb[0].mxu0 %v7842
      %v8021 = vpop.f32.mrb[0].mxu0
      %v8022 = vadd.f32 %v7873, %v8021
      %v8023 = vpop.f32.mrb[0].mxu0
      %v8024 = vpop.f32.mrb[0].mxu0
      %v8025 = vadd.f32 %v7873, %v8024
      %v8026 = vpop.f32.mrb[0].mxu0
      %8027 = vmatprep.mubr.bf16.mxu0 0
      %8028 = vmatmul.mubr.bf16.gmra.mrb[0].mxu0 %v7843
      %v8029 = vpop.f32.mrb[0].mxu0
      %v8030 = vadd.f32 %v7873, %v8029
      %v8031 = vpop.f32.mrb[0].mxu0
      %v8032 = vpop.f32.mrb[0].mxu0
      %v8033 = vadd.f32 %v7873, %v8032
      %v8034 = vpop.f32.mrb[0].mxu0
      %8035 = vmatprep.mubr.bf16.mxu0 0
      %8036 = vmatmul.mubr.bf16.gmra.mrb[0].mxu0 %v7844
      %v8037 = vpop.f32.mrb[0].mxu0
      %v8038 = vadd.f32 %v7873, %v8037
      %v8039 = vpop.f32.mrb[0].mxu0
      %v8040 = vpop.f32.mrb[0].mxu0
      %v8041 = vadd.f32 %v7873, %v8040
      %v8042 = vpop.f32.mrb[0].mxu0
      %8043 = vmatprep.mubr.bf16.mxu0 0
      %8044 = vmatmul.mubr.bf16.gmra.mrb[0].mxu0 %v7845
      %v8045 = vpop.f32.mrb[0].mxu0
      %v8046 = vadd.f32 %v7873, %v8045
      %v8047 = vpop.f32.mrb[0].mxu0
      %v8048 = vpop.f32.mrb[0].mxu0
      %v8049 = vadd.f32 %v7873, %v8048
      %v8050 = vpop.f32.mrb[0].mxu0
      %8051 = vmatprep.mubr.bf16.mxu0 0
      %8052 = vmatmul.mubr.bf16.gmra.mrb[0].mxu0 %v7846
      %v8053 = vpop.f32.mrb[0].mxu0
      %v8054 = vadd.f32 %v7873, %v8053
      %v8055 = vpop.f32.mrb[0].mxu0
      %v8056 = vpop.f32.mrb[0].mxu0
      %v8057 = vadd.f32 %v7873, %v8056
      %v8058 = vpop.f32.mrb[0].mxu0
      %8059 = vmatprep.mubr.bf16.mxu0 0
      %8060 = vmatmul.mubr.bf16.gmra.mrb[0].mxu0 %v7847
      %v8061 = vpop.f32.mrb[0].mxu0
      %v8062 = vadd.f32 %v7873, %v8061
      %v8063 = vpop.f32.mrb[0].mxu0
      %v8064 = vpop.f32.mrb[0].mxu0
      %v8065 = vadd.f32 %v7873, %v8064
      %v8066 = vpop.f32.mrb[0].mxu0
      %8067 = vmatprep.mubr.bf16.mxu0 0
      %8068 = vmatmul.mubr.bf16.gmra.mrb[0].mxu0 %v7848
      %v8069 = vpop.f32.mrb[0].mxu0
      %v8070 = vadd.f32 %v7873, %v8069
      %v8071 = vpop.f32.mrb[0].mxu0
      %v8072 = vpop.f32.mrb[0].mxu0
      %v8073 = vadd.f32 %v7873, %v8072
      %v8074 = vpop.f32.mrb[0].mxu0
      %8075 = vmatprep.mubr.bf16.mxu0 0
      %8076 = vmatmul.mubr.bf16.gmra.mrb[0].mxu0 %v7849
      %v8077 = vpop.f32.mrb[0].mxu0
      %v8078 = vadd.f32 %v7873, %v8077
      %v8079 = vpop.f32.mrb[0].mxu0
      %v8080 = vpop.f32.mrb[0].mxu0
      %v8081 = vadd.f32 %v7873, %v8080
      %v8082 = vpop.f32.mrb[0].mxu0
      %8083 = vmatprep.mubr.bf16.mxu0 0
      %8084 = vmatmul.mubr.bf16.gmra.mrb[0].mxu0 %v7850
      %v8085 = vpop.f32.mrb[0].mxu0
      %v8086 = vadd.f32 %v7873, %v8085
      %v8087 = vpop.f32.mrb[0].mxu0
      %v8088 = vpop.f32.mrb[0].mxu0
      %v8089 = vadd.f32 %v7873, %v8088
      %v8090 = vpop.f32.mrb[0].mxu0
      %8091 = vmatprep.mubr.bf16.mxu0 0
      %8092 = vmatmul.mubr.bf16.gmra.mrb[0].mxu0 %v7851
      %v8093 = vpop.f32.mrb[0].mxu0
      %v8094 = vadd.f32 %v7873, %v8093
      %v8095 = vpop.f32.mrb[0].mxu0
      %v8096 = vpop.f32.mrb[0].mxu0
      %v8097 = vadd.f32 %v7873, %v8096
      %v8098 = vpop.f32.mrb[0].mxu0
      %8099 = vdwg.mxu0
      %8100 = vst [vmem:[%s305] sm:$0xff] %v7958
      %8101 = vst [vmem:[%s305 + $0x8] sm:$0xff] %v7961
      %8102 = vst [vmem:[%s305 + $0x10] sm:$0xff] %v7966
      %8103 = vst [vmem:[%s305 + $0x18] sm:$0xff] %v7969
      %8104 = vst [vmem:[%s305 + $0x20] sm:$0xff] %v7974
      %8105 = vst [vmem:[%s305 + $0x28] sm:$0xff] %v7977
      %8106 = vst [vmem:[%s305 + $0x30] sm:$0xff] %v7982
      %8107 = vst [vmem:[%s305 + $0x38] sm:$0xff] %v7985
      %8108 = vst [vmem:[%s305 + $0x40] sm:$0xff] %v7990
      %8109 = vst [vmem:[%s305 + $0x48] sm:$0xff] %v7993
      %8110 = vst [vmem:[%s305 + $0x50] sm:$0xff] %v7998
      %8111 = vst [vmem:[%s305 + $0x58] sm:$0xff] %v8001
      %8112 = vst [vmem:[%s305 + $0x60] sm:$0xff] %v8006
      %8113 = vst [vmem:[%s305 + $0x68] sm:$0xff] %v8009
      %8114 = vst [vmem:[%s305 + $0x70] sm:$0xff] %v8014
      %8115 = vst [vmem:[%s305 + $0x78] sm:$0xff] %v8017
      %8116 = vst [vmem:[%s305 + $0x80] sm:$0xff] %v8022
      %8117 = vst [vmem:[%s305 + $0x88] sm:$0xff] %v8025
      %8118 = vst [vmem:[%s305 + $0x90] sm:$0xff] %v8030
      %8119 = vst [vmem:[%s305 + $0x98] sm:$0xff] %v8033
      %8120 = vst [vmem:[%s305 + $0xa0] sm:$0xff] %v8038
      %8121 = vst [vmem:[%s305 + $0xa8] sm:$0xff] %v8041
      %8122 = vst [vmem:[%s305 + $0xb0] sm:$0xff] %v8046
      %8123 = vst [vmem:[%s305 + $0xb8] sm:$0xff] %v8049
      %8124 = vst [vmem:[%s305 + $0xc0] sm:$0xff] %v8054
      %8125 = vst [vmem:[%s305 + $0xc8] sm:$0xff] %v8057
      %8126 = vst [vmem:[%s305 + $0xd0] sm:$0xff] %v8062
      %8127 = vst [vmem:[%s305 + $0xd8] sm:$0xff] %v8065
      %8128 = vst [vmem:[%s305 + $0xe0] sm:$0xff] %v8070
      %8129 = vst [vmem:[%s305 + $0xe8] sm:$0xff] %v8073
      %8130 = vst [vmem:[%s305 + $0xf0] sm:$0xff] %v8078
      %8131 = vst [vmem:[%s305 + $0xf8] sm:$0xff] %v8081
      %8132 = vst [vmem:[%s305 + $0x100] sm:$0xff] %v8086
      %8133 = vst [vmem:[%s305 + $0x108] sm:$0xff] %v8089
      %8134 = vst [vmem:[%s305 + $0x110] sm:$0xff] %v8094
      %8135 = vst [vmem:[%s305 + $0x118] sm:$0xff] %v8097
      %p8136 = scmp.lt.s32.totalorder %s19, 1
      %s8137 = scalar_select %p8136, %s19, 1
      %s8138 = smul.addr %s8137, 36
      %s8139 = smul.addr %s8138, 8
      %s8140 = scalar_lea.vmem %s8, %s8139
      // Predicated region
      $region53: #{_lambda_.1} parent=51 // pred_check
        %p8141 = pneg %p210
      $region54: #{_lambda_.1} parent=51 // pred_check_branch
        %8143 = sbr.rel (%p8141) target = $region56
      $region55: #{_lambda_.1} parent=51 // pred_region
        _
      $region56: #{_lambda_.1} parent=51 // pred_fallthru
        _
    $region52: #{_lambda_.1} parent=5 // pred_fallthru
      _
    %p8144 = scmp.le.s32.totalorder 2, %s14
    // Predicated region
    $region57: #{_lambda_.1} parent=5 // pred_check
      %p8145 = pneg %p8144
    $region58: #{_lambda_.1} parent=5 // pred_check_branch
      %8147 = sbr.rel (%p8145) target = $region60
    $region59: #{_lambda_.1} parent=5 // pred_region
      %s8148 = ssub.s32 %s14, 2
      // Predicated region
      $region61: #{_lambda_.1} parent=59 // pred_check
        %p8149 = pneg %p216
      $region62: #{_lambda_.1} parent=59 // pred_check_branch
        %8151 = sbr.rel (%p8149) target = $region64
      $region63: #{_lambda_.1} parent=59 // pred_region
        %p8152 = scmp.lt.s32.totalorder %s20, 1
        %s8153 = scalar_select %p8152, %s20, 1
        %s8154 = smul.addr %s8153, 36
        %s8155 = smul.addr %s8154, 8
        %s8156 = scalar_lea.vmem %s8, %s8155
      $region64: #{_lambda_.1} parent=59 // pred_fallthru
        _
    $region60: #{_lambda_.1} parent=5 // pred_fallthru
      _
  $region6: #{_lambda_.1} parent=0 // loop_footer
    %s18 = sadd.s32 1, %s14
  $region7: #{_lambda_.1} parent=0 // loop_footer_branch
    %13 = sbr.rel target = $region3
  $region8: #{_lambda_.1} parent=0 // loop_exit
    _

</llo_original>
